<compile_context>
chip_gen: v6e
topology: v6e:2x2x1
jax: 0.10.0
libtpu: 0.0.40
codegen_flags: <defaults>
</compile_context>

<pallas_src>
import numpy as np

import jax
import jax.numpy as jnp
from jax.experimental import pallas as pl
from jax.experimental.pallas import tpu as pltpu


# ---------------------------- fused Pallas kernel ----------------------------

def _mnist_fused_kernel(xs_ref, sel1_ref, m1_ref, b1_ref, sel2_ref, m2_ref, b2_ref,
                        selp_ref, tile_ref, tilet_ref, g2_ref, be2_ref,
                        w1h_ref, bfc1_ref, g1_ref, be1_ref, wfc2_ref, bfc2_ref,
                        o_ref):
    f32, bf16 = jnp.float32, jnp.bfloat16

    c2 = g2_ref.shape[1]                     # 64 channels after conv2
    w768 = m2_ref.shape[2]                   # 768 = 2 * pw * c2 (even/odd halves)
    half = w768 // 2                         # 384
    hidden = w1h_ref.shape[2]                # 128
    ph = w1h_ref.shape[0]                    # 6 pooled rows
    pw = half // c2                          # 6 pooled cols
    n = selp_ref.shape[1] // ph              # batch size (static Python int)

    xs = xs_ref[...]                         # (n*16, 16) f32, images stacked over rows

    # ---- Conv2d(1,32,3)+ReLU: 3 banded matmuls on the stacked batch --------------
    # rows = img*14 + y, lanes = x_out*32 + oc, padded to 512 lanes.
    acc1 = None
    for a in range(3):
        lhs = jnp.dot(sel1_ref[a], xs, preferred_element_type=f32).astype(bf16)  # (n*14,16)
        d = jnp.dot(lhs, m1_ref[a], preferred_element_type=f32)                  # (n*14,512)
        acc1 = d if acc1 is None else acc1 + d
    h1 = jnp.maximum(acc1 + b1_ref[...], 0.0)                                    # (n*14,512)

    # ---- Conv2d(32,64,3)+ReLU: 3 banded matmuls, whole-MXU-tile contraction ------
    # output lanes = e*384 + q*64 + oc where conv2 output column s = 2q + e.
    acc2 = None
    for i in range(3):
        lhs = jnp.dot(sel2_ref[i], h1, preferred_element_type=f32).astype(bf16)  # (n*12,512)
        d = jnp.dot(lhs, m2_ref[i], preferred_element_type=f32)                  # (n*12,768)
        acc2 = d if acc2 is None else acc2 + d
    h2 = jnp.maximum(acc2 + b2_ref[...], 0.0)                                    # (n*12,768)

    # ---- MaxPool2d(2): row pairs via 0/1 selection dots (which also reorder rows
    # to (p, img) for fc1); column pairs via the even/odd lane halves of m2. ------
    ymax = jnp.maximum(jnp.dot(selp_ref[0], h2, preferred_element_type=f32),
                       jnp.dot(selp_ref[1], h2, preferred_element_type=f32))     # (n*6,768)
    pooled = jnp.maximum(ymax[:, :half], ymax[:, half:])                         # (n*6,384)

    # ---- BatchNorm2d(64): batch stats (training mode), pw-fold via MXU dot -------
    count = float(n * ph * pw)
    col_sum = jnp.sum(pooled, axis=0, keepdims=True)                             # (1,384)
    col_sq = jnp.sum(pooled * pooled, axis=0, keepdims=True)                     # (1,384)
    s1 = jnp.dot(col_sum, tilet_ref[...], preferred_element_type=f32)            # (1,64)
    s2 = jnp.dot(col_sq, tilet_ref[...], preferred_element_type=f32)             # (1,64)
    mean_c = s1 / count
    var_c = s2 / count - mean_c * mean_c                                         # biased var
    scale_c = g2_ref[...] * jax.lax.rsqrt(var_c + 1e-5)
    shift_c = be2_ref[...] - mean_c * scale_c
    scale = jnp.dot(scale_c, tile_ref[...], preferred_element_type=f32)          # (1,384)
    shift = jnp.dot(shift_c, tile_ref[...], preferred_element_type=f32)          # (1,384)

    # one vector pass over the whole stacked pooled block
    feat = (pooled * scale + shift).astype(bf16)                                 # (n*6,384)

    # ---- Linear(2304,128)+ReLU: NCHW flatten folded into w1h; accumulate over p --
    acc = None
    for p in range(ph):
        d = jnp.dot(feat[p * n:(p + 1) * n, :], w1h_ref[p],
                    preferred_element_type=f32)                                  # (n,128)
        acc = d if acc is None else acc + d
    h = jnp.maximum(acc + bfc1_ref[...], 0.0)                                    # (n,128)

    # ---- BatchNorm1d(128), batch stats, only when batch > 1 (as in torch) --------
    if n > 1:
        hm = jnp.mean(h, axis=0, keepdims=True)
        hv = jnp.mean(h * h, axis=0, keepdims=True) - hm * hm
        inv = jax.lax.rsqrt(hv + 1e-5) * g1_ref[...]
        h = (h - hm) * inv + be1_ref[...]

    # ---- Linear(128, num_classes): single batched dot + single fused store -------
    o_ref[...] = jnp.dot(h, wfc2_ref[...], preferred_element_type=f32) + bfc2_ref[...]


# ---------------------------- pallas_call wrapper ----------------------------

@jax.jit
def mnist_classifier_forward(x_nchw, prepped):
    n, _, h, w = x_nchw.shape
    num_classes = prepped["fc2_b"].shape[1]
    xs = x_nchw.astype(jnp.float32).reshape(n * h, w)        # stack images over rows (IC=1)

    args = (xs, prepped["sel1"], prepped["m1"], prepped["b1t"], prepped["sel2"],
            prepped["m2"], prepped["b2t"], prepped["selp"], prepped["tile"],
            prepped["tileT"], prepped["bn2d_g"], prepped["bn2d_b"],
            prepped["w1h"], prepped["fc1_b"], prepped["bn1d_g"], prepped["bn1d_b"],
            prepped["w2h"], prepped["fc2_b"])
    vmem = pl.BlockSpec(memory_space=pltpu.MemorySpace.VMEM)
    return pl.pallas_call(
        _mnist_fused_kernel,
        out_shape=jax.ShapeDtypeStruct((n, num_classes), jnp.float32),
        in_specs=[vmem] * len(args),
        out_specs=vmem,
    )(*args)


# ---------------------------- parameter preparation ----------------------------

def init_params(key, feature_dim, num_classes=10):
    ks = jax.random.split(key, 6)
    return {
        # torch Conv2d weight layout: (OC, IC, KH, KW)
        "conv1_w": jax.random.normal(ks[0], (32, 1, 3, 3), jnp.float32) * 0.1,
        "conv1_b": jax.random.normal(ks[1], (32,), jnp.float32) * 0.1,
        "conv2_w": jax.random.normal(ks[2], (64, 32, 3, 3), jnp.float32) * 0.05,
        "conv2_b": jax.random.normal(ks[3], (64,), jnp.float32) * 0.05,
        # fresh torch BatchNorm: weight=1, bias=0
        "bn2d_g": jnp.ones((64,), jnp.float32),
        "bn2d_b": jnp.zeros((64,), jnp.float32),
        # torch Linear weight layout: (out_features, in_features)
        "fc1_w": jax.random.normal(ks[4], (128, feature_dim), jnp.float32) * 0.02,
        "fc1_b": jnp.zeros((128,), jnp.float32),
        "bn1d_g": jnp.ones((128,), jnp.float32),
        "bn1d_b": jnp.zeros((128,), jnp.float32),
        "fc2_w": jax.random.normal(ks[5], (num_classes, 128), jnp.float32) * 0.05,
        "fc2_b": jnp.zeros((num_classes,), jnp.float32),
    }
    # TODO(synk): optional `weights` checkpoint loading path is intentionally not reproduced.


def prepare_params(params, height=16, width=16, batch=2):
    """One-time weight layout work (banding, padding, flatten-perm, selection mats)."""
    oh1, ow1 = height - 2, width - 2          # 14, 14
    oh2, ow2 = oh1 - 2, ow1 - 2               # 12, 12
    ph, pw = oh2 // 2, ow2 // 2               # 6, 6
    oc1 = params["conv1_w"].shape[0]          # 32
    oc2 = params["conv2_w"].shape[0]          # 64
    hidden = params["fc1_w"].shape[0]         # 128
    nc = params["fc2_w"].shape[0]             # num_classes
    half = pw * oc2                           # 384
    w1cols = ow1 * oc1                        # 448
    w1pad = ((w1cols + 127) // 128) * 128     # 512 (lane-aligned conv1 output width)

    w1 = np.asarray(params["conv1_w"], np.float32)
    w2 = np.asarray(params["conv2_w"], np.float32)

    # Conv1 width-banded weights, padded to w1pad output lanes:
    #   m1[a, xin, xout*32+oc] = w1[oc, 0, a, xin-xout]
    m1 = np.zeros((3, width, w1pad), np.float32)
    for a in range(3):
        for b in range(3):
            for xo in range(ow1):
                m1[a, xo + b, xo * oc1:(xo + 1) * oc1] = w1[:, 0, a, b]
    b1t = np.zeros((1, w1pad), np.float32)
    b1t[0, :w1cols] = np.tile(np.asarray(params["conv1_b"], np.float32), ow1)

    # Conv2 width-banded weights with pool-friendly output columns, K padded 448->512:
    #   output col = (s % 2) * half + (s // 2) * 64 + oc   (s = conv2 output column)
    m2 = np.zeros((3, w1pad, 2 * half), np.float32)
    for i in range(3):
        for j in range(3):
            for s in range(ow2):
                x = s + j
                col0 = (s % 2) * half + (s // 2) * oc2
                m2[i, x * oc1:(x + 1) * oc1, col0:col0 + oc2] = w2[:, :, i, j].T
    b2t = np.tile(np.asarray(params["conv2_b"], np.float32), ow2)[None, :]

    # 0/1 row-selection matrices over the STACKED batch:
    #   sel1[a]: x rows (img*H + y + a)      -> conv1 LHS rows (img*14 + y)
    #   sel2[i]: h1 rows (img*14 + y + i)    -> conv2 LHS rows (img*12 + y)
    #   selp[e]: h2 rows (img*12 + 2p + e)   -> pooled rows (p*n + img)   [fc1 order]
    sel1 = np.zeros((3, batch * oh1, batch * height), np.float32)
    sel2 = np.zeros((3, batch * oh2, batch * oh1), np.float32)
    for a in range(3):
        for img in range(batch):
            for y in range(oh1):
                sel1[a, img * oh1 + y, img * height + y + a] = 1.0
            for y in range(oh2):
                sel2[a, img * oh2 + y, img * oh1 + y + a] = 1.0
    selp = np.zeros((2, ph * batch, batch * oh2), np.float32)
    for e in range(2):
        for p in range(ph):
            for img in range(batch):
                selp[e, p * batch + img, img * oh2 + 2 * p + e] = 1.0

    # 0/1 tiling matrices: per-channel (1,64) <-> per-column (1, pw*64)
    tile = np.zeros((oc2, half), np.float32)
    for q in range(pw):
        tile[:, q * oc2:(q + 1) * oc2] = np.eye(oc2, dtype=np.float32)
    tileT = np.ascontiguousarray(tile.T)

    # fc1 weight with the NCHW flatten folded in:
    #   w1h[p, q*64+oc, k] = fc1_w[k, oc*(ph*pw) + p*pw + q]
    fc1 = np.asarray(params["fc1_w"], np.float32).reshape(hidden, oc2, ph, pw)
    w1h = np.ascontiguousarray(fc1.transpose(2, 3, 1, 0)).reshape(ph, half, hidden)

    return {
        "sel1": jnp.asarray(sel1),
        "m1": jnp.asarray(m1, jnp.bfloat16),
        "b1t": jnp.asarray(b1t),
        "sel2": jnp.asarray(sel2),
        "m2": jnp.asarray(m2, jnp.bfloat16),
        "b2t": jnp.asarray(b2t),
        "selp": jnp.asarray(selp),
        "tile": jnp.asarray(tile),
        "tileT": jnp.asarray(tileT),
        "bn2d_g": jnp.asarray(params["bn2d_g"], jnp.float32).reshape(1, oc2),
        "bn2d_b": jnp.asarray(params["bn2d_b"], jnp.float32).reshape(1, oc2),
        "w1h": jnp.asarray(w1h, jnp.bfloat16),
        "fc1_b": jnp.asarray(params["fc1_b"], jnp.float32).reshape(1, hidden),
        "bn1d_g": jnp.asarray(params["bn1d_g"], jnp.float32).reshape(1, hidden),
        "bn1d_b": jnp.asarray(params["bn1d_b"], jnp.float32).reshape(1, hidden),
        "w2h": jnp.asarray(np.asarray(params["fc2_w"], np.float32).T),
        "fc2_b": jnp.asarray(params["fc2_b"], jnp.float32).reshape(1, nc),
    }


# ---------------------------- main ----------------------------

if __name__ == "__main__":
    N, C, H, W = 2, 1, 16, 16
    key = jax.random.PRNGKey(0)
    kx, kp = jax.random.split(key)
    x = jax.random.normal(kx, (N, C, H, W), jnp.float32)

    # MnistConfig.feature_dimensions implied by the conv/pool stack and input size.
    feat_dim = 64 * ((H - 4) // 2) * ((W - 4) // 2)   # = 2304 for 16x16 input
    params = init_params(kp, feat_dim, num_classes=10)
    prepped = prepare_params(params, height=H, width=W, batch=N)

    out = mnist_classifier_forward(x, prepped)
    jax.block_until_ready(out)
    assert out.shape == (N, 10) and out.dtype == jnp.float32
    assert bool(jnp.all(jnp.isfinite(out)))
    print("KERNEL_OK")
</pallas_src>

<mosaic_0001>
module attributes {stable_mosaic.version = 11 : i64} {
  func.func @_mnist_fused_kernel(%arg0: memref<32x16xf32, #tpu.memory_space<vmem>>, %arg1: memref<3x28x32xf32, #tpu.memory_space<vmem>>, %arg2: memref<3x16x512xbf16, #tpu.memory_space<vmem>>, %arg3: memref<1x512xf32, #tpu.memory_space<vmem>>, %arg4: memref<3x24x28xf32, #tpu.memory_space<vmem>>, %arg5: memref<3x512x768xbf16, #tpu.memory_space<vmem>>, %arg6: memref<1x768xf32, #tpu.memory_space<vmem>>, %arg7: memref<2x12x24xf32, #tpu.memory_space<vmem>>, %arg8: memref<64x384xf32, #tpu.memory_space<vmem>>, %arg9: memref<384x64xf32, #tpu.memory_space<vmem>>, %arg10: memref<1x64xf32, #tpu.memory_space<vmem>>, %arg11: memref<1x64xf32, #tpu.memory_space<vmem>>, %arg12: memref<6x384x128xbf16, #tpu.memory_space<vmem>>, %arg13: memref<1x128xf32, #tpu.memory_space<vmem>>, %arg14: memref<1x128xf32, #tpu.memory_space<vmem>>, %arg15: memref<1x128xf32, #tpu.memory_space<vmem>>, %arg16: memref<128x10xf32, #tpu.memory_space<vmem>>, %arg17: memref<1x10xf32, #tpu.memory_space<vmem>>, %arg18: memref<2x10xf32, #tpu.memory_space<vmem>>) attributes {dimension_semantics = [], scalar_prefetch = 0 : i64, scratch_operands = 0 : i64, tpu.core_type = #tpu.core_type<tc>} {
    %c0 = arith.constant 0 : index
    %c0_0 = arith.constant 0 : index
    %0 = vector.load %arg0[%c0, %c0_0] : memref<32x16xf32, #tpu.memory_space<vmem>>, vector<32x16xf32>
    %c0_1 = arith.constant 0 : index
    %c0_2 = arith.constant 0 : index
    %c0_3 = arith.constant 0 : index
    %1 = vector.load %arg1[%c0_1, %c0_2, %c0_3] : memref<3x28x32xf32, #tpu.memory_space<vmem>>, vector<1x28x32xf32>
    %2 = vector.shape_cast %1 : vector<1x28x32xf32> to vector<28x32xf32>
    %cst = arith.constant dense<0.000000e+00> : vector<28x16xf32>
    %3 = tpu.matmul %2, %0, %cst {dimension_numbers = #tpu.dot_dimension_numbers<[1], [0], [0], [1], [0, 0, 1, 1], [], []>} : vector<28x32xf32>, vector<32x16xf32>, vector<28x16xf32> -> vector<28x16xf32>
    %4 = arith.truncf %3 : vector<28x16xf32> to vector<28x16xbf16>
    %c0_4 = arith.constant 0 : index
    %c0_5 = arith.constant 0 : index
    %c0_6 = arith.constant 0 : index
    %5 = vector.load %arg2[%c0_4, %c0_5, %c0_6] : memref<3x16x512xbf16, #tpu.memory_space<vmem>>, vector<1x16x512xbf16>
    %6 = vector.shape_cast %5 : vector<1x16x512xbf16> to vector<16x512xbf16>
    %cst_7 = arith.constant dense<0.000000e+00> : vector<28x512xf32>
    %7 = tpu.matmul %4, %6, %cst_7 {dimension_numbers = #tpu.dot_dimension_numbers<[1], [0], [0], [1], [0, 0, 1, 1], [], []>} : vector<28x16xbf16>, vector<16x512xbf16>, vector<28x512xf32> -> vector<28x512xf32>
    %c1 = arith.constant 1 : index
    %c0_8 = arith.constant 0 : index
    %c0_9 = arith.constant 0 : index
    %8 = vector.load %arg1[%c1, %c0_8, %c0_9] : memref<3x28x32xf32, #tpu.memory_space<vmem>>, vector<1x28x32xf32>
    %9 = vector.shape_cast %8 : vector<1x28x32xf32> to vector<28x32xf32>
    %cst_10 = arith.constant dense<0.000000e+00> : vector<28x16xf32>
    %10 = tpu.matmul %9, %0, %cst_10 {dimension_numbers = #tpu.dot_dimension_numbers<[1], [0], [0], [1], [0, 0, 1, 1], [], []>} : vector<28x32xf32>, vector<32x16xf32>, vector<28x16xf32> -> vector<28x16xf32>
    %11 = arith.truncf %10 : vector<28x16xf32> to vector<28x16xbf16>
    %c1_11 = arith.constant 1 : index
    %c0_12 = arith.constant 0 : index
    %c0_13 = arith.constant 0 : index
    %12 = vector.load %arg2[%c1_11, %c0_12, %c0_13] : memref<3x16x512xbf16, #tpu.memory_space<vmem>>, vector<1x16x512xbf16>
    %13 = vector.shape_cast %12 : vector<1x16x512xbf16> to vector<16x512xbf16>
    %cst_14 = arith.constant dense<0.000000e+00> : vector<28x512xf32>
    %14 = tpu.matmul %11, %13, %cst_14 {dimension_numbers = #tpu.dot_dimension_numbers<[1], [0], [0], [1], [0, 0, 1, 1], [], []>} : vector<28x16xbf16>, vector<16x512xbf16>, vector<28x512xf32> -> vector<28x512xf32>
    %15 = arith.addf %7, %14 : vector<28x512xf32>
    %c2 = arith.constant 2 : index
    %c0_15 = arith.constant 0 : index
    %c0_16 = arith.constant 0 : index
    %16 = vector.load %arg1[%c2, %c0_15, %c0_16] : memref<3x28x32xf32, #tpu.memory_space<vmem>>, vector<1x28x32xf32>
    %17 = vector.shape_cast %16 : vector<1x28x32xf32> to vector<28x32xf32>
    %cst_17 = arith.constant dense<0.000000e+00> : vector<28x16xf32>
    %18 = tpu.matmul %17, %0, %cst_17 {dimension_numbers = #tpu.dot_dimension_numbers<[1], [0], [0], [1], [0, 0, 1, 1], [], []>} : vector<28x32xf32>, vector<32x16xf32>, vector<28x16xf32> -> vector<28x16xf32>
    %19 = arith.truncf %18 : vector<28x16xf32> to vector<28x16xbf16>
    %c2_18 = arith.constant 2 : index
    %c0_19 = arith.constant 0 : index
    %c0_20 = arith.constant 0 : index
    %20 = vector.load %arg2[%c2_18, %c0_19, %c0_20] : memref<3x16x512xbf16, #tpu.memory_space<vmem>>, vector<1x16x512xbf16>
    %21 = vector.shape_cast %20 : vector<1x16x512xbf16> to vector<16x512xbf16>
    %cst_21 = arith.constant dense<0.000000e+00> : vector<28x512xf32>
    %22 = tpu.matmul %19, %21, %cst_21 {dimension_numbers = #tpu.dot_dimension_numbers<[1], [0], [0], [1], [0, 0, 1, 1], [], []>} : vector<28x16xbf16>, vector<16x512xbf16>, vector<28x512xf32> -> vector<28x512xf32>
    %23 = arith.addf %15, %22 : vector<28x512xf32>
    %c0_22 = arith.constant 0 : index
    %c0_23 = arith.constant 0 : index
    %24 = vector.load %arg3[%c0_22, %c0_23] : memref<1x512xf32, #tpu.memory_space<vmem>>, vector<1x512xf32>
    %25 = vector.broadcast %24 : vector<1x512xf32> to vector<28x512xf32>
    %26 = arith.addf %23, %25 : vector<28x512xf32>
    %cst_24 = arith.constant 0.000000e+00 : f32
    %27 = vector.broadcast %cst_24 : f32 to vector<28x512xf32>
    %28 = arith.maximumf %26, %27 : vector<28x512xf32>
    %c0_25 = arith.constant 0 : index
    %c0_26 = arith.constant 0 : index
    %c0_27 = arith.constant 0 : index
    %29 = vector.load %arg4[%c0_25, %c0_26, %c0_27] : memref<3x24x28xf32, #tpu.memory_space<vmem>>, vector<1x24x28xf32>
    %30 = vector.shape_cast %29 : vector<1x24x28xf32> to vector<24x28xf32>
    %cst_28 = arith.constant dense<0.000000e+00> : vector<24x512xf32>
    %31 = tpu.matmul %30, %28, %cst_28 {dimension_numbers = #tpu.dot_dimension_numbers<[1], [0], [0], [1], [0, 0, 1, 1], [], []>} : vector<24x28xf32>, vector<28x512xf32>, vector<24x512xf32> -> vector<24x512xf32>
    %32 = arith.truncf %31 : vector<24x512xf32> to vector<24x512xbf16>
    %c0_29 = arith.constant 0 : index
    %c0_30 = arith.constant 0 : index
    %c0_31 = arith.constant 0 : index
    %33 = vector.load %arg5[%c0_29, %c0_30, %c0_31] : memref<3x512x768xbf16, #tpu.memory_space<vmem>>, vector<1x512x768xbf16>
    %34 = vector.shape_cast %33 : vector<1x512x768xbf16> to vector<512x768xbf16>
    %cst_32 = arith.constant dense<0.000000e+00> : vector<24x768xf32>
    %35 = tpu.matmul %32, %34, %cst_32 {dimension_numbers = #tpu.dot_dimension_numbers<[1], [0], [0], [1], [0, 0, 1, 1], [], []>} : vector<24x512xbf16>, vector<512x768xbf16>, vector<24x768xf32> -> vector<24x768xf32>
    %c1_33 = arith.constant 1 : index
    %c0_34 = arith.constant 0 : index
    %c0_35 = arith.constant 0 : index
    %36 = vector.load %arg4[%c1_33, %c0_34, %c0_35] : memref<3x24x28xf32, #tpu.memory_space<vmem>>, vector<1x24x28xf32>
    %37 = vector.shape_cast %36 : vector<1x24x28xf32> to vector<24x28xf32>
    %cst_36 = arith.constant dense<0.000000e+00> : vector<24x512xf32>
    %38 = tpu.matmul %37, %28, %cst_36 {dimension_numbers = #tpu.dot_dimension_numbers<[1], [0], [0], [1], [0, 0, 1, 1], [], []>} : vector<24x28xf32>, vector<28x512xf32>, vector<24x512xf32> -> vector<24x512xf32>
    %39 = arith.truncf %38 : vector<24x512xf32> to vector<24x512xbf16>
    %c1_37 = arith.constant 1 : index
    %c0_38 = arith.constant 0 : index
    %c0_39 = arith.constant 0 : index
    %40 = vector.load %arg5[%c1_37, %c0_38, %c0_39] : memref<3x512x768xbf16, #tpu.memory_space<vmem>>, vector<1x512x768xbf16>
    %41 = vector.shape_cast %40 : vector<1x512x768xbf16> to vector<512x768xbf16>
    %cst_40 = arith.constant dense<0.000000e+00> : vector<24x768xf32>
    %42 = tpu.matmul %39, %41, %cst_40 {dimension_numbers = #tpu.dot_dimension_numbers<[1], [0], [0], [1], [0, 0, 1, 1], [], []>} : vector<24x512xbf16>, vector<512x768xbf16>, vector<24x768xf32> -> vector<24x768xf32>
    %43 = arith.addf %35, %42 : vector<24x768xf32>
    %c2_41 = arith.constant 2 : index
    %c0_42 = arith.constant 0 : index
    %c0_43 = arith.constant 0 : index
    %44 = vector.load %arg4[%c2_41, %c0_42, %c0_43] : memref<3x24x28xf32, #tpu.memory_space<vmem>>, vector<1x24x28xf32>
    %45 = vector.shape_cast %44 : vector<1x24x28xf32> to vector<24x28xf32>
    %cst_44 = arith.constant dense<0.000000e+00> : vector<24x512xf32>
    %46 = tpu.matmul %45, %28, %cst_44 {dimension_numbers = #tpu.dot_dimension_numbers<[1], [0], [0], [1], [0, 0, 1, 1], [], []>} : vector<24x28xf32>, vector<28x512xf32>, vector<24x512xf32> -> vector<24x512xf32>
    %47 = arith.truncf %46 : vector<24x512xf32> to vector<24x512xbf16>
    %c2_45 = arith.constant 2 : index
    %c0_46 = arith.constant 0 : index
    %c0_47 = arith.constant 0 : index
    %48 = vector.load %arg5[%c2_45, %c0_46, %c0_47] : memref<3x512x768xbf16, #tpu.memory_space<vmem>>, vector<1x512x768xbf16>
    %49 = vector.shape_cast %48 : vector<1x512x768xbf16> to vector<512x768xbf16>
    %cst_48 = arith.constant dense<0.000000e+00> : vector<24x768xf32>
    %50 = tpu.matmul %47, %49, %cst_48 {dimension_numbers = #tpu.dot_dimension_numbers<[1], [0], [0], [1], [0, 0, 1, 1], [], []>} : vector<24x512xbf16>, vector<512x768xbf16>, vector<24x768xf32> -> vector<24x768xf32>
    %51 = arith.addf %43, %50 : vector<24x768xf32>
    %c0_49 = arith.constant 0 : index
    %c0_50 = arith.constant 0 : index
    %52 = vector.load %arg6[%c0_49, %c0_50] : memref<1x768xf32, #tpu.memory_space<vmem>>, vector<1x768xf32>
    %53 = vector.broadcast %52 : vector<1x768xf32> to vector<24x768xf32>
    %54 = arith.addf %51, %53 : vector<24x768xf32>
    %cst_51 = arith.constant 0.000000e+00 : f32
    %55 = vector.broadcast %cst_51 : f32 to vector<24x768xf32>
    %56 = arith.maximumf %54, %55 : vector<24x768xf32>
    %c0_52 = arith.constant 0 : index
    %c0_53 = arith.constant 0 : index
    %c0_54 = arith.constant 0 : index
    %57 = vector.load %arg7[%c0_52, %c0_53, %c0_54] : memref<2x12x24xf32, #tpu.memory_space<vmem>>, vector<1x12x24xf32>
    %58 = vector.shape_cast %57 : vector<1x12x24xf32> to vector<12x24xf32>
    %cst_55 = arith.constant dense<0.000000e+00> : vector<12x768xf32>
    %59 = tpu.matmul %58, %56, %cst_55 {dimension_numbers = #tpu.dot_dimension_numbers<[1], [0], [0], [1], [0, 0, 1, 1], [], []>} : vector<12x24xf32>, vector<24x768xf32>, vector<12x768xf32> -> vector<12x768xf32>
    %c1_56 = arith.constant 1 : index
    %c0_57 = arith.constant 0 : index
    %c0_58 = arith.constant 0 : index
    %60 = vector.load %arg7[%c1_56, %c0_57, %c0_58] : memref<2x12x24xf32, #tpu.memory_space<vmem>>, vector<1x12x24xf32>
    %61 = vector.shape_cast %60 : vector<1x12x24xf32> to vector<12x24xf32>
    %cst_59 = arith.constant dense<0.000000e+00> : vector<12x768xf32>
    %62 = tpu.matmul %61, %56, %cst_59 {dimension_numbers = #tpu.dot_dimension_numbers<[1], [0], [0], [1], [0, 0, 1, 1], [], []>} : vector<12x24xf32>, vector<24x768xf32>, vector<12x768xf32> -> vector<12x768xf32>
    %63 = arith.maximumf %59, %62 : vector<12x768xf32>
    %64 = vector.extract_strided_slice %63 {offsets = [0, 0], sizes = [12, 384], strides = [1, 1]} : vector<12x768xf32> to vector<12x384xf32>
    %65 = vector.extract_strided_slice %63 {offsets = [0, 384], sizes = [12, 384], strides = [1, 1]} : vector<12x768xf32> to vector<12x384xf32>
    %66 = arith.maximumf %64, %65 : vector<12x384xf32>
    %cst_60 = arith.constant dense<0.000000e+00> : vector<384xf32>
    %67 = vector.multi_reduction <add>, %66, %cst_60 [0] : vector<12x384xf32> to vector<384xf32>
    %68 = vector.shape_cast %67 : vector<384xf32> to vector<1x384xf32>
    %69 = arith.mulf %66, %66 : vector<12x384xf32>
    %cst_61 = arith.constant dense<0.000000e+00> : vector<384xf32>
    %70 = vector.multi_reduction <add>, %69, %cst_61 [0] : vector<12x384xf32> to vector<384xf32>
    %71 = vector.shape_cast %70 : vector<384xf32> to vector<1x384xf32>
    %c0_62 = arith.constant 0 : index
    %c0_63 = arith.constant 0 : index
    %72 = vector.load %arg9[%c0_62, %c0_63] : memref<384x64xf32, #tpu.memory_space<vmem>>, vector<384x64xf32>
    %cst_64 = arith.constant dense<0.000000e+00> : vector<1x64xf32>
    %73 = tpu.matmul %68, %72, %cst_64 {dimension_numbers = #tpu.dot_dimension_numbers<[1], [0], [0], [1], [0, 0, 1, 1], [], []>} : vector<1x384xf32>, vector<384x64xf32>, vector<1x64xf32> -> vector<1x64xf32>
    %c0_65 = arith.constant 0 : index
    %c0_66 = arith.constant 0 : index
    %74 = vector.load %arg9[%c0_65, %c0_66] : memref<384x64xf32, #tpu.memory_space<vmem>>, vector<384x64xf32>
    %cst_67 = arith.constant dense<0.000000e+00> : vector<1x64xf32>
    %75 = tpu.matmul %71, %74, %cst_67 {dimension_numbers = #tpu.dot_dimension_numbers<[1], [0], [0], [1], [0, 0, 1, 1], [], []>} : vector<1x384xf32>, vector<384x64xf32>, vector<1x64xf32> -> vector<1x64xf32>
    %cst_68 = arith.constant 7.200000e+01 : f32
    %76 = vector.broadcast %cst_68 : f32 to vector<1x64xf32>
    %77 = arith.divf %73, %76 : vector<1x64xf32>
    %cst_69 = arith.constant 7.200000e+01 : f32
    %78 = vector.broadcast %cst_69 : f32 to vector<1x64xf32>
    %79 = arith.divf %75, %78 : vector<1x64xf32>
    %80 = arith.mulf %77, %77 : vector<1x64xf32>
    %81 = arith.subf %79, %80 : vector<1x64xf32>
    %c0_70 = arith.constant 0 : index
    %c0_71 = arith.constant 0 : index
    %82 = vector.load %arg10[%c0_70, %c0_71] : memref<1x64xf32, #tpu.memory_space<vmem>>, vector<1x64xf32>
    %cst_72 = arith.constant 9.99999974E-6 : f32
    %83 = vector.broadcast %cst_72 : f32 to vector<1x64xf32>
    %84 = arith.addf %81, %83 : vector<1x64xf32>
    %85 = math.rsqrt %84 : vector<1x64xf32>
    %86 = arith.mulf %82, %85 : vector<1x64xf32>
    %c0_73 = arith.constant 0 : index
    %c0_74 = arith.constant 0 : index
    %87 = vector.load %arg11[%c0_73, %c0_74] : memref<1x64xf32, #tpu.memory_space<vmem>>, vector<1x64xf32>
    %88 = arith.mulf %77, %86 : vector<1x64xf32>
    %89 = arith.subf %87, %88 : vector<1x64xf32>
    %c0_75 = arith.constant 0 : index
    %c0_76 = arith.constant 0 : index
    %90 = vector.load %arg8[%c0_75, %c0_76] : memref<64x384xf32, #tpu.memory_space<vmem>>, vector<64x384xf32>
    %cst_77 = arith.constant dense<0.000000e+00> : vector<1x384xf32>
    %91 = tpu.matmul %86, %90, %cst_77 {dimension_numbers = #tpu.dot_dimension_numbers<[1], [0], [0], [1], [0, 0, 1, 1], [], []>} : vector<1x64xf32>, vector<64x384xf32>, vector<1x384xf32> -> vector<1x384xf32>
    %c0_78 = arith.constant 0 : index
    %c0_79 = arith.constant 0 : index
    %92 = vector.load %arg8[%c0_78, %c0_79] : memref<64x384xf32, #tpu.memory_space<vmem>>, vector<64x384xf32>
    %cst_80 = arith.constant dense<0.000000e+00> : vector<1x384xf32>
    %93 = tpu.matmul %89, %92, %cst_80 {dimension_numbers = #tpu.dot_dimension_numbers<[1], [0], [0], [1], [0, 0, 1, 1], [], []>} : vector<1x64xf32>, vector<64x384xf32>, vector<1x384xf32> -> vector<1x384xf32>
    %94 = vector.broadcast %91 : vector<1x384xf32> to vector<12x384xf32>
    %95 = arith.mulf %66, %94 : vector<12x384xf32>
    %96 = vector.broadcast %93 : vector<1x384xf32> to vector<12x384xf32>
    %97 = arith.addf %95, %96 : vector<12x384xf32>
    %98 = arith.truncf %97 : vector<12x384xf32> to vector<12x384xbf16>
    %99 = vector.extract_strided_slice %98 {offsets = [0, 0], sizes = [2, 384], strides = [1, 1]} : vector<12x384xbf16> to vector<2x384xbf16>
    %c0_81 = arith.constant 0 : index
    %c0_82 = arith.constant 0 : index
    %c0_83 = arith.constant 0 : index
    %100 = vector.load %arg12[%c0_81, %c0_82, %c0_83] : memref<6x384x128xbf16, #tpu.memory_space<vmem>>, vector<1x384x128xbf16>
    %101 = vector.shape_cast %100 : vector<1x384x128xbf16> to vector<384x128xbf16>
    %cst_84 = arith.constant dense<0.000000e+00> : vector<2x128xf32>
    %102 = tpu.matmul %99, %101, %cst_84 {dimension_numbers = #tpu.dot_dimension_numbers<[1], [0], [0], [1], [0, 0, 1, 1], [], []>} : vector<2x384xbf16>, vector<384x128xbf16>, vector<2x128xf32> -> vector<2x128xf32>
    %103 = vector.extract_strided_slice %98 {offsets = [2, 0], sizes = [2, 384], strides = [1, 1]} : vector<12x384xbf16> to vector<2x384xbf16>
    %c1_85 = arith.constant 1 : index
    %c0_86 = arith.constant 0 : index
    %c0_87 = arith.constant 0 : index
    %104 = vector.load %arg12[%c1_85, %c0_86, %c0_87] : memref<6x384x128xbf16, #tpu.memory_space<vmem>>, vector<1x384x128xbf16>
    %105 = vector.shape_cast %104 : vector<1x384x128xbf16> to vector<384x128xbf16>
    %cst_88 = arith.constant dense<0.000000e+00> : vector<2x128xf32>
    %106 = tpu.matmul %103, %105, %cst_88 {dimension_numbers = #tpu.dot_dimension_numbers<[1], [0], [0], [1], [0, 0, 1, 1], [], []>} : vector<2x384xbf16>, vector<384x128xbf16>, vector<2x128xf32> -> vector<2x128xf32>
    %107 = arith.addf %102, %106 : vector<2x128xf32>
    %108 = vector.extract_strided_slice %98 {offsets = [4, 0], sizes = [2, 384], strides = [1, 1]} : vector<12x384xbf16> to vector<2x384xbf16>
    %c2_89 = arith.constant 2 : index
    %c0_90 = arith.constant 0 : index
    %c0_91 = arith.constant 0 : index
    %109 = vector.load %arg12[%c2_89, %c0_90, %c0_91] : memref<6x384x128xbf16, #tpu.memory_space<vmem>>, vector<1x384x128xbf16>
    %110 = vector.shape_cast %109 : vector<1x384x128xbf16> to vector<384x128xbf16>
    %cst_92 = arith.constant dense<0.000000e+00> : vector<2x128xf32>
    %111 = tpu.matmul %108, %110, %cst_92 {dimension_numbers = #tpu.dot_dimension_numbers<[1], [0], [0], [1], [0, 0, 1, 1], [], []>} : vector<2x384xbf16>, vector<384x128xbf16>, vector<2x128xf32> -> vector<2x128xf32>
    %112 = arith.addf %107, %111 : vector<2x128xf32>
    %113 = vector.extract_strided_slice %98 {offsets = [6, 0], sizes = [2, 384], strides = [1, 1]} : vector<12x384xbf16> to vector<2x384xbf16>
    %c3 = arith.constant 3 : index
    %c0_93 = arith.constant 0 : index
    %c0_94 = arith.constant 0 : index
    %114 = vector.load %arg12[%c3, %c0_93, %c0_94] : memref<6x384x128xbf16, #tpu.memory_space<vmem>>, vector<1x384x128xbf16>
    %115 = vector.shape_cast %114 : vector<1x384x128xbf16> to vector<384x128xbf16>
    %cst_95 = arith.constant dense<0.000000e+00> : vector<2x128xf32>
    %116 = tpu.matmul %113, %115, %cst_95 {dimension_numbers = #tpu.dot_dimension_numbers<[1], [0], [0], [1], [0, 0, 1, 1], [], []>} : vector<2x384xbf16>, vector<384x128xbf16>, vector<2x128xf32> -> vector<2x128xf32>
    %117 = arith.addf %112, %116 : vector<2x128xf32>
    %118 = vector.extract_strided_slice %98 {offsets = [8, 0], sizes = [2, 384], strides = [1, 1]} : vector<12x384xbf16> to vector<2x384xbf16>
    %c4 = arith.constant 4 : index
    %c0_96 = arith.constant 0 : index
    %c0_97 = arith.constant 0 : index
    %119 = vector.load %arg12[%c4, %c0_96, %c0_97] : memref<6x384x128xbf16, #tpu.memory_space<vmem>>, vector<1x384x128xbf16>
    %120 = vector.shape_cast %119 : vector<1x384x128xbf16> to vector<384x128xbf16>
    %cst_98 = arith.constant dense<0.000000e+00> : vector<2x128xf32>
    %121 = tpu.matmul %118, %120, %cst_98 {dimension_numbers = #tpu.dot_dimension_numbers<[1], [0], [0], [1], [0, 0, 1, 1], [], []>} : vector<2x384xbf16>, vector<384x128xbf16>, vector<2x128xf32> -> vector<2x128xf32>
    %122 = arith.addf %117, %121 : vector<2x128xf32>
    %123 = vector.extract_strided_slice %98 {offsets = [10, 0], sizes = [2, 384], strides = [1, 1]} : vector<12x384xbf16> to vector<2x384xbf16>
    %c5 = arith.constant 5 : index
    %c0_99 = arith.constant 0 : index
    %c0_100 = arith.constant 0 : index
    %124 = vector.load %arg12[%c5, %c0_99, %c0_100] : memref<6x384x128xbf16, #tpu.memory_space<vmem>>, vector<1x384x128xbf16>
    %125 = vector.shape_cast %124 : vector<1x384x128xbf16> to vector<384x128xbf16>
    %cst_101 = arith.constant dense<0.000000e+00> : vector<2x128xf32>
    %126 = tpu.matmul %123, %125, %cst_101 {dimension_numbers = #tpu.dot_dimension_numbers<[1], [0], [0], [1], [0, 0, 1, 1], [], []>} : vector<2x384xbf16>, vector<384x128xbf16>, vector<2x128xf32> -> vector<2x128xf32>
    %127 = arith.addf %122, %126 : vector<2x128xf32>
    %c0_102 = arith.constant 0 : index
    %c0_103 = arith.constant 0 : index
    %128 = vector.load %arg13[%c0_102, %c0_103] : memref<1x128xf32, #tpu.memory_space<vmem>>, vector<1x128xf32>
    %129 = vector.broadcast %128 : vector<1x128xf32> to vector<2x128xf32>
    %130 = arith.addf %127, %129 : vector<2x128xf32>
    %cst_104 = arith.constant 0.000000e+00 : f32
    %131 = vector.broadcast %cst_104 : f32 to vector<2x128xf32>
    %132 = arith.maximumf %130, %131 : vector<2x128xf32>
    %cst_105 = arith.constant dense<0.000000e+00> : vector<128xf32>
    %133 = vector.multi_reduction <add>, %132, %cst_105 [0] : vector<2x128xf32> to vector<128xf32>
    %134 = vector.shape_cast %133 : vector<128xf32> to vector<1x128xf32>
    %cst_106 = arith.constant 2.000000e+00 : f32
    %135 = vector.broadcast %cst_106 : f32 to vector<1x128xf32>
    %136 = arith.divf %134, %135 : vector<1x128xf32>
    %137 = arith.mulf %132, %132 : vector<2x128xf32>
    %cst_107 = arith.constant dense<0.000000e+00> : vector<128xf32>
    %138 = vector.multi_reduction <add>, %137, %cst_107 [0] : vector<2x128xf32> to vector<128xf32>
    %139 = vector.shape_cast %138 : vector<128xf32> to vector<1x128xf32>
    %cst_108 = arith.constant 2.000000e+00 : f32
    %140 = vector.broadcast %cst_108 : f32 to vector<1x128xf32>
    %141 = arith.divf %139, %140 : vector<1x128xf32>
    %142 = arith.mulf %136, %136 : vector<1x128xf32>
    %143 = arith.subf %141, %142 : vector<1x128xf32>
    %cst_109 = arith.constant 9.99999974E-6 : f32
    %144 = vector.broadcast %cst_109 : f32 to vector<1x128xf32>
    %145 = arith.addf %143, %144 : vector<1x128xf32>
    %146 = math.rsqrt %145 : vector<1x128xf32>
    %c0_110 = arith.constant 0 : index
    %c0_111 = arith.constant 0 : index
    %147 = vector.load %arg14[%c0_110, %c0_111] : memref<1x128xf32, #tpu.memory_space<vmem>>, vector<1x128xf32>
    %148 = arith.mulf %146, %147 : vector<1x128xf32>
    %149 = vector.broadcast %136 : vector<1x128xf32> to vector<2x128xf32>
    %150 = arith.subf %132, %149 : vector<2x128xf32>
    %151 = vector.broadcast %148 : vector<1x128xf32> to vector<2x128xf32>
    %152 = arith.mulf %150, %151 : vector<2x128xf32>
    %c0_112 = arith.constant 0 : index
    %c0_113 = arith.constant 0 : index
    %153 = vector.load %arg15[%c0_112, %c0_113] : memref<1x128xf32, #tpu.memory_space<vmem>>, vector<1x128xf32>
    %154 = vector.broadcast %153 : vector<1x128xf32> to vector<2x128xf32>
    %155 = arith.addf %152, %154 : vector<2x128xf32>
    %c0_114 = arith.constant 0 : index
    %c0_115 = arith.constant 0 : index
    %156 = vector.load %arg16[%c0_114, %c0_115] : memref<128x10xf32, #tpu.memory_space<vmem>>, vector<128x10xf32>
    %cst_116 = arith.constant dense<0.000000e+00> : vector<2x10xf32>
    %157 = tpu.matmul %155, %156, %cst_116 {dimension_numbers = #tpu.dot_dimension_numbers<[1], [0], [0], [1], [0, 0, 1, 1], [], []>} : vector<2x128xf32>, vector<128x10xf32>, vector<2x10xf32> -> vector<2x10xf32>
    %c0_117 = arith.constant 0 : index
    %c0_118 = arith.constant 0 : index
    %158 = vector.load %arg17[%c0_117, %c0_118] : memref<1x10xf32, #tpu.memory_space<vmem>>, vector<1x10xf32>
    %159 = vector.broadcast %158 : vector<1x10xf32> to vector<2x10xf32>
    %160 = arith.addf %157, %159 : vector<2x10xf32>
    %c0_119 = arith.constant 0 : index
    %c0_120 = arith.constant 0 : index
    %161 = vector.load %arg18[%c0_119, %c0_120] : memref<2x10xf32, #tpu.memory_space<vmem>>, vector<2x10xf32>
    tpu.vector_store %arg18[%c0_119, %c0_120], %160 {strides = array<i32>} : memref<2x10xf32, #tpu.memory_space<vmem>>, vector<2x10xf32>,
    return
  }
}

</mosaic_0001>

<llo_original>
// kernel: mnist_classifier_forward.1
$region0: #{mnist_classifier_forward.1}
  #allocation0 [shape = 'u32[]', space=smem, size = 0x4, offset = 0x4, fixed_abs, tag = 'smem constant byte address 0x4 - core index']
  #allocation1 [shape = 'u32[144,128]{1,0:T(1,128)}', space=vmem, size = 0x12000, scoped, tag = 'internal scratch']
  %s0 = inlined_call_operand.hbm [shape: f32[32,16], index: 0, kind: input, shape index: {}]
  %s1 = inlined_call_operand.hbm [shape: f32[3,28,32], index: 1, kind: input, shape index: {}]
  %s2 = inlined_call_operand.hbm [shape: bf16[3,16,512], index: 2, kind: input, shape index: {}]
  %s3 = inlined_call_operand.hbm [shape: f32[1,512], index: 3, kind: input, shape index: {}]
  %s4 = inlined_call_operand.hbm [shape: f32[3,24,28], index: 4, kind: input, shape index: {}]
  %s5 = inlined_call_operand.hbm [shape: bf16[3,512,768], index: 5, kind: input, shape index: {}]
  %s6 = inlined_call_operand.hbm [shape: f32[1,768], index: 6, kind: input, shape index: {}]
  %s7 = inlined_call_operand.vmem [shape: f32[2,12,24], index: 7, kind: input, shape index: {}]
  %s8 = inlined_call_operand.hbm [shape: f32[64,384], index: 8, kind: input, shape index: {}]
  %s9 = inlined_call_operand.vmem [shape: f32[384,64], index: 9, kind: input, shape index: {}]
  %s10 = inlined_call_operand.hbm [shape: f32[1,64], index: 10, kind: input, shape index: {}]
  %s11 = inlined_call_operand.hbm [shape: f32[1,64], index: 11, kind: input, shape index: {}]
  %s12 = inlined_call_operand.hbm [shape: bf16[6,384,128], index: 12, kind: input, shape index: {}]
  %s13 = inlined_call_operand.hbm [shape: f32[1,128], index: 13, kind: input, shape index: {}]
  %s14 = inlined_call_operand.hbm [shape: f32[1,128], index: 14, kind: input, shape index: {}]
  %s15 = inlined_call_operand.hbm [shape: f32[1,128], index: 15, kind: input, shape index: {}]
  %s16 = inlined_call_operand.vmem [shape: f32[128,10], index: 16, kind: input, shape index: {}]
  %s17 = inlined_call_operand.hbm [shape: f32[1,10], index: 17, kind: input, shape index: {}]
  %s18 = inlined_call_operand.hbm [shape: f32[2,10], index: 18, kind: output, shape index: {}]
  %s19 = sld [smem:[#allocation0]]
  $region142: #{mnist_classifier_forward.1} parent=0
    _
  %s21 = ssub.s32 1, %s19
  %s22 = scalar_select 0, %s21, %s19
  $region1: #{mnist_classifier_forward.1} parent=0
    #allocation2 [shape = 'u8[16384]{0}', space=vmem, size = 0x4000, scoped, tag = 'input window, operand 0, single buffered']
    #allocation3 [shape = 's32[1]{0}', space=sflag, size = 0x4, scoped, tag = 'scoped memory for mnist_classifier_forward.1']
    #allocation4 [shape = 's32[1]{0}', space=sflag, size = 0x4, scoped, tag = 'scoped memory for mnist_classifier_forward.1']
    #allocation5 [shape = 'u8[49152]{0}', space=vmem, size = 0xc000, scoped, tag = 'input window, operand 1, single buffered']
    #allocation6 [shape = 's32[1]{0}', space=sflag, size = 0x4, scoped, tag = 'scoped memory for mnist_classifier_forward.1']
    #allocation7 [shape = 'u8[49152]{0}', space=vmem, size = 0xc000, scoped, tag = 'input window, operand 2, single buffered']
    #allocation8 [shape = 'u8[2048]{0}', space=vmem, size = 0x800, scoped, tag = 'input window, operand 3, single buffered']
    #allocation9 [shape = 's32[1]{0}', space=sflag, size = 0x4, scoped, tag = 'scoped memory for mnist_classifier_forward.1']
    #allocation10 [shape = 'u8[36864]{0}', space=vmem, size = 0x9000, scoped, tag = 'input window, operand 4, single buffered']
    #allocation11 [shape = 'u8[2359296]{0}', space=vmem, size = 0x240000, scoped, tag = 'input window, operand 5, single buffered']
    #allocation12 [shape = 's32[1]{0}', space=sflag, size = 0x4, scoped, tag = 'scoped memory for mnist_classifier_forward.1']
    #allocation13 [shape = 'u8[3072]{0}', space=vmem, size = 0xc00, scoped, tag = 'input window, operand 6, single buffered']
    #allocation14 [shape = 'u8[98304]{0}', space=vmem, size = 0x18000, scoped, tag = 'input window, operand 8, single buffered']
    #allocation15 [shape = 's32[1]{0}', space=sflag, size = 0x4, scoped, tag = 'scoped memory for mnist_classifier_forward.1']
    #allocation16 [shape = 'u8[512]{0}', space=vmem, size = 0x400, scoped, tag = 'input window, operand 10, single buffered']
    #allocation17 [shape = 'u8[512]{0}', space=vmem, size = 0x400, scoped, tag = 'input window, operand 11, single buffered']
    #allocation18 [shape = 's32[1]{0}', space=sflag, size = 0x4, scoped, tag = 'scoped memory for mnist_classifier_forward.1']
    #allocation19 [shape = 'u8[589824]{0}', space=vmem, size = 0x90000, scoped, tag = 'input window, operand 12, single buffered']
    #allocation20 [shape = 'u8[512]{0}', space=vmem, size = 0x400, scoped, tag = 'input window, operand 13, single buffered']
    #allocation21 [shape = 's32[1]{0}', space=sflag, size = 0x4, scoped, tag = 'scoped memory for mnist_classifier_forward.1']
    #allocation22 [shape = 'u8[512]{0}', space=vmem, size = 0x400, scoped, tag = 'input window, operand 14, single buffered']
    #allocation23 [shape = 'u8[512]{0}', space=vmem, size = 0x400, scoped, tag = 'input window, operand 15, single buffered']
    #allocation24 [shape = 's32[1]{0}', space=sflag, size = 0x4, scoped, tag = 'scoped memory for mnist_classifier_forward.1']
    #allocation25 [shape = 'u8[512]{0}', space=vmem, size = 0x400, scoped, tag = 'input window, operand 17, single buffered']
    #allocation26 [shape = 'u8[1024]{0}', space=vmem, size = 0x400, scoped, tag = 'output window, operand 0, single buffered']
    %23 = vsyncpa [#allocation3], 0
    %24 = vsyncpa [#allocation6], 0
    %25 = vsyncpa [#allocation9], 0
    %26 = vsyncpa [#allocation12], 0
    %27 = vsyncpa [#allocation15], 0
    %28 = vsyncpa [#allocation18], 0
    %29 = vsyncpa [#allocation21], 0
    %30 = vsyncpa [#allocation24], 0
    %31 = vsyncpa [#allocation4], 0
    // Predicated region
    $region2: #{mnist_classifier_forward.1} parent=1 // pred_check
      _
    $region3: #{mnist_classifier_forward.1} parent=1 // pred_check_branch
      %33 = sbr.rel (0) target = $region5
    $region4: #{mnist_classifier_forward.1} parent=1 // pred_region
      %s35 = ssub.s32 512, 512
      %36 = vsyncadd [#allocation3], %s35
      %s37 = sshll.u32 [#allocation2], 4
      %s38 = int_to_ptr.vmem [resolvable:$true] %s37
      %43 = dma.hbm_to_vmem [thread:$0]  %s0, 512, %s38, [#allocation3], 128, 128, 8
    $region5: #{mnist_classifier_forward.1} parent=1 // pred_fallthru
      _
    // Predicated region
    $region6: #{mnist_classifier_forward.1} parent=1 // pred_check
      _
    $region7: #{mnist_classifier_forward.1} parent=1 // pred_check_branch
      %45 = sbr.rel (0) target = $region9
    $region8: #{mnist_classifier_forward.1} parent=1 // pred_region
      %s47 = ssub.s32 1536, 1536
      %48 = vsyncadd [#allocation6], %s47
      %s49 = sshll.u32 [#allocation5], 4
      %s50 = int_to_ptr.vmem [resolvable:$true] %s49
      %55 = dma.hbm_to_vmem [thread:$0]  %s1, 1536, %s50, [#allocation6], 128, 128, 8
    $region9: #{mnist_classifier_forward.1} parent=1 // pred_fallthru
      _
    // Predicated region
    $region10: #{mnist_classifier_forward.1} parent=1 // pred_check
      _
    $region11: #{mnist_classifier_forward.1} parent=1 // pred_check_branch
      %57 = sbr.rel (0) target = $region13
    $region12: #{mnist_classifier_forward.1} parent=1 // pred_region
      %s59 = ssub.s32 1536, 1536
      %60 = vsyncadd [#allocation6], %s59
      %s61 = sshll.u32 [#allocation7], 4
      %s62 = int_to_ptr.vmem [resolvable:$true] %s61
      %67 = dma.hbm_to_vmem [thread:$0]  %s2, 1536, %s62, [#allocation6], 256, 256, 16
    $region13: #{mnist_classifier_forward.1} parent=1 // pred_fallthru
      _
    // Predicated region
    $region14: #{mnist_classifier_forward.1} parent=1 // pred_check
      _
    $region15: #{mnist_classifier_forward.1} parent=1 // pred_check_branch
      %69 = sbr.rel (0) target = $region17
    $region16: #{mnist_classifier_forward.1} parent=1 // pred_region
      %s71 = ssub.s32 64, 64
      %72 = vsyncadd [#allocation9], %s71
      %s74 = sshll.u32 [#allocation8], 4
      %s75 = int_to_ptr.vmem [resolvable:$true] %s74
      %77 = dma.hbm_to_vmem [thread:$0]  %s3, 64, %s75, [#allocation9]
    $region17: #{mnist_classifier_forward.1} parent=1 // pred_fallthru
      _
    // Predicated region
    $region18: #{mnist_classifier_forward.1} parent=1 // pred_check
      _
    $region19: #{mnist_classifier_forward.1} parent=1 // pred_check_branch
      %79 = sbr.rel (0) target = $region21
    $region20: #{mnist_classifier_forward.1} parent=1 // pred_region
      %s81 = ssub.s32 1152, 1152
      %82 = vsyncadd [#allocation9], %s81
      %s83 = sshll.u32 [#allocation10], 4
      %s84 = int_to_ptr.vmem [resolvable:$true] %s83
      %89 = dma.hbm_to_vmem [thread:$0]  %s4, 1152, %s84, [#allocation9], 128, 128, 8
    $region21: #{mnist_classifier_forward.1} parent=1 // pred_fallthru
      _
    // Predicated region
    $region22: #{mnist_classifier_forward.1} parent=1 // pred_check
      _
    $region23: #{mnist_classifier_forward.1} parent=1 // pred_check_branch
      %91 = sbr.rel (0) target = $region25
    $region24: #{mnist_classifier_forward.1} parent=1 // pred_region
      %s93 = ssub.s32 73728, 73728
      %94 = vsyncadd [#allocation12], %s93
      %s95 = sshll.u32 [#allocation11], 4
      %s96 = int_to_ptr.vmem [resolvable:$true] %s95
      %101 = dma.hbm_to_vmem [thread:$0]  %s5, 73728, %s96, [#allocation12], 384, 384, 24
    $region25: #{mnist_classifier_forward.1} parent=1 // pred_fallthru
      _
    // Predicated region
    $region26: #{mnist_classifier_forward.1} parent=1 // pred_check
      _
    $region27: #{mnist_classifier_forward.1} parent=1 // pred_check_branch
      %103 = sbr.rel (0) target = $region29
    $region28: #{mnist_classifier_forward.1} parent=1 // pred_region
      %s105 = ssub.s32 96, 96
      %106 = vsyncadd [#allocation12], %s105
      %s108 = sshll.u32 [#allocation13], 4
      %s109 = int_to_ptr.vmem [resolvable:$true] %s108
      %111 = dma.hbm_to_vmem [thread:$0]  %s6, 96, %s109, [#allocation12]
    $region29: #{mnist_classifier_forward.1} parent=1 // pred_fallthru
      _
    // Predicated region
    $region30: #{mnist_classifier_forward.1} parent=1 // pred_check
      _
    $region31: #{mnist_classifier_forward.1} parent=1 // pred_check_branch
      %113 = sbr.rel (0) target = $region33
    $region32: #{mnist_classifier_forward.1} parent=1 // pred_region
      _
    $region33: #{mnist_classifier_forward.1} parent=1 // pred_fallthru
      _
    // Predicated region
    $region34: #{mnist_classifier_forward.1} parent=1 // pred_check
      _
    $region35: #{mnist_classifier_forward.1} parent=1 // pred_check_branch
      %115 = sbr.rel (0) target = $region37
    $region36: #{mnist_classifier_forward.1} parent=1 // pred_region
      %s117 = ssub.s32 3072, 3072
      %118 = vsyncadd [#allocation15], %s117
      %s119 = sshll.u32 [#allocation14], 4
      %s120 = int_to_ptr.vmem [resolvable:$true] %s119
      %125 = dma.hbm_to_vmem [thread:$0]  %s8, 3072, %s120, [#allocation15], 384, 384, 24
    $region37: #{mnist_classifier_forward.1} parent=1 // pred_fallthru
      _
    // Predicated region
    $region38: #{mnist_classifier_forward.1} parent=1 // pred_check
      _
    $region39: #{mnist_classifier_forward.1} parent=1 // pred_check_branch
      %127 = sbr.rel (0) target = $region41
    $region40: #{mnist_classifier_forward.1} parent=1 // pred_region
      _
    $region41: #{mnist_classifier_forward.1} parent=1 // pred_fallthru
      _
    // Predicated region
    $region42: #{mnist_classifier_forward.1} parent=1 // pred_check
      _
    $region43: #{mnist_classifier_forward.1} parent=1 // pred_check_branch
      %129 = sbr.rel (0) target = $region45
    $region44: #{mnist_classifier_forward.1} parent=1 // pred_region
      %s131 = ssub.s32 16, 16
      %132 = vsyncadd [#allocation15], %s131
      %s134 = sshll.u32 [#allocation16], 4
      %s135 = int_to_ptr.vmem [resolvable:$true] %s134
      %137 = dma.hbm_to_vmem [thread:$0]  %s10, 16, %s135, [#allocation15]
    $region45: #{mnist_classifier_forward.1} parent=1 // pred_fallthru
      _
    // Predicated region
    $region46: #{mnist_classifier_forward.1} parent=1 // pred_check
      _
    $region47: #{mnist_classifier_forward.1} parent=1 // pred_check_branch
      %139 = sbr.rel (0) target = $region49
    $region48: #{mnist_classifier_forward.1} parent=1 // pred_region
      %s141 = ssub.s32 16, 16
      %142 = vsyncadd [#allocation18], %s141
      %s144 = sshll.u32 [#allocation17], 4
      %s145 = int_to_ptr.vmem [resolvable:$true] %s144
      %147 = dma.hbm_to_vmem [thread:$0]  %s11, 16, %s145, [#allocation18]
    $region49: #{mnist_classifier_forward.1} parent=1 // pred_fallthru
      _
    // Predicated region
    $region50: #{mnist_classifier_forward.1} parent=1 // pred_check
      _
    $region51: #{mnist_classifier_forward.1} parent=1 // pred_check_branch
      %149 = sbr.rel (0) target = $region53
    $region52: #{mnist_classifier_forward.1} parent=1 // pred_region
      %s151 = ssub.s32 18432, 18432
      %152 = vsyncadd [#allocation18], %s151
      %s153 = sshll.u32 [#allocation19], 4
      %s154 = int_to_ptr.vmem [resolvable:$true] %s153
      %159 = dma.hbm_to_vmem [thread:$0]  %s12, 18432, %s154, [#allocation18], 64, 64, 4
    $region53: #{mnist_classifier_forward.1} parent=1 // pred_fallthru
      _
    // Predicated region
    $region54: #{mnist_classifier_forward.1} parent=1 // pred_check
      _
    $region55: #{mnist_classifier_forward.1} parent=1 // pred_check_branch
      %161 = sbr.rel (0) target = $region57
    $region56: #{mnist_classifier_forward.1} parent=1 // pred_region
      %s163 = ssub.s32 16, 16
      %164 = vsyncadd [#allocation21], %s163
      %s166 = sshll.u32 [#allocation20], 4
      %s167 = int_to_ptr.vmem [resolvable:$true] %s166
      %169 = dma.hbm_to_vmem [thread:$0]  %s13, 16, %s167, [#allocation21]
    $region57: #{mnist_classifier_forward.1} parent=1 // pred_fallthru
      _
    // Predicated region
    $region58: #{mnist_classifier_forward.1} parent=1 // pred_check
      _
    $region59: #{mnist_classifier_forward.1} parent=1 // pred_check_branch
      %171 = sbr.rel (0) target = $region61
    $region60: #{mnist_classifier_forward.1} parent=1 // pred_region
      %s173 = ssub.s32 16, 16
      %174 = vsyncadd [#allocation21], %s173
      %s176 = sshll.u32 [#allocation22], 4
      %s177 = int_to_ptr.vmem [resolvable:$true] %s176
      %179 = dma.hbm_to_vmem [thread:$0]  %s14, 16, %s177, [#allocation21]
    $region61: #{mnist_classifier_forward.1} parent=1 // pred_fallthru
      _
    // Predicated region
    $region62: #{mnist_classifier_forward.1} parent=1 // pred_check
      _
    $region63: #{mnist_classifier_forward.1} parent=1 // pred_check_branch
      %181 = sbr.rel (0) target = $region65
    $region64: #{mnist_classifier_forward.1} parent=1 // pred_region
      %s183 = ssub.s32 16, 16
      %184 = vsyncadd [#allocation24], %s183
      %s186 = sshll.u32 [#allocation23], 4
      %s187 = int_to_ptr.vmem [resolvable:$true] %s186
      %189 = dma.hbm_to_vmem [thread:$0]  %s15, 16, %s187, [#allocation24]
    $region65: #{mnist_classifier_forward.1} parent=1 // pred_fallthru
      _
    // Predicated region
    $region66: #{mnist_classifier_forward.1} parent=1 // pred_check
      _
    $region67: #{mnist_classifier_forward.1} parent=1 // pred_check_branch
      %191 = sbr.rel (0) target = $region69
    $region68: #{mnist_classifier_forward.1} parent=1 // pred_region
      _
    $region69: #{mnist_classifier_forward.1} parent=1 // pred_fallthru
      _
    // Predicated region
    $region70: #{mnist_classifier_forward.1} parent=1 // pred_check
      _
    $region71: #{mnist_classifier_forward.1} parent=1 // pred_check_branch
      %193 = sbr.rel (0) target = $region73
    $region72: #{mnist_classifier_forward.1} parent=1 // pred_region
      %s195 = ssub.s32 16, 16
      %196 = vsyncadd [#allocation24], %s195
      %s198 = sshll.u32 [#allocation25], 4
      %s199 = int_to_ptr.vmem [resolvable:$true] %s198
      %201 = dma.hbm_to_vmem [thread:$0]  %s17, 16, %s199, [#allocation24]
    $region73: #{mnist_classifier_forward.1} parent=1 // pred_fallthru
      _
    // Predicated region
    $region74: #{mnist_classifier_forward.1} parent=1 // pred_check
      _
    $region75: #{mnist_classifier_forward.1} parent=1 // pred_check_branch
      %203 = sbr.rel (0) target = $region77
    $region76: #{mnist_classifier_forward.1} parent=1 // pred_region
      %204 = dma.done [#allocation3], 512
    $region77: #{mnist_classifier_forward.1} parent=1 // pred_fallthru
      _
    // Predicated region
    $region78: #{mnist_classifier_forward.1} parent=1 // pred_check
      _
    $region79: #{mnist_classifier_forward.1} parent=1 // pred_check_branch
      %206 = sbr.rel (0) target = $region81
    $region80: #{mnist_classifier_forward.1} parent=1 // pred_region
      %207 = dma.done [#allocation6], 1536
    $region81: #{mnist_classifier_forward.1} parent=1 // pred_fallthru
      _
    // Predicated region
    $region82: #{mnist_classifier_forward.1} parent=1 // pred_check
      _
    $region83: #{mnist_classifier_forward.1} parent=1 // pred_check_branch
      %209 = sbr.rel (0) target = $region85
    $region84: #{mnist_classifier_forward.1} parent=1 // pred_region
      %210 = dma.done [#allocation6], 1536
    $region85: #{mnist_classifier_forward.1} parent=1 // pred_fallthru
      _
    // Predicated region
    $region86: #{mnist_classifier_forward.1} parent=1 // pred_check
      _
    $region87: #{mnist_classifier_forward.1} parent=1 // pred_check_branch
      %212 = sbr.rel (0) target = $region89
    $region88: #{mnist_classifier_forward.1} parent=1 // pred_region
      %213 = dma.done [#allocation9], 64
    $region89: #{mnist_classifier_forward.1} parent=1 // pred_fallthru
      _
    // Predicated region
    $region90: #{mnist_classifier_forward.1} parent=1 // pred_check
      _
    $region91: #{mnist_classifier_forward.1} parent=1 // pred_check_branch
      %215 = sbr.rel (0) target = $region93
    $region92: #{mnist_classifier_forward.1} parent=1 // pred_region
      %216 = dma.done [#allocation9], 1152
    $region93: #{mnist_classifier_forward.1} parent=1 // pred_fallthru
      _
    // Predicated region
    $region94: #{mnist_classifier_forward.1} parent=1 // pred_check
      _
    $region95: #{mnist_classifier_forward.1} parent=1 // pred_check_branch
      %218 = sbr.rel (0) target = $region97
    $region96: #{mnist_classifier_forward.1} parent=1 // pred_region
      %219 = dma.done [#allocation12], 73728
    $region97: #{mnist_classifier_forward.1} parent=1 // pred_fallthru
      _
    // Predicated region
    $region98: #{mnist_classifier_forward.1} parent=1 // pred_check
      _
    $region99: #{mnist_classifier_forward.1} parent=1 // pred_check_branch
      %221 = sbr.rel (0) target = $region101
    $region100: #{mnist_classifier_forward.1} parent=1 // pred_region
      %222 = dma.done [#allocation12], 96
    $region101: #{mnist_classifier_forward.1} parent=1 // pred_fallthru
      _
    // Predicated region
    $region102: #{mnist_classifier_forward.1} parent=1 // pred_check
      _
    $region103: #{mnist_classifier_forward.1} parent=1 // pred_check_branch
      %224 = sbr.rel (0) target = $region105
    $region104: #{mnist_classifier_forward.1} parent=1 // pred_region
      %225 = dma.done [#allocation15], 3072
    $region105: #{mnist_classifier_forward.1} parent=1 // pred_fallthru
      _
    // Predicated region
    $region106: #{mnist_classifier_forward.1} parent=1 // pred_check
      _
    $region107: #{mnist_classifier_forward.1} parent=1 // pred_check_branch
      %227 = sbr.rel (0) target = $region109
    $region108: #{mnist_classifier_forward.1} parent=1 // pred_region
      %228 = dma.done [#allocation15], 16
    $region109: #{mnist_classifier_forward.1} parent=1 // pred_fallthru
      _
    // Predicated region
    $region110: #{mnist_classifier_forward.1} parent=1 // pred_check
      _
    $region111: #{mnist_classifier_forward.1} parent=1 // pred_check_branch
      %230 = sbr.rel (0) target = $region113
    $region112: #{mnist_classifier_forward.1} parent=1 // pred_region
      %231 = dma.done [#allocation18], 16
    $region113: #{mnist_classifier_forward.1} parent=1 // pred_fallthru
      _
    // Predicated region
    $region114: #{mnist_classifier_forward.1} parent=1 // pred_check
      _
    $region115: #{mnist_classifier_forward.1} parent=1 // pred_check_branch
      %233 = sbr.rel (0) target = $region117
    $region116: #{mnist_classifier_forward.1} parent=1 // pred_region
      %234 = dma.done [#allocation18], 18432
    $region117: #{mnist_classifier_forward.1} parent=1 // pred_fallthru
      _
    // Predicated region
    $region118: #{mnist_classifier_forward.1} parent=1 // pred_check
      _
    $region119: #{mnist_classifier_forward.1} parent=1 // pred_check_branch
      %236 = sbr.rel (0) target = $region121
    $region120: #{mnist_classifier_forward.1} parent=1 // pred_region
      %237 = dma.done [#allocation21], 16
    $region121: #{mnist_classifier_forward.1} parent=1 // pred_fallthru
      _
    // Predicated region
    $region122: #{mnist_classifier_forward.1} parent=1 // pred_check
      _
    $region123: #{mnist_classifier_forward.1} parent=1 // pred_check_branch
      %239 = sbr.rel (0) target = $region125
    $region124: #{mnist_classifier_forward.1} parent=1 // pred_region
      %240 = dma.done [#allocation21], 16
    $region125: #{mnist_classifier_forward.1} parent=1 // pred_fallthru
      _
    // Predicated region
    $region126: #{mnist_classifier_forward.1} parent=1 // pred_check
      _
    $region127: #{mnist_classifier_forward.1} parent=1 // pred_check_branch
      %242 = sbr.rel (0) target = $region129
    $region128: #{mnist_classifier_forward.1} parent=1 // pred_region
      %243 = dma.done [#allocation24], 16
    $region129: #{mnist_classifier_forward.1} parent=1 // pred_fallthru
      _
    // Predicated region
    $region130: #{mnist_classifier_forward.1} parent=1 // pred_check
      _
    $region131: #{mnist_classifier_forward.1} parent=1 // pred_check_branch
      %245 = sbr.rel (0) target = $region133
    $region132: #{mnist_classifier_forward.1} parent=1 // pred_region
      %246 = dma.done [#allocation24], 16
    $region133: #{mnist_classifier_forward.1} parent=1 // pred_fallthru
      _
    %v248 = vld [vmem:[#allocation2] sm:$0xff]
    %v249 = vld [vmem:[#allocation2 + $0x8] sm:$0xff]
    %v250 = vld [vmem:[#allocation2 + $0x10] sm:$0xff]
    %v251 = vld [vmem:[#allocation2 + $0x18] sm:$0xff]
    %v252 = vld [vmem:[#allocation5] sm:$0xff]
    %v253 = vld [vmem:[#allocation5 + $0x8] sm:$0xff]
    %v254 = vld [vmem:[#allocation5 + $0x10] sm:$0xff]
    %v255 = vld [vmem:[#allocation5 + $0x18] sm:$0xf]
    %vm256 = vcmask 261120
    %v258 = vsel %vm256, %v252, 0
    %v261 = vsel %vm256, %v253, 0
    %v264 = vsel %vm256, %v254, 0
    %v267 = vsel %vm256, %v255, 0
    %269 = vmatprep.subr.mxu0 0.0
    %270 = vmatpush1.msra.mxu0 0.0
    %271 = vmatprep.subr.mxu0 0.0
    %272 = vmatpush1.msra.mxu0 0.0
    %273 = vmatprep.subr.mxu0 0.0
    %274 = vmatpush1.msra.mxu0 0.0
    %275 = vmatprep.subr.mxu0 0.0
    %276 = vmatpush1.msra.mxu0 0.0
    %277 = vmatprep.subr.mxu0 0.0
    %278 = vmatpush1.msra.mxu0 0.0
    %279 = vmatprep.subr.mxu0 0.0
    %280 = vmatpush1.msra.mxu0 0.0
    %281 = vmatprep.subr.mxu0 0.0
    %282 = vmatpush1.msra.mxu0 0.0
    %283 = vmatprep.subr.mxu0 0.0
    %284 = vmatpush1.msra.mxu0 0.0
    %285 = vmatprep.subr.mxu0 0.0
    %286 = vmatpush1.msra.mxu0 0.0
    %287 = vmatprep.subr.mxu0 0.0
    %288 = vmatpush1.msra.mxu0 0.0
    %289 = vmatprep.subr.mxu0 0.0
    %290 = vmatpush1.msra.mxu0 0.0
    %291 = vmatprep.subr.mxu0 0.0
    %292 = vmatpush1.msra.mxu0 0.0
    %293 = vmatprep.subr.mxu0 0.0
    %294 = vmatpush1.msra.mxu0 %v251
    %295 = vmatprep.subr.mxu0 0.0
    %296 = vmatpush1.msra.mxu0 %v250
    %297 = vmatprep.subr.mxu0 0.0
    %298 = vmatpush1.msra.mxu0 %v249
    %299 = vmatprep.subr.mxu0 0.0
    %300 = vmatpush1.msra.mxu0 %v248
    %301 = vmatprep.subr.mxu0 0.0
    %302 = vmatpush2.msra.mxu0 0.0
    %303 = vmatprep.subr.mxu0 0.0
    %304 = vmatpush2.msra.mxu0 0.0
    %305 = vmatprep.subr.mxu0 0.0
    %306 = vmatpush2.msra.mxu0 0.0
    %307 = vmatprep.subr.mxu0 0.0
    %308 = vmatpush2.msra.mxu0 0.0
    %309 = vmatprep.subr.mxu0 0.0
    %310 = vmatpush2.msra.mxu0 0.0
    %311 = vmatprep.subr.mxu0 0.0
    %312 = vmatpush2.msra.mxu0 0.0
    %313 = vmatprep.subr.mxu0 0.0
    %314 = vmatpush2.msra.mxu0 0.0
    %315 = vmatprep.subr.mxu0 0.0
    %316 = vmatpush2.msra.mxu0 0.0
    %317 = vmatprep.subr.mxu0 0.0
    %318 = vmatpush2.msra.mxu0 0.0
    %319 = vmatprep.subr.mxu0 0.0
    %320 = vmatpush2.msra.mxu0 0.0
    %321 = vmatprep.subr.mxu0 0.0
    %322 = vmatpush2.msra.mxu0 0.0
    %323 = vmatprep.subr.mxu0 0.0
    %324 = vmatpush2.msra.mxu0 0.0
    %325 = vmatprep.subr.mxu0 0.0
    %326 = vmatpush2.msra.mxu0 0.0
    %327 = vmatprep.subr.mxu0 0.0
    %328 = vmatpush2.msra.mxu0 0.0
    %329 = vmatprep.subr.mxu0 0.0
    %330 = vmatpush2.msra.mxu0 0.0
    %331 = vmatprep.subr.mxu0 0.0
    %332 = vmatpush2.msra.mxu0 0.0
    %333 = vmatprep.mubr.f32.mxu0 0.0
    %334 = vmatmul.mubr.f32.gmra.mxu0 %v258
    %v335 = vpop.f32.mrf.mxu0
    %v336 = vadd.f32 0.0, %v335
    %v337 = vpop.f32.mrf.mxu0
    %338 = vmatprep.mubr.f32.mxu0 0.0
    %339 = vmatmul.mubr.f32.gmra.mxu0 %v261
    %v340 = vpop.f32.mrf.mxu0
    %v341 = vadd.f32 0.0, %v340
    %v342 = vpop.f32.mrf.mxu0
    %343 = vmatprep.mubr.f32.mxu0 0.0
    %344 = vmatmul.mubr.f32.gmra.mxu0 %v264
    %v345 = vpop.f32.mrf.mxu0
    %v346 = vadd.f32 0.0, %v345
    %v347 = vpop.f32.mrf.mxu0
    %348 = vmatprep.mubr.f32.mxu0 0.0
    %349 = vmatmul.mubr.f32.gmra.mxu0 %v267
    %v350 = vpop.f32.mrf.mxu0
    %v351 = vadd.f32 0.0, %v350
    %v352 = vpop.f32.mrf.mxu0
    %353 = vdwg.mxu0
    %v354 = vpack.c.bf16 %v341, %v336
    %v355 = vpack.c.bf16 %v351, %v346
    %v356 = vld [vmem:[#allocation7] sm:$0xff]
    %v357 = vld [vmem:[#allocation7 + $0x8] sm:$0xff]
    %v358 = vld [vmem:[#allocation7 + $0x10] sm:$0xff]
    %v359 = vld [vmem:[#allocation7 + $0x18] sm:$0xff]
    %s360 = scalar_lea.vmem [#allocation5], 32
    %v361 = vld [vmem:[%s360] sm:$0xff]
    %v362 = vld [vmem:[%s360 + $0x8] sm:$0xff]
    %v363 = vld [vmem:[%s360 + $0x10] sm:$0xff]
    %v364 = vld [vmem:[%s360 + $0x18] sm:$0xf]
    %v366 = vsel %vm256, %v361, 0
    %v369 = vsel %vm256, %v362, 0
    %v372 = vsel %vm256, %v363, 0
    %v375 = vsel %vm256, %v364, 0
    %377 = vmatprep.subr.mxu0 0.0
    %378 = vmatpush1.msra.mxu0 0.0
    %379 = vmatprep.subr.mxu0 0.0
    %380 = vmatpush1.msra.mxu0 0.0
    %381 = vmatprep.subr.mxu0 0.0
    %382 = vmatpush1.msra.mxu0 0.0
    %383 = vmatprep.subr.mxu0 0.0
    %384 = vmatpush1.msra.mxu0 0.0
    %385 = vmatprep.subr.mxu0 0.0
    %386 = vmatpush1.msra.mxu0 0.0
    %387 = vmatprep.subr.mxu0 0.0
    %388 = vmatpush1.msra.mxu0 0.0
    %389 = vmatprep.subr.mxu0 0.0
    %390 = vmatpush1.msra.mxu0 0.0
    %391 = vmatprep.subr.mxu0 0.0
    %392 = vmatpush1.msra.mxu0 0.0
    %393 = vmatprep.subr.mxu0 0.0
    %394 = vmatpush1.msra.mxu0 0.0
    %395 = vmatprep.subr.mxu0 0.0
    %396 = vmatpush1.msra.mxu0 0.0
    %397 = vmatprep.subr.mxu0 0.0
    %398 = vmatpush1.msra.mxu0 0.0
    %399 = vmatprep.subr.mxu0 0.0
    %400 = vmatpush1.msra.mxu0 0.0
    %401 = vmatprep.subr.mxu0 0.0
    %402 = vmatpush1.msra.mxu0 %v251
    %403 = vmatprep.subr.mxu0 0.0
    %404 = vmatpush1.msra.mxu0 %v250
    %405 = vmatprep.subr.mxu0 0.0
    %406 = vmatpush1.msra.mxu0 %v249
    %407 = vmatprep.subr.mxu0 0.0
    %408 = vmatpush1.msra.mxu0 %v248
    %409 = vmatprep.subr.mxu0 0.0
    %410 = vmatpush2.msra.mxu0 0.0
    %411 = vmatprep.subr.mxu0 0.0
    %412 = vmatpush2.msra.mxu0 0.0
    %413 = vmatprep.subr.mxu0 0.0
    %414 = vmatpush2.msra.mxu0 0.0
    %415 = vmatprep.subr.mxu0 0.0
    %416 = vmatpush2.msra.mxu0 0.0
    %417 = vmatprep.subr.mxu0 0.0
    %418 = vmatpush2.msra.mxu0 0.0
    %419 = vmatprep.subr.mxu0 0.0
    %420 = vmatpush2.msra.mxu0 0.0
    %421 = vmatprep.subr.mxu0 0.0
    %422 = vmatpush2.msra.mxu0 0.0
    %423 = vmatprep.subr.mxu0 0.0
    %424 = vmatpush2.msra.mxu0 0.0
    %425 = vmatprep.subr.mxu0 0.0
    %426 = vmatpush2.msra.mxu0 0.0
    %427 = vmatprep.subr.mxu0 0.0
    %428 = vmatpush2.msra.mxu0 0.0
    %429 = vmatprep.subr.mxu0 0.0
    %430 = vmatpush2.msra.mxu0 0.0
    %431 = vmatprep.subr.mxu0 0.0
    %432 = vmatpush2.msra.mxu0 0.0
    %433 = vmatprep.subr.mxu0 0.0
    %434 = vmatpush2.msra.mxu0 0.0
    %435 = vmatprep.subr.mxu0 0.0
    %436 = vmatpush2.msra.mxu0 0.0
    %437 = vmatprep.subr.mxu0 0.0
    %438 = vmatpush2.msra.mxu0 0.0
    %439 = vmatprep.subr.mxu0 0.0
    %440 = vmatpush2.msra.mxu0 0.0
    %441 = vmatprep.mubr.f32.mxu0 0.0
    %442 = vmatmul.mubr.f32.gmra.mxu0 %v366
    %v443 = vpop.f32.mrf.mxu0
    %v444 = vadd.f32 0.0, %v443
    %v445 = vpop.f32.mrf.mxu0
    %446 = vmatprep.mubr.f32.mxu0 0.0
    %447 = vmatmul.mubr.f32.gmra.mxu0 %v369
    %v448 = vpop.f32.mrf.mxu0
    %v449 = vadd.f32 0.0, %v448
    %v450 = vpop.f32.mrf.mxu0
    %451 = vmatprep.mubr.f32.mxu0 0.0
    %452 = vmatmul.mubr.f32.gmra.mxu0 %v372
    %v453 = vpop.f32.mrf.mxu0
    %v454 = vadd.f32 0.0, %v453
    %v455 = vpop.f32.mrf.mxu0
    %456 = vmatprep.mubr.f32.mxu0 0.0
    %457 = vmatmul.mubr.f32.gmra.mxu0 %v375
    %v458 = vpop.f32.mrf.mxu0
    %v459 = vadd.f32 0.0, %v458
    %v460 = vpop.f32.mrf.mxu0
    %461 = vdwg.mxu0
    %v462 = vpack.c.bf16 %v449, %v444
    %v463 = vpack.c.bf16 %v459, %v454
    %s464 = scalar_lea.vmem [#allocation7], 32
    %v465 = vld [vmem:[%s464] sm:$0xff]
    %v466 = vld [vmem:[%s464 + $0x8] sm:$0xff]
    %v467 = vld [vmem:[%s464 + $0x10] sm:$0xff]
    %v468 = vld [vmem:[%s464 + $0x18] sm:$0xff]
    %v473 = vunpack.c.l.b16 %v465
    %v474 = vunpack.c.h.b16 %v465
    %v475 = vunpack.c.l.b16 %v466
    %v476 = vunpack.c.h.b16 %v466
    %v477 = vunpack.c.l.b16 %v467
    %v478 = vunpack.c.h.b16 %v467
    %v479 = vunpack.c.l.b16 %v468
    %v480 = vunpack.c.h.b16 %v468
    %v481 = vpack.c.b16 %v477, %v473
    %v482 = vpack.c.b16 %v478, %v474
    %v483 = vpack.c.b16 %v479, %v475
    %v484 = vpack.c.b16 %v480, %v476
    %vm489 = vcmask 130048
    %v491 = vsel %vm489, %v462, 0
    %v494 = vsel %vm489, %v463, 0
    %496 = vmatprep.subr.bf16.mxu0 0
    %497 = vmatpush1.bf16.msra.mxu0 0
    %498 = vmatprep.subr.bf16.mxu0 0
    %499 = vmatpush1.bf16.msra.mxu0 0
    %500 = vmatprep.subr.bf16.mxu0 0
    %501 = vmatpush1.bf16.msra.mxu0 0
    %502 = vmatprep.subr.bf16.mxu0 0
    %503 = vmatpush1.bf16.msra.mxu0 0
    %504 = vmatprep.subr.bf16.mxu0 0
    %505 = vmatpush1.bf16.msra.mxu0 0
    %506 = vmatprep.subr.bf16.mxu0 0
    %507 = vmatpush1.bf16.msra.mxu0 0
    %508 = vmatprep.subr.bf16.mxu0 0
    %509 = vmatpush1.bf16.msra.mxu0 0
    %510 = vmatprep.subr.bf16.mxu0 %v482
    %511 = vmatpush1.bf16.msra.mxu0 %v481
    %512 = vmatprep.subr.bf16.mxu0 0
    %513 = vmatpush2.bf16.msra.mxu0 0
    %514 = vmatprep.subr.bf16.mxu0 0
    %515 = vmatpush2.bf16.msra.mxu0 0
    %516 = vmatprep.subr.bf16.mxu0 0
    %517 = vmatpush2.bf16.msra.mxu0 0
    %518 = vmatprep.subr.bf16.mxu0 0
    %519 = vmatpush2.bf16.msra.mxu0 0
    %520 = vmatprep.subr.bf16.mxu0 0
    %521 = vmatpush2.bf16.msra.mxu0 0
    %522 = vmatprep.subr.bf16.mxu0 0
    %523 = vmatpush2.bf16.msra.mxu0 0
    %524 = vmatprep.subr.bf16.mxu0 0
    %525 = vmatpush2.bf16.msra.mxu0 0
    %526 = vmatprep.subr.bf16.mxu0 0
    %527 = vmatpush2.bf16.msra.mxu0 0
    %528 = vmatprep.mubr.bf16.mxu0 0
    %529 = vmatmul.mubr.bf16.gmra.mxu0 %v491
    %v530 = vpop.f32.mrf.mxu0
    %v531 = vadd.f32 0.0, %v530
    %v532 = vpop.f32.mrf.mxu0
    %v533 = vadd.f32 0.0, %v532
    %v534 = vpop.f32.mrf.mxu0
    %v535 = vadd.f32 0.0, %v534
    %v536 = vpop.f32.mrf.mxu0
    %v537 = vadd.f32 0.0, %v536
    %538 = vmatprep.mubr.bf16.mxu0 0
    %539 = vmatmul.mubr.bf16.gmra.mxu0 %v494
    %v540 = vpop.f32.mrf.mxu0
    %v541 = vadd.f32 0.0, %v540
    %v542 = vpop.f32.mrf.mxu0
    %v543 = vadd.f32 0.0, %v542
    %v544 = vpop.f32.mrf.mxu0
    %v545 = vadd.f32 0.0, %v544
    %v546 = vpop.f32.mrf.mxu0
    %v547 = vadd.f32 0.0, %v546
    %548 = vdwg.mxu0
    %549 = vmatprep.subr.bf16.mxu0 0
    %550 = vmatpush1.bf16.msra.mxu0 0
    %551 = vmatprep.subr.bf16.mxu0 0
    %552 = vmatpush1.bf16.msra.mxu0 0
    %553 = vmatprep.subr.bf16.mxu0 0
    %554 = vmatpush1.bf16.msra.mxu0 0
    %555 = vmatprep.subr.bf16.mxu0 0
    %556 = vmatpush1.bf16.msra.mxu0 0
    %557 = vmatprep.subr.bf16.mxu0 0
    %558 = vmatpush1.bf16.msra.mxu0 0
    %559 = vmatprep.subr.bf16.mxu0 0
    %560 = vmatpush1.bf16.msra.mxu0 0
    %561 = vmatprep.subr.bf16.mxu0 0
    %562 = vmatpush1.bf16.msra.mxu0 0
    %563 = vmatprep.subr.bf16.mxu0 %v484
    %564 = vmatpush1.bf16.msra.mxu0 %v483
    %565 = vmatprep.subr.bf16.mxu0 0
    %566 = vmatpush2.bf16.msra.mxu0 0
    %567 = vmatprep.subr.bf16.mxu0 0
    %568 = vmatpush2.bf16.msra.mxu0 0
    %569 = vmatprep.subr.bf16.mxu0 0
    %570 = vmatpush2.bf16.msra.mxu0 0
    %571 = vmatprep.subr.bf16.mxu0 0
    %572 = vmatpush2.bf16.msra.mxu0 0
    %573 = vmatprep.subr.bf16.mxu0 0
    %574 = vmatpush2.bf16.msra.mxu0 0
    %575 = vmatprep.subr.bf16.mxu0 0
    %576 = vmatpush2.bf16.msra.mxu0 0
    %577 = vmatprep.subr.bf16.mxu0 0
    %578 = vmatpush2.bf16.msra.mxu0 0
    %579 = vmatprep.subr.bf16.mxu0 0
    %580 = vmatpush2.bf16.msra.mxu0 0
    %581 = vmatprep.mubr.bf16.mxu0 0
    %582 = vmatmul.mubr.bf16.gmra.mxu0 %v491
    %v583 = vpop.f32.mrf.mxu0
    %v584 = vadd.f32 0.0, %v583
    %v585 = vpop.f32.mrf.mxu0
    %v586 = vadd.f32 0.0, %v585
    %v587 = vpop.f32.mrf.mxu0
    %v588 = vadd.f32 0.0, %v587
    %v589 = vpop.f32.mrf.mxu0
    %v590 = vadd.f32 0.0, %v589
    %591 = vmatprep.mubr.bf16.mxu0 0
    %592 = vmatmul.mubr.bf16.gmra.mxu0 %v494
    %v593 = vpop.f32.mrf.mxu0
    %v594 = vadd.f32 0.0, %v593
    %v595 = vpop.f32.mrf.mxu0
    %v596 = vadd.f32 0.0, %v595
    %v597 = vpop.f32.mrf.mxu0
    %v598 = vadd.f32 0.0, %v597
    %v599 = vpop.f32.mrf.mxu0
    %v600 = vadd.f32 0.0, %v599
    %601 = vdwg.mxu0
    %v606 = vunpack.c.l.b16 %v356
    %v607 = vunpack.c.h.b16 %v356
    %v608 = vunpack.c.l.b16 %v357
    %v609 = vunpack.c.h.b16 %v357
    %v610 = vunpack.c.l.b16 %v358
    %v611 = vunpack.c.h.b16 %v358
    %v612 = vunpack.c.l.b16 %v359
    %v613 = vunpack.c.h.b16 %v359
    %v614 = vpack.c.b16 %v610, %v606
    %v615 = vpack.c.b16 %v611, %v607
    %v616 = vpack.c.b16 %v612, %v608
    %v617 = vpack.c.b16 %v613, %v609
    %v623 = vsel %vm489, %v354, 0
    %v626 = vsel %vm489, %v355, 0
    %628 = vmatprep.subr.bf16.mxu0 0
    %629 = vmatpush1.bf16.msra.mxu0 0
    %630 = vmatprep.subr.bf16.mxu0 0
    %631 = vmatpush1.bf16.msra.mxu0 0
    %632 = vmatprep.subr.bf16.mxu0 0
    %633 = vmatpush1.bf16.msra.mxu0 0
    %634 = vmatprep.subr.bf16.mxu0 0
    %635 = vmatpush1.bf16.msra.mxu0 0
    %636 = vmatprep.subr.bf16.mxu0 0
    %637 = vmatpush1.bf16.msra.mxu0 0
    %638 = vmatprep.subr.bf16.mxu0 0
    %639 = vmatpush1.bf16.msra.mxu0 0
    %640 = vmatprep.subr.bf16.mxu0 0
    %641 = vmatpush1.bf16.msra.mxu0 0
    %642 = vmatprep.subr.bf16.mxu0 %v615
    %643 = vmatpush1.bf16.msra.mxu0 %v614
    %644 = vmatprep.subr.bf16.mxu0 0
    %645 = vmatpush2.bf16.msra.mxu0 0
    %646 = vmatprep.subr.bf16.mxu0 0
    %647 = vmatpush2.bf16.msra.mxu0 0
    %648 = vmatprep.subr.bf16.mxu0 0
    %649 = vmatpush2.bf16.msra.mxu0 0
    %650 = vmatprep.subr.bf16.mxu0 0
    %651 = vmatpush2.bf16.msra.mxu0 0
    %652 = vmatprep.subr.bf16.mxu0 0
    %653 = vmatpush2.bf16.msra.mxu0 0
    %654 = vmatprep.subr.bf16.mxu0 0
    %655 = vmatpush2.bf16.msra.mxu0 0
    %656 = vmatprep.subr.bf16.mxu0 0
    %657 = vmatpush2.bf16.msra.mxu0 0
    %658 = vmatprep.subr.bf16.mxu0 0
    %659 = vmatpush2.bf16.msra.mxu0 0
    %660 = vmatprep.mubr.bf16.mxu0 0
    %661 = vmatmul.mubr.bf16.gmra.mxu0 %v623
    %v662 = vpop.f32.mrf.mxu0
    %v663 = vadd.f32 %v531, %v662
    %v664 = vpop.f32.mrf.mxu0
    %v665 = vadd.f32 %v533, %v664
    %v666 = vpop.f32.mrf.mxu0
    %v667 = vadd.f32 %v535, %v666
    %v668 = vpop.f32.mrf.mxu0
    %v669 = vadd.f32 %v537, %v668
    %670 = vmatprep.mubr.bf16.mxu0 0
    %671 = vmatmul.mubr.bf16.gmra.mxu0 %v626
    %v672 = vpop.f32.mrf.mxu0
    %v673 = vadd.f32 %v541, %v672
    %v674 = vpop.f32.mrf.mxu0
    %v675 = vadd.f32 %v543, %v674
    %v676 = vpop.f32.mrf.mxu0
    %v677 = vadd.f32 %v545, %v676
    %v678 = vpop.f32.mrf.mxu0
    %v679 = vadd.f32 %v547, %v678
    %680 = vdwg.mxu0
    %681 = vmatprep.subr.bf16.mxu0 0
    %682 = vmatpush1.bf16.msra.mxu0 0
    %683 = vmatprep.subr.bf16.mxu0 0
    %684 = vmatpush1.bf16.msra.mxu0 0
    %685 = vmatprep.subr.bf16.mxu0 0
    %686 = vmatpush1.bf16.msra.mxu0 0
    %687 = vmatprep.subr.bf16.mxu0 0
    %688 = vmatpush1.bf16.msra.mxu0 0
    %689 = vmatprep.subr.bf16.mxu0 0
    %690 = vmatpush1.bf16.msra.mxu0 0
    %691 = vmatprep.subr.bf16.mxu0 0
    %692 = vmatpush1.bf16.msra.mxu0 0
    %693 = vmatprep.subr.bf16.mxu0 0
    %694 = vmatpush1.bf16.msra.mxu0 0
    %695 = vmatprep.subr.bf16.mxu0 %v617
    %696 = vmatpush1.bf16.msra.mxu0 %v616
    %697 = vmatprep.subr.bf16.mxu0 0
    %698 = vmatpush2.bf16.msra.mxu0 0
    %699 = vmatprep.subr.bf16.mxu0 0
    %700 = vmatpush2.bf16.msra.mxu0 0
    %701 = vmatprep.subr.bf16.mxu0 0
    %702 = vmatpush2.bf16.msra.mxu0 0
    %703 = vmatprep.subr.bf16.mxu0 0
    %704 = vmatpush2.bf16.msra.mxu0 0
    %705 = vmatprep.subr.bf16.mxu0 0
    %706 = vmatpush2.bf16.msra.mxu0 0
    %707 = vmatprep.subr.bf16.mxu0 0
    %708 = vmatpush2.bf16.msra.mxu0 0
    %709 = vmatprep.subr.bf16.mxu0 0
    %710 = vmatpush2.bf16.msra.mxu0 0
    %711 = vmatprep.subr.bf16.mxu0 0
    %712 = vmatpush2.bf16.msra.mxu0 0
    %713 = vmatprep.mubr.bf16.mxu0 0
    %714 = vmatmul.mubr.bf16.gmra.mxu0 %v623
    %v715 = vpop.f32.mrf.mxu0
    %v716 = vadd.f32 %v584, %v715
    %v717 = vpop.f32.mrf.mxu0
    %v718 = vadd.f32 %v586, %v717
    %v719 = vpop.f32.mrf.mxu0
    %v720 = vadd.f32 %v588, %v719
    %v721 = vpop.f32.mrf.mxu0
    %v722 = vadd.f32 %v590, %v721
    %723 = vmatprep.mubr.bf16.mxu0 0
    %724 = vmatmul.mubr.bf16.gmra.mxu0 %v626
    %v725 = vpop.f32.mrf.mxu0
    %v726 = vadd.f32 %v594, %v725
    %v727 = vpop.f32.mrf.mxu0
    %v728 = vadd.f32 %v596, %v727
    %v729 = vpop.f32.mrf.mxu0
    %v730 = vadd.f32 %v598, %v729
    %v731 = vpop.f32.mrf.mxu0
    %v732 = vadd.f32 %v600, %v731
    %733 = vdwg.mxu0
    %s734 = scalar_lea.vmem [#allocation5], 64
    %v735 = vld [vmem:[%s734] sm:$0xff]
    %v736 = vld [vmem:[%s734 + $0x8] sm:$0xff]
    %v737 = vld [vmem:[%s734 + $0x10] sm:$0xff]
    %v738 = vld [vmem:[%s734 + $0x18] sm:$0xf]
    %v740 = vsel %vm256, %v735, 0
    %v743 = vsel %vm256, %v736, 0
    %v746 = vsel %vm256, %v737, 0
    %v749 = vsel %vm256, %v738, 0
    %751 = vmatprep.subr.mxu0 0.0
    %752 = vmatpush1.msra.mxu0 0.0
    %753 = vmatprep.subr.mxu0 0.0
    %754 = vmatpush1.msra.mxu0 0.0
    %755 = vmatprep.subr.mxu0 0.0
    %756 = vmatpush1.msra.mxu0 0.0
    %757 = vmatprep.subr.mxu0 0.0
    %758 = vmatpush1.msra.mxu0 0.0
    %759 = vmatprep.subr.mxu0 0.0
    %760 = vmatpush1.msra.mxu0 0.0
    %761 = vmatprep.subr.mxu0 0.0
    %762 = vmatpush1.msra.mxu0 0.0
    %763 = vmatprep.subr.mxu0 0.0
    %764 = vmatpush1.msra.mxu0 0.0
    %765 = vmatprep.subr.mxu0 0.0
    %766 = vmatpush1.msra.mxu0 0.0
    %767 = vmatprep.subr.mxu0 0.0
    %768 = vmatpush1.msra.mxu0 0.0
    %769 = vmatprep.subr.mxu0 0.0
    %770 = vmatpush1.msra.mxu0 0.0
    %771 = vmatprep.subr.mxu0 0.0
    %772 = vmatpush1.msra.mxu0 0.0
    %773 = vmatprep.subr.mxu0 0.0
    %774 = vmatpush1.msra.mxu0 0.0
    %775 = vmatprep.subr.mxu0 0.0
    %776 = vmatpush1.msra.mxu0 %v251
    %777 = vmatprep.subr.mxu0 0.0
    %778 = vmatpush1.msra.mxu0 %v250
    %779 = vmatprep.subr.mxu0 0.0
    %780 = vmatpush1.msra.mxu0 %v249
    %781 = vmatprep.subr.mxu0 0.0
    %782 = vmatpush1.msra.mxu0 %v248
    %783 = vmatprep.subr.mxu0 0.0
    %784 = vmatpush2.msra.mxu0 0.0
    %785 = vmatprep.subr.mxu0 0.0
    %786 = vmatpush2.msra.mxu0 0.0
    %787 = vmatprep.subr.mxu0 0.0
    %788 = vmatpush2.msra.mxu0 0.0
    %789 = vmatprep.subr.mxu0 0.0
    %790 = vmatpush2.msra.mxu0 0.0
    %791 = vmatprep.subr.mxu0 0.0
    %792 = vmatpush2.msra.mxu0 0.0
    %793 = vmatprep.subr.mxu0 0.0
    %794 = vmatpush2.msra.mxu0 0.0
    %795 = vmatprep.subr.mxu0 0.0
    %796 = vmatpush2.msra.mxu0 0.0
    %797 = vmatprep.subr.mxu0 0.0
    %798 = vmatpush2.msra.mxu0 0.0
    %799 = vmatprep.subr.mxu0 0.0
    %800 = vmatpush2.msra.mxu0 0.0
    %801 = vmatprep.subr.mxu0 0.0
    %802 = vmatpush2.msra.mxu0 0.0
    %803 = vmatprep.subr.mxu0 0.0
    %804 = vmatpush2.msra.mxu0 0.0
    %805 = vmatprep.subr.mxu0 0.0
    %806 = vmatpush2.msra.mxu0 0.0
    %807 = vmatprep.subr.mxu0 0.0
    %808 = vmatpush2.msra.mxu0 0.0
    %809 = vmatprep.subr.mxu0 0.0
    %810 = vmatpush2.msra.mxu0 0.0
    %811 = vmatprep.subr.mxu0 0.0
    %812 = vmatpush2.msra.mxu0 0.0
    %813 = vmatprep.subr.mxu0 0.0
    %814 = vmatpush2.msra.mxu0 0.0
    %815 = vmatprep.mubr.f32.mxu0 0.0
    %816 = vmatmul.mubr.f32.gmra.mxu0 %v740
    %v817 = vpop.f32.mrf.mxu0
    %v818 = vadd.f32 0.0, %v817
    %v819 = vpop.f32.mrf.mxu0
    %820 = vmatprep.mubr.f32.mxu0 0.0
    %821 = vmatmul.mubr.f32.gmra.mxu0 %v743
    %v822 = vpop.f32.mrf.mxu0
    %v823 = vadd.f32 0.0, %v822
    %v824 = vpop.f32.mrf.mxu0
    %825 = vmatprep.mubr.f32.mxu0 0.0
    %826 = vmatmul.mubr.f32.gmra.mxu0 %v746
    %v827 = vpop.f32.mrf.mxu0
    %v828 = vadd.f32 0.0, %v827
    %v829 = vpop.f32.mrf.mxu0
    %830 = vmatprep.mubr.f32.mxu0 0.0
    %831 = vmatmul.mubr.f32.gmra.mxu0 %v749
    %v832 = vpop.f32.mrf.mxu0
    %v833 = vadd.f32 0.0, %v832
    %v834 = vpop.f32.mrf.mxu0
    %835 = vdwg.mxu0
    %v836 = vpack.c.bf16 %v823, %v818
    %v837 = vpack.c.bf16 %v833, %v828
    %s838 = scalar_lea.vmem [#allocation7], 64
    %v839 = vld [vmem:[%s838] sm:$0xff]
    %v840 = vld [vmem:[%s838 + $0x8] sm:$0xff]
    %v841 = vld [vmem:[%s838 + $0x10] sm:$0xff]
    %v842 = vld [vmem:[%s838 + $0x18] sm:$0xff]
    %v847 = vunpack.c.l.b16 %v839
    %v848 = vunpack.c.h.b16 %v839
    %v849 = vunpack.c.l.b16 %v840
    %v850 = vunpack.c.h.b16 %v840
    %v851 = vunpack.c.l.b16 %v841
    %v852 = vunpack.c.h.b16 %v841
    %v853 = vunpack.c.l.b16 %v842
    %v854 = vunpack.c.h.b16 %v842
    %v855 = vpack.c.b16 %v851, %v847
    %v856 = vpack.c.b16 %v852, %v848
    %v857 = vpack.c.b16 %v853, %v849
    %v858 = vpack.c.b16 %v854, %v850
    %v864 = vsel %vm489, %v836, 0
    %v867 = vsel %vm489, %v837, 0
    %869 = vmatprep.subr.bf16.mxu0 0
    %870 = vmatpush1.bf16.msra.mxu0 0
    %871 = vmatprep.subr.bf16.mxu0 0
    %872 = vmatpush1.bf16.msra.mxu0 0
    %873 = vmatprep.subr.bf16.mxu0 0
    %874 = vmatpush1.bf16.msra.mxu0 0
    %875 = vmatprep.subr.bf16.mxu0 0
    %876 = vmatpush1.bf16.msra.mxu0 0
    %877 = vmatprep.subr.bf16.mxu0 0
    %878 = vmatpush1.bf16.msra.mxu0 0
    %879 = vmatprep.subr.bf16.mxu0 0
    %880 = vmatpush1.bf16.msra.mxu0 0
    %881 = vmatprep.subr.bf16.mxu0 0
    %882 = vmatpush1.bf16.msra.mxu0 0
    %883 = vmatprep.subr.bf16.mxu0 %v856
    %884 = vmatpush1.bf16.msra.mxu0 %v855
    %885 = vmatprep.subr.bf16.mxu0 0
    %886 = vmatpush2.bf16.msra.mxu0 0
    %887 = vmatprep.subr.bf16.mxu0 0
    %888 = vmatpush2.bf16.msra.mxu0 0
    %889 = vmatprep.subr.bf16.mxu0 0
    %890 = vmatpush2.bf16.msra.mxu0 0
    %891 = vmatprep.subr.bf16.mxu0 0
    %892 = vmatpush2.bf16.msra.mxu0 0
    %893 = vmatprep.subr.bf16.mxu0 0
    %894 = vmatpush2.bf16.msra.mxu0 0
    %895 = vmatprep.subr.bf16.mxu0 0
    %896 = vmatpush2.bf16.msra.mxu0 0
    %897 = vmatprep.subr.bf16.mxu0 0
    %898 = vmatpush2.bf16.msra.mxu0 0
    %899 = vmatprep.subr.bf16.mxu0 0
    %900 = vmatpush2.bf16.msra.mxu0 0
    %901 = vmatprep.mubr.bf16.mxu0 0
    %902 = vmatmul.mubr.bf16.gmra.mxu0 %v864
    %v903 = vpop.f32.mrf.mxu0
    %v904 = vadd.f32 0.0, %v903
    %v905 = vpop.f32.mrf.mxu0
    %v906 = vadd.f32 0.0, %v905
    %v907 = vpop.f32.mrf.mxu0
    %v908 = vadd.f32 0.0, %v907
    %v909 = vpop.f32.mrf.mxu0
    %v910 = vadd.f32 0.0, %v909
    %911 = vmatprep.mubr.bf16.mxu0 0
    %912 = vmatmul.mubr.bf16.gmra.mxu0 %v867
    %v913 = vpop.f32.mrf.mxu0
    %v914 = vadd.f32 0.0, %v913
    %v915 = vpop.f32.mrf.mxu0
    %v916 = vadd.f32 0.0, %v915
    %v917 = vpop.f32.mrf.mxu0
    %v918 = vadd.f32 0.0, %v917
    %v919 = vpop.f32.mrf.mxu0
    %v920 = vadd.f32 0.0, %v919
    %921 = vdwg.mxu0
    %922 = vmatprep.subr.bf16.mxu0 0
    %923 = vmatpush1.bf16.msra.mxu0 0
    %924 = vmatprep.subr.bf16.mxu0 0
    %925 = vmatpush1.bf16.msra.mxu0 0
    %926 = vmatprep.subr.bf16.mxu0 0
    %927 = vmatpush1.bf16.msra.mxu0 0
    %928 = vmatprep.subr.bf16.mxu0 0
    %929 = vmatpush1.bf16.msra.mxu0 0
    %930 = vmatprep.subr.bf16.mxu0 0
    %931 = vmatpush1.bf16.msra.mxu0 0
    %932 = vmatprep.subr.bf16.mxu0 0
    %933 = vmatpush1.bf16.msra.mxu0 0
    %934 = vmatprep.subr.bf16.mxu0 0
    %935 = vmatpush1.bf16.msra.mxu0 0
    %936 = vmatprep.subr.bf16.mxu0 %v858
    %937 = vmatpush1.bf16.msra.mxu0 %v857
    %938 = vmatprep.subr.bf16.mxu0 0
    %939 = vmatpush2.bf16.msra.mxu0 0
    %940 = vmatprep.subr.bf16.mxu0 0
    %941 = vmatpush2.bf16.msra.mxu0 0
    %942 = vmatprep.subr.bf16.mxu0 0
    %943 = vmatpush2.bf16.msra.mxu0 0
    %944 = vmatprep.subr.bf16.mxu0 0
    %945 = vmatpush2.bf16.msra.mxu0 0
    %946 = vmatprep.subr.bf16.mxu0 0
    %947 = vmatpush2.bf16.msra.mxu0 0
    %948 = vmatprep.subr.bf16.mxu0 0
    %949 = vmatpush2.bf16.msra.mxu0 0
    %950 = vmatprep.subr.bf16.mxu0 0
    %951 = vmatpush2.bf16.msra.mxu0 0
    %952 = vmatprep.subr.bf16.mxu0 0
    %953 = vmatpush2.bf16.msra.mxu0 0
    %954 = vmatprep.mubr.bf16.mxu0 0
    %955 = vmatmul.mubr.bf16.gmra.mxu0 %v864
    %v956 = vpop.f32.mrf.mxu0
    %v957 = vadd.f32 0.0, %v956
    %v958 = vpop.f32.mrf.mxu0
    %v959 = vadd.f32 0.0, %v958
    %v960 = vpop.f32.mrf.mxu0
    %v961 = vadd.f32 0.0, %v960
    %v962 = vpop.f32.mrf.mxu0
    %v963 = vadd.f32 0.0, %v962
    %964 = vmatprep.mubr.bf16.mxu0 0
    %965 = vmatmul.mubr.bf16.gmra.mxu0 %v867
    %v966 = vpop.f32.mrf.mxu0
    %v967 = vadd.f32 0.0, %v966
    %v968 = vpop.f32.mrf.mxu0
    %v969 = vadd.f32 0.0, %v968
    %v970 = vpop.f32.mrf.mxu0
    %v971 = vadd.f32 0.0, %v970
    %v972 = vpop.f32.mrf.mxu0
    %v973 = vadd.f32 0.0, %v972
    %974 = vdwg.mxu0
    %v975 = vadd.f32 %v663, %v904
    %v976 = vadd.f32 %v665, %v906
    %v977 = vadd.f32 %v716, %v957
    %v978 = vadd.f32 %v718, %v959
    %v979 = vadd.f32 %v667, %v908
    %v980 = vadd.f32 %v669, %v910
    %v981 = vadd.f32 %v720, %v961
    %v982 = vadd.f32 %v722, %v963
    %v983 = vadd.f32 %v673, %v914
    %v984 = vadd.f32 %v675, %v916
    %v985 = vadd.f32 %v726, %v967
    %v986 = vadd.f32 %v728, %v969
    %v987 = vadd.f32 %v677, %v918
    %v988 = vadd.f32 %v679, %v920
    %v989 = vadd.f32 %v730, %v971
    %v990 = vadd.f32 %v732, %v973
    %v991 = vld [vmem:[#allocation8] sm:$0xf]
    %v993 = vlaneseq
    %v994 = vshrl.u32 %v993, 7
    %v995 = vsub.s32 0, %v994
    %v996 = vrot.slane %v991, %v995
    %v997 = vlaneseq
    %v998 = vshrl.u32 %v997, 7
    %v999 = vsub.s32 1, %v998
    %v1000 = vrot.slane %v991, %v999
    %v1001 = vlaneseq
    %v1002 = vshrl.u32 %v1001, 7
    %v1003 = vsub.s32 2, %v1002
    %v1004 = vrot.slane %v991, %v1003
    %v1005 = vlaneseq
    %v1006 = vshrl.u32 %v1005, 7
    %v1007 = vsub.s32 3, %v1006
    %v1008 = vrot.slane %v991, %v1007
    %v1013 = vadd.f32 %v975, %v996
    %v1014 = vadd.f32 %v976, %v1000
    %v1015 = vadd.f32 %v977, %v1004
    %v1016 = vadd.f32 %v978, %v1008
    %v1017 = vadd.f32 %v979, %v996
    %v1018 = vadd.f32 %v980, %v1000
    %v1019 = vadd.f32 %v981, %v1004
    %v1020 = vadd.f32 %v982, %v1008
    %v1021 = vadd.f32 %v983, %v996
    %v1022 = vadd.f32 %v984, %v1000
    %v1023 = vadd.f32 %v985, %v1004
    %v1024 = vadd.f32 %v986, %v1008
    %v1025 = vadd.f32 %v987, %v996
    %v1026 = vadd.f32 %v988, %v1000
    %v1027 = vadd.f32 %v989, %v1004
    %v1028 = vadd.f32 %v990, %v1008
    %v1029 = vmax.f32 %v1013, 0.0
    %v1030 = vmax.f32 %v1014, 0.0
    %v1031 = vmax.f32 %v1015, 0.0
    %v1032 = vmax.f32 %v1016, 0.0
    %v1033 = vmax.f32 %v1017, 0.0
    %v1034 = vmax.f32 %v1018, 0.0
    %v1035 = vmax.f32 %v1019, 0.0
    %v1036 = vmax.f32 %v1020, 0.0
    %v1037 = vmax.f32 %v1021, 0.0
    %v1038 = vmax.f32 %v1022, 0.0
    %v1039 = vmax.f32 %v1023, 0.0
    %v1040 = vmax.f32 %v1024, 0.0
    %v1041 = vmax.f32 %v1025, 0.0
    %v1042 = vmax.f32 %v1026, 0.0
    %v1043 = vmax.f32 %v1027, 0.0
    %v1044 = vmax.f32 %v1028, 0.0
    %v1045 = vld [vmem:[#allocation10] sm:$0xff]
    %v1046 = vld [vmem:[#allocation10 + $0x8] sm:$0xff]
    %v1047 = vld [vmem:[#allocation10 + $0x10] sm:$0xff]
    %vm1048 = vcmask 228352
    %v1050 = vsel %vm1048, %v1045, 0
    %v1053 = vsel %vm1048, %v1046, 0
    %v1056 = vsel %vm1048, %v1047, 0
    %vm1058 = vcmask 1043456
    %v1060 = vsel %vm1058, %v1041, 0
    %v1063 = vsel %vm1058, %v1042, 0
    %v1066 = vsel %vm1058, %v1043, 0
    %v1069 = vsel %vm1058, %v1044, 0
    %1071 = vmatprep.subr.mxu0 0.0
    %1072 = vmatpush1.msra.mxu0 0.0
    %1073 = vmatprep.subr.mxu0 0.0
    %1074 = vmatpush1.msra.mxu0 0.0
    %1075 = vmatprep.subr.mxu0 0.0
    %1076 = vmatpush1.msra.mxu0 0.0
    %1077 = vmatprep.subr.mxu0 0.0
    %1078 = vmatpush1.msra.mxu0 0.0
    %1079 = vmatprep.subr.mxu0 0.0
    %1080 = vmatpush1.msra.mxu0 0.0
    %1081 = vmatprep.subr.mxu0 0.0
    %1082 = vmatpush1.msra.mxu0 0.0
    %1083 = vmatprep.subr.mxu0 0.0
    %1084 = vmatpush1.msra.mxu0 0.0
    %1085 = vmatprep.subr.mxu0 0.0
    %1086 = vmatpush1.msra.mxu0 0.0
    %1087 = vmatprep.subr.mxu0 0.0
    %1088 = vmatpush1.msra.mxu0 0.0
    %1089 = vmatprep.subr.mxu0 0.0
    %1090 = vmatpush1.msra.mxu0 0.0
    %1091 = vmatprep.subr.mxu0 0.0
    %1092 = vmatpush1.msra.mxu0 0.0
    %1093 = vmatprep.subr.mxu0 0.0
    %1094 = vmatpush1.msra.mxu0 0.0
    %1095 = vmatprep.subr.mxu0 %v1063
    %1096 = vmatpush1.msra.mxu0 %v1060
    %1097 = vmatprep.subr.mxu0 %v1038
    %1098 = vmatpush1.msra.mxu0 %v1037
    %1099 = vmatprep.subr.mxu0 %v1034
    %1100 = vmatpush1.msra.mxu0 %v1033
    %1101 = vmatprep.subr.mxu0 %v1030
    %1102 = vmatpush1.msra.mxu0 %v1029
    %1103 = vmatprep.subr.mxu0 0.0
    %1104 = vmatpush2.msra.mxu0 0.0
    %1105 = vmatprep.subr.mxu0 0.0
    %1106 = vmatpush2.msra.mxu0 0.0
    %1107 = vmatprep.subr.mxu0 0.0
    %1108 = vmatpush2.msra.mxu0 0.0
    %1109 = vmatprep.subr.mxu0 0.0
    %1110 = vmatpush2.msra.mxu0 0.0
    %1111 = vmatprep.subr.mxu0 0.0
    %1112 = vmatpush2.msra.mxu0 0.0
    %1113 = vmatprep.subr.mxu0 0.0
    %1114 = vmatpush2.msra.mxu0 0.0
    %1115 = vmatprep.subr.mxu0 0.0
    %1116 = vmatpush2.msra.mxu0 0.0
    %1117 = vmatprep.subr.mxu0 0.0
    %1118 = vmatpush2.msra.mxu0 0.0
    %1119 = vmatprep.subr.mxu0 0.0
    %1120 = vmatpush2.msra.mxu0 0.0
    %1121 = vmatprep.subr.mxu0 0.0
    %1122 = vmatpush2.msra.mxu0 0.0
    %1123 = vmatprep.subr.mxu0 0.0
    %1124 = vmatpush2.msra.mxu0 0.0
    %1125 = vmatprep.subr.mxu0 0.0
    %1126 = vmatpush2.msra.mxu0 0.0
    %1127 = vmatprep.subr.mxu0 0.0
    %1128 = vmatpush2.msra.mxu0 0.0
    %1129 = vmatprep.subr.mxu0 0.0
    %1130 = vmatpush2.msra.mxu0 0.0
    %1131 = vmatprep.subr.mxu0 0.0
    %1132 = vmatpush2.msra.mxu0 0.0
    %1133 = vmatprep.subr.mxu0 0.0
    %1134 = vmatpush2.msra.mxu0 0.0
    %1135 = vmatprep.mubr.f32.mxu0 0.0
    %1136 = vmatmul.mubr.f32.gmra.mxu0 %v1050
    %v1137 = vpop.f32.mrf.mxu0
    %v1138 = vadd.f32 0.0, %v1137
    %v1139 = vpop.f32.mrf.mxu0
    %v1140 = vadd.f32 0.0, %v1139
    %1141 = vmatprep.mubr.f32.mxu0 0.0
    %1142 = vmatmul.mubr.f32.gmra.mxu0 %v1053
    %v1143 = vpop.f32.mrf.mxu0
    %v1144 = vadd.f32 0.0, %v1143
    %v1145 = vpop.f32.mrf.mxu0
    %v1146 = vadd.f32 0.0, %v1145
    %1147 = vmatprep.mubr.f32.mxu0 0.0
    %1148 = vmatmul.mubr.f32.gmra.mxu0 %v1056
    %v1149 = vpop.f32.mrf.mxu0
    %v1150 = vadd.f32 0.0, %v1149
    %v1151 = vpop.f32.mrf.mxu0
    %v1152 = vadd.f32 0.0, %v1151
    %1153 = vdwg.mxu0
    %1154 = vmatprep.subr.mxu0 0.0
    %1155 = vmatpush1.msra.mxu0 0.0
    %1156 = vmatprep.subr.mxu0 0.0
    %1157 = vmatpush1.msra.mxu0 0.0
    %1158 = vmatprep.subr.mxu0 0.0
    %1159 = vmatpush1.msra.mxu0 0.0
    %1160 = vmatprep.subr.mxu0 0.0
    %1161 = vmatpush1.msra.mxu0 0.0
    %1162 = vmatprep.subr.mxu0 0.0
    %1163 = vmatpush1.msra.mxu0 0.0
    %1164 = vmatprep.subr.mxu0 0.0
    %1165 = vmatpush1.msra.mxu0 0.0
    %1166 = vmatprep.subr.mxu0 0.0
    %1167 = vmatpush1.msra.mxu0 0.0
    %1168 = vmatprep.subr.mxu0 0.0
    %1169 = vmatpush1.msra.mxu0 0.0
    %1170 = vmatprep.subr.mxu0 0.0
    %1171 = vmatpush1.msra.mxu0 0.0
    %1172 = vmatprep.subr.mxu0 0.0
    %1173 = vmatpush1.msra.mxu0 0.0
    %1174 = vmatprep.subr.mxu0 0.0
    %1175 = vmatpush1.msra.mxu0 0.0
    %1176 = vmatprep.subr.mxu0 0.0
    %1177 = vmatpush1.msra.mxu0 0.0
    %1178 = vmatprep.subr.mxu0 %v1069
    %1179 = vmatpush1.msra.mxu0 %v1066
    %1180 = vmatprep.subr.mxu0 %v1040
    %1181 = vmatpush1.msra.mxu0 %v1039
    %1182 = vmatprep.subr.mxu0 %v1036
    %1183 = vmatpush1.msra.mxu0 %v1035
    %1184 = vmatprep.subr.mxu0 %v1032
    %1185 = vmatpush1.msra.mxu0 %v1031
    %1186 = vmatprep.subr.mxu0 0.0
    %1187 = vmatpush2.msra.mxu0 0.0
    %1188 = vmatprep.subr.mxu0 0.0
    %1189 = vmatpush2.msra.mxu0 0.0
    %1190 = vmatprep.subr.mxu0 0.0
    %1191 = vmatpush2.msra.mxu0 0.0
    %1192 = vmatprep.subr.mxu0 0.0
    %1193 = vmatpush2.msra.mxu0 0.0
    %1194 = vmatprep.subr.mxu0 0.0
    %1195 = vmatpush2.msra.mxu0 0.0
    %1196 = vmatprep.subr.mxu0 0.0
    %1197 = vmatpush2.msra.mxu0 0.0
    %1198 = vmatprep.subr.mxu0 0.0
    %1199 = vmatpush2.msra.mxu0 0.0
    %1200 = vmatprep.subr.mxu0 0.0
    %1201 = vmatpush2.msra.mxu0 0.0
    %1202 = vmatprep.subr.mxu0 0.0
    %1203 = vmatpush2.msra.mxu0 0.0
    %1204 = vmatprep.subr.mxu0 0.0
    %1205 = vmatpush2.msra.mxu0 0.0
    %1206 = vmatprep.subr.mxu0 0.0
    %1207 = vmatpush2.msra.mxu0 0.0
    %1208 = vmatprep.subr.mxu0 0.0
    %1209 = vmatpush2.msra.mxu0 0.0
    %1210 = vmatprep.subr.mxu0 0.0
    %1211 = vmatpush2.msra.mxu0 0.0
    %1212 = vmatprep.subr.mxu0 0.0
    %1213 = vmatpush2.msra.mxu0 0.0
    %1214 = vmatprep.subr.mxu0 0.0
    %1215 = vmatpush2.msra.mxu0 0.0
    %1216 = vmatprep.subr.mxu0 0.0
    %1217 = vmatpush2.msra.mxu0 0.0
    %1218 = vmatprep.mubr.f32.mxu0 0.0
    %1219 = vmatmul.mubr.f32.gmra.mxu0 %v1050
    %v1220 = vpop.f32.mrf.mxu0
    %v1221 = vadd.f32 0.0, %v1220
    %v1222 = vpop.f32.mrf.mxu0
    %v1223 = vadd.f32 0.0, %v1222
    %1224 = vmatprep.mubr.f32.mxu0 0.0
    %1225 = vmatmul.mubr.f32.gmra.mxu0 %v1053
    %v1226 = vpop.f32.mrf.mxu0
    %v1227 = vadd.f32 0.0, %v1226
    %v1228 = vpop.f32.mrf.mxu0
    %v1229 = vadd.f32 0.0, %v1228
    %1230 = vmatprep.mubr.f32.mxu0 0.0
    %1231 = vmatmul.mubr.f32.gmra.mxu0 %v1056
    %v1232 = vpop.f32.mrf.mxu0
    %v1233 = vadd.f32 0.0, %v1232
    %v1234 = vpop.f32.mrf.mxu0
    %v1235 = vadd.f32 0.0, %v1234
    %1236 = vdwg.mxu0
    %v1237 = vpack.c.bf16 %v1144, %v1138
    %v1238 = vpack.c.bf16 %v1146, %v1140
    %v1239 = vpack.c.bf16 %v1227, %v1221
    %v1240 = vpack.c.bf16 %v1229, %v1223
    %v1241 = vpack.c.bf16 %v1150, %v1150
    %v1242 = vpack.c.bf16 %v1152, %v1152
    %v1243 = vpack.c.bf16 %v1233, %v1233
    %v1244 = vpack.c.bf16 %v1235, %v1235
    %v1245 = vld [vmem:[#allocation11] sm:$0xff]
    %v1246 = vld [vmem:[#allocation11 + $0x8] sm:$0xff]
    %v1247 = vld [vmem:[#allocation11 + $0x10] sm:$0xff]
    %v1248 = vld [vmem:[#allocation11 + $0x18] sm:$0xff]
    %v1249 = vld [vmem:[#allocation11 + $0x20] sm:$0xff]
    %v1250 = vld [vmem:[#allocation11 + $0x28] sm:$0xff]
    %v1251 = vld [vmem:[#allocation11 + $0x30] sm:$0xff]
    %v1252 = vld [vmem:[#allocation11 + $0x38] sm:$0xff]
    %v1253 = vld [vmem:[#allocation11 + $0x40] sm:$0xff]
    %v1254 = vld [vmem:[#allocation11 + $0x48] sm:$0xff]
    %v1255 = vld [vmem:[#allocation11 + $0x50] sm:$0xff]
    %v1256 = vld [vmem:[#allocation11 + $0x58] sm:$0xff]
    %v1257 = vld [vmem:[#allocation11 + $0x60] sm:$0xff]
    %v1258 = vld [vmem:[#allocation11 + $0x68] sm:$0xff]
    %v1259 = vld [vmem:[#allocation11 + $0x70] sm:$0xff]
    %v1260 = vld [vmem:[#allocation11 + $0x78] sm:$0xff]
    %v1261 = vld [vmem:[#allocation11 + $0x80] sm:$0xff]
    %v1262 = vld [vmem:[#allocation11 + $0x88] sm:$0xff]
    %v1263 = vld [vmem:[#allocation11 + $0x90] sm:$0xff]
    %v1264 = vld [vmem:[#allocation11 + $0x98] sm:$0xff]
    %v1265 = vld [vmem:[#allocation11 + $0xa0] sm:$0xff]
    %v1266 = vld [vmem:[#allocation11 + $0xa8] sm:$0xff]
    %v1267 = vld [vmem:[#allocation11 + $0xb0] sm:$0xff]
    %v1268 = vld [vmem:[#allocation11 + $0xb8] sm:$0xff]
    %v1269 = vld [vmem:[#allocation11 + $0xc0] sm:$0xff]
    %v1270 = vld [vmem:[#allocation11 + $0xc8] sm:$0xff]
    %v1271 = vld [vmem:[#allocation11 + $0xd0] sm:$0xff]
    %v1272 = vld [vmem:[#allocation11 + $0xd8] sm:$0xff]
    %v1273 = vld [vmem:[#allocation11 + $0xe0] sm:$0xff]
    %v1274 = vld [vmem:[#allocation11 + $0xe8] sm:$0xff]
    %v1275 = vld [vmem:[#allocation11 + $0xf0] sm:$0xff]
    %v1276 = vld [vmem:[#allocation11 + $0xf8] sm:$0xff]
    %v1277 = vld [vmem:[#allocation11 + $0x100] sm:$0xff]
    %v1278 = vld [vmem:[#allocation11 + $0x108] sm:$0xff]
    %v1279 = vld [vmem:[#allocation11 + $0x110] sm:$0xff]
    %v1280 = vld [vmem:[#allocation11 + $0x118] sm:$0xff]
    %v1281 = vld [vmem:[#allocation11 + $0x120] sm:$0xff]
    %v1282 = vld [vmem:[#allocation11 + $0x128] sm:$0xff]
    %v1283 = vld [vmem:[#allocation11 + $0x130] sm:$0xff]
    %v1284 = vld [vmem:[#allocation11 + $0x138] sm:$0xff]
    %v1285 = vld [vmem:[#allocation11 + $0x140] sm:$0xff]
    %v1286 = vld [vmem:[#allocation11 + $0x148] sm:$0xff]
    %v1287 = vld [vmem:[#allocation11 + $0x150] sm:$0xff]
    %v1288 = vld [vmem:[#allocation11 + $0x158] sm:$0xff]
    %v1289 = vld [vmem:[#allocation11 + $0x160] sm:$0xff]
    %v1290 = vld [vmem:[#allocation11 + $0x168] sm:$0xff]
    %v1291 = vld [vmem:[#allocation11 + $0x170] sm:$0xff]
    %v1292 = vld [vmem:[#allocation11 + $0x178] sm:$0xff]
    %v1293 = vld [vmem:[#allocation11 + $0x180] sm:$0xff]
    %v1294 = vld [vmem:[#allocation11 + $0x188] sm:$0xff]
    %v1295 = vld [vmem:[#allocation11 + $0x190] sm:$0xff]
    %v1296 = vld [vmem:[#allocation11 + $0x198] sm:$0xff]
    %v1297 = vld [vmem:[#allocation11 + $0x1a0] sm:$0xff]
    %v1298 = vld [vmem:[#allocation11 + $0x1a8] sm:$0xff]
    %v1299 = vld [vmem:[#allocation11 + $0x1b0] sm:$0xff]
    %v1300 = vld [vmem:[#allocation11 + $0x1b8] sm:$0xff]
    %v1301 = vld [vmem:[#allocation11 + $0x1c0] sm:$0xff]
    %v1302 = vld [vmem:[#allocation11 + $0x1c8] sm:$0xff]
    %v1303 = vld [vmem:[#allocation11 + $0x1d0] sm:$0xff]
    %v1304 = vld [vmem:[#allocation11 + $0x1d8] sm:$0xff]
    %v1305 = vld [vmem:[#allocation11 + $0x1e0] sm:$0xff]
    %v1306 = vld [vmem:[#allocation11 + $0x1e8] sm:$0xff]
    %v1307 = vld [vmem:[#allocation11 + $0x1f0] sm:$0xff]
    %v1308 = vld [vmem:[#allocation11 + $0x1f8] sm:$0xff]
    %v1309 = vld [vmem:[#allocation11 + $0x200] sm:$0xff]
    %v1310 = vld [vmem:[#allocation11 + $0x208] sm:$0xff]
    %v1311 = vld [vmem:[#allocation11 + $0x210] sm:$0xff]
    %v1312 = vld [vmem:[#allocation11 + $0x218] sm:$0xff]
    %v1313 = vld [vmem:[#allocation11 + $0x220] sm:$0xff]
    %v1314 = vld [vmem:[#allocation11 + $0x228] sm:$0xff]
    %v1315 = vld [vmem:[#allocation11 + $0x230] sm:$0xff]
    %v1316 = vld [vmem:[#allocation11 + $0x238] sm:$0xff]
    %v1317 = vld [vmem:[#allocation11 + $0x240] sm:$0xff]
    %v1318 = vld [vmem:[#allocation11 + $0x248] sm:$0xff]
    %v1319 = vld [vmem:[#allocation11 + $0x250] sm:$0xff]
    %v1320 = vld [vmem:[#allocation11 + $0x258] sm:$0xff]
    %v1321 = vld [vmem:[#allocation11 + $0x260] sm:$0xff]
    %v1322 = vld [vmem:[#allocation11 + $0x268] sm:$0xff]
    %v1323 = vld [vmem:[#allocation11 + $0x270] sm:$0xff]
    %v1324 = vld [vmem:[#allocation11 + $0x278] sm:$0xff]
    %v1325 = vld [vmem:[#allocation11 + $0x280] sm:$0xff]
    %v1326 = vld [vmem:[#allocation11 + $0x288] sm:$0xff]
    %v1327 = vld [vmem:[#allocation11 + $0x290] sm:$0xff]
    %v1328 = vld [vmem:[#allocation11 + $0x298] sm:$0xff]
    %v1329 = vld [vmem:[#allocation11 + $0x2a0] sm:$0xff]
    %v1330 = vld [vmem:[#allocation11 + $0x2a8] sm:$0xff]
    %v1331 = vld [vmem:[#allocation11 + $0x2b0] sm:$0xff]
    %v1332 = vld [vmem:[#allocation11 + $0x2b8] sm:$0xff]
    %v1333 = vld [vmem:[#allocation11 + $0x2c0] sm:$0xff]
    %v1334 = vld [vmem:[#allocation11 + $0x2c8] sm:$0xff]
    %v1335 = vld [vmem:[#allocation11 + $0x2d0] sm:$0xff]
    %v1336 = vld [vmem:[#allocation11 + $0x2d8] sm:$0xff]
    %v1337 = vld [vmem:[#allocation11 + $0x2e0] sm:$0xff]
    %v1338 = vld [vmem:[#allocation11 + $0x2e8] sm:$0xff]
    %v1339 = vld [vmem:[#allocation11 + $0x2f0] sm:$0xff]
    %v1340 = vld [vmem:[#allocation11 + $0x2f8] sm:$0xff]
    %v1341 = vld [vmem:[#allocation11 + $0x300] sm:$0xff]
    %v1342 = vld [vmem:[#allocation11 + $0x308] sm:$0xff]
    %v1343 = vld [vmem:[#allocation11 + $0x310] sm:$0xff]
    %v1344 = vld [vmem:[#allocation11 + $0x318] sm:$0xff]
    %v1345 = vld [vmem:[#allocation11 + $0x320] sm:$0xff]
    %v1346 = vld [vmem:[#allocation11 + $0x328] sm:$0xff]
    %v1347 = vld [vmem:[#allocation11 + $0x330] sm:$0xff]
    %v1348 = vld [vmem:[#allocation11 + $0x338] sm:$0xff]
    %v1349 = vld [vmem:[#allocation11 + $0x340] sm:$0xff]
    %v1350 = vld [vmem:[#allocation11 + $0x348] sm:$0xff]
    %v1351 = vld [vmem:[#allocation11 + $0x350] sm:$0xff]
    %v1352 = vld [vmem:[#allocation11 + $0x358] sm:$0xff]
    %v1353 = vld [vmem:[#allocation11 + $0x360] sm:$0xff]
    %v1354 = vld [vmem:[#allocation11 + $0x368] sm:$0xff]
    %v1355 = vld [vmem:[#allocation11 + $0x370] sm:$0xff]
    %v1356 = vld [vmem:[#allocation11 + $0x378] sm:$0xff]
    %v1357 = vld [vmem:[#allocation11 + $0x380] sm:$0xff]
    %v1358 = vld [vmem:[#allocation11 + $0x388] sm:$0xff]
    %v1359 = vld [vmem:[#allocation11 + $0x390] sm:$0xff]
    %v1360 = vld [vmem:[#allocation11 + $0x398] sm:$0xff]
    %v1361 = vld [vmem:[#allocation11 + $0x3a0] sm:$0xff]
    %v1362 = vld [vmem:[#allocation11 + $0x3a8] sm:$0xff]
    %v1363 = vld [vmem:[#allocation11 + $0x3b0] sm:$0xff]
    %v1364 = vld [vmem:[#allocation11 + $0x3b8] sm:$0xff]
    %v1365 = vld [vmem:[#allocation11 + $0x3c0] sm:$0xff]
    %v1366 = vld [vmem:[#allocation11 + $0x3c8] sm:$0xff]
    %v1367 = vld [vmem:[#allocation11 + $0x3d0] sm:$0xff]
    %v1368 = vld [vmem:[#allocation11 + $0x3d8] sm:$0xff]
    %v1369 = vld [vmem:[#allocation11 + $0x3e0] sm:$0xff]
    %v1370 = vld [vmem:[#allocation11 + $0x3e8] sm:$0xff]
    %v1371 = vld [vmem:[#allocation11 + $0x3f0] sm:$0xff]
    %v1372 = vld [vmem:[#allocation11 + $0x3f8] sm:$0xff]
    %v1373 = vld [vmem:[#allocation11 + $0x400] sm:$0xff]
    %v1374 = vld [vmem:[#allocation11 + $0x408] sm:$0xff]
    %v1375 = vld [vmem:[#allocation11 + $0x410] sm:$0xff]
    %v1376 = vld [vmem:[#allocation11 + $0x418] sm:$0xff]
    %v1377 = vld [vmem:[#allocation11 + $0x420] sm:$0xff]
    %v1378 = vld [vmem:[#allocation11 + $0x428] sm:$0xff]
    %v1379 = vld [vmem:[#allocation11 + $0x430] sm:$0xff]
    %v1380 = vld [vmem:[#allocation11 + $0x438] sm:$0xff]
    %v1381 = vld [vmem:[#allocation11 + $0x440] sm:$0xff]
    %v1382 = vld [vmem:[#allocation11 + $0x448] sm:$0xff]
    %v1383 = vld [vmem:[#allocation11 + $0x450] sm:$0xff]
    %v1384 = vld [vmem:[#allocation11 + $0x458] sm:$0xff]
    %v1385 = vld [vmem:[#allocation11 + $0x460] sm:$0xff]
    %v1386 = vld [vmem:[#allocation11 + $0x468] sm:$0xff]
    %v1387 = vld [vmem:[#allocation11 + $0x470] sm:$0xff]
    %v1388 = vld [vmem:[#allocation11 + $0x478] sm:$0xff]
    %v1389 = vld [vmem:[#allocation11 + $0x480] sm:$0xff]
    %v1390 = vld [vmem:[#allocation11 + $0x488] sm:$0xff]
    %v1391 = vld [vmem:[#allocation11 + $0x490] sm:$0xff]
    %v1392 = vld [vmem:[#allocation11 + $0x498] sm:$0xff]
    %v1393 = vld [vmem:[#allocation11 + $0x4a0] sm:$0xff]
    %v1394 = vld [vmem:[#allocation11 + $0x4a8] sm:$0xff]
    %v1395 = vld [vmem:[#allocation11 + $0x4b0] sm:$0xff]
    %v1396 = vld [vmem:[#allocation11 + $0x4b8] sm:$0xff]
    %v1397 = vld [vmem:[#allocation11 + $0x4c0] sm:$0xff]
    %v1398 = vld [vmem:[#allocation11 + $0x4c8] sm:$0xff]
    %v1399 = vld [vmem:[#allocation11 + $0x4d0] sm:$0xff]
    %v1400 = vld [vmem:[#allocation11 + $0x4d8] sm:$0xff]
    %v1401 = vld [vmem:[#allocation11 + $0x4e0] sm:$0xff]
    %v1402 = vld [vmem:[#allocation11 + $0x4e8] sm:$0xff]
    %v1403 = vld [vmem:[#allocation11 + $0x4f0] sm:$0xff]
    %v1404 = vld [vmem:[#allocation11 + $0x4f8] sm:$0xff]
    %v1405 = vld [vmem:[#allocation11 + $0x500] sm:$0xff]
    %v1406 = vld [vmem:[#allocation11 + $0x508] sm:$0xff]
    %v1407 = vld [vmem:[#allocation11 + $0x510] sm:$0xff]
    %v1408 = vld [vmem:[#allocation11 + $0x518] sm:$0xff]
    %v1409 = vld [vmem:[#allocation11 + $0x520] sm:$0xff]
    %v1410 = vld [vmem:[#allocation11 + $0x528] sm:$0xff]
    %v1411 = vld [vmem:[#allocation11 + $0x530] sm:$0xff]
    %v1412 = vld [vmem:[#allocation11 + $0x538] sm:$0xff]
    %v1413 = vld [vmem:[#allocation11 + $0x540] sm:$0xff]
    %v1414 = vld [vmem:[#allocation11 + $0x548] sm:$0xff]
    %v1415 = vld [vmem:[#allocation11 + $0x550] sm:$0xff]
    %v1416 = vld [vmem:[#allocation11 + $0x558] sm:$0xff]
    %v1417 = vld [vmem:[#allocation11 + $0x560] sm:$0xff]
    %v1418 = vld [vmem:[#allocation11 + $0x568] sm:$0xff]
    %v1419 = vld [vmem:[#allocation11 + $0x570] sm:$0xff]
    %v1420 = vld [vmem:[#allocation11 + $0x578] sm:$0xff]
    %v1421 = vld [vmem:[#allocation11 + $0x580] sm:$0xff]
    %v1422 = vld [vmem:[#allocation11 + $0x588] sm:$0xff]
    %v1423 = vld [vmem:[#allocation11 + $0x590] sm:$0xff]
    %v1424 = vld [vmem:[#allocation11 + $0x598] sm:$0xff]
    %v1425 = vld [vmem:[#allocation11 + $0x5a0] sm:$0xff]
    %v1426 = vld [vmem:[#allocation11 + $0x5a8] sm:$0xff]
    %v1427 = vld [vmem:[#allocation11 + $0x5b0] sm:$0xff]
    %v1428 = vld [vmem:[#allocation11 + $0x5b8] sm:$0xff]
    %v1429 = vld [vmem:[#allocation11 + $0x5c0] sm:$0xff]
    %v1430 = vld [vmem:[#allocation11 + $0x5c8] sm:$0xff]
    %v1431 = vld [vmem:[#allocation11 + $0x5d0] sm:$0xff]
    %v1432 = vld [vmem:[#allocation11 + $0x5d8] sm:$0xff]
    %v1433 = vld [vmem:[#allocation11 + $0x5e0] sm:$0xff]
    %v1434 = vld [vmem:[#allocation11 + $0x5e8] sm:$0xff]
    %v1435 = vld [vmem:[#allocation11 + $0x5f0] sm:$0xff]
    %v1436 = vld [vmem:[#allocation11 + $0x5f8] sm:$0xff]
    %s1437 = scalar_lea.vmem [#allocation10], 24
    %v1438 = vld [vmem:[%s1437] sm:$0xff]
    %v1439 = vld [vmem:[%s1437 + $0x8] sm:$0xff]
    %v1440 = vld [vmem:[%s1437 + $0x10] sm:$0xff]
    %v1442 = vsel %vm1048, %v1438, 0
    %v1445 = vsel %vm1048, %v1439, 0
    %v1448 = vsel %vm1048, %v1440, 0
    %1450 = vmatprep.subr.mxu0 0.0
    %1451 = vmatpush1.msra.mxu0 0.0
    %1452 = vmatprep.subr.mxu0 0.0
    %1453 = vmatpush1.msra.mxu0 0.0
    %1454 = vmatprep.subr.mxu0 0.0
    %1455 = vmatpush1.msra.mxu0 0.0
    %1456 = vmatprep.subr.mxu0 0.0
    %1457 = vmatpush1.msra.mxu0 0.0
    %1458 = vmatprep.subr.mxu0 0.0
    %1459 = vmatpush1.msra.mxu0 0.0
    %1460 = vmatprep.subr.mxu0 0.0
    %1461 = vmatpush1.msra.mxu0 0.0
    %1462 = vmatprep.subr.mxu0 0.0
    %1463 = vmatpush1.msra.mxu0 0.0
    %1464 = vmatprep.subr.mxu0 0.0
    %1465 = vmatpush1.msra.mxu0 0.0
    %1466 = vmatprep.subr.mxu0 0.0
    %1467 = vmatpush1.msra.mxu0 0.0
    %1468 = vmatprep.subr.mxu0 0.0
    %1469 = vmatpush1.msra.mxu0 0.0
    %1470 = vmatprep.subr.mxu0 0.0
    %1471 = vmatpush1.msra.mxu0 0.0
    %1472 = vmatprep.subr.mxu0 0.0
    %1473 = vmatpush1.msra.mxu0 0.0
    %1474 = vmatprep.subr.mxu0 %v1063
    %1475 = vmatpush1.msra.mxu0 %v1060
    %1476 = vmatprep.subr.mxu0 %v1038
    %1477 = vmatpush1.msra.mxu0 %v1037
    %1478 = vmatprep.subr.mxu0 %v1034
    %1479 = vmatpush1.msra.mxu0 %v1033
    %1480 = vmatprep.subr.mxu0 %v1030
    %1481 = vmatpush1.msra.mxu0 %v1029
    %1482 = vmatprep.subr.mxu0 0.0
    %1483 = vmatpush2.msra.mxu0 0.0
    %1484 = vmatprep.subr.mxu0 0.0
    %1485 = vmatpush2.msra.mxu0 0.0
    %1486 = vmatprep.subr.mxu0 0.0
    %1487 = vmatpush2.msra.mxu0 0.0
    %1488 = vmatprep.subr.mxu0 0.0
    %1489 = vmatpush2.msra.mxu0 0.0
    %1490 = vmatprep.subr.mxu0 0.0
    %1491 = vmatpush2.msra.mxu0 0.0
    %1492 = vmatprep.subr.mxu0 0.0
    %1493 = vmatpush2.msra.mxu0 0.0
    %1494 = vmatprep.subr.mxu0 0.0
    %1495 = vmatpush2.msra.mxu0 0.0
    %1496 = vmatprep.subr.mxu0 0.0
    %1497 = vmatpush2.msra.mxu0 0.0
    %1498 = vmatprep.subr.mxu0 0.0
    %1499 = vmatpush2.msra.mxu0 0.0
    %1500 = vmatprep.subr.mxu0 0.0
    %1501 = vmatpush2.msra.mxu0 0.0
    %1502 = vmatprep.subr.mxu0 0.0
    %1503 = vmatpush2.msra.mxu0 0.0
    %1504 = vmatprep.subr.mxu0 0.0
    %1505 = vmatpush2.msra.mxu0 0.0
    %1506 = vmatprep.subr.mxu0 0.0
    %1507 = vmatpush2.msra.mxu0 0.0
    %1508 = vmatprep.subr.mxu0 0.0
    %1509 = vmatpush2.msra.mxu0 0.0
    %1510 = vmatprep.subr.mxu0 0.0
    %1511 = vmatpush2.msra.mxu0 0.0
    %1512 = vmatprep.subr.mxu0 0.0
    %1513 = vmatpush2.msra.mxu0 0.0
    %1514 = vmatprep.mubr.f32.mxu0 0.0
    %1515 = vmatmul.mubr.f32.gmra.mxu0 %v1442
    %v1516 = vpop.f32.mrf.mxu0
    %v1517 = vadd.f32 0.0, %v1516
    %v1518 = vpop.f32.mrf.mxu0
    %v1519 = vadd.f32 0.0, %v1518
    %1520 = vmatprep.mubr.f32.mxu0 0.0
    %1521 = vmatmul.mubr.f32.gmra.mxu0 %v1445
    %v1522 = vpop.f32.mrf.mxu0
    %v1523 = vadd.f32 0.0, %v1522
    %v1524 = vpop.f32.mrf.mxu0
    %v1525 = vadd.f32 0.0, %v1524
    %1526 = vmatprep.mubr.f32.mxu0 0.0
    %1527 = vmatmul.mubr.f32.gmra.mxu0 %v1448
    %v1528 = vpop.f32.mrf.mxu0
    %v1529 = vadd.f32 0.0, %v1528
    %v1530 = vpop.f32.mrf.mxu0
    %v1531 = vadd.f32 0.0, %v1530
    %1532 = vdwg.mxu0
    %1533 = vmatprep.subr.mxu0 0.0
    %1534 = vmatpush1.msra.mxu0 0.0
    %1535 = vmatprep.subr.mxu0 0.0
    %1536 = vmatpush1.msra.mxu0 0.0
    %1537 = vmatprep.subr.mxu0 0.0
    %1538 = vmatpush1.msra.mxu0 0.0
    %1539 = vmatprep.subr.mxu0 0.0
    %1540 = vmatpush1.msra.mxu0 0.0
    %1541 = vmatprep.subr.mxu0 0.0
    %1542 = vmatpush1.msra.mxu0 0.0
    %1543 = vmatprep.subr.mxu0 0.0
    %1544 = vmatpush1.msra.mxu0 0.0
    %1545 = vmatprep.subr.mxu0 0.0
    %1546 = vmatpush1.msra.mxu0 0.0
    %1547 = vmatprep.subr.mxu0 0.0
    %1548 = vmatpush1.msra.mxu0 0.0
    %1549 = vmatprep.subr.mxu0 0.0
    %1550 = vmatpush1.msra.mxu0 0.0
    %1551 = vmatprep.subr.mxu0 0.0
    %1552 = vmatpush1.msra.mxu0 0.0
    %1553 = vmatprep.subr.mxu0 0.0
    %1554 = vmatpush1.msra.mxu0 0.0
    %1555 = vmatprep.subr.mxu0 0.0
    %1556 = vmatpush1.msra.mxu0 0.0
    %1557 = vmatprep.subr.mxu0 %v1069
    %1558 = vmatpush1.msra.mxu0 %v1066
    %1559 = vmatprep.subr.mxu0 %v1040
    %1560 = vmatpush1.msra.mxu0 %v1039
    %1561 = vmatprep.subr.mxu0 %v1036
    %1562 = vmatpush1.msra.mxu0 %v1035
    %1563 = vmatprep.subr.mxu0 %v1032
    %1564 = vmatpush1.msra.mxu0 %v1031
    %1565 = vmatprep.subr.mxu0 0.0
    %1566 = vmatpush2.msra.mxu0 0.0
    %1567 = vmatprep.subr.mxu0 0.0
    %1568 = vmatpush2.msra.mxu0 0.0
    %1569 = vmatprep.subr.mxu0 0.0
    %1570 = vmatpush2.msra.mxu0 0.0
    %1571 = vmatprep.subr.mxu0 0.0
    %1572 = vmatpush2.msra.mxu0 0.0
    %1573 = vmatprep.subr.mxu0 0.0
    %1574 = vmatpush2.msra.mxu0 0.0
    %1575 = vmatprep.subr.mxu0 0.0
    %1576 = vmatpush2.msra.mxu0 0.0
    %1577 = vmatprep.subr.mxu0 0.0
    %1578 = vmatpush2.msra.mxu0 0.0
    %1579 = vmatprep.subr.mxu0 0.0
    %1580 = vmatpush2.msra.mxu0 0.0
    %1581 = vmatprep.subr.mxu0 0.0
    %1582 = vmatpush2.msra.mxu0 0.0
    %1583 = vmatprep.subr.mxu0 0.0
    %1584 = vmatpush2.msra.mxu0 0.0
    %1585 = vmatprep.subr.mxu0 0.0
    %1586 = vmatpush2.msra.mxu0 0.0
    %1587 = vmatprep.subr.mxu0 0.0
    %1588 = vmatpush2.msra.mxu0 0.0
    %1589 = vmatprep.subr.mxu0 0.0
    %1590 = vmatpush2.msra.mxu0 0.0
    %1591 = vmatprep.subr.mxu0 0.0
    %1592 = vmatpush2.msra.mxu0 0.0
    %1593 = vmatprep.subr.mxu0 0.0
    %1594 = vmatpush2.msra.mxu0 0.0
    %1595 = vmatprep.subr.mxu0 0.0
    %1596 = vmatpush2.msra.mxu0 0.0
    %1597 = vmatprep.mubr.f32.mxu0 0.0
    %1598 = vmatmul.mubr.f32.gmra.mxu0 %v1442
    %v1599 = vpop.f32.mrf.mxu0
    %v1600 = vadd.f32 0.0, %v1599
    %v1601 = vpop.f32.mrf.mxu0
    %v1602 = vadd.f32 0.0, %v1601
    %1603 = vmatprep.mubr.f32.mxu0 0.0
    %1604 = vmatmul.mubr.f32.gmra.mxu0 %v1445
    %v1605 = vpop.f32.mrf.mxu0
    %v1606 = vadd.f32 0.0, %v1605
    %v1607 = vpop.f32.mrf.mxu0
    %v1608 = vadd.f32 0.0, %v1607
    %1609 = vmatprep.mubr.f32.mxu0 0.0
    %1610 = vmatmul.mubr.f32.gmra.mxu0 %v1448
    %v1611 = vpop.f32.mrf.mxu0
    %v1612 = vadd.f32 0.0, %v1611
    %v1613 = vpop.f32.mrf.mxu0
    %v1614 = vadd.f32 0.0, %v1613
    %1615 = vdwg.mxu0
    %v1616 = vpack.c.bf16 %v1523, %v1517
    %v1617 = vpack.c.bf16 %v1525, %v1519
    %v1618 = vpack.c.bf16 %v1606, %v1600
    %v1619 = vpack.c.bf16 %v1608, %v1602
    %v1620 = vpack.c.bf16 %v1529, %v1529
    %v1621 = vpack.c.bf16 %v1531, %v1531
    %v1622 = vpack.c.bf16 %v1612, %v1612
    %v1623 = vpack.c.bf16 %v1614, %v1614
    %s1624 = scalar_lea.vmem [#allocation11], 1536
    %v1625 = vld [vmem:[%s1624] sm:$0xff]
    %v1626 = vld [vmem:[%s1624 + $0x8] sm:$0xff]
    %v1627 = vld [vmem:[%s1624 + $0x10] sm:$0xff]
    %v1628 = vld [vmem:[%s1624 + $0x18] sm:$0xff]
    %v1629 = vld [vmem:[%s1624 + $0x20] sm:$0xff]
    %v1630 = vld [vmem:[%s1624 + $0x28] sm:$0xff]
    %v1631 = vld [vmem:[%s1624 + $0x30] sm:$0xff]
    %v1632 = vld [vmem:[%s1624 + $0x38] sm:$0xff]
    %v1633 = vld [vmem:[%s1624 + $0x40] sm:$0xff]
    %v1634 = vld [vmem:[%s1624 + $0x48] sm:$0xff]
    %v1635 = vld [vmem:[%s1624 + $0x50] sm:$0xff]
    %v1636 = vld [vmem:[%s1624 + $0x58] sm:$0xff]
    %v1637 = vld [vmem:[%s1624 + $0x60] sm:$0xff]
    %v1638 = vld [vmem:[%s1624 + $0x68] sm:$0xff]
    %v1639 = vld [vmem:[%s1624 + $0x70] sm:$0xff]
    %v1640 = vld [vmem:[%s1624 + $0x78] sm:$0xff]
    %v1641 = vld [vmem:[%s1624 + $0x80] sm:$0xff]
    %v1642 = vld [vmem:[%s1624 + $0x88] sm:$0xff]
    %v1643 = vld [vmem:[%s1624 + $0x90] sm:$0xff]
    %v1644 = vld [vmem:[%s1624 + $0x98] sm:$0xff]
    %v1645 = vld [vmem:[%s1624 + $0xa0] sm:$0xff]
    %v1646 = vld [vmem:[%s1624 + $0xa8] sm:$0xff]
    %v1647 = vld [vmem:[%s1624 + $0xb0] sm:$0xff]
    %v1648 = vld [vmem:[%s1624 + $0xb8] sm:$0xff]
    %v1649 = vld [vmem:[%s1624 + $0xc0] sm:$0xff]
    %v1650 = vld [vmem:[%s1624 + $0xc8] sm:$0xff]
    %v1651 = vld [vmem:[%s1624 + $0xd0] sm:$0xff]
    %v1652 = vld [vmem:[%s1624 + $0xd8] sm:$0xff]
    %v1653 = vld [vmem:[%s1624 + $0xe0] sm:$0xff]
    %v1654 = vld [vmem:[%s1624 + $0xe8] sm:$0xff]
    %v1655 = vld [vmem:[%s1624 + $0xf0] sm:$0xff]
    %v1656 = vld [vmem:[%s1624 + $0xf8] sm:$0xff]
    %v1657 = vld [vmem:[%s1624 + $0x100] sm:$0xff]
    %v1658 = vld [vmem:[%s1624 + $0x108] sm:$0xff]
    %v1659 = vld [vmem:[%s1624 + $0x110] sm:$0xff]
    %v1660 = vld [vmem:[%s1624 + $0x118] sm:$0xff]
    %v1661 = vld [vmem:[%s1624 + $0x120] sm:$0xff]
    %v1662 = vld [vmem:[%s1624 + $0x128] sm:$0xff]
    %v1663 = vld [vmem:[%s1624 + $0x130] sm:$0xff]
    %v1664 = vld [vmem:[%s1624 + $0x138] sm:$0xff]
    %v1665 = vld [vmem:[%s1624 + $0x140] sm:$0xff]
    %v1666 = vld [vmem:[%s1624 + $0x148] sm:$0xff]
    %v1667 = vld [vmem:[%s1624 + $0x150] sm:$0xff]
    %v1668 = vld [vmem:[%s1624 + $0x158] sm:$0xff]
    %v1669 = vld [vmem:[%s1624 + $0x160] sm:$0xff]
    %v1670 = vld [vmem:[%s1624 + $0x168] sm:$0xff]
    %v1671 = vld [vmem:[%s1624 + $0x170] sm:$0xff]
    %v1672 = vld [vmem:[%s1624 + $0x178] sm:$0xff]
    %v1673 = vld [vmem:[%s1624 + $0x180] sm:$0xff]
    %v1674 = vld [vmem:[%s1624 + $0x188] sm:$0xff]
    %v1675 = vld [vmem:[%s1624 + $0x190] sm:$0xff]
    %v1676 = vld [vmem:[%s1624 + $0x198] sm:$0xff]
    %v1677 = vld [vmem:[%s1624 + $0x1a0] sm:$0xff]
    %v1678 = vld [vmem:[%s1624 + $0x1a8] sm:$0xff]
    %v1679 = vld [vmem:[%s1624 + $0x1b0] sm:$0xff]
    %v1680 = vld [vmem:[%s1624 + $0x1b8] sm:$0xff]
    %v1681 = vld [vmem:[%s1624 + $0x1c0] sm:$0xff]
    %v1682 = vld [vmem:[%s1624 + $0x1c8] sm:$0xff]
    %v1683 = vld [vmem:[%s1624 + $0x1d0] sm:$0xff]
    %v1684 = vld [vmem:[%s1624 + $0x1d8] sm:$0xff]
    %v1685 = vld [vmem:[%s1624 + $0x1e0] sm:$0xff]
    %v1686 = vld [vmem:[%s1624 + $0x1e8] sm:$0xff]
    %v1687 = vld [vmem:[%s1624 + $0x1f0] sm:$0xff]
    %v1688 = vld [vmem:[%s1624 + $0x1f8] sm:$0xff]
    %v1689 = vld [vmem:[%s1624 + $0x200] sm:$0xff]
    %v1690 = vld [vmem:[%s1624 + $0x208] sm:$0xff]
    %v1691 = vld [vmem:[%s1624 + $0x210] sm:$0xff]
    %v1692 = vld [vmem:[%s1624 + $0x218] sm:$0xff]
    %v1693 = vld [vmem:[%s1624 + $0x220] sm:$0xff]
    %v1694 = vld [vmem:[%s1624 + $0x228] sm:$0xff]
    %v1695 = vld [vmem:[%s1624 + $0x230] sm:$0xff]
    %v1696 = vld [vmem:[%s1624 + $0x238] sm:$0xff]
    %v1697 = vld [vmem:[%s1624 + $0x240] sm:$0xff]
    %v1698 = vld [vmem:[%s1624 + $0x248] sm:$0xff]
    %v1699 = vld [vmem:[%s1624 + $0x250] sm:$0xff]
    %v1700 = vld [vmem:[%s1624 + $0x258] sm:$0xff]
    %v1701 = vld [vmem:[%s1624 + $0x260] sm:$0xff]
    %v1702 = vld [vmem:[%s1624 + $0x268] sm:$0xff]
    %v1703 = vld [vmem:[%s1624 + $0x270] sm:$0xff]
    %v1704 = vld [vmem:[%s1624 + $0x278] sm:$0xff]
    %v1705 = vld [vmem:[%s1624 + $0x280] sm:$0xff]
    %v1706 = vld [vmem:[%s1624 + $0x288] sm:$0xff]
    %v1707 = vld [vmem:[%s1624 + $0x290] sm:$0xff]
    %v1708 = vld [vmem:[%s1624 + $0x298] sm:$0xff]
    %v1709 = vld [vmem:[%s1624 + $0x2a0] sm:$0xff]
    %v1710 = vld [vmem:[%s1624 + $0x2a8] sm:$0xff]
    %v1711 = vld [vmem:[%s1624 + $0x2b0] sm:$0xff]
    %v1712 = vld [vmem:[%s1624 + $0x2b8] sm:$0xff]
    %v1713 = vld [vmem:[%s1624 + $0x2c0] sm:$0xff]
    %v1714 = vld [vmem:[%s1624 + $0x2c8] sm:$0xff]
    %v1715 = vld [vmem:[%s1624 + $0x2d0] sm:$0xff]
    %v1716 = vld [vmem:[%s1624 + $0x2d8] sm:$0xff]
    %v1717 = vld [vmem:[%s1624 + $0x2e0] sm:$0xff]
    %v1718 = vld [vmem:[%s1624 + $0x2e8] sm:$0xff]
    %v1719 = vld [vmem:[%s1624 + $0x2f0] sm:$0xff]
    %v1720 = vld [vmem:[%s1624 + $0x2f8] sm:$0xff]
    %v1721 = vld [vmem:[%s1624 + $0x300] sm:$0xff]
    %v1722 = vld [vmem:[%s1624 + $0x308] sm:$0xff]
    %v1723 = vld [vmem:[%s1624 + $0x310] sm:$0xff]
    %v1724 = vld [vmem:[%s1624 + $0x318] sm:$0xff]
    %v1725 = vld [vmem:[%s1624 + $0x320] sm:$0xff]
    %v1726 = vld [vmem:[%s1624 + $0x328] sm:$0xff]
    %v1727 = vld [vmem:[%s1624 + $0x330] sm:$0xff]
    %v1728 = vld [vmem:[%s1624 + $0x338] sm:$0xff]
    %v1729 = vld [vmem:[%s1624 + $0x340] sm:$0xff]
    %v1730 = vld [vmem:[%s1624 + $0x348] sm:$0xff]
    %v1731 = vld [vmem:[%s1624 + $0x350] sm:$0xff]
    %v1732 = vld [vmem:[%s1624 + $0x358] sm:$0xff]
    %v1733 = vld [vmem:[%s1624 + $0x360] sm:$0xff]
    %v1734 = vld [vmem:[%s1624 + $0x368] sm:$0xff]
    %v1735 = vld [vmem:[%s1624 + $0x370] sm:$0xff]
    %v1736 = vld [vmem:[%s1624 + $0x378] sm:$0xff]
    %v1737 = vld [vmem:[%s1624 + $0x380] sm:$0xff]
    %v1738 = vld [vmem:[%s1624 + $0x388] sm:$0xff]
    %v1739 = vld [vmem:[%s1624 + $0x390] sm:$0xff]
    %v1740 = vld [vmem:[%s1624 + $0x398] sm:$0xff]
    %v1741 = vld [vmem:[%s1624 + $0x3a0] sm:$0xff]
    %v1742 = vld [vmem:[%s1624 + $0x3a8] sm:$0xff]
    %v1743 = vld [vmem:[%s1624 + $0x3b0] sm:$0xff]
    %v1744 = vld [vmem:[%s1624 + $0x3b8] sm:$0xff]
    %v1745 = vld [vmem:[%s1624 + $0x3c0] sm:$0xff]
    %v1746 = vld [vmem:[%s1624 + $0x3c8] sm:$0xff]
    %v1747 = vld [vmem:[%s1624 + $0x3d0] sm:$0xff]
    %v1748 = vld [vmem:[%s1624 + $0x3d8] sm:$0xff]
    %v1749 = vld [vmem:[%s1624 + $0x3e0] sm:$0xff]
    %v1750 = vld [vmem:[%s1624 + $0x3e8] sm:$0xff]
    %v1751 = vld [vmem:[%s1624 + $0x3f0] sm:$0xff]
    %v1752 = vld [vmem:[%s1624 + $0x3f8] sm:$0xff]
    %v1753 = vld [vmem:[%s1624 + $0x400] sm:$0xff]
    %v1754 = vld [vmem:[%s1624 + $0x408] sm:$0xff]
    %v1755 = vld [vmem:[%s1624 + $0x410] sm:$0xff]
    %v1756 = vld [vmem:[%s1624 + $0x418] sm:$0xff]
    %v1757 = vld [vmem:[%s1624 + $0x420] sm:$0xff]
    %v1758 = vld [vmem:[%s1624 + $0x428] sm:$0xff]
    %v1759 = vld [vmem:[%s1624 + $0x430] sm:$0xff]
    %v1760 = vld [vmem:[%s1624 + $0x438] sm:$0xff]
    %v1761 = vld [vmem:[%s1624 + $0x440] sm:$0xff]
    %v1762 = vld [vmem:[%s1624 + $0x448] sm:$0xff]
    %v1763 = vld [vmem:[%s1624 + $0x450] sm:$0xff]
    %v1764 = vld [vmem:[%s1624 + $0x458] sm:$0xff]
    %v1765 = vld [vmem:[%s1624 + $0x460] sm:$0xff]
    %v1766 = vld [vmem:[%s1624 + $0x468] sm:$0xff]
    %v1767 = vld [vmem:[%s1624 + $0x470] sm:$0xff]
    %v1768 = vld [vmem:[%s1624 + $0x478] sm:$0xff]
    %v1769 = vld [vmem:[%s1624 + $0x480] sm:$0xff]
    %v1770 = vld [vmem:[%s1624 + $0x488] sm:$0xff]
    %v1771 = vld [vmem:[%s1624 + $0x490] sm:$0xff]
    %v1772 = vld [vmem:[%s1624 + $0x498] sm:$0xff]
    %v1773 = vld [vmem:[%s1624 + $0x4a0] sm:$0xff]
    %v1774 = vld [vmem:[%s1624 + $0x4a8] sm:$0xff]
    %v1775 = vld [vmem:[%s1624 + $0x4b0] sm:$0xff]
    %v1776 = vld [vmem:[%s1624 + $0x4b8] sm:$0xff]
    %v1777 = vld [vmem:[%s1624 + $0x4c0] sm:$0xff]
    %v1778 = vld [vmem:[%s1624 + $0x4c8] sm:$0xff]
    %v1779 = vld [vmem:[%s1624 + $0x4d0] sm:$0xff]
    %v1780 = vld [vmem:[%s1624 + $0x4d8] sm:$0xff]
    %v1781 = vld [vmem:[%s1624 + $0x4e0] sm:$0xff]
    %v1782 = vld [vmem:[%s1624 + $0x4e8] sm:$0xff]
    %v1783 = vld [vmem:[%s1624 + $0x4f0] sm:$0xff]
    %v1784 = vld [vmem:[%s1624 + $0x4f8] sm:$0xff]
    %v1785 = vld [vmem:[%s1624 + $0x500] sm:$0xff]
    %v1786 = vld [vmem:[%s1624 + $0x508] sm:$0xff]
    %v1787 = vld [vmem:[%s1624 + $0x510] sm:$0xff]
    %v1788 = vld [vmem:[%s1624 + $0x518] sm:$0xff]
    %v1789 = vld [vmem:[%s1624 + $0x520] sm:$0xff]
    %v1790 = vld [vmem:[%s1624 + $0x528] sm:$0xff]
    %v1791 = vld [vmem:[%s1624 + $0x530] sm:$0xff]
    %v1792 = vld [vmem:[%s1624 + $0x538] sm:$0xff]
    %v1793 = vld [vmem:[%s1624 + $0x540] sm:$0xff]
    %v1794 = vld [vmem:[%s1624 + $0x548] sm:$0xff]
    %v1795 = vld [vmem:[%s1624 + $0x550] sm:$0xff]
    %v1796 = vld [vmem:[%s1624 + $0x558] sm:$0xff]
    %v1797 = vld [vmem:[%s1624 + $0x560] sm:$0xff]
    %v1798 = vld [vmem:[%s1624 + $0x568] sm:$0xff]
    %v1799 = vld [vmem:[%s1624 + $0x570] sm:$0xff]
    %v1800 = vld [vmem:[%s1624 + $0x578] sm:$0xff]
    %v1801 = vld [vmem:[%s1624 + $0x580] sm:$0xff]
    %v1802 = vld [vmem:[%s1624 + $0x588] sm:$0xff]
    %v1803 = vld [vmem:[%s1624 + $0x590] sm:$0xff]
    %v1804 = vld [vmem:[%s1624 + $0x598] sm:$0xff]
    %v1805 = vld [vmem:[%s1624 + $0x5a0] sm:$0xff]
    %v1806 = vld [vmem:[%s1624 + $0x5a8] sm:$0xff]
    %v1807 = vld [vmem:[%s1624 + $0x5b0] sm:$0xff]
    %v1808 = vld [vmem:[%s1624 + $0x5b8] sm:$0xff]
    %v1809 = vld [vmem:[%s1624 + $0x5c0] sm:$0xff]
    %v1810 = vld [vmem:[%s1624 + $0x5c8] sm:$0xff]
    %v1811 = vld [vmem:[%s1624 + $0x5d0] sm:$0xff]
    %v1812 = vld [vmem:[%s1624 + $0x5d8] sm:$0xff]
    %v1813 = vld [vmem:[%s1624 + $0x5e0] sm:$0xff]
    %v1814 = vld [vmem:[%s1624 + $0x5e8] sm:$0xff]
    %v1815 = vld [vmem:[%s1624 + $0x5f0] sm:$0xff]
    %v1816 = vld [vmem:[%s1624 + $0x5f8] sm:$0xff]
    %v2009 = vunpack.c.l.b16 %v1625
    %v2010 = vunpack.c.h.b16 %v1625
    %v2011 = vunpack.c.l.b16 %v1626
    %v2012 = vunpack.c.h.b16 %v1626
    %v2013 = vunpack.c.l.b16 %v1627
    %v2014 = vunpack.c.h.b16 %v1627
    %v2015 = vunpack.c.l.b16 %v1628
    %v2016 = vunpack.c.h.b16 %v1628
    %v2017 = vunpack.c.l.b16 %v1629
    %v2018 = vunpack.c.h.b16 %v1629
    %v2019 = vunpack.c.l.b16 %v1630
    %v2020 = vunpack.c.h.b16 %v1630
    %v2021 = vunpack.c.l.b16 %v1631
    %v2022 = vunpack.c.h.b16 %v1631
    %v2023 = vunpack.c.l.b16 %v1632
    %v2024 = vunpack.c.h.b16 %v1632
    %v2025 = vunpack.c.l.b16 %v1633
    %v2026 = vunpack.c.h.b16 %v1633
    %v2027 = vunpack.c.l.b16 %v1634
    %v2028 = vunpack.c.h.b16 %v1634
    %v2029 = vunpack.c.l.b16 %v1635
    %v2030 = vunpack.c.h.b16 %v1635
    %v2031 = vunpack.c.l.b16 %v1636
    %v2032 = vunpack.c.h.b16 %v1636
    %v2033 = vunpack.c.l.b16 %v1637
    %v2034 = vunpack.c.h.b16 %v1637
    %v2035 = vunpack.c.l.b16 %v1638
    %v2036 = vunpack.c.h.b16 %v1638
    %v2037 = vunpack.c.l.b16 %v1639
    %v2038 = vunpack.c.h.b16 %v1639
    %v2039 = vunpack.c.l.b16 %v1640
    %v2040 = vunpack.c.h.b16 %v1640
    %v2041 = vunpack.c.l.b16 %v1641
    %v2042 = vunpack.c.h.b16 %v1641
    %v2043 = vunpack.c.l.b16 %v1642
    %v2044 = vunpack.c.h.b16 %v1642
    %v2045 = vunpack.c.l.b16 %v1643
    %v2046 = vunpack.c.h.b16 %v1643
    %v2047 = vunpack.c.l.b16 %v1644
    %v2048 = vunpack.c.h.b16 %v1644
    %v2049 = vunpack.c.l.b16 %v1645
    %v2050 = vunpack.c.h.b16 %v1645
    %v2051 = vunpack.c.l.b16 %v1646
    %v2052 = vunpack.c.h.b16 %v1646
    %v2053 = vunpack.c.l.b16 %v1647
    %v2054 = vunpack.c.h.b16 %v1647
    %v2055 = vunpack.c.l.b16 %v1648
    %v2056 = vunpack.c.h.b16 %v1648
    %v2057 = vunpack.c.l.b16 %v1649
    %v2058 = vunpack.c.h.b16 %v1649
    %v2059 = vunpack.c.l.b16 %v1650
    %v2060 = vunpack.c.h.b16 %v1650
    %v2061 = vunpack.c.l.b16 %v1651
    %v2062 = vunpack.c.h.b16 %v1651
    %v2063 = vunpack.c.l.b16 %v1652
    %v2064 = vunpack.c.h.b16 %v1652
    %v2065 = vunpack.c.l.b16 %v1653
    %v2066 = vunpack.c.h.b16 %v1653
    %v2067 = vunpack.c.l.b16 %v1654
    %v2068 = vunpack.c.h.b16 %v1654
    %v2069 = vunpack.c.l.b16 %v1655
    %v2070 = vunpack.c.h.b16 %v1655
    %v2071 = vunpack.c.l.b16 %v1656
    %v2072 = vunpack.c.h.b16 %v1656
    %v2073 = vunpack.c.l.b16 %v1657
    %v2074 = vunpack.c.h.b16 %v1657
    %v2075 = vunpack.c.l.b16 %v1658
    %v2076 = vunpack.c.h.b16 %v1658
    %v2077 = vunpack.c.l.b16 %v1659
    %v2078 = vunpack.c.h.b16 %v1659
    %v2079 = vunpack.c.l.b16 %v1660
    %v2080 = vunpack.c.h.b16 %v1660
    %v2081 = vunpack.c.l.b16 %v1661
    %v2082 = vunpack.c.h.b16 %v1661
    %v2083 = vunpack.c.l.b16 %v1662
    %v2084 = vunpack.c.h.b16 %v1662
    %v2085 = vunpack.c.l.b16 %v1663
    %v2086 = vunpack.c.h.b16 %v1663
    %v2087 = vunpack.c.l.b16 %v1664
    %v2088 = vunpack.c.h.b16 %v1664
    %v2089 = vunpack.c.l.b16 %v1665
    %v2090 = vunpack.c.h.b16 %v1665
    %v2091 = vunpack.c.l.b16 %v1666
    %v2092 = vunpack.c.h.b16 %v1666
    %v2093 = vunpack.c.l.b16 %v1667
    %v2094 = vunpack.c.h.b16 %v1667
    %v2095 = vunpack.c.l.b16 %v1668
    %v2096 = vunpack.c.h.b16 %v1668
    %v2097 = vunpack.c.l.b16 %v1669
    %v2098 = vunpack.c.h.b16 %v1669
    %v2099 = vunpack.c.l.b16 %v1670
    %v2100 = vunpack.c.h.b16 %v1670
    %v2101 = vunpack.c.l.b16 %v1671
    %v2102 = vunpack.c.h.b16 %v1671
    %v2103 = vunpack.c.l.b16 %v1672
    %v2104 = vunpack.c.h.b16 %v1672
    %v2105 = vunpack.c.l.b16 %v1673
    %v2106 = vunpack.c.h.b16 %v1673
    %v2107 = vunpack.c.l.b16 %v1674
    %v2108 = vunpack.c.h.b16 %v1674
    %v2109 = vunpack.c.l.b16 %v1675
    %v2110 = vunpack.c.h.b16 %v1675
    %v2111 = vunpack.c.l.b16 %v1676
    %v2112 = vunpack.c.h.b16 %v1676
    %v2113 = vunpack.c.l.b16 %v1677
    %v2114 = vunpack.c.h.b16 %v1677
    %v2115 = vunpack.c.l.b16 %v1678
    %v2116 = vunpack.c.h.b16 %v1678
    %v2117 = vunpack.c.l.b16 %v1679
    %v2118 = vunpack.c.h.b16 %v1679
    %v2119 = vunpack.c.l.b16 %v1680
    %v2120 = vunpack.c.h.b16 %v1680
    %v2121 = vunpack.c.l.b16 %v1681
    %v2122 = vunpack.c.h.b16 %v1681
    %v2123 = vunpack.c.l.b16 %v1682
    %v2124 = vunpack.c.h.b16 %v1682
    %v2125 = vunpack.c.l.b16 %v1683
    %v2126 = vunpack.c.h.b16 %v1683
    %v2127 = vunpack.c.l.b16 %v1684
    %v2128 = vunpack.c.h.b16 %v1684
    %v2129 = vunpack.c.l.b16 %v1685
    %v2130 = vunpack.c.h.b16 %v1685
    %v2131 = vunpack.c.l.b16 %v1686
    %v2132 = vunpack.c.h.b16 %v1686
    %v2133 = vunpack.c.l.b16 %v1687
    %v2134 = vunpack.c.h.b16 %v1687
    %v2135 = vunpack.c.l.b16 %v1688
    %v2136 = vunpack.c.h.b16 %v1688
    %v2137 = vunpack.c.l.b16 %v1689
    %v2138 = vunpack.c.h.b16 %v1689
    %v2139 = vunpack.c.l.b16 %v1690
    %v2140 = vunpack.c.h.b16 %v1690
    %v2141 = vunpack.c.l.b16 %v1691
    %v2142 = vunpack.c.h.b16 %v1691
    %v2143 = vunpack.c.l.b16 %v1692
    %v2144 = vunpack.c.h.b16 %v1692
    %v2145 = vunpack.c.l.b16 %v1693
    %v2146 = vunpack.c.h.b16 %v1693
    %v2147 = vunpack.c.l.b16 %v1694
    %v2148 = vunpack.c.h.b16 %v1694
    %v2149 = vunpack.c.l.b16 %v1695
    %v2150 = vunpack.c.h.b16 %v1695
    %v2151 = vunpack.c.l.b16 %v1696
    %v2152 = vunpack.c.h.b16 %v1696
    %v2153 = vunpack.c.l.b16 %v1697
    %v2154 = vunpack.c.h.b16 %v1697
    %v2155 = vunpack.c.l.b16 %v1698
    %v2156 = vunpack.c.h.b16 %v1698
    %v2157 = vunpack.c.l.b16 %v1699
    %v2158 = vunpack.c.h.b16 %v1699
    %v2159 = vunpack.c.l.b16 %v1700
    %v2160 = vunpack.c.h.b16 %v1700
    %v2161 = vunpack.c.l.b16 %v1701
    %v2162 = vunpack.c.h.b16 %v1701
    %v2163 = vunpack.c.l.b16 %v1702
    %v2164 = vunpack.c.h.b16 %v1702
    %v2165 = vunpack.c.l.b16 %v1703
    %v2166 = vunpack.c.h.b16 %v1703
    %v2167 = vunpack.c.l.b16 %v1704
    %v2168 = vunpack.c.h.b16 %v1704
    %v2169 = vunpack.c.l.b16 %v1705
    %v2170 = vunpack.c.h.b16 %v1705
    %v2171 = vunpack.c.l.b16 %v1706
    %v2172 = vunpack.c.h.b16 %v1706
    %v2173 = vunpack.c.l.b16 %v1707
    %v2174 = vunpack.c.h.b16 %v1707
    %v2175 = vunpack.c.l.b16 %v1708
    %v2176 = vunpack.c.h.b16 %v1708
    %v2177 = vunpack.c.l.b16 %v1709
    %v2178 = vunpack.c.h.b16 %v1709
    %v2179 = vunpack.c.l.b16 %v1710
    %v2180 = vunpack.c.h.b16 %v1710
    %v2181 = vunpack.c.l.b16 %v1711
    %v2182 = vunpack.c.h.b16 %v1711
    %v2183 = vunpack.c.l.b16 %v1712
    %v2184 = vunpack.c.h.b16 %v1712
    %v2185 = vunpack.c.l.b16 %v1713
    %v2186 = vunpack.c.h.b16 %v1713
    %v2187 = vunpack.c.l.b16 %v1714
    %v2188 = vunpack.c.h.b16 %v1714
    %v2189 = vunpack.c.l.b16 %v1715
    %v2190 = vunpack.c.h.b16 %v1715
    %v2191 = vunpack.c.l.b16 %v1716
    %v2192 = vunpack.c.h.b16 %v1716
    %v2193 = vunpack.c.l.b16 %v1717
    %v2194 = vunpack.c.h.b16 %v1717
    %v2195 = vunpack.c.l.b16 %v1718
    %v2196 = vunpack.c.h.b16 %v1718
    %v2197 = vunpack.c.l.b16 %v1719
    %v2198 = vunpack.c.h.b16 %v1719
    %v2199 = vunpack.c.l.b16 %v1720
    %v2200 = vunpack.c.h.b16 %v1720
    %v2201 = vunpack.c.l.b16 %v1721
    %v2202 = vunpack.c.h.b16 %v1721
    %v2203 = vunpack.c.l.b16 %v1722
    %v2204 = vunpack.c.h.b16 %v1722
    %v2205 = vunpack.c.l.b16 %v1723
    %v2206 = vunpack.c.h.b16 %v1723
    %v2207 = vunpack.c.l.b16 %v1724
    %v2208 = vunpack.c.h.b16 %v1724
    %v2209 = vunpack.c.l.b16 %v1725
    %v2210 = vunpack.c.h.b16 %v1725
    %v2211 = vunpack.c.l.b16 %v1726
    %v2212 = vunpack.c.h.b16 %v1726
    %v2213 = vunpack.c.l.b16 %v1727
    %v2214 = vunpack.c.h.b16 %v1727
    %v2215 = vunpack.c.l.b16 %v1728
    %v2216 = vunpack.c.h.b16 %v1728
    %v2217 = vunpack.c.l.b16 %v1729
    %v2218 = vunpack.c.h.b16 %v1729
    %v2219 = vunpack.c.l.b16 %v1730
    %v2220 = vunpack.c.h.b16 %v1730
    %v2221 = vunpack.c.l.b16 %v1731
    %v2222 = vunpack.c.h.b16 %v1731
    %v2223 = vunpack.c.l.b16 %v1732
    %v2224 = vunpack.c.h.b16 %v1732
    %v2225 = vunpack.c.l.b16 %v1733
    %v2226 = vunpack.c.h.b16 %v1733
    %v2227 = vunpack.c.l.b16 %v1734
    %v2228 = vunpack.c.h.b16 %v1734
    %v2229 = vunpack.c.l.b16 %v1735
    %v2230 = vunpack.c.h.b16 %v1735
    %v2231 = vunpack.c.l.b16 %v1736
    %v2232 = vunpack.c.h.b16 %v1736
    %v2233 = vunpack.c.l.b16 %v1737
    %v2234 = vunpack.c.h.b16 %v1737
    %v2235 = vunpack.c.l.b16 %v1738
    %v2236 = vunpack.c.h.b16 %v1738
    %v2237 = vunpack.c.l.b16 %v1739
    %v2238 = vunpack.c.h.b16 %v1739
    %v2239 = vunpack.c.l.b16 %v1740
    %v2240 = vunpack.c.h.b16 %v1740
    %v2241 = vunpack.c.l.b16 %v1741
    %v2242 = vunpack.c.h.b16 %v1741
    %v2243 = vunpack.c.l.b16 %v1742
    %v2244 = vunpack.c.h.b16 %v1742
    %v2245 = vunpack.c.l.b16 %v1743
    %v2246 = vunpack.c.h.b16 %v1743
    %v2247 = vunpack.c.l.b16 %v1744
    %v2248 = vunpack.c.h.b16 %v1744
    %v2249 = vunpack.c.l.b16 %v1745
    %v2250 = vunpack.c.h.b16 %v1745
    %v2251 = vunpack.c.l.b16 %v1746
    %v2252 = vunpack.c.h.b16 %v1746
    %v2253 = vunpack.c.l.b16 %v1747
    %v2254 = vunpack.c.h.b16 %v1747
    %v2255 = vunpack.c.l.b16 %v1748
    %v2256 = vunpack.c.h.b16 %v1748
    %v2257 = vunpack.c.l.b16 %v1749
    %v2258 = vunpack.c.h.b16 %v1749
    %v2259 = vunpack.c.l.b16 %v1750
    %v2260 = vunpack.c.h.b16 %v1750
    %v2261 = vunpack.c.l.b16 %v1751
    %v2262 = vunpack.c.h.b16 %v1751
    %v2263 = vunpack.c.l.b16 %v1752
    %v2264 = vunpack.c.h.b16 %v1752
    %v2265 = vunpack.c.l.b16 %v1753
    %v2266 = vunpack.c.h.b16 %v1753
    %v2267 = vunpack.c.l.b16 %v1754
    %v2268 = vunpack.c.h.b16 %v1754
    %v2269 = vunpack.c.l.b16 %v1755
    %v2270 = vunpack.c.h.b16 %v1755
    %v2271 = vunpack.c.l.b16 %v1756
    %v2272 = vunpack.c.h.b16 %v1756
    %v2273 = vunpack.c.l.b16 %v1757
    %v2274 = vunpack.c.h.b16 %v1757
    %v2275 = vunpack.c.l.b16 %v1758
    %v2276 = vunpack.c.h.b16 %v1758
    %v2277 = vunpack.c.l.b16 %v1759
    %v2278 = vunpack.c.h.b16 %v1759
    %v2279 = vunpack.c.l.b16 %v1760
    %v2280 = vunpack.c.h.b16 %v1760
    %v2281 = vunpack.c.l.b16 %v1761
    %v2282 = vunpack.c.h.b16 %v1761
    %v2283 = vunpack.c.l.b16 %v1762
    %v2284 = vunpack.c.h.b16 %v1762
    %v2285 = vunpack.c.l.b16 %v1763
    %v2286 = vunpack.c.h.b16 %v1763
    %v2287 = vunpack.c.l.b16 %v1764
    %v2288 = vunpack.c.h.b16 %v1764
    %v2289 = vunpack.c.l.b16 %v1765
    %v2290 = vunpack.c.h.b16 %v1765
    %v2291 = vunpack.c.l.b16 %v1766
    %v2292 = vunpack.c.h.b16 %v1766
    %v2293 = vunpack.c.l.b16 %v1767
    %v2294 = vunpack.c.h.b16 %v1767
    %v2295 = vunpack.c.l.b16 %v1768
    %v2296 = vunpack.c.h.b16 %v1768
    %v2297 = vunpack.c.l.b16 %v1769
    %v2298 = vunpack.c.h.b16 %v1769
    %v2299 = vunpack.c.l.b16 %v1770
    %v2300 = vunpack.c.h.b16 %v1770
    %v2301 = vunpack.c.l.b16 %v1771
    %v2302 = vunpack.c.h.b16 %v1771
    %v2303 = vunpack.c.l.b16 %v1772
    %v2304 = vunpack.c.h.b16 %v1772
    %v2305 = vunpack.c.l.b16 %v1773
    %v2306 = vunpack.c.h.b16 %v1773
    %v2307 = vunpack.c.l.b16 %v1774
    %v2308 = vunpack.c.h.b16 %v1774
    %v2309 = vunpack.c.l.b16 %v1775
    %v2310 = vunpack.c.h.b16 %v1775
    %v2311 = vunpack.c.l.b16 %v1776
    %v2312 = vunpack.c.h.b16 %v1776
    %v2313 = vunpack.c.l.b16 %v1777
    %v2314 = vunpack.c.h.b16 %v1777
    %v2315 = vunpack.c.l.b16 %v1778
    %v2316 = vunpack.c.h.b16 %v1778
    %v2317 = vunpack.c.l.b16 %v1779
    %v2318 = vunpack.c.h.b16 %v1779
    %v2319 = vunpack.c.l.b16 %v1780
    %v2320 = vunpack.c.h.b16 %v1780
    %v2321 = vunpack.c.l.b16 %v1781
    %v2322 = vunpack.c.h.b16 %v1781
    %v2323 = vunpack.c.l.b16 %v1782
    %v2324 = vunpack.c.h.b16 %v1782
    %v2325 = vunpack.c.l.b16 %v1783
    %v2326 = vunpack.c.h.b16 %v1783
    %v2327 = vunpack.c.l.b16 %v1784
    %v2328 = vunpack.c.h.b16 %v1784
    %v2329 = vunpack.c.l.b16 %v1785
    %v2330 = vunpack.c.h.b16 %v1785
    %v2331 = vunpack.c.l.b16 %v1786
    %v2332 = vunpack.c.h.b16 %v1786
    %v2333 = vunpack.c.l.b16 %v1787
    %v2334 = vunpack.c.h.b16 %v1787
    %v2335 = vunpack.c.l.b16 %v1788
    %v2336 = vunpack.c.h.b16 %v1788
    %v2337 = vunpack.c.l.b16 %v1789
    %v2338 = vunpack.c.h.b16 %v1789
    %v2339 = vunpack.c.l.b16 %v1790
    %v2340 = vunpack.c.h.b16 %v1790
    %v2341 = vunpack.c.l.b16 %v1791
    %v2342 = vunpack.c.h.b16 %v1791
    %v2343 = vunpack.c.l.b16 %v1792
    %v2344 = vunpack.c.h.b16 %v1792
    %v2345 = vunpack.c.l.b16 %v1793
    %v2346 = vunpack.c.h.b16 %v1793
    %v2347 = vunpack.c.l.b16 %v1794
    %v2348 = vunpack.c.h.b16 %v1794
    %v2349 = vunpack.c.l.b16 %v1795
    %v2350 = vunpack.c.h.b16 %v1795
    %v2351 = vunpack.c.l.b16 %v1796
    %v2352 = vunpack.c.h.b16 %v1796
    %v2353 = vunpack.c.l.b16 %v1797
    %v2354 = vunpack.c.h.b16 %v1797
    %v2355 = vunpack.c.l.b16 %v1798
    %v2356 = vunpack.c.h.b16 %v1798
    %v2357 = vunpack.c.l.b16 %v1799
    %v2358 = vunpack.c.h.b16 %v1799
    %v2359 = vunpack.c.l.b16 %v1800
    %v2360 = vunpack.c.h.b16 %v1800
    %v2361 = vunpack.c.l.b16 %v1801
    %v2362 = vunpack.c.h.b16 %v1801
    %v2363 = vunpack.c.l.b16 %v1802
    %v2364 = vunpack.c.h.b16 %v1802
    %v2365 = vunpack.c.l.b16 %v1803
    %v2366 = vunpack.c.h.b16 %v1803
    %v2367 = vunpack.c.l.b16 %v1804
    %v2368 = vunpack.c.h.b16 %v1804
    %v2369 = vunpack.c.l.b16 %v1805
    %v2370 = vunpack.c.h.b16 %v1805
    %v2371 = vunpack.c.l.b16 %v1806
    %v2372 = vunpack.c.h.b16 %v1806
    %v2373 = vunpack.c.l.b16 %v1807
    %v2374 = vunpack.c.h.b16 %v1807
    %v2375 = vunpack.c.l.b16 %v1808
    %v2376 = vunpack.c.h.b16 %v1808
    %v2377 = vunpack.c.l.b16 %v1809
    %v2378 = vunpack.c.h.b16 %v1809
    %v2379 = vunpack.c.l.b16 %v1810
    %v2380 = vunpack.c.h.b16 %v1810
    %v2381 = vunpack.c.l.b16 %v1811
    %v2382 = vunpack.c.h.b16 %v1811
    %v2383 = vunpack.c.l.b16 %v1812
    %v2384 = vunpack.c.h.b16 %v1812
    %v2385 = vunpack.c.l.b16 %v1813
    %v2386 = vunpack.c.h.b16 %v1813
    %v2387 = vunpack.c.l.b16 %v1814
    %v2388 = vunpack.c.h.b16 %v1814
    %v2389 = vunpack.c.l.b16 %v1815
    %v2390 = vunpack.c.h.b16 %v1815
    %v2391 = vunpack.c.l.b16 %v1816
    %v2392 = vunpack.c.h.b16 %v1816
    %v2393 = vpack.c.b16 %v2015, %v2009
    %v2394 = vpack.c.b16 %v2016, %v2010
    %v2395 = vpack.c.b16 %v2017, %v2011
    %v2396 = vpack.c.b16 %v2018, %v2012
    %v2397 = vpack.c.b16 %v2019, %v2013
    %v2398 = vpack.c.b16 %v2020, %v2014
    %v2399 = vpack.c.b16 %v2027, %v2021
    %v2400 = vpack.c.b16 %v2028, %v2022
    %v2401 = vpack.c.b16 %v2029, %v2023
    %v2402 = vpack.c.b16 %v2030, %v2024
    %v2403 = vpack.c.b16 %v2031, %v2025
    %v2404 = vpack.c.b16 %v2032, %v2026
    %v2405 = vpack.c.b16 %v2039, %v2033
    %v2406 = vpack.c.b16 %v2040, %v2034
    %v2407 = vpack.c.b16 %v2041, %v2035
    %v2408 = vpack.c.b16 %v2042, %v2036
    %v2409 = vpack.c.b16 %v2043, %v2037
    %v2410 = vpack.c.b16 %v2044, %v2038
    %v2411 = vpack.c.b16 %v2051, %v2045
    %v2412 = vpack.c.b16 %v2052, %v2046
    %v2413 = vpack.c.b16 %v2053, %v2047
    %v2414 = vpack.c.b16 %v2054, %v2048
    %v2415 = vpack.c.b16 %v2055, %v2049
    %v2416 = vpack.c.b16 %v2056, %v2050
    %v2417 = vpack.c.b16 %v2063, %v2057
    %v2418 = vpack.c.b16 %v2064, %v2058
    %v2419 = vpack.c.b16 %v2065, %v2059
    %v2420 = vpack.c.b16 %v2066, %v2060
    %v2421 = vpack.c.b16 %v2067, %v2061
    %v2422 = vpack.c.b16 %v2068, %v2062
    %v2423 = vpack.c.b16 %v2075, %v2069
    %v2424 = vpack.c.b16 %v2076, %v2070
    %v2425 = vpack.c.b16 %v2077, %v2071
    %v2426 = vpack.c.b16 %v2078, %v2072
    %v2427 = vpack.c.b16 %v2079, %v2073
    %v2428 = vpack.c.b16 %v2080, %v2074
    %v2429 = vpack.c.b16 %v2087, %v2081
    %v2430 = vpack.c.b16 %v2088, %v2082
    %v2431 = vpack.c.b16 %v2089, %v2083
    %v2432 = vpack.c.b16 %v2090, %v2084
    %v2433 = vpack.c.b16 %v2091, %v2085
    %v2434 = vpack.c.b16 %v2092, %v2086
    %v2435 = vpack.c.b16 %v2099, %v2093
    %v2436 = vpack.c.b16 %v2100, %v2094
    %v2437 = vpack.c.b16 %v2101, %v2095
    %v2438 = vpack.c.b16 %v2102, %v2096
    %v2439 = vpack.c.b16 %v2103, %v2097
    %v2440 = vpack.c.b16 %v2104, %v2098
    %v2441 = vpack.c.b16 %v2111, %v2105
    %v2442 = vpack.c.b16 %v2112, %v2106
    %v2443 = vpack.c.b16 %v2113, %v2107
    %v2444 = vpack.c.b16 %v2114, %v2108
    %v2445 = vpack.c.b16 %v2115, %v2109
    %v2446 = vpack.c.b16 %v2116, %v2110
    %v2447 = vpack.c.b16 %v2123, %v2117
    %v2448 = vpack.c.b16 %v2124, %v2118
    %v2449 = vpack.c.b16 %v2125, %v2119
    %v2450 = vpack.c.b16 %v2126, %v2120
    %v2451 = vpack.c.b16 %v2127, %v2121
    %v2452 = vpack.c.b16 %v2128, %v2122
    %v2453 = vpack.c.b16 %v2135, %v2129
    %v2454 = vpack.c.b16 %v2136, %v2130
    %v2455 = vpack.c.b16 %v2137, %v2131
    %v2456 = vpack.c.b16 %v2138, %v2132
    %v2457 = vpack.c.b16 %v2139, %v2133
    %v2458 = vpack.c.b16 %v2140, %v2134
    %v2459 = vpack.c.b16 %v2147, %v2141
    %v2460 = vpack.c.b16 %v2148, %v2142
    %v2461 = vpack.c.b16 %v2149, %v2143
    %v2462 = vpack.c.b16 %v2150, %v2144
    %v2463 = vpack.c.b16 %v2151, %v2145
    %v2464 = vpack.c.b16 %v2152, %v2146
    %v2465 = vpack.c.b16 %v2159, %v2153
    %v2466 = vpack.c.b16 %v2160, %v2154
    %v2467 = vpack.c.b16 %v2161, %v2155
    %v2468 = vpack.c.b16 %v2162, %v2156
    %v2469 = vpack.c.b16 %v2163, %v2157
    %v2470 = vpack.c.b16 %v2164, %v2158
    %v2471 = vpack.c.b16 %v2171, %v2165
    %v2472 = vpack.c.b16 %v2172, %v2166
    %v2473 = vpack.c.b16 %v2173, %v2167
    %v2474 = vpack.c.b16 %v2174, %v2168
    %v2475 = vpack.c.b16 %v2175, %v2169
    %v2476 = vpack.c.b16 %v2176, %v2170
    %v2477 = vpack.c.b16 %v2183, %v2177
    %v2478 = vpack.c.b16 %v2184, %v2178
    %v2479 = vpack.c.b16 %v2185, %v2179
    %v2480 = vpack.c.b16 %v2186, %v2180
    %v2481 = vpack.c.b16 %v2187, %v2181
    %v2482 = vpack.c.b16 %v2188, %v2182
    %v2483 = vpack.c.b16 %v2195, %v2189
    %v2484 = vpack.c.b16 %v2196, %v2190
    %v2485 = vpack.c.b16 %v2197, %v2191
    %v2486 = vpack.c.b16 %v2198, %v2192
    %v2487 = vpack.c.b16 %v2199, %v2193
    %v2488 = vpack.c.b16 %v2200, %v2194
    %v2489 = vpack.c.b16 %v2207, %v2201
    %v2490 = vpack.c.b16 %v2208, %v2202
    %v2491 = vpack.c.b16 %v2209, %v2203
    %v2492 = vpack.c.b16 %v2210, %v2204
    %v2493 = vpack.c.b16 %v2211, %v2205
    %v2494 = vpack.c.b16 %v2212, %v2206
    %v2495 = vpack.c.b16 %v2219, %v2213
    %v2496 = vpack.c.b16 %v2220, %v2214
    %v2497 = vpack.c.b16 %v2221, %v2215
    %v2498 = vpack.c.b16 %v2222, %v2216
    %v2499 = vpack.c.b16 %v2223, %v2217
    %v2500 = vpack.c.b16 %v2224, %v2218
    %v2501 = vpack.c.b16 %v2231, %v2225
    %v2502 = vpack.c.b16 %v2232, %v2226
    %v2503 = vpack.c.b16 %v2233, %v2227
    %v2504 = vpack.c.b16 %v2234, %v2228
    %v2505 = vpack.c.b16 %v2235, %v2229
    %v2506 = vpack.c.b16 %v2236, %v2230
    %v2507 = vpack.c.b16 %v2243, %v2237
    %v2508 = vpack.c.b16 %v2244, %v2238
    %v2509 = vpack.c.b16 %v2245, %v2239
    %v2510 = vpack.c.b16 %v2246, %v2240
    %v2511 = vpack.c.b16 %v2247, %v2241
    %v2512 = vpack.c.b16 %v2248, %v2242
    %v2513 = vpack.c.b16 %v2255, %v2249
    %v2514 = vpack.c.b16 %v2256, %v2250
    %v2515 = vpack.c.b16 %v2257, %v2251
    %v2516 = vpack.c.b16 %v2258, %v2252
    %v2517 = vpack.c.b16 %v2259, %v2253
    %v2518 = vpack.c.b16 %v2260, %v2254
    %v2519 = vpack.c.b16 %v2267, %v2261
    %v2520 = vpack.c.b16 %v2268, %v2262
    %v2521 = vpack.c.b16 %v2269, %v2263
    %v2522 = vpack.c.b16 %v2270, %v2264
    %v2523 = vpack.c.b16 %v2271, %v2265
    %v2524 = vpack.c.b16 %v2272, %v2266
    %v2525 = vpack.c.b16 %v2279, %v2273
    %v2526 = vpack.c.b16 %v2280, %v2274
    %v2527 = vpack.c.b16 %v2281, %v2275
    %v2528 = vpack.c.b16 %v2282, %v2276
    %v2529 = vpack.c.b16 %v2283, %v2277
    %v2530 = vpack.c.b16 %v2284, %v2278
    %v2531 = vpack.c.b16 %v2291, %v2285
    %v2532 = vpack.c.b16 %v2292, %v2286
    %v2533 = vpack.c.b16 %v2293, %v2287
    %v2534 = vpack.c.b16 %v2294, %v2288
    %v2535 = vpack.c.b16 %v2295, %v2289
    %v2536 = vpack.c.b16 %v2296, %v2290
    %v2537 = vpack.c.b16 %v2303, %v2297
    %v2538 = vpack.c.b16 %v2304, %v2298
    %v2539 = vpack.c.b16 %v2305, %v2299
    %v2540 = vpack.c.b16 %v2306, %v2300
    %v2541 = vpack.c.b16 %v2307, %v2301
    %v2542 = vpack.c.b16 %v2308, %v2302
    %v2543 = vpack.c.b16 %v2315, %v2309
    %v2544 = vpack.c.b16 %v2316, %v2310
    %v2545 = vpack.c.b16 %v2317, %v2311
    %v2546 = vpack.c.b16 %v2318, %v2312
    %v2547 = vpack.c.b16 %v2319, %v2313
    %v2548 = vpack.c.b16 %v2320, %v2314
    %v2549 = vpack.c.b16 %v2327, %v2321
    %v2550 = vpack.c.b16 %v2328, %v2322
    %v2551 = vpack.c.b16 %v2329, %v2323
    %v2552 = vpack.c.b16 %v2330, %v2324
    %v2553 = vpack.c.b16 %v2331, %v2325
    %v2554 = vpack.c.b16 %v2332, %v2326
    %v2555 = vpack.c.b16 %v2339, %v2333
    %v2556 = vpack.c.b16 %v2340, %v2334
    %v2557 = vpack.c.b16 %v2341, %v2335
    %v2558 = vpack.c.b16 %v2342, %v2336
    %v2559 = vpack.c.b16 %v2343, %v2337
    %v2560 = vpack.c.b16 %v2344, %v2338
    %v2561 = vpack.c.b16 %v2351, %v2345
    %v2562 = vpack.c.b16 %v2352, %v2346
    %v2563 = vpack.c.b16 %v2353, %v2347
    %v2564 = vpack.c.b16 %v2354, %v2348
    %v2565 = vpack.c.b16 %v2355, %v2349
    %v2566 = vpack.c.b16 %v2356, %v2350
    %v2567 = vpack.c.b16 %v2363, %v2357
    %v2568 = vpack.c.b16 %v2364, %v2358
    %v2569 = vpack.c.b16 %v2365, %v2359
    %v2570 = vpack.c.b16 %v2366, %v2360
    %v2571 = vpack.c.b16 %v2367, %v2361
    %v2572 = vpack.c.b16 %v2368, %v2362
    %v2573 = vpack.c.b16 %v2375, %v2369
    %v2574 = vpack.c.b16 %v2376, %v2370
    %v2575 = vpack.c.b16 %v2377, %v2371
    %v2576 = vpack.c.b16 %v2378, %v2372
    %v2577 = vpack.c.b16 %v2379, %v2373
    %v2578 = vpack.c.b16 %v2380, %v2374
    %v2579 = vpack.c.b16 %v2387, %v2381
    %v2580 = vpack.c.b16 %v2388, %v2382
    %v2581 = vpack.c.b16 %v2389, %v2383
    %v2582 = vpack.c.b16 %v2390, %v2384
    %v2583 = vpack.c.b16 %v2391, %v2385
    %v2584 = vpack.c.b16 %v2392, %v2386
    %2777 = vmatprep.subr.bf16.mxu0 %v2436
    %2778 = vmatpush1.bf16.msra.mxu0 %v2435
    %2779 = vmatprep.subr.bf16.mxu0 %v2430
    %2780 = vmatpush1.bf16.msra.mxu0 %v2429
    %2781 = vmatprep.subr.bf16.mxu0 %v2424
    %2782 = vmatpush1.bf16.msra.mxu0 %v2423
    %2783 = vmatprep.subr.bf16.mxu0 %v2418
    %2784 = vmatpush1.bf16.msra.mxu0 %v2417
    %2785 = vmatprep.subr.bf16.mxu0 %v2412
    %2786 = vmatpush1.bf16.msra.mxu0 %v2411
    %2787 = vmatprep.subr.bf16.mxu0 %v2406
    %2788 = vmatpush1.bf16.msra.mxu0 %v2405
    %2789 = vmatprep.subr.bf16.mxu0 %v2400
    %2790 = vmatpush1.bf16.msra.mxu0 %v2399
    %2791 = vmatprep.subr.bf16.mxu0 %v2394
    %2792 = vmatpush1.bf16.msra.mxu0 %v2393
    %2793 = vmatprep.subr.bf16.mxu0 %v2484
    %2794 = vmatpush2.bf16.msra.mxu0 %v2483
    %2795 = vmatprep.subr.bf16.mxu0 %v2478
    %2796 = vmatpush2.bf16.msra.mxu0 %v2477
    %2797 = vmatprep.subr.bf16.mxu0 %v2472
    %2798 = vmatpush2.bf16.msra.mxu0 %v2471
    %2799 = vmatprep.subr.bf16.mxu0 %v2466
    %2800 = vmatpush2.bf16.msra.mxu0 %v2465
    %2801 = vmatprep.subr.bf16.mxu0 %v2460
    %2802 = vmatpush2.bf16.msra.mxu0 %v2459
    %2803 = vmatprep.subr.bf16.mxu0 %v2454
    %2804 = vmatpush2.bf16.msra.mxu0 %v2453
    %2805 = vmatprep.subr.bf16.mxu0 %v2448
    %2806 = vmatpush2.bf16.msra.mxu0 %v2447
    %2807 = vmatprep.subr.bf16.mxu0 %v2442
    %2808 = vmatpush2.bf16.msra.mxu0 %v2441
    %2809 = vmatprep.mubr.bf16.mxu0 %v1617
    %2810 = vmatmul.mubr.bf16.gmra.mxu0 %v1616
    %v2811 = vpop.f32.mrf.mxu0
    %v2812 = vadd.f32 0.0, %v2811
    %v2813 = vpop.f32.mrf.mxu0
    %v2814 = vadd.f32 0.0, %v2813
    %v2815 = vpop.f32.mrf.mxu0
    %v2816 = vadd.f32 0.0, %v2815
    %v2817 = vpop.f32.mrf.mxu0
    %v2818 = vadd.f32 0.0, %v2817
    %2819 = vmatprep.mubr.bf16.mxu0 %v1621
    %2820 = vmatmul.mubr.bf16.gmra.mxu0 %v1620
    %v2821 = vpop.f32.mrf.mxu0
    %v2822 = vadd.f32 0.0, %v2821
    %v2823 = vpop.f32.mrf.mxu0
    %v2824 = vadd.f32 0.0, %v2823
    %v2825 = vpop.f32.mrf.mxu0
    %v2826 = vpop.f32.mrf.mxu0
    %2827 = vdwg.mxu0
    %2828 = vmatprep.subr.bf16.mxu0 %v2532
    %2829 = vmatpush1.bf16.msra.mxu0 %v2531
    %2830 = vmatprep.subr.bf16.mxu0 %v2526
    %2831 = vmatpush1.bf16.msra.mxu0 %v2525
    %2832 = vmatprep.subr.bf16.mxu0 %v2520
    %2833 = vmatpush1.bf16.msra.mxu0 %v2519
    %2834 = vmatprep.subr.bf16.mxu0 %v2514
    %2835 = vmatpush1.bf16.msra.mxu0 %v2513
    %2836 = vmatprep.subr.bf16.mxu0 %v2508
    %2837 = vmatpush1.bf16.msra.mxu0 %v2507
    %2838 = vmatprep.subr.bf16.mxu0 %v2502
    %2839 = vmatpush1.bf16.msra.mxu0 %v2501
    %2840 = vmatprep.subr.bf16.mxu0 %v2496
    %2841 = vmatpush1.bf16.msra.mxu0 %v2495
    %2842 = vmatprep.subr.bf16.mxu0 %v2490
    %2843 = vmatpush1.bf16.msra.mxu0 %v2489
    %2844 = vmatprep.subr.bf16.mxu0 %v2580
    %2845 = vmatpush2.bf16.msra.mxu0 %v2579
    %2846 = vmatprep.subr.bf16.mxu0 %v2574
    %2847 = vmatpush2.bf16.msra.mxu0 %v2573
    %2848 = vmatprep.subr.bf16.mxu0 %v2568
    %2849 = vmatpush2.bf16.msra.mxu0 %v2567
    %2850 = vmatprep.subr.bf16.mxu0 %v2562
    %2851 = vmatpush2.bf16.msra.mxu0 %v2561
    %2852 = vmatprep.subr.bf16.mxu0 %v2556
    %2853 = vmatpush2.bf16.msra.mxu0 %v2555
    %2854 = vmatprep.subr.bf16.mxu0 %v2550
    %2855 = vmatpush2.bf16.msra.mxu0 %v2549
    %2856 = vmatprep.subr.bf16.mxu0 %v2544
    %2857 = vmatpush2.bf16.msra.mxu0 %v2543
    %2858 = vmatprep.subr.bf16.mxu0 %v2538
    %2859 = vmatpush2.bf16.msra.mxu0 %v2537
    %2860 = vmatprep.mubr.bf16.mxu0 %v1619
    %2861 = vmatmul.mubr.bf16.gmra.mxu0 %v1618
    %v2862 = vpop.f32.mrf.mxu0
    %v2863 = vadd.f32 %v2812, %v2862
    %v2864 = vpop.f32.mrf.mxu0
    %v2865 = vadd.f32 %v2814, %v2864
    %v2866 = vpop.f32.mrf.mxu0
    %v2867 = vadd.f32 %v2816, %v2866
    %v2868 = vpop.f32.mrf.mxu0
    %v2869 = vadd.f32 %v2818, %v2868
    %2870 = vmatprep.mubr.bf16.mxu0 %v1623
    %2871 = vmatmul.mubr.bf16.gmra.mxu0 %v1622
    %v2872 = vpop.f32.mrf.mxu0
    %v2873 = vadd.f32 %v2822, %v2872
    %v2874 = vpop.f32.mrf.mxu0
    %v2875 = vadd.f32 %v2824, %v2874
    %v2876 = vpop.f32.mrf.mxu0
    %v2877 = vpop.f32.mrf.mxu0
    %2878 = vdwg.mxu0
    %2879 = vmatprep.subr.bf16.mxu0 %v2438
    %2880 = vmatpush1.bf16.msra.mxu0 %v2437
    %2881 = vmatprep.subr.bf16.mxu0 %v2432
    %2882 = vmatpush1.bf16.msra.mxu0 %v2431
    %2883 = vmatprep.subr.bf16.mxu0 %v2426
    %2884 = vmatpush1.bf16.msra.mxu0 %v2425
    %2885 = vmatprep.subr.bf16.mxu0 %v2420
    %2886 = vmatpush1.bf16.msra.mxu0 %v2419
    %2887 = vmatprep.subr.bf16.mxu0 %v2414
    %2888 = vmatpush1.bf16.msra.mxu0 %v2413
    %2889 = vmatprep.subr.bf16.mxu0 %v2408
    %2890 = vmatpush1.bf16.msra.mxu0 %v2407
    %2891 = vmatprep.subr.bf16.mxu0 %v2402
    %2892 = vmatpush1.bf16.msra.mxu0 %v2401
    %2893 = vmatprep.subr.bf16.mxu0 %v2396
    %2894 = vmatpush1.bf16.msra.mxu0 %v2395
    %2895 = vmatprep.subr.bf16.mxu0 %v2486
    %2896 = vmatpush2.bf16.msra.mxu0 %v2485
    %2897 = vmatprep.subr.bf16.mxu0 %v2480
    %2898 = vmatpush2.bf16.msra.mxu0 %v2479
    %2899 = vmatprep.subr.bf16.mxu0 %v2474
    %2900 = vmatpush2.bf16.msra.mxu0 %v2473
    %2901 = vmatprep.subr.bf16.mxu0 %v2468
    %2902 = vmatpush2.bf16.msra.mxu0 %v2467
    %2903 = vmatprep.subr.bf16.mxu0 %v2462
    %2904 = vmatpush2.bf16.msra.mxu0 %v2461
    %2905 = vmatprep.subr.bf16.mxu0 %v2456
    %2906 = vmatpush2.bf16.msra.mxu0 %v2455
    %2907 = vmatprep.subr.bf16.mxu0 %v2450
    %2908 = vmatpush2.bf16.msra.mxu0 %v2449
    %2909 = vmatprep.subr.bf16.mxu0 %v2444
    %2910 = vmatpush2.bf16.msra.mxu0 %v2443
    %2911 = vmatprep.mubr.bf16.mxu0 %v1617
    %2912 = vmatmul.mubr.bf16.gmra.mxu0 %v1616
    %v2913 = vpop.f32.mrf.mxu0
    %v2914 = vadd.f32 0.0, %v2913
    %v2915 = vpop.f32.mrf.mxu0
    %v2916 = vadd.f32 0.0, %v2915
    %v2917 = vpop.f32.mrf.mxu0
    %v2918 = vadd.f32 0.0, %v2917
    %v2919 = vpop.f32.mrf.mxu0
    %v2920 = vadd.f32 0.0, %v2919
    %2921 = vmatprep.mubr.bf16.mxu0 %v1621
    %2922 = vmatmul.mubr.bf16.gmra.mxu0 %v1620
    %v2923 = vpop.f32.mrf.mxu0
    %v2924 = vadd.f32 0.0, %v2923
    %v2925 = vpop.f32.mrf.mxu0
    %v2926 = vadd.f32 0.0, %v2925
    %v2927 = vpop.f32.mrf.mxu0
    %v2928 = vpop.f32.mrf.mxu0
    %2929 = vdwg.mxu0
    %2930 = vmatprep.subr.bf16.mxu0 %v2534
    %2931 = vmatpush1.bf16.msra.mxu0 %v2533
    %2932 = vmatprep.subr.bf16.mxu0 %v2528
    %2933 = vmatpush1.bf16.msra.mxu0 %v2527
    %2934 = vmatprep.subr.bf16.mxu0 %v2522
    %2935 = vmatpush1.bf16.msra.mxu0 %v2521
    %2936 = vmatprep.subr.bf16.mxu0 %v2516
    %2937 = vmatpush1.bf16.msra.mxu0 %v2515
    %2938 = vmatprep.subr.bf16.mxu0 %v2510
    %2939 = vmatpush1.bf16.msra.mxu0 %v2509
    %2940 = vmatprep.subr.bf16.mxu0 %v2504
    %2941 = vmatpush1.bf16.msra.mxu0 %v2503
    %2942 = vmatprep.subr.bf16.mxu0 %v2498
    %2943 = vmatpush1.bf16.msra.mxu0 %v2497
    %2944 = vmatprep.subr.bf16.mxu0 %v2492
    %2945 = vmatpush1.bf16.msra.mxu0 %v2491
    %2946 = vmatprep.subr.bf16.mxu0 %v2582
    %2947 = vmatpush2.bf16.msra.mxu0 %v2581
    %2948 = vmatprep.subr.bf16.mxu0 %v2576
    %2949 = vmatpush2.bf16.msra.mxu0 %v2575
    %2950 = vmatprep.subr.bf16.mxu0 %v2570
    %2951 = vmatpush2.bf16.msra.mxu0 %v2569
    %2952 = vmatprep.subr.bf16.mxu0 %v2564
    %2953 = vmatpush2.bf16.msra.mxu0 %v2563
    %2954 = vmatprep.subr.bf16.mxu0 %v2558
    %2955 = vmatpush2.bf16.msra.mxu0 %v2557
    %2956 = vmatprep.subr.bf16.mxu0 %v2552
    %2957 = vmatpush2.bf16.msra.mxu0 %v2551
    %2958 = vmatprep.subr.bf16.mxu0 %v2546
    %2959 = vmatpush2.bf16.msra.mxu0 %v2545
    %2960 = vmatprep.subr.bf16.mxu0 %v2540
    %2961 = vmatpush2.bf16.msra.mxu0 %v2539
    %2962 = vmatprep.mubr.bf16.mxu0 %v1619
    %2963 = vmatmul.mubr.bf16.gmra.mxu0 %v1618
    %v2964 = vpop.f32.mrf.mxu0
    %v2965 = vadd.f32 %v2914, %v2964
    %v2966 = vpop.f32.mrf.mxu0
    %v2967 = vadd.f32 %v2916, %v2966
    %v2968 = vpop.f32.mrf.mxu0
    %v2969 = vadd.f32 %v2918, %v2968
    %v2970 = vpop.f32.mrf.mxu0
    %v2971 = vadd.f32 %v2920, %v2970
    %2972 = vmatprep.mubr.bf16.mxu0 %v1623
    %2973 = vmatmul.mubr.bf16.gmra.mxu0 %v1622
    %v2974 = vpop.f32.mrf.mxu0
    %v2975 = vadd.f32 %v2924, %v2974
    %v2976 = vpop.f32.mrf.mxu0
    %v2977 = vadd.f32 %v2926, %v2976
    %v2978 = vpop.f32.mrf.mxu0
    %v2979 = vpop.f32.mrf.mxu0
    %2980 = vdwg.mxu0
    %2981 = vmatprep.subr.bf16.mxu0 %v2440
    %2982 = vmatpush1.bf16.msra.mxu0 %v2439
    %2983 = vmatprep.subr.bf16.mxu0 %v2434
    %2984 = vmatpush1.bf16.msra.mxu0 %v2433
    %2985 = vmatprep.subr.bf16.mxu0 %v2428
    %2986 = vmatpush1.bf16.msra.mxu0 %v2427
    %2987 = vmatprep.subr.bf16.mxu0 %v2422
    %2988 = vmatpush1.bf16.msra.mxu0 %v2421
    %2989 = vmatprep.subr.bf16.mxu0 %v2416
    %2990 = vmatpush1.bf16.msra.mxu0 %v2415
    %2991 = vmatprep.subr.bf16.mxu0 %v2410
    %2992 = vmatpush1.bf16.msra.mxu0 %v2409
    %2993 = vmatprep.subr.bf16.mxu0 %v2404
    %2994 = vmatpush1.bf16.msra.mxu0 %v2403
    %2995 = vmatprep.subr.bf16.mxu0 %v2398
    %2996 = vmatpush1.bf16.msra.mxu0 %v2397
    %2997 = vmatprep.subr.bf16.mxu0 %v2488
    %2998 = vmatpush2.bf16.msra.mxu0 %v2487
    %2999 = vmatprep.subr.bf16.mxu0 %v2482
    %3000 = vmatpush2.bf16.msra.mxu0 %v2481
    %3001 = vmatprep.subr.bf16.mxu0 %v2476
    %3002 = vmatpush2.bf16.msra.mxu0 %v2475
    %3003 = vmatprep.subr.bf16.mxu0 %v2470
    %3004 = vmatpush2.bf16.msra.mxu0 %v2469
    %3005 = vmatprep.subr.bf16.mxu0 %v2464
    %3006 = vmatpush2.bf16.msra.mxu0 %v2463
    %3007 = vmatprep.subr.bf16.mxu0 %v2458
    %3008 = vmatpush2.bf16.msra.mxu0 %v2457
    %3009 = vmatprep.subr.bf16.mxu0 %v2452
    %3010 = vmatpush2.bf16.msra.mxu0 %v2451
    %3011 = vmatprep.subr.bf16.mxu0 %v2446
    %3012 = vmatpush2.bf16.msra.mxu0 %v2445
    %3013 = vmatprep.mubr.bf16.mxu0 %v1617
    %3014 = vmatmul.mubr.bf16.gmra.mxu0 %v1616
    %v3015 = vpop.f32.mrf.mxu0
    %v3016 = vadd.f32 0.0, %v3015
    %v3017 = vpop.f32.mrf.mxu0
    %v3018 = vadd.f32 0.0, %v3017
    %v3019 = vpop.f32.mrf.mxu0
    %v3020 = vadd.f32 0.0, %v3019
    %v3021 = vpop.f32.mrf.mxu0
    %v3022 = vadd.f32 0.0, %v3021
    %3023 = vmatprep.mubr.bf16.mxu0 %v1621
    %3024 = vmatmul.mubr.bf16.gmra.mxu0 %v1620
    %v3025 = vpop.f32.mrf.mxu0
    %v3026 = vadd.f32 0.0, %v3025
    %v3027 = vpop.f32.mrf.mxu0
    %v3028 = vadd.f32 0.0, %v3027
    %v3029 = vpop.f32.mrf.mxu0
    %v3030 = vpop.f32.mrf.mxu0
    %3031 = vdwg.mxu0
    %3032 = vmatprep.subr.bf16.mxu0 %v2536
    %3033 = vmatpush1.bf16.msra.mxu0 %v2535
    %3034 = vmatprep.subr.bf16.mxu0 %v2530
    %3035 = vmatpush1.bf16.msra.mxu0 %v2529
    %3036 = vmatprep.subr.bf16.mxu0 %v2524
    %3037 = vmatpush1.bf16.msra.mxu0 %v2523
    %3038 = vmatprep.subr.bf16.mxu0 %v2518
    %3039 = vmatpush1.bf16.msra.mxu0 %v2517
    %3040 = vmatprep.subr.bf16.mxu0 %v2512
    %3041 = vmatpush1.bf16.msra.mxu0 %v2511
    %3042 = vmatprep.subr.bf16.mxu0 %v2506
    %3043 = vmatpush1.bf16.msra.mxu0 %v2505
    %3044 = vmatprep.subr.bf16.mxu0 %v2500
    %3045 = vmatpush1.bf16.msra.mxu0 %v2499
    %3046 = vmatprep.subr.bf16.mxu0 %v2494
    %3047 = vmatpush1.bf16.msra.mxu0 %v2493
    %3048 = vmatprep.subr.bf16.mxu0 %v2584
    %3049 = vmatpush2.bf16.msra.mxu0 %v2583
    %3050 = vmatprep.subr.bf16.mxu0 %v2578
    %3051 = vmatpush2.bf16.msra.mxu0 %v2577
    %3052 = vmatprep.subr.bf16.mxu0 %v2572
    %3053 = vmatpush2.bf16.msra.mxu0 %v2571
    %3054 = vmatprep.subr.bf16.mxu0 %v2566
    %3055 = vmatpush2.bf16.msra.mxu0 %v2565
    %3056 = vmatprep.subr.bf16.mxu0 %v2560
    %3057 = vmatpush2.bf16.msra.mxu0 %v2559
    %3058 = vmatprep.subr.bf16.mxu0 %v2554
    %3059 = vmatpush2.bf16.msra.mxu0 %v2553
    %3060 = vmatprep.subr.bf16.mxu0 %v2548
    %3061 = vmatpush2.bf16.msra.mxu0 %v2547
    %3062 = vmatprep.subr.bf16.mxu0 %v2542
    %3063 = vmatpush2.bf16.msra.mxu0 %v2541
    %3064 = vmatprep.mubr.bf16.mxu0 %v1619
    %3065 = vmatmul.mubr.bf16.gmra.mxu0 %v1618
    %v3066 = vpop.f32.mrf.mxu0
    %v3067 = vadd.f32 %v3016, %v3066
    %v3068 = vpop.f32.mrf.mxu0
    %v3069 = vadd.f32 %v3018, %v3068
    %v3070 = vpop.f32.mrf.mxu0
    %v3071 = vadd.f32 %v3020, %v3070
    %v3072 = vpop.f32.mrf.mxu0
    %v3073 = vadd.f32 %v3022, %v3072
    %3074 = vmatprep.mubr.bf16.mxu0 %v1623
    %3075 = vmatmul.mubr.bf16.gmra.mxu0 %v1622
    %v3076 = vpop.f32.mrf.mxu0
    %v3077 = vadd.f32 %v3026, %v3076
    %v3078 = vpop.f32.mrf.mxu0
    %v3079 = vadd.f32 %v3028, %v3078
    %v3080 = vpop.f32.mrf.mxu0
    %v3081 = vpop.f32.mrf.mxu0
    %3082 = vdwg.mxu0
    %v3275 = vunpack.c.l.b16 %v1245
    %v3276 = vunpack.c.h.b16 %v1245
    %v3277 = vunpack.c.l.b16 %v1246
    %v3278 = vunpack.c.h.b16 %v1246
    %v3279 = vunpack.c.l.b16 %v1247
    %v3280 = vunpack.c.h.b16 %v1247
    %v3281 = vunpack.c.l.b16 %v1248
    %v3282 = vunpack.c.h.b16 %v1248
    %v3283 = vunpack.c.l.b16 %v1249
    %v3284 = vunpack.c.h.b16 %v1249
    %v3285 = vunpack.c.l.b16 %v1250
    %v3286 = vunpack.c.h.b16 %v1250
    %v3287 = vunpack.c.l.b16 %v1251
    %v3288 = vunpack.c.h.b16 %v1251
    %v3289 = vunpack.c.l.b16 %v1252
    %v3290 = vunpack.c.h.b16 %v1252
    %v3291 = vunpack.c.l.b16 %v1253
    %v3292 = vunpack.c.h.b16 %v1253
    %v3293 = vunpack.c.l.b16 %v1254
    %v3294 = vunpack.c.h.b16 %v1254
    %v3295 = vunpack.c.l.b16 %v1255
    %v3296 = vunpack.c.h.b16 %v1255
    %v3297 = vunpack.c.l.b16 %v1256
    %v3298 = vunpack.c.h.b16 %v1256
    %v3299 = vunpack.c.l.b16 %v1257
    %v3300 = vunpack.c.h.b16 %v1257
    %v3301 = vunpack.c.l.b16 %v1258
    %v3302 = vunpack.c.h.b16 %v1258
    %v3303 = vunpack.c.l.b16 %v1259
    %v3304 = vunpack.c.h.b16 %v1259
    %v3305 = vunpack.c.l.b16 %v1260
    %v3306 = vunpack.c.h.b16 %v1260
    %v3307 = vunpack.c.l.b16 %v1261
    %v3308 = vunpack.c.h.b16 %v1261
    %v3309 = vunpack.c.l.b16 %v1262
    %v3310 = vunpack.c.h.b16 %v1262
    %v3311 = vunpack.c.l.b16 %v1263
    %v3312 = vunpack.c.h.b16 %v1263
    %v3313 = vunpack.c.l.b16 %v1264
    %v3314 = vunpack.c.h.b16 %v1264
    %v3315 = vunpack.c.l.b16 %v1265
    %v3316 = vunpack.c.h.b16 %v1265
    %v3317 = vunpack.c.l.b16 %v1266
    %v3318 = vunpack.c.h.b16 %v1266
    %v3319 = vunpack.c.l.b16 %v1267
    %v3320 = vunpack.c.h.b16 %v1267
    %v3321 = vunpack.c.l.b16 %v1268
    %v3322 = vunpack.c.h.b16 %v1268
    %v3323 = vunpack.c.l.b16 %v1269
    %v3324 = vunpack.c.h.b16 %v1269
    %v3325 = vunpack.c.l.b16 %v1270
    %v3326 = vunpack.c.h.b16 %v1270
    %v3327 = vunpack.c.l.b16 %v1271
    %v3328 = vunpack.c.h.b16 %v1271
    %v3329 = vunpack.c.l.b16 %v1272
    %v3330 = vunpack.c.h.b16 %v1272
    %v3331 = vunpack.c.l.b16 %v1273
    %v3332 = vunpack.c.h.b16 %v1273
    %v3333 = vunpack.c.l.b16 %v1274
    %v3334 = vunpack.c.h.b16 %v1274
    %v3335 = vunpack.c.l.b16 %v1275
    %v3336 = vunpack.c.h.b16 %v1275
    %v3337 = vunpack.c.l.b16 %v1276
    %v3338 = vunpack.c.h.b16 %v1276
    %v3339 = vunpack.c.l.b16 %v1277
    %v3340 = vunpack.c.h.b16 %v1277
    %v3341 = vunpack.c.l.b16 %v1278
    %v3342 = vunpack.c.h.b16 %v1278
    %v3343 = vunpack.c.l.b16 %v1279
    %v3344 = vunpack.c.h.b16 %v1279
    %v3345 = vunpack.c.l.b16 %v1280
    %v3346 = vunpack.c.h.b16 %v1280
    %v3347 = vunpack.c.l.b16 %v1281
    %v3348 = vunpack.c.h.b16 %v1281
    %v3349 = vunpack.c.l.b16 %v1282
    %v3350 = vunpack.c.h.b16 %v1282
    %v3351 = vunpack.c.l.b16 %v1283
    %v3352 = vunpack.c.h.b16 %v1283
    %v3353 = vunpack.c.l.b16 %v1284
    %v3354 = vunpack.c.h.b16 %v1284
    %v3355 = vunpack.c.l.b16 %v1285
    %v3356 = vunpack.c.h.b16 %v1285
    %v3357 = vunpack.c.l.b16 %v1286
    %v3358 = vunpack.c.h.b16 %v1286
    %v3359 = vunpack.c.l.b16 %v1287
    %v3360 = vunpack.c.h.b16 %v1287
    %v3361 = vunpack.c.l.b16 %v1288
    %v3362 = vunpack.c.h.b16 %v1288
    %v3363 = vunpack.c.l.b16 %v1289
    %v3364 = vunpack.c.h.b16 %v1289
    %v3365 = vunpack.c.l.b16 %v1290
    %v3366 = vunpack.c.h.b16 %v1290
    %v3367 = vunpack.c.l.b16 %v1291
    %v3368 = vunpack.c.h.b16 %v1291
    %v3369 = vunpack.c.l.b16 %v1292
    %v3370 = vunpack.c.h.b16 %v1292
    %v3371 = vunpack.c.l.b16 %v1293
    %v3372 = vunpack.c.h.b16 %v1293
    %v3373 = vunpack.c.l.b16 %v1294
    %v3374 = vunpack.c.h.b16 %v1294
    %v3375 = vunpack.c.l.b16 %v1295
    %v3376 = vunpack.c.h.b16 %v1295
    %v3377 = vunpack.c.l.b16 %v1296
    %v3378 = vunpack.c.h.b16 %v1296
    %v3379 = vunpack.c.l.b16 %v1297
    %v3380 = vunpack.c.h.b16 %v1297
    %v3381 = vunpack.c.l.b16 %v1298
    %v3382 = vunpack.c.h.b16 %v1298
    %v3383 = vunpack.c.l.b16 %v1299
    %v3384 = vunpack.c.h.b16 %v1299
    %v3385 = vunpack.c.l.b16 %v1300
    %v3386 = vunpack.c.h.b16 %v1300
    %v3387 = vunpack.c.l.b16 %v1301
    %v3388 = vunpack.c.h.b16 %v1301
    %v3389 = vunpack.c.l.b16 %v1302
    %v3390 = vunpack.c.h.b16 %v1302
    %v3391 = vunpack.c.l.b16 %v1303
    %v3392 = vunpack.c.h.b16 %v1303
    %v3393 = vunpack.c.l.b16 %v1304
    %v3394 = vunpack.c.h.b16 %v1304
    %v3395 = vunpack.c.l.b16 %v1305
    %v3396 = vunpack.c.h.b16 %v1305
    %v3397 = vunpack.c.l.b16 %v1306
    %v3398 = vunpack.c.h.b16 %v1306
    %v3399 = vunpack.c.l.b16 %v1307
    %v3400 = vunpack.c.h.b16 %v1307
    %v3401 = vunpack.c.l.b16 %v1308
    %v3402 = vunpack.c.h.b16 %v1308
    %v3403 = vunpack.c.l.b16 %v1309
    %v3404 = vunpack.c.h.b16 %v1309
    %v3405 = vunpack.c.l.b16 %v1310
    %v3406 = vunpack.c.h.b16 %v1310
    %v3407 = vunpack.c.l.b16 %v1311
    %v3408 = vunpack.c.h.b16 %v1311
    %v3409 = vunpack.c.l.b16 %v1312
    %v3410 = vunpack.c.h.b16 %v1312
    %v3411 = vunpack.c.l.b16 %v1313
    %v3412 = vunpack.c.h.b16 %v1313
    %v3413 = vunpack.c.l.b16 %v1314
    %v3414 = vunpack.c.h.b16 %v1314
    %v3415 = vunpack.c.l.b16 %v1315
    %v3416 = vunpack.c.h.b16 %v1315
    %v3417 = vunpack.c.l.b16 %v1316
    %v3418 = vunpack.c.h.b16 %v1316
    %v3419 = vunpack.c.l.b16 %v1317
    %v3420 = vunpack.c.h.b16 %v1317
    %v3421 = vunpack.c.l.b16 %v1318
    %v3422 = vunpack.c.h.b16 %v1318
    %v3423 = vunpack.c.l.b16 %v1319
    %v3424 = vunpack.c.h.b16 %v1319
    %v3425 = vunpack.c.l.b16 %v1320
    %v3426 = vunpack.c.h.b16 %v1320
    %v3427 = vunpack.c.l.b16 %v1321
    %v3428 = vunpack.c.h.b16 %v1321
    %v3429 = vunpack.c.l.b16 %v1322
    %v3430 = vunpack.c.h.b16 %v1322
    %v3431 = vunpack.c.l.b16 %v1323
    %v3432 = vunpack.c.h.b16 %v1323
    %v3433 = vunpack.c.l.b16 %v1324
    %v3434 = vunpack.c.h.b16 %v1324
    %v3435 = vunpack.c.l.b16 %v1325
    %v3436 = vunpack.c.h.b16 %v1325
    %v3437 = vunpack.c.l.b16 %v1326
    %v3438 = vunpack.c.h.b16 %v1326
    %v3439 = vunpack.c.l.b16 %v1327
    %v3440 = vunpack.c.h.b16 %v1327
    %v3441 = vunpack.c.l.b16 %v1328
    %v3442 = vunpack.c.h.b16 %v1328
    %v3443 = vunpack.c.l.b16 %v1329
    %v3444 = vunpack.c.h.b16 %v1329
    %v3445 = vunpack.c.l.b16 %v1330
    %v3446 = vunpack.c.h.b16 %v1330
    %v3447 = vunpack.c.l.b16 %v1331
    %v3448 = vunpack.c.h.b16 %v1331
    %v3449 = vunpack.c.l.b16 %v1332
    %v3450 = vunpack.c.h.b16 %v1332
    %v3451 = vunpack.c.l.b16 %v1333
    %v3452 = vunpack.c.h.b16 %v1333
    %v3453 = vunpack.c.l.b16 %v1334
    %v3454 = vunpack.c.h.b16 %v1334
    %v3455 = vunpack.c.l.b16 %v1335
    %v3456 = vunpack.c.h.b16 %v1335
    %v3457 = vunpack.c.l.b16 %v1336
    %v3458 = vunpack.c.h.b16 %v1336
    %v3459 = vunpack.c.l.b16 %v1337
    %v3460 = vunpack.c.h.b16 %v1337
    %v3461 = vunpack.c.l.b16 %v1338
    %v3462 = vunpack.c.h.b16 %v1338
    %v3463 = vunpack.c.l.b16 %v1339
    %v3464 = vunpack.c.h.b16 %v1339
    %v3465 = vunpack.c.l.b16 %v1340
    %v3466 = vunpack.c.h.b16 %v1340
    %v3467 = vunpack.c.l.b16 %v1341
    %v3468 = vunpack.c.h.b16 %v1341
    %v3469 = vunpack.c.l.b16 %v1342
    %v3470 = vunpack.c.h.b16 %v1342
    %v3471 = vunpack.c.l.b16 %v1343
    %v3472 = vunpack.c.h.b16 %v1343
    %v3473 = vunpack.c.l.b16 %v1344
    %v3474 = vunpack.c.h.b16 %v1344
    %v3475 = vunpack.c.l.b16 %v1345
    %v3476 = vunpack.c.h.b16 %v1345
    %v3477 = vunpack.c.l.b16 %v1346
    %v3478 = vunpack.c.h.b16 %v1346
    %v3479 = vunpack.c.l.b16 %v1347
    %v3480 = vunpack.c.h.b16 %v1347
    %v3481 = vunpack.c.l.b16 %v1348
    %v3482 = vunpack.c.h.b16 %v1348
    %v3483 = vunpack.c.l.b16 %v1349
    %v3484 = vunpack.c.h.b16 %v1349
    %v3485 = vunpack.c.l.b16 %v1350
    %v3486 = vunpack.c.h.b16 %v1350
    %v3487 = vunpack.c.l.b16 %v1351
    %v3488 = vunpack.c.h.b16 %v1351
    %v3489 = vunpack.c.l.b16 %v1352
    %v3490 = vunpack.c.h.b16 %v1352
    %v3491 = vunpack.c.l.b16 %v1353
    %v3492 = vunpack.c.h.b16 %v1353
    %v3493 = vunpack.c.l.b16 %v1354
    %v3494 = vunpack.c.h.b16 %v1354
    %v3495 = vunpack.c.l.b16 %v1355
    %v3496 = vunpack.c.h.b16 %v1355
    %v3497 = vunpack.c.l.b16 %v1356
    %v3498 = vunpack.c.h.b16 %v1356
    %v3499 = vunpack.c.l.b16 %v1357
    %v3500 = vunpack.c.h.b16 %v1357
    %v3501 = vunpack.c.l.b16 %v1358
    %v3502 = vunpack.c.h.b16 %v1358
    %v3503 = vunpack.c.l.b16 %v1359
    %v3504 = vunpack.c.h.b16 %v1359
    %v3505 = vunpack.c.l.b16 %v1360
    %v3506 = vunpack.c.h.b16 %v1360
    %v3507 = vunpack.c.l.b16 %v1361
    %v3508 = vunpack.c.h.b16 %v1361
    %v3509 = vunpack.c.l.b16 %v1362
    %v3510 = vunpack.c.h.b16 %v1362
    %v3511 = vunpack.c.l.b16 %v1363
    %v3512 = vunpack.c.h.b16 %v1363
    %v3513 = vunpack.c.l.b16 %v1364
    %v3514 = vunpack.c.h.b16 %v1364
    %v3515 = vunpack.c.l.b16 %v1365
    %v3516 = vunpack.c.h.b16 %v1365
    %v3517 = vunpack.c.l.b16 %v1366
    %v3518 = vunpack.c.h.b16 %v1366
    %v3519 = vunpack.c.l.b16 %v1367
    %v3520 = vunpack.c.h.b16 %v1367
    %v3521 = vunpack.c.l.b16 %v1368
    %v3522 = vunpack.c.h.b16 %v1368
    %v3523 = vunpack.c.l.b16 %v1369
    %v3524 = vunpack.c.h.b16 %v1369
    %v3525 = vunpack.c.l.b16 %v1370
    %v3526 = vunpack.c.h.b16 %v1370
    %v3527 = vunpack.c.l.b16 %v1371
    %v3528 = vunpack.c.h.b16 %v1371
    %v3529 = vunpack.c.l.b16 %v1372
    %v3530 = vunpack.c.h.b16 %v1372
    %v3531 = vunpack.c.l.b16 %v1373
    %v3532 = vunpack.c.h.b16 %v1373
    %v3533 = vunpack.c.l.b16 %v1374
    %v3534 = vunpack.c.h.b16 %v1374
    %v3535 = vunpack.c.l.b16 %v1375
    %v3536 = vunpack.c.h.b16 %v1375
    %v3537 = vunpack.c.l.b16 %v1376
    %v3538 = vunpack.c.h.b16 %v1376
    %v3539 = vunpack.c.l.b16 %v1377
    %v3540 = vunpack.c.h.b16 %v1377
    %v3541 = vunpack.c.l.b16 %v1378
    %v3542 = vunpack.c.h.b16 %v1378
    %v3543 = vunpack.c.l.b16 %v1379
    %v3544 = vunpack.c.h.b16 %v1379
    %v3545 = vunpack.c.l.b16 %v1380
    %v3546 = vunpack.c.h.b16 %v1380
    %v3547 = vunpack.c.l.b16 %v1381
    %v3548 = vunpack.c.h.b16 %v1381
    %v3549 = vunpack.c.l.b16 %v1382
    %v3550 = vunpack.c.h.b16 %v1382
    %v3551 = vunpack.c.l.b16 %v1383
    %v3552 = vunpack.c.h.b16 %v1383
    %v3553 = vunpack.c.l.b16 %v1384
    %v3554 = vunpack.c.h.b16 %v1384
    %v3555 = vunpack.c.l.b16 %v1385
    %v3556 = vunpack.c.h.b16 %v1385
    %v3557 = vunpack.c.l.b16 %v1386
    %v3558 = vunpack.c.h.b16 %v1386
    %v3559 = vunpack.c.l.b16 %v1387
    %v3560 = vunpack.c.h.b16 %v1387
    %v3561 = vunpack.c.l.b16 %v1388
    %v3562 = vunpack.c.h.b16 %v1388
    %v3563 = vunpack.c.l.b16 %v1389
    %v3564 = vunpack.c.h.b16 %v1389
    %v3565 = vunpack.c.l.b16 %v1390
    %v3566 = vunpack.c.h.b16 %v1390
    %v3567 = vunpack.c.l.b16 %v1391
    %v3568 = vunpack.c.h.b16 %v1391
    %v3569 = vunpack.c.l.b16 %v1392
    %v3570 = vunpack.c.h.b16 %v1392
    %v3571 = vunpack.c.l.b16 %v1393
    %v3572 = vunpack.c.h.b16 %v1393
    %v3573 = vunpack.c.l.b16 %v1394
    %v3574 = vunpack.c.h.b16 %v1394
    %v3575 = vunpack.c.l.b16 %v1395
    %v3576 = vunpack.c.h.b16 %v1395
    %v3577 = vunpack.c.l.b16 %v1396
    %v3578 = vunpack.c.h.b16 %v1396
    %v3579 = vunpack.c.l.b16 %v1397
    %v3580 = vunpack.c.h.b16 %v1397
    %v3581 = vunpack.c.l.b16 %v1398
    %v3582 = vunpack.c.h.b16 %v1398
    %v3583 = vunpack.c.l.b16 %v1399
    %v3584 = vunpack.c.h.b16 %v1399
    %v3585 = vunpack.c.l.b16 %v1400
    %v3586 = vunpack.c.h.b16 %v1400
    %v3587 = vunpack.c.l.b16 %v1401
    %v3588 = vunpack.c.h.b16 %v1401
    %v3589 = vunpack.c.l.b16 %v1402
    %v3590 = vunpack.c.h.b16 %v1402
    %v3591 = vunpack.c.l.b16 %v1403
    %v3592 = vunpack.c.h.b16 %v1403
    %v3593 = vunpack.c.l.b16 %v1404
    %v3594 = vunpack.c.h.b16 %v1404
    %v3595 = vunpack.c.l.b16 %v1405
    %v3596 = vunpack.c.h.b16 %v1405
    %v3597 = vunpack.c.l.b16 %v1406
    %v3598 = vunpack.c.h.b16 %v1406
    %v3599 = vunpack.c.l.b16 %v1407
    %v3600 = vunpack.c.h.b16 %v1407
    %v3601 = vunpack.c.l.b16 %v1408
    %v3602 = vunpack.c.h.b16 %v1408
    %v3603 = vunpack.c.l.b16 %v1409
    %v3604 = vunpack.c.h.b16 %v1409
    %v3605 = vunpack.c.l.b16 %v1410
    %v3606 = vunpack.c.h.b16 %v1410
    %v3607 = vunpack.c.l.b16 %v1411
    %v3608 = vunpack.c.h.b16 %v1411
    %v3609 = vunpack.c.l.b16 %v1412
    %v3610 = vunpack.c.h.b16 %v1412
    %v3611 = vunpack.c.l.b16 %v1413
    %v3612 = vunpack.c.h.b16 %v1413
    %v3613 = vunpack.c.l.b16 %v1414
    %v3614 = vunpack.c.h.b16 %v1414
    %v3615 = vunpack.c.l.b16 %v1415
    %v3616 = vunpack.c.h.b16 %v1415
    %v3617 = vunpack.c.l.b16 %v1416
    %v3618 = vunpack.c.h.b16 %v1416
    %v3619 = vunpack.c.l.b16 %v1417
    %v3620 = vunpack.c.h.b16 %v1417
    %v3621 = vunpack.c.l.b16 %v1418
    %v3622 = vunpack.c.h.b16 %v1418
    %v3623 = vunpack.c.l.b16 %v1419
    %v3624 = vunpack.c.h.b16 %v1419
    %v3625 = vunpack.c.l.b16 %v1420
    %v3626 = vunpack.c.h.b16 %v1420
    %v3627 = vunpack.c.l.b16 %v1421
    %v3628 = vunpack.c.h.b16 %v1421
    %v3629 = vunpack.c.l.b16 %v1422
    %v3630 = vunpack.c.h.b16 %v1422
    %v3631 = vunpack.c.l.b16 %v1423
    %v3632 = vunpack.c.h.b16 %v1423
    %v3633 = vunpack.c.l.b16 %v1424
    %v3634 = vunpack.c.h.b16 %v1424
    %v3635 = vunpack.c.l.b16 %v1425
    %v3636 = vunpack.c.h.b16 %v1425
    %v3637 = vunpack.c.l.b16 %v1426
    %v3638 = vunpack.c.h.b16 %v1426
    %v3639 = vunpack.c.l.b16 %v1427
    %v3640 = vunpack.c.h.b16 %v1427
    %v3641 = vunpack.c.l.b16 %v1428
    %v3642 = vunpack.c.h.b16 %v1428
    %v3643 = vunpack.c.l.b16 %v1429
    %v3644 = vunpack.c.h.b16 %v1429
    %v3645 = vunpack.c.l.b16 %v1430
    %v3646 = vunpack.c.h.b16 %v1430
    %v3647 = vunpack.c.l.b16 %v1431
    %v3648 = vunpack.c.h.b16 %v1431
    %v3649 = vunpack.c.l.b16 %v1432
    %v3650 = vunpack.c.h.b16 %v1432
    %v3651 = vunpack.c.l.b16 %v1433
    %v3652 = vunpack.c.h.b16 %v1433
    %v3653 = vunpack.c.l.b16 %v1434
    %v3654 = vunpack.c.h.b16 %v1434
    %v3655 = vunpack.c.l.b16 %v1435
    %v3656 = vunpack.c.h.b16 %v1435
    %v3657 = vunpack.c.l.b16 %v1436
    %v3658 = vunpack.c.h.b16 %v1436
    %v3659 = vpack.c.b16 %v3281, %v3275
    %v3660 = vpack.c.b16 %v3282, %v3276
    %v3661 = vpack.c.b16 %v3283, %v3277
    %v3662 = vpack.c.b16 %v3284, %v3278
    %v3663 = vpack.c.b16 %v3285, %v3279
    %v3664 = vpack.c.b16 %v3286, %v3280
    %v3665 = vpack.c.b16 %v3293, %v3287
    %v3666 = vpack.c.b16 %v3294, %v3288
    %v3667 = vpack.c.b16 %v3295, %v3289
    %v3668 = vpack.c.b16 %v3296, %v3290
    %v3669 = vpack.c.b16 %v3297, %v3291
    %v3670 = vpack.c.b16 %v3298, %v3292
    %v3671 = vpack.c.b16 %v3305, %v3299
    %v3672 = vpack.c.b16 %v3306, %v3300
    %v3673 = vpack.c.b16 %v3307, %v3301
    %v3674 = vpack.c.b16 %v3308, %v3302
    %v3675 = vpack.c.b16 %v3309, %v3303
    %v3676 = vpack.c.b16 %v3310, %v3304
    %v3677 = vpack.c.b16 %v3317, %v3311
    %v3678 = vpack.c.b16 %v3318, %v3312
    %v3679 = vpack.c.b16 %v3319, %v3313
    %v3680 = vpack.c.b16 %v3320, %v3314
    %v3681 = vpack.c.b16 %v3321, %v3315
    %v3682 = vpack.c.b16 %v3322, %v3316
    %v3683 = vpack.c.b16 %v3329, %v3323
    %v3684 = vpack.c.b16 %v3330, %v3324
    %v3685 = vpack.c.b16 %v3331, %v3325
    %v3686 = vpack.c.b16 %v3332, %v3326
    %v3687 = vpack.c.b16 %v3333, %v3327
    %v3688 = vpack.c.b16 %v3334, %v3328
    %v3689 = vpack.c.b16 %v3341, %v3335
    %v3690 = vpack.c.b16 %v3342, %v3336
    %v3691 = vpack.c.b16 %v3343, %v3337
    %v3692 = vpack.c.b16 %v3344, %v3338
    %v3693 = vpack.c.b16 %v3345, %v3339
    %v3694 = vpack.c.b16 %v3346, %v3340
    %v3695 = vpack.c.b16 %v3353, %v3347
    %v3696 = vpack.c.b16 %v3354, %v3348
    %v3697 = vpack.c.b16 %v3355, %v3349
    %v3698 = vpack.c.b16 %v3356, %v3350
    %v3699 = vpack.c.b16 %v3357, %v3351
    %v3700 = vpack.c.b16 %v3358, %v3352
    %v3701 = vpack.c.b16 %v3365, %v3359
    %v3702 = vpack.c.b16 %v3366, %v3360
    %v3703 = vpack.c.b16 %v3367, %v3361
    %v3704 = vpack.c.b16 %v3368, %v3362
    %v3705 = vpack.c.b16 %v3369, %v3363
    %v3706 = vpack.c.b16 %v3370, %v3364
    %v3707 = vpack.c.b16 %v3377, %v3371
    %v3708 = vpack.c.b16 %v3378, %v3372
    %v3709 = vpack.c.b16 %v3379, %v3373
    %v3710 = vpack.c.b16 %v3380, %v3374
    %v3711 = vpack.c.b16 %v3381, %v3375
    %v3712 = vpack.c.b16 %v3382, %v3376
    %v3713 = vpack.c.b16 %v3389, %v3383
    %v3714 = vpack.c.b16 %v3390, %v3384
    %v3715 = vpack.c.b16 %v3391, %v3385
    %v3716 = vpack.c.b16 %v3392, %v3386
    %v3717 = vpack.c.b16 %v3393, %v3387
    %v3718 = vpack.c.b16 %v3394, %v3388
    %v3719 = vpack.c.b16 %v3401, %v3395
    %v3720 = vpack.c.b16 %v3402, %v3396
    %v3721 = vpack.c.b16 %v3403, %v3397
    %v3722 = vpack.c.b16 %v3404, %v3398
    %v3723 = vpack.c.b16 %v3405, %v3399
    %v3724 = vpack.c.b16 %v3406, %v3400
    %v3725 = vpack.c.b16 %v3413, %v3407
    %v3726 = vpack.c.b16 %v3414, %v3408
    %v3727 = vpack.c.b16 %v3415, %v3409
    %v3728 = vpack.c.b16 %v3416, %v3410
    %v3729 = vpack.c.b16 %v3417, %v3411
    %v3730 = vpack.c.b16 %v3418, %v3412
    %v3731 = vpack.c.b16 %v3425, %v3419
    %v3732 = vpack.c.b16 %v3426, %v3420
    %v3733 = vpack.c.b16 %v3427, %v3421
    %v3734 = vpack.c.b16 %v3428, %v3422
    %v3735 = vpack.c.b16 %v3429, %v3423
    %v3736 = vpack.c.b16 %v3430, %v3424
    %v3737 = vpack.c.b16 %v3437, %v3431
    %v3738 = vpack.c.b16 %v3438, %v3432
    %v3739 = vpack.c.b16 %v3439, %v3433
    %v3740 = vpack.c.b16 %v3440, %v3434
    %v3741 = vpack.c.b16 %v3441, %v3435
    %v3742 = vpack.c.b16 %v3442, %v3436
    %v3743 = vpack.c.b16 %v3449, %v3443
    %v3744 = vpack.c.b16 %v3450, %v3444
    %v3745 = vpack.c.b16 %v3451, %v3445
    %v3746 = vpack.c.b16 %v3452, %v3446
    %v3747 = vpack.c.b16 %v3453, %v3447
    %v3748 = vpack.c.b16 %v3454, %v3448
    %v3749 = vpack.c.b16 %v3461, %v3455
    %v3750 = vpack.c.b16 %v3462, %v3456
    %v3751 = vpack.c.b16 %v3463, %v3457
    %v3752 = vpack.c.b16 %v3464, %v3458
    %v3753 = vpack.c.b16 %v3465, %v3459
    %v3754 = vpack.c.b16 %v3466, %v3460
    %v3755 = vpack.c.b16 %v3473, %v3467
    %v3756 = vpack.c.b16 %v3474, %v3468
    %v3757 = vpack.c.b16 %v3475, %v3469
    %v3758 = vpack.c.b16 %v3476, %v3470
    %v3759 = vpack.c.b16 %v3477, %v3471
    %v3760 = vpack.c.b16 %v3478, %v3472
    %v3761 = vpack.c.b16 %v3485, %v3479
    %v3762 = vpack.c.b16 %v3486, %v3480
    %v3763 = vpack.c.b16 %v3487, %v3481
    %v3764 = vpack.c.b16 %v3488, %v3482
    %v3765 = vpack.c.b16 %v3489, %v3483
    %v3766 = vpack.c.b16 %v3490, %v3484
    %v3767 = vpack.c.b16 %v3497, %v3491
    %v3768 = vpack.c.b16 %v3498, %v3492
    %v3769 = vpack.c.b16 %v3499, %v3493
    %v3770 = vpack.c.b16 %v3500, %v3494
    %v3771 = vpack.c.b16 %v3501, %v3495
    %v3772 = vpack.c.b16 %v3502, %v3496
    %v3773 = vpack.c.b16 %v3509, %v3503
    %v3774 = vpack.c.b16 %v3510, %v3504
    %v3775 = vpack.c.b16 %v3511, %v3505
    %v3776 = vpack.c.b16 %v3512, %v3506
    %v3777 = vpack.c.b16 %v3513, %v3507
    %v3778 = vpack.c.b16 %v3514, %v3508
    %v3779 = vpack.c.b16 %v3521, %v3515
    %v3780 = vpack.c.b16 %v3522, %v3516
    %v3781 = vpack.c.b16 %v3523, %v3517
    %v3782 = vpack.c.b16 %v3524, %v3518
    %v3783 = vpack.c.b16 %v3525, %v3519
    %v3784 = vpack.c.b16 %v3526, %v3520
    %v3785 = vpack.c.b16 %v3533, %v3527
    %v3786 = vpack.c.b16 %v3534, %v3528
    %v3787 = vpack.c.b16 %v3535, %v3529
    %v3788 = vpack.c.b16 %v3536, %v3530
    %v3789 = vpack.c.b16 %v3537, %v3531
    %v3790 = vpack.c.b16 %v3538, %v3532
    %v3791 = vpack.c.b16 %v3545, %v3539
    %v3792 = vpack.c.b16 %v3546, %v3540
    %v3793 = vpack.c.b16 %v3547, %v3541
    %v3794 = vpack.c.b16 %v3548, %v3542
    %v3795 = vpack.c.b16 %v3549, %v3543
    %v3796 = vpack.c.b16 %v3550, %v3544
    %v3797 = vpack.c.b16 %v3557, %v3551
    %v3798 = vpack.c.b16 %v3558, %v3552
    %v3799 = vpack.c.b16 %v3559, %v3553
    %v3800 = vpack.c.b16 %v3560, %v3554
    %v3801 = vpack.c.b16 %v3561, %v3555
    %v3802 = vpack.c.b16 %v3562, %v3556
    %v3803 = vpack.c.b16 %v3569, %v3563
    %v3804 = vpack.c.b16 %v3570, %v3564
    %v3805 = vpack.c.b16 %v3571, %v3565
    %v3806 = vpack.c.b16 %v3572, %v3566
    %v3807 = vpack.c.b16 %v3573, %v3567
    %v3808 = vpack.c.b16 %v3574, %v3568
    %v3809 = vpack.c.b16 %v3581, %v3575
    %v3810 = vpack.c.b16 %v3582, %v3576
    %v3811 = vpack.c.b16 %v3583, %v3577
    %v3812 = vpack.c.b16 %v3584, %v3578
    %v3813 = vpack.c.b16 %v3585, %v3579
    %v3814 = vpack.c.b16 %v3586, %v3580
    %v3815 = vpack.c.b16 %v3593, %v3587
    %v3816 = vpack.c.b16 %v3594, %v3588
    %v3817 = vpack.c.b16 %v3595, %v3589
    %v3818 = vpack.c.b16 %v3596, %v3590
    %v3819 = vpack.c.b16 %v3597, %v3591
    %v3820 = vpack.c.b16 %v3598, %v3592
    %v3821 = vpack.c.b16 %v3605, %v3599
    %v3822 = vpack.c.b16 %v3606, %v3600
    %v3823 = vpack.c.b16 %v3607, %v3601
    %v3824 = vpack.c.b16 %v3608, %v3602
    %v3825 = vpack.c.b16 %v3609, %v3603
    %v3826 = vpack.c.b16 %v3610, %v3604
    %v3827 = vpack.c.b16 %v3617, %v3611
    %v3828 = vpack.c.b16 %v3618, %v3612
    %v3829 = vpack.c.b16 %v3619, %v3613
    %v3830 = vpack.c.b16 %v3620, %v3614
    %v3831 = vpack.c.b16 %v3621, %v3615
    %v3832 = vpack.c.b16 %v3622, %v3616
    %v3833 = vpack.c.b16 %v3629, %v3623
    %v3834 = vpack.c.b16 %v3630, %v3624
    %v3835 = vpack.c.b16 %v3631, %v3625
    %v3836 = vpack.c.b16 %v3632, %v3626
    %v3837 = vpack.c.b16 %v3633, %v3627
    %v3838 = vpack.c.b16 %v3634, %v3628
    %v3839 = vpack.c.b16 %v3641, %v3635
    %v3840 = vpack.c.b16 %v3642, %v3636
    %v3841 = vpack.c.b16 %v3643, %v3637
    %v3842 = vpack.c.b16 %v3644, %v3638
    %v3843 = vpack.c.b16 %v3645, %v3639
    %v3844 = vpack.c.b16 %v3646, %v3640
    %v3845 = vpack.c.b16 %v3653, %v3647
    %v3846 = vpack.c.b16 %v3654, %v3648
    %v3847 = vpack.c.b16 %v3655, %v3649
    %v3848 = vpack.c.b16 %v3656, %v3650
    %v3849 = vpack.c.b16 %v3657, %v3651
    %v3850 = vpack.c.b16 %v3658, %v3652
    %4043 = vmatprep.subr.bf16.mxu0 %v3702
    %4044 = vmatpush1.bf16.msra.mxu0 %v3701
    %4045 = vmatprep.subr.bf16.mxu0 %v3696
    %4046 = vmatpush1.bf16.msra.mxu0 %v3695
    %4047 = vmatprep.subr.bf16.mxu0 %v3690
    %4048 = vmatpush1.bf16.msra.mxu0 %v3689
    %4049 = vmatprep.subr.bf16.mxu0 %v3684
    %4050 = vmatpush1.bf16.msra.mxu0 %v3683
    %4051 = vmatprep.subr.bf16.mxu0 %v3678
    %4052 = vmatpush1.bf16.msra.mxu0 %v3677
    %4053 = vmatprep.subr.bf16.mxu0 %v3672
    %4054 = vmatpush1.bf16.msra.mxu0 %v3671
    %4055 = vmatprep.subr.bf16.mxu0 %v3666
    %4056 = vmatpush1.bf16.msra.mxu0 %v3665
    %4057 = vmatprep.subr.bf16.mxu0 %v3660
    %4058 = vmatpush1.bf16.msra.mxu0 %v3659
    %4059 = vmatprep.subr.bf16.mxu0 %v3750
    %4060 = vmatpush2.bf16.msra.mxu0 %v3749
    %4061 = vmatprep.subr.bf16.mxu0 %v3744
    %4062 = vmatpush2.bf16.msra.mxu0 %v3743
    %4063 = vmatprep.subr.bf16.mxu0 %v3738
    %4064 = vmatpush2.bf16.msra.mxu0 %v3737
    %4065 = vmatprep.subr.bf16.mxu0 %v3732
    %4066 = vmatpush2.bf16.msra.mxu0 %v3731
    %4067 = vmatprep.subr.bf16.mxu0 %v3726
    %4068 = vmatpush2.bf16.msra.mxu0 %v3725
    %4069 = vmatprep.subr.bf16.mxu0 %v3720
    %4070 = vmatpush2.bf16.msra.mxu0 %v3719
    %4071 = vmatprep.subr.bf16.mxu0 %v3714
    %4072 = vmatpush2.bf16.msra.mxu0 %v3713
    %4073 = vmatprep.subr.bf16.mxu0 %v3708
    %4074 = vmatpush2.bf16.msra.mxu0 %v3707
    %4075 = vmatprep.mubr.bf16.mxu0 %v1238
    %4076 = vmatmul.mubr.bf16.gmra.mxu0 %v1237
    %v4077 = vpop.f32.mrf.mxu0
    %v4078 = vadd.f32 %v2863, %v4077
    %v4079 = vpop.f32.mrf.mxu0
    %v4080 = vadd.f32 %v2865, %v4079
    %v4081 = vpop.f32.mrf.mxu0
    %v4082 = vadd.f32 %v2867, %v4081
    %v4083 = vpop.f32.mrf.mxu0
    %v4084 = vadd.f32 %v2869, %v4083
    %4085 = vmatprep.mubr.bf16.mxu0 %v1242
    %4086 = vmatmul.mubr.bf16.gmra.mxu0 %v1241
    %v4087 = vpop.f32.mrf.mxu0
    %v4088 = vadd.f32 %v2873, %v4087
    %v4089 = vpop.f32.mrf.mxu0
    %v4090 = vadd.f32 %v2875, %v4089
    %v4091 = vpop.f32.mrf.mxu0
    %v4092 = vpop.f32.mrf.mxu0
    %4093 = vdwg.mxu0
    %4094 = vmatprep.subr.bf16.mxu0 %v3798
    %4095 = vmatpush1.bf16.msra.mxu0 %v3797
    %4096 = vmatprep.subr.bf16.mxu0 %v3792
    %4097 = vmatpush1.bf16.msra.mxu0 %v3791
    %4098 = vmatprep.subr.bf16.mxu0 %v3786
    %4099 = vmatpush1.bf16.msra.mxu0 %v3785
    %4100 = vmatprep.subr.bf16.mxu0 %v3780
    %4101 = vmatpush1.bf16.msra.mxu0 %v3779
    %4102 = vmatprep.subr.bf16.mxu0 %v3774
    %4103 = vmatpush1.bf16.msra.mxu0 %v3773
    %4104 = vmatprep.subr.bf16.mxu0 %v3768
    %4105 = vmatpush1.bf16.msra.mxu0 %v3767
    %4106 = vmatprep.subr.bf16.mxu0 %v3762
    %4107 = vmatpush1.bf16.msra.mxu0 %v3761
    %4108 = vmatprep.subr.bf16.mxu0 %v3756
    %4109 = vmatpush1.bf16.msra.mxu0 %v3755
    %4110 = vmatprep.subr.bf16.mxu0 %v3846
    %4111 = vmatpush2.bf16.msra.mxu0 %v3845
    %4112 = vmatprep.subr.bf16.mxu0 %v3840
    %4113 = vmatpush2.bf16.msra.mxu0 %v3839
    %4114 = vmatprep.subr.bf16.mxu0 %v3834
    %4115 = vmatpush2.bf16.msra.mxu0 %v3833
    %4116 = vmatprep.subr.bf16.mxu0 %v3828
    %4117 = vmatpush2.bf16.msra.mxu0 %v3827
    %4118 = vmatprep.subr.bf16.mxu0 %v3822
    %4119 = vmatpush2.bf16.msra.mxu0 %v3821
    %4120 = vmatprep.subr.bf16.mxu0 %v3816
    %4121 = vmatpush2.bf16.msra.mxu0 %v3815
    %4122 = vmatprep.subr.bf16.mxu0 %v3810
    %4123 = vmatpush2.bf16.msra.mxu0 %v3809
    %4124 = vmatprep.subr.bf16.mxu0 %v3804
    %4125 = vmatpush2.bf16.msra.mxu0 %v3803
    %4126 = vmatprep.mubr.bf16.mxu0 %v1240
    %4127 = vmatmul.mubr.bf16.gmra.mxu0 %v1239
    %v4128 = vpop.f32.mrf.mxu0
    %v4129 = vadd.f32 %v4078, %v4128
    %v4130 = vpop.f32.mrf.mxu0
    %v4131 = vadd.f32 %v4080, %v4130
    %v4132 = vpop.f32.mrf.mxu0
    %v4133 = vadd.f32 %v4082, %v4132
    %v4134 = vpop.f32.mrf.mxu0
    %v4135 = vadd.f32 %v4084, %v4134
    %4136 = vmatprep.mubr.bf16.mxu0 %v1244
    %4137 = vmatmul.mubr.bf16.gmra.mxu0 %v1243
    %v4138 = vpop.f32.mrf.mxu0
    %v4139 = vadd.f32 %v4088, %v4138
    %v4140 = vpop.f32.mrf.mxu0
    %v4141 = vadd.f32 %v4090, %v4140
    %v4142 = vpop.f32.mrf.mxu0
    %v4143 = vpop.f32.mrf.mxu0
    %4144 = vdwg.mxu0
    %4145 = vmatprep.subr.bf16.mxu0 %v3704
    %4146 = vmatpush1.bf16.msra.mxu0 %v3703
    %4147 = vmatprep.subr.bf16.mxu0 %v3698
    %4148 = vmatpush1.bf16.msra.mxu0 %v3697
    %4149 = vmatprep.subr.bf16.mxu0 %v3692
    %4150 = vmatpush1.bf16.msra.mxu0 %v3691
    %4151 = vmatprep.subr.bf16.mxu0 %v3686
    %4152 = vmatpush1.bf16.msra.mxu0 %v3685
    %4153 = vmatprep.subr.bf16.mxu0 %v3680
    %4154 = vmatpush1.bf16.msra.mxu0 %v3679
    %4155 = vmatprep.subr.bf16.mxu0 %v3674
    %4156 = vmatpush1.bf16.msra.mxu0 %v3673
    %4157 = vmatprep.subr.bf16.mxu0 %v3668
    %4158 = vmatpush1.bf16.msra.mxu0 %v3667
    %4159 = vmatprep.subr.bf16.mxu0 %v3662
    %4160 = vmatpush1.bf16.msra.mxu0 %v3661
    %4161 = vmatprep.subr.bf16.mxu0 %v3752
    %4162 = vmatpush2.bf16.msra.mxu0 %v3751
    %4163 = vmatprep.subr.bf16.mxu0 %v3746
    %4164 = vmatpush2.bf16.msra.mxu0 %v3745
    %4165 = vmatprep.subr.bf16.mxu0 %v3740
    %4166 = vmatpush2.bf16.msra.mxu0 %v3739
    %4167 = vmatprep.subr.bf16.mxu0 %v3734
    %4168 = vmatpush2.bf16.msra.mxu0 %v3733
    %4169 = vmatprep.subr.bf16.mxu0 %v3728
    %4170 = vmatpush2.bf16.msra.mxu0 %v3727
    %4171 = vmatprep.subr.bf16.mxu0 %v3722
    %4172 = vmatpush2.bf16.msra.mxu0 %v3721
    %4173 = vmatprep.subr.bf16.mxu0 %v3716
    %4174 = vmatpush2.bf16.msra.mxu0 %v3715
    %4175 = vmatprep.subr.bf16.mxu0 %v3710
    %4176 = vmatpush2.bf16.msra.mxu0 %v3709
    %4177 = vmatprep.mubr.bf16.mxu0 %v1238
    %4178 = vmatmul.mubr.bf16.gmra.mxu0 %v1237
    %v4179 = vpop.f32.mrf.mxu0
    %v4180 = vadd.f32 %v2965, %v4179
    %v4181 = vpop.f32.mrf.mxu0
    %v4182 = vadd.f32 %v2967, %v4181
    %v4183 = vpop.f32.mrf.mxu0
    %v4184 = vadd.f32 %v2969, %v4183
    %v4185 = vpop.f32.mrf.mxu0
    %v4186 = vadd.f32 %v2971, %v4185
    %4187 = vmatprep.mubr.bf16.mxu0 %v1242
    %4188 = vmatmul.mubr.bf16.gmra.mxu0 %v1241
    %v4189 = vpop.f32.mrf.mxu0
    %v4190 = vadd.f32 %v2975, %v4189
    %v4191 = vpop.f32.mrf.mxu0
    %v4192 = vadd.f32 %v2977, %v4191
    %v4193 = vpop.f32.mrf.mxu0
    %v4194 = vpop.f32.mrf.mxu0
    %4195 = vdwg.mxu0
    %4196 = vmatprep.subr.bf16.mxu0 %v3800
    %4197 = vmatpush1.bf16.msra.mxu0 %v3799
    %4198 = vmatprep.subr.bf16.mxu0 %v3794
    %4199 = vmatpush1.bf16.msra.mxu0 %v3793
    %4200 = vmatprep.subr.bf16.mxu0 %v3788
    %4201 = vmatpush1.bf16.msra.mxu0 %v3787
    %4202 = vmatprep.subr.bf16.mxu0 %v3782
    %4203 = vmatpush1.bf16.msra.mxu0 %v3781
    %4204 = vmatprep.subr.bf16.mxu0 %v3776
    %4205 = vmatpush1.bf16.msra.mxu0 %v3775
    %4206 = vmatprep.subr.bf16.mxu0 %v3770
    %4207 = vmatpush1.bf16.msra.mxu0 %v3769
    %4208 = vmatprep.subr.bf16.mxu0 %v3764
    %4209 = vmatpush1.bf16.msra.mxu0 %v3763
    %4210 = vmatprep.subr.bf16.mxu0 %v3758
    %4211 = vmatpush1.bf16.msra.mxu0 %v3757
    %4212 = vmatprep.subr.bf16.mxu0 %v3848
    %4213 = vmatpush2.bf16.msra.mxu0 %v3847
    %4214 = vmatprep.subr.bf16.mxu0 %v3842
    %4215 = vmatpush2.bf16.msra.mxu0 %v3841
    %4216 = vmatprep.subr.bf16.mxu0 %v3836
    %4217 = vmatpush2.bf16.msra.mxu0 %v3835
    %4218 = vmatprep.subr.bf16.mxu0 %v3830
    %4219 = vmatpush2.bf16.msra.mxu0 %v3829
    %4220 = vmatprep.subr.bf16.mxu0 %v3824
    %4221 = vmatpush2.bf16.msra.mxu0 %v3823
    %4222 = vmatprep.subr.bf16.mxu0 %v3818
    %4223 = vmatpush2.bf16.msra.mxu0 %v3817
    %4224 = vmatprep.subr.bf16.mxu0 %v3812
    %4225 = vmatpush2.bf16.msra.mxu0 %v3811
    %4226 = vmatprep.subr.bf16.mxu0 %v3806
    %4227 = vmatpush2.bf16.msra.mxu0 %v3805
    %4228 = vmatprep.mubr.bf16.mxu0 %v1240
    %4229 = vmatmul.mubr.bf16.gmra.mxu0 %v1239
    %v4230 = vpop.f32.mrf.mxu0
    %v4231 = vadd.f32 %v4180, %v4230
    %v4232 = vpop.f32.mrf.mxu0
    %v4233 = vadd.f32 %v4182, %v4232
    %v4234 = vpop.f32.mrf.mxu0
    %v4235 = vadd.f32 %v4184, %v4234
    %v4236 = vpop.f32.mrf.mxu0
    %v4237 = vadd.f32 %v4186, %v4236
    %4238 = vmatprep.mubr.bf16.mxu0 %v1244
    %4239 = vmatmul.mubr.bf16.gmra.mxu0 %v1243
    %v4240 = vpop.f32.mrf.mxu0
    %v4241 = vadd.f32 %v4190, %v4240
    %v4242 = vpop.f32.mrf.mxu0
    %v4243 = vadd.f32 %v4192, %v4242
    %v4244 = vpop.f32.mrf.mxu0
    %v4245 = vpop.f32.mrf.mxu0
    %4246 = vdwg.mxu0
    %4247 = vmatprep.subr.bf16.mxu0 %v3706
    %4248 = vmatpush1.bf16.msra.mxu0 %v3705
    %4249 = vmatprep.subr.bf16.mxu0 %v3700
    %4250 = vmatpush1.bf16.msra.mxu0 %v3699
    %4251 = vmatprep.subr.bf16.mxu0 %v3694
    %4252 = vmatpush1.bf16.msra.mxu0 %v3693
    %4253 = vmatprep.subr.bf16.mxu0 %v3688
    %4254 = vmatpush1.bf16.msra.mxu0 %v3687
    %4255 = vmatprep.subr.bf16.mxu0 %v3682
    %4256 = vmatpush1.bf16.msra.mxu0 %v3681
    %4257 = vmatprep.subr.bf16.mxu0 %v3676
    %4258 = vmatpush1.bf16.msra.mxu0 %v3675
    %4259 = vmatprep.subr.bf16.mxu0 %v3670
    %4260 = vmatpush1.bf16.msra.mxu0 %v3669
    %4261 = vmatprep.subr.bf16.mxu0 %v3664
    %4262 = vmatpush1.bf16.msra.mxu0 %v3663
    %4263 = vmatprep.subr.bf16.mxu0 %v3754
    %4264 = vmatpush2.bf16.msra.mxu0 %v3753
    %4265 = vmatprep.subr.bf16.mxu0 %v3748
    %4266 = vmatpush2.bf16.msra.mxu0 %v3747
    %4267 = vmatprep.subr.bf16.mxu0 %v3742
    %4268 = vmatpush2.bf16.msra.mxu0 %v3741
    %4269 = vmatprep.subr.bf16.mxu0 %v3736
    %4270 = vmatpush2.bf16.msra.mxu0 %v3735
    %4271 = vmatprep.subr.bf16.mxu0 %v3730
    %4272 = vmatpush2.bf16.msra.mxu0 %v3729
    %4273 = vmatprep.subr.bf16.mxu0 %v3724
    %4274 = vmatpush2.bf16.msra.mxu0 %v3723
    %4275 = vmatprep.subr.bf16.mxu0 %v3718
    %4276 = vmatpush2.bf16.msra.mxu0 %v3717
    %4277 = vmatprep.subr.bf16.mxu0 %v3712
    %4278 = vmatpush2.bf16.msra.mxu0 %v3711
    %4279 = vmatprep.mubr.bf16.mxu0 %v1238
    %4280 = vmatmul.mubr.bf16.gmra.mxu0 %v1237
    %v4281 = vpop.f32.mrf.mxu0
    %v4282 = vadd.f32 %v3067, %v4281
    %v4283 = vpop.f32.mrf.mxu0
    %v4284 = vadd.f32 %v3069, %v4283
    %v4285 = vpop.f32.mrf.mxu0
    %v4286 = vadd.f32 %v3071, %v4285
    %v4287 = vpop.f32.mrf.mxu0
    %v4288 = vadd.f32 %v3073, %v4287
    %4289 = vmatprep.mubr.bf16.mxu0 %v1242
    %4290 = vmatmul.mubr.bf16.gmra.mxu0 %v1241
    %v4291 = vpop.f32.mrf.mxu0
    %v4292 = vadd.f32 %v3077, %v4291
    %v4293 = vpop.f32.mrf.mxu0
    %v4294 = vadd.f32 %v3079, %v4293
    %v4295 = vpop.f32.mrf.mxu0
    %v4296 = vpop.f32.mrf.mxu0
    %4297 = vdwg.mxu0
    %4298 = vmatprep.subr.bf16.mxu0 %v3802
    %4299 = vmatpush1.bf16.msra.mxu0 %v3801
    %4300 = vmatprep.subr.bf16.mxu0 %v3796
    %4301 = vmatpush1.bf16.msra.mxu0 %v3795
    %4302 = vmatprep.subr.bf16.mxu0 %v3790
    %4303 = vmatpush1.bf16.msra.mxu0 %v3789
    %4304 = vmatprep.subr.bf16.mxu0 %v3784
    %4305 = vmatpush1.bf16.msra.mxu0 %v3783
    %4306 = vmatprep.subr.bf16.mxu0 %v3778
    %4307 = vmatpush1.bf16.msra.mxu0 %v3777
    %4308 = vmatprep.subr.bf16.mxu0 %v3772
    %4309 = vmatpush1.bf16.msra.mxu0 %v3771
    %4310 = vmatprep.subr.bf16.mxu0 %v3766
    %4311 = vmatpush1.bf16.msra.mxu0 %v3765
    %4312 = vmatprep.subr.bf16.mxu0 %v3760
    %4313 = vmatpush1.bf16.msra.mxu0 %v3759
    %4314 = vmatprep.subr.bf16.mxu0 %v3850
    %4315 = vmatpush2.bf16.msra.mxu0 %v3849
    %4316 = vmatprep.subr.bf16.mxu0 %v3844
    %4317 = vmatpush2.bf16.msra.mxu0 %v3843
    %4318 = vmatprep.subr.bf16.mxu0 %v3838
    %4319 = vmatpush2.bf16.msra.mxu0 %v3837
    %4320 = vmatprep.subr.bf16.mxu0 %v3832
    %4321 = vmatpush2.bf16.msra.mxu0 %v3831
    %4322 = vmatprep.subr.bf16.mxu0 %v3826
    %4323 = vmatpush2.bf16.msra.mxu0 %v3825
    %4324 = vmatprep.subr.bf16.mxu0 %v3820
    %4325 = vmatpush2.bf16.msra.mxu0 %v3819
    %4326 = vmatprep.subr.bf16.mxu0 %v3814
    %4327 = vmatpush2.bf16.msra.mxu0 %v3813
    %4328 = vmatprep.subr.bf16.mxu0 %v3808
    %4329 = vmatpush2.bf16.msra.mxu0 %v3807
    %4330 = vmatprep.mubr.bf16.mxu0 %v1240
    %4331 = vmatmul.mubr.bf16.gmra.mxu0 %v1239
    %v4332 = vpop.f32.mrf.mxu0
    %v4333 = vadd.f32 %v4282, %v4332
    %v4334 = vpop.f32.mrf.mxu0
    %v4335 = vadd.f32 %v4284, %v4334
    %v4336 = vpop.f32.mrf.mxu0
    %v4337 = vadd.f32 %v4286, %v4336
    %v4338 = vpop.f32.mrf.mxu0
    %v4339 = vadd.f32 %v4288, %v4338
    %4340 = vmatprep.mubr.bf16.mxu0 %v1244
    %4341 = vmatmul.mubr.bf16.gmra.mxu0 %v1243
    %v4342 = vpop.f32.mrf.mxu0
    %v4343 = vadd.f32 %v4292, %v4342
    %v4344 = vpop.f32.mrf.mxu0
    %v4345 = vadd.f32 %v4294, %v4344
    %v4346 = vpop.f32.mrf.mxu0
    %v4347 = vpop.f32.mrf.mxu0
    %4348 = vdwg.mxu0
    %s4349 = scalar_lea.vmem [#allocation10], 48
    %v4350 = vld [vmem:[%s4349] sm:$0xff]
    %v4351 = vld [vmem:[%s4349 + $0x8] sm:$0xff]
    %v4352 = vld [vmem:[%s4349 + $0x10] sm:$0xff]
    %v4354 = vsel %vm1048, %v4350, 0
    %v4357 = vsel %vm1048, %v4351, 0
    %v4360 = vsel %vm1048, %v4352, 0
    %4362 = vmatprep.subr.mxu0 0.0
    %4363 = vmatpush1.msra.mxu0 0.0
    %4364 = vmatprep.subr.mxu0 0.0
    %4365 = vmatpush1.msra.mxu0 0.0
    %4366 = vmatprep.subr.mxu0 0.0
    %4367 = vmatpush1.msra.mxu0 0.0
    %4368 = vmatprep.subr.mxu0 0.0
    %4369 = vmatpush1.msra.mxu0 0.0
    %4370 = vmatprep.subr.mxu0 0.0
    %4371 = vmatpush1.msra.mxu0 0.0
    %4372 = vmatprep.subr.mxu0 0.0
    %4373 = vmatpush1.msra.mxu0 0.0
    %4374 = vmatprep.subr.mxu0 0.0
    %4375 = vmatpush1.msra.mxu0 0.0
    %4376 = vmatprep.subr.mxu0 0.0
    %4377 = vmatpush1.msra.mxu0 0.0
    %4378 = vmatprep.subr.mxu0 0.0
    %4379 = vmatpush1.msra.mxu0 0.0
    %4380 = vmatprep.subr.mxu0 0.0
    %4381 = vmatpush1.msra.mxu0 0.0
    %4382 = vmatprep.subr.mxu0 0.0
    %4383 = vmatpush1.msra.mxu0 0.0
    %4384 = vmatprep.subr.mxu0 0.0
    %4385 = vmatpush1.msra.mxu0 0.0
    %4386 = vmatprep.subr.mxu0 %v1063
    %4387 = vmatpush1.msra.mxu0 %v1060
    %4388 = vmatprep.subr.mxu0 %v1038
    %4389 = vmatpush1.msra.mxu0 %v1037
    %4390 = vmatprep.subr.mxu0 %v1034
    %4391 = vmatpush1.msra.mxu0 %v1033
    %4392 = vmatprep.subr.mxu0 %v1030
    %4393 = vmatpush1.msra.mxu0 %v1029
    %4394 = vmatprep.subr.mxu0 0.0
    %4395 = vmatpush2.msra.mxu0 0.0
    %4396 = vmatprep.subr.mxu0 0.0
    %4397 = vmatpush2.msra.mxu0 0.0
    %4398 = vmatprep.subr.mxu0 0.0
    %4399 = vmatpush2.msra.mxu0 0.0
    %4400 = vmatprep.subr.mxu0 0.0
    %4401 = vmatpush2.msra.mxu0 0.0
    %4402 = vmatprep.subr.mxu0 0.0
    %4403 = vmatpush2.msra.mxu0 0.0
    %4404 = vmatprep.subr.mxu0 0.0
    %4405 = vmatpush2.msra.mxu0 0.0
    %4406 = vmatprep.subr.mxu0 0.0
    %4407 = vmatpush2.msra.mxu0 0.0
    %4408 = vmatprep.subr.mxu0 0.0
    %4409 = vmatpush2.msra.mxu0 0.0
    %4410 = vmatprep.subr.mxu0 0.0
    %4411 = vmatpush2.msra.mxu0 0.0
    %4412 = vmatprep.subr.mxu0 0.0
    %4413 = vmatpush2.msra.mxu0 0.0
    %4414 = vmatprep.subr.mxu0 0.0
    %4415 = vmatpush2.msra.mxu0 0.0
    %4416 = vmatprep.subr.mxu0 0.0
    %4417 = vmatpush2.msra.mxu0 0.0
    %4418 = vmatprep.subr.mxu0 0.0
    %4419 = vmatpush2.msra.mxu0 0.0
    %4420 = vmatprep.subr.mxu0 0.0
    %4421 = vmatpush2.msra.mxu0 0.0
    %4422 = vmatprep.subr.mxu0 0.0
    %4423 = vmatpush2.msra.mxu0 0.0
    %4424 = vmatprep.subr.mxu0 0.0
    %4425 = vmatpush2.msra.mxu0 0.0
    %4426 = vmatprep.mubr.f32.mxu0 0.0
    %4427 = vmatmul.mubr.f32.gmra.mxu0 %v4354
    %v4428 = vpop.f32.mrf.mxu0
    %v4429 = vadd.f32 0.0, %v4428
    %v4430 = vpop.f32.mrf.mxu0
    %v4431 = vadd.f32 0.0, %v4430
    %4432 = vmatprep.mubr.f32.mxu0 0.0
    %4433 = vmatmul.mubr.f32.gmra.mxu0 %v4357
    %v4434 = vpop.f32.mrf.mxu0
    %v4435 = vadd.f32 0.0, %v4434
    %v4436 = vpop.f32.mrf.mxu0
    %v4437 = vadd.f32 0.0, %v4436
    %4438 = vmatprep.mubr.f32.mxu0 0.0
    %4439 = vmatmul.mubr.f32.gmra.mxu0 %v4360
    %v4440 = vpop.f32.mrf.mxu0
    %v4441 = vadd.f32 0.0, %v4440
    %v4442 = vpop.f32.mrf.mxu0
    %v4443 = vadd.f32 0.0, %v4442
    %4444 = vdwg.mxu0
    %4445 = vmatprep.subr.mxu0 0.0
    %4446 = vmatpush1.msra.mxu0 0.0
    %4447 = vmatprep.subr.mxu0 0.0
    %4448 = vmatpush1.msra.mxu0 0.0
    %4449 = vmatprep.subr.mxu0 0.0
    %4450 = vmatpush1.msra.mxu0 0.0
    %4451 = vmatprep.subr.mxu0 0.0
    %4452 = vmatpush1.msra.mxu0 0.0
    %4453 = vmatprep.subr.mxu0 0.0
    %4454 = vmatpush1.msra.mxu0 0.0
    %4455 = vmatprep.subr.mxu0 0.0
    %4456 = vmatpush1.msra.mxu0 0.0
    %4457 = vmatprep.subr.mxu0 0.0
    %4458 = vmatpush1.msra.mxu0 0.0
    %4459 = vmatprep.subr.mxu0 0.0
    %4460 = vmatpush1.msra.mxu0 0.0
    %4461 = vmatprep.subr.mxu0 0.0
    %4462 = vmatpush1.msra.mxu0 0.0
    %4463 = vmatprep.subr.mxu0 0.0
    %4464 = vmatpush1.msra.mxu0 0.0
    %4465 = vmatprep.subr.mxu0 0.0
    %4466 = vmatpush1.msra.mxu0 0.0
    %4467 = vmatprep.subr.mxu0 0.0
    %4468 = vmatpush1.msra.mxu0 0.0
    %4469 = vmatprep.subr.mxu0 %v1069
    %4470 = vmatpush1.msra.mxu0 %v1066
    %4471 = vmatprep.subr.mxu0 %v1040
    %4472 = vmatpush1.msra.mxu0 %v1039
    %4473 = vmatprep.subr.mxu0 %v1036
    %4474 = vmatpush1.msra.mxu0 %v1035
    %4475 = vmatprep.subr.mxu0 %v1032
    %4476 = vmatpush1.msra.mxu0 %v1031
    %4477 = vmatprep.subr.mxu0 0.0
    %4478 = vmatpush2.msra.mxu0 0.0
    %4479 = vmatprep.subr.mxu0 0.0
    %4480 = vmatpush2.msra.mxu0 0.0
    %4481 = vmatprep.subr.mxu0 0.0
    %4482 = vmatpush2.msra.mxu0 0.0
    %4483 = vmatprep.subr.mxu0 0.0
    %4484 = vmatpush2.msra.mxu0 0.0
    %4485 = vmatprep.subr.mxu0 0.0
    %4486 = vmatpush2.msra.mxu0 0.0
    %4487 = vmatprep.subr.mxu0 0.0
    %4488 = vmatpush2.msra.mxu0 0.0
    %4489 = vmatprep.subr.mxu0 0.0
    %4490 = vmatpush2.msra.mxu0 0.0
    %4491 = vmatprep.subr.mxu0 0.0
    %4492 = vmatpush2.msra.mxu0 0.0
    %4493 = vmatprep.subr.mxu0 0.0
    %4494 = vmatpush2.msra.mxu0 0.0
    %4495 = vmatprep.subr.mxu0 0.0
    %4496 = vmatpush2.msra.mxu0 0.0
    %4497 = vmatprep.subr.mxu0 0.0
    %4498 = vmatpush2.msra.mxu0 0.0
    %4499 = vmatprep.subr.mxu0 0.0
    %4500 = vmatpush2.msra.mxu0 0.0
    %4501 = vmatprep.subr.mxu0 0.0
    %4502 = vmatpush2.msra.mxu0 0.0
    %4503 = vmatprep.subr.mxu0 0.0
    %4504 = vmatpush2.msra.mxu0 0.0
    %4505 = vmatprep.subr.mxu0 0.0
    %4506 = vmatpush2.msra.mxu0 0.0
    %4507 = vmatprep.subr.mxu0 0.0
    %4508 = vmatpush2.msra.mxu0 0.0
    %4509 = vmatprep.mubr.f32.mxu0 0.0
    %4510 = vmatmul.mubr.f32.gmra.mxu0 %v4354
    %v4511 = vpop.f32.mrf.mxu0
    %v4512 = vadd.f32 0.0, %v4511
    %v4513 = vpop.f32.mrf.mxu0
    %v4514 = vadd.f32 0.0, %v4513
    %4515 = vmatprep.mubr.f32.mxu0 0.0
    %4516 = vmatmul.mubr.f32.gmra.mxu0 %v4357
    %v4517 = vpop.f32.mrf.mxu0
    %v4518 = vadd.f32 0.0, %v4517
    %v4519 = vpop.f32.mrf.mxu0
    %v4520 = vadd.f32 0.0, %v4519
    %4521 = vmatprep.mubr.f32.mxu0 0.0
    %4522 = vmatmul.mubr.f32.gmra.mxu0 %v4360
    %v4523 = vpop.f32.mrf.mxu0
    %v4524 = vadd.f32 0.0, %v4523
    %v4525 = vpop.f32.mrf.mxu0
    %v4526 = vadd.f32 0.0, %v4525
    %4527 = vdwg.mxu0
    %v4528 = vpack.c.bf16 %v4435, %v4429
    %v4529 = vpack.c.bf16 %v4437, %v4431
    %v4530 = vpack.c.bf16 %v4518, %v4512
    %v4531 = vpack.c.bf16 %v4520, %v4514
    %v4532 = vpack.c.bf16 %v4441, %v4441
    %v4533 = vpack.c.bf16 %v4443, %v4443
    %v4534 = vpack.c.bf16 %v4524, %v4524
    %v4535 = vpack.c.bf16 %v4526, %v4526
    %s4536 = scalar_lea.vmem [#allocation11], 3072
    %v4537 = vld [vmem:[%s4536] sm:$0xff]
    %v4538 = vld [vmem:[%s4536 + $0x8] sm:$0xff]
    %v4539 = vld [vmem:[%s4536 + $0x10] sm:$0xff]
    %v4540 = vld [vmem:[%s4536 + $0x18] sm:$0xff]
    %v4541 = vld [vmem:[%s4536 + $0x20] sm:$0xff]
    %v4542 = vld [vmem:[%s4536 + $0x28] sm:$0xff]
    %v4543 = vld [vmem:[%s4536 + $0x30] sm:$0xff]
    %v4544 = vld [vmem:[%s4536 + $0x38] sm:$0xff]
    %v4545 = vld [vmem:[%s4536 + $0x40] sm:$0xff]
    %v4546 = vld [vmem:[%s4536 + $0x48] sm:$0xff]
    %v4547 = vld [vmem:[%s4536 + $0x50] sm:$0xff]
    %v4548 = vld [vmem:[%s4536 + $0x58] sm:$0xff]
    %v4549 = vld [vmem:[%s4536 + $0x60] sm:$0xff]
    %v4550 = vld [vmem:[%s4536 + $0x68] sm:$0xff]
    %v4551 = vld [vmem:[%s4536 + $0x70] sm:$0xff]
    %v4552 = vld [vmem:[%s4536 + $0x78] sm:$0xff]
    %v4553 = vld [vmem:[%s4536 + $0x80] sm:$0xff]
    %v4554 = vld [vmem:[%s4536 + $0x88] sm:$0xff]
    %v4555 = vld [vmem:[%s4536 + $0x90] sm:$0xff]
    %v4556 = vld [vmem:[%s4536 + $0x98] sm:$0xff]
    %v4557 = vld [vmem:[%s4536 + $0xa0] sm:$0xff]
    %v4558 = vld [vmem:[%s4536 + $0xa8] sm:$0xff]
    %v4559 = vld [vmem:[%s4536 + $0xb0] sm:$0xff]
    %v4560 = vld [vmem:[%s4536 + $0xb8] sm:$0xff]
    %v4561 = vld [vmem:[%s4536 + $0xc0] sm:$0xff]
    %v4562 = vld [vmem:[%s4536 + $0xc8] sm:$0xff]
    %v4563 = vld [vmem:[%s4536 + $0xd0] sm:$0xff]
    %v4564 = vld [vmem:[%s4536 + $0xd8] sm:$0xff]
    %v4565 = vld [vmem:[%s4536 + $0xe0] sm:$0xff]
    %v4566 = vld [vmem:[%s4536 + $0xe8] sm:$0xff]
    %v4567 = vld [vmem:[%s4536 + $0xf0] sm:$0xff]
    %v4568 = vld [vmem:[%s4536 + $0xf8] sm:$0xff]
    %v4569 = vld [vmem:[%s4536 + $0x100] sm:$0xff]
    %v4570 = vld [vmem:[%s4536 + $0x108] sm:$0xff]
    %v4571 = vld [vmem:[%s4536 + $0x110] sm:$0xff]
    %v4572 = vld [vmem:[%s4536 + $0x118] sm:$0xff]
    %v4573 = vld [vmem:[%s4536 + $0x120] sm:$0xff]
    %v4574 = vld [vmem:[%s4536 + $0x128] sm:$0xff]
    %v4575 = vld [vmem:[%s4536 + $0x130] sm:$0xff]
    %v4576 = vld [vmem:[%s4536 + $0x138] sm:$0xff]
    %v4577 = vld [vmem:[%s4536 + $0x140] sm:$0xff]
    %v4578 = vld [vmem:[%s4536 + $0x148] sm:$0xff]
    %v4579 = vld [vmem:[%s4536 + $0x150] sm:$0xff]
    %v4580 = vld [vmem:[%s4536 + $0x158] sm:$0xff]
    %v4581 = vld [vmem:[%s4536 + $0x160] sm:$0xff]
    %v4582 = vld [vmem:[%s4536 + $0x168] sm:$0xff]
    %v4583 = vld [vmem:[%s4536 + $0x170] sm:$0xff]
    %v4584 = vld [vmem:[%s4536 + $0x178] sm:$0xff]
    %v4585 = vld [vmem:[%s4536 + $0x180] sm:$0xff]
    %v4586 = vld [vmem:[%s4536 + $0x188] sm:$0xff]
    %v4587 = vld [vmem:[%s4536 + $0x190] sm:$0xff]
    %v4588 = vld [vmem:[%s4536 + $0x198] sm:$0xff]
    %v4589 = vld [vmem:[%s4536 + $0x1a0] sm:$0xff]
    %v4590 = vld [vmem:[%s4536 + $0x1a8] sm:$0xff]
    %v4591 = vld [vmem:[%s4536 + $0x1b0] sm:$0xff]
    %v4592 = vld [vmem:[%s4536 + $0x1b8] sm:$0xff]
    %v4593 = vld [vmem:[%s4536 + $0x1c0] sm:$0xff]
    %v4594 = vld [vmem:[%s4536 + $0x1c8] sm:$0xff]
    %v4595 = vld [vmem:[%s4536 + $0x1d0] sm:$0xff]
    %v4596 = vld [vmem:[%s4536 + $0x1d8] sm:$0xff]
    %v4597 = vld [vmem:[%s4536 + $0x1e0] sm:$0xff]
    %v4598 = vld [vmem:[%s4536 + $0x1e8] sm:$0xff]
    %v4599 = vld [vmem:[%s4536 + $0x1f0] sm:$0xff]
    %v4600 = vld [vmem:[%s4536 + $0x1f8] sm:$0xff]
    %v4601 = vld [vmem:[%s4536 + $0x200] sm:$0xff]
    %v4602 = vld [vmem:[%s4536 + $0x208] sm:$0xff]
    %v4603 = vld [vmem:[%s4536 + $0x210] sm:$0xff]
    %v4604 = vld [vmem:[%s4536 + $0x218] sm:$0xff]
    %v4605 = vld [vmem:[%s4536 + $0x220] sm:$0xff]
    %v4606 = vld [vmem:[%s4536 + $0x228] sm:$0xff]
    %v4607 = vld [vmem:[%s4536 + $0x230] sm:$0xff]
    %v4608 = vld [vmem:[%s4536 + $0x238] sm:$0xff]
    %v4609 = vld [vmem:[%s4536 + $0x240] sm:$0xff]
    %v4610 = vld [vmem:[%s4536 + $0x248] sm:$0xff]
    %v4611 = vld [vmem:[%s4536 + $0x250] sm:$0xff]
    %v4612 = vld [vmem:[%s4536 + $0x258] sm:$0xff]
    %v4613 = vld [vmem:[%s4536 + $0x260] sm:$0xff]
    %v4614 = vld [vmem:[%s4536 + $0x268] sm:$0xff]
    %v4615 = vld [vmem:[%s4536 + $0x270] sm:$0xff]
    %v4616 = vld [vmem:[%s4536 + $0x278] sm:$0xff]
    %v4617 = vld [vmem:[%s4536 + $0x280] sm:$0xff]
    %v4618 = vld [vmem:[%s4536 + $0x288] sm:$0xff]
    %v4619 = vld [vmem:[%s4536 + $0x290] sm:$0xff]
    %v4620 = vld [vmem:[%s4536 + $0x298] sm:$0xff]
    %v4621 = vld [vmem:[%s4536 + $0x2a0] sm:$0xff]
    %v4622 = vld [vmem:[%s4536 + $0x2a8] sm:$0xff]
    %v4623 = vld [vmem:[%s4536 + $0x2b0] sm:$0xff]
    %v4624 = vld [vmem:[%s4536 + $0x2b8] sm:$0xff]
    %v4625 = vld [vmem:[%s4536 + $0x2c0] sm:$0xff]
    %v4626 = vld [vmem:[%s4536 + $0x2c8] sm:$0xff]
    %v4627 = vld [vmem:[%s4536 + $0x2d0] sm:$0xff]
    %v4628 = vld [vmem:[%s4536 + $0x2d8] sm:$0xff]
    %v4629 = vld [vmem:[%s4536 + $0x2e0] sm:$0xff]
    %v4630 = vld [vmem:[%s4536 + $0x2e8] sm:$0xff]
    %v4631 = vld [vmem:[%s4536 + $0x2f0] sm:$0xff]
    %v4632 = vld [vmem:[%s4536 + $0x2f8] sm:$0xff]
    %v4633 = vld [vmem:[%s4536 + $0x300] sm:$0xff]
    %v4634 = vld [vmem:[%s4536 + $0x308] sm:$0xff]
    %v4635 = vld [vmem:[%s4536 + $0x310] sm:$0xff]
    %v4636 = vld [vmem:[%s4536 + $0x318] sm:$0xff]
    %v4637 = vld [vmem:[%s4536 + $0x320] sm:$0xff]
    %v4638 = vld [vmem:[%s4536 + $0x328] sm:$0xff]
    %v4639 = vld [vmem:[%s4536 + $0x330] sm:$0xff]
    %v4640 = vld [vmem:[%s4536 + $0x338] sm:$0xff]
    %v4641 = vld [vmem:[%s4536 + $0x340] sm:$0xff]
    %v4642 = vld [vmem:[%s4536 + $0x348] sm:$0xff]
    %v4643 = vld [vmem:[%s4536 + $0x350] sm:$0xff]
    %v4644 = vld [vmem:[%s4536 + $0x358] sm:$0xff]
    %v4645 = vld [vmem:[%s4536 + $0x360] sm:$0xff]
    %v4646 = vld [vmem:[%s4536 + $0x368] sm:$0xff]
    %v4647 = vld [vmem:[%s4536 + $0x370] sm:$0xff]
    %v4648 = vld [vmem:[%s4536 + $0x378] sm:$0xff]
    %v4649 = vld [vmem:[%s4536 + $0x380] sm:$0xff]
    %v4650 = vld [vmem:[%s4536 + $0x388] sm:$0xff]
    %v4651 = vld [vmem:[%s4536 + $0x390] sm:$0xff]
    %v4652 = vld [vmem:[%s4536 + $0x398] sm:$0xff]
    %v4653 = vld [vmem:[%s4536 + $0x3a0] sm:$0xff]
    %v4654 = vld [vmem:[%s4536 + $0x3a8] sm:$0xff]
    %v4655 = vld [vmem:[%s4536 + $0x3b0] sm:$0xff]
    %v4656 = vld [vmem:[%s4536 + $0x3b8] sm:$0xff]
    %v4657 = vld [vmem:[%s4536 + $0x3c0] sm:$0xff]
    %v4658 = vld [vmem:[%s4536 + $0x3c8] sm:$0xff]
    %v4659 = vld [vmem:[%s4536 + $0x3d0] sm:$0xff]
    %v4660 = vld [vmem:[%s4536 + $0x3d8] sm:$0xff]
    %v4661 = vld [vmem:[%s4536 + $0x3e0] sm:$0xff]
    %v4662 = vld [vmem:[%s4536 + $0x3e8] sm:$0xff]
    %v4663 = vld [vmem:[%s4536 + $0x3f0] sm:$0xff]
    %v4664 = vld [vmem:[%s4536 + $0x3f8] sm:$0xff]
    %v4665 = vld [vmem:[%s4536 + $0x400] sm:$0xff]
    %v4666 = vld [vmem:[%s4536 + $0x408] sm:$0xff]
    %v4667 = vld [vmem:[%s4536 + $0x410] sm:$0xff]
    %v4668 = vld [vmem:[%s4536 + $0x418] sm:$0xff]
    %v4669 = vld [vmem:[%s4536 + $0x420] sm:$0xff]
    %v4670 = vld [vmem:[%s4536 + $0x428] sm:$0xff]
    %v4671 = vld [vmem:[%s4536 + $0x430] sm:$0xff]
    %v4672 = vld [vmem:[%s4536 + $0x438] sm:$0xff]
    %v4673 = vld [vmem:[%s4536 + $0x440] sm:$0xff]
    %v4674 = vld [vmem:[%s4536 + $0x448] sm:$0xff]
    %v4675 = vld [vmem:[%s4536 + $0x450] sm:$0xff]
    %v4676 = vld [vmem:[%s4536 + $0x458] sm:$0xff]
    %v4677 = vld [vmem:[%s4536 + $0x460] sm:$0xff]
    %v4678 = vld [vmem:[%s4536 + $0x468] sm:$0xff]
    %v4679 = vld [vmem:[%s4536 + $0x470] sm:$0xff]
    %v4680 = vld [vmem:[%s4536 + $0x478] sm:$0xff]
    %v4681 = vld [vmem:[%s4536 + $0x480] sm:$0xff]
    %v4682 = vld [vmem:[%s4536 + $0x488] sm:$0xff]
    %v4683 = vld [vmem:[%s4536 + $0x490] sm:$0xff]
    %v4684 = vld [vmem:[%s4536 + $0x498] sm:$0xff]
    %v4685 = vld [vmem:[%s4536 + $0x4a0] sm:$0xff]
    %v4686 = vld [vmem:[%s4536 + $0x4a8] sm:$0xff]
    %v4687 = vld [vmem:[%s4536 + $0x4b0] sm:$0xff]
    %v4688 = vld [vmem:[%s4536 + $0x4b8] sm:$0xff]
    %v4689 = vld [vmem:[%s4536 + $0x4c0] sm:$0xff]
    %v4690 = vld [vmem:[%s4536 + $0x4c8] sm:$0xff]
    %v4691 = vld [vmem:[%s4536 + $0x4d0] sm:$0xff]
    %v4692 = vld [vmem:[%s4536 + $0x4d8] sm:$0xff]
    %v4693 = vld [vmem:[%s4536 + $0x4e0] sm:$0xff]
    %v4694 = vld [vmem:[%s4536 + $0x4e8] sm:$0xff]
    %v4695 = vld [vmem:[%s4536 + $0x4f0] sm:$0xff]
    %v4696 = vld [vmem:[%s4536 + $0x4f8] sm:$0xff]
    %v4697 = vld [vmem:[%s4536 + $0x500] sm:$0xff]
    %v4698 = vld [vmem:[%s4536 + $0x508] sm:$0xff]
    %v4699 = vld [vmem:[%s4536 + $0x510] sm:$0xff]
    %v4700 = vld [vmem:[%s4536 + $0x518] sm:$0xff]
    %v4701 = vld [vmem:[%s4536 + $0x520] sm:$0xff]
    %v4702 = vld [vmem:[%s4536 + $0x528] sm:$0xff]
    %v4703 = vld [vmem:[%s4536 + $0x530] sm:$0xff]
    %v4704 = vld [vmem:[%s4536 + $0x538] sm:$0xff]
    %v4705 = vld [vmem:[%s4536 + $0x540] sm:$0xff]
    %v4706 = vld [vmem:[%s4536 + $0x548] sm:$0xff]
    %v4707 = vld [vmem:[%s4536 + $0x550] sm:$0xff]
    %v4708 = vld [vmem:[%s4536 + $0x558] sm:$0xff]
    %v4709 = vld [vmem:[%s4536 + $0x560] sm:$0xff]
    %v4710 = vld [vmem:[%s4536 + $0x568] sm:$0xff]
    %v4711 = vld [vmem:[%s4536 + $0x570] sm:$0xff]
    %v4712 = vld [vmem:[%s4536 + $0x578] sm:$0xff]
    %v4713 = vld [vmem:[%s4536 + $0x580] sm:$0xff]
    %v4714 = vld [vmem:[%s4536 + $0x588] sm:$0xff]
    %v4715 = vld [vmem:[%s4536 + $0x590] sm:$0xff]
    %v4716 = vld [vmem:[%s4536 + $0x598] sm:$0xff]
    %v4717 = vld [vmem:[%s4536 + $0x5a0] sm:$0xff]
    %v4718 = vld [vmem:[%s4536 + $0x5a8] sm:$0xff]
    %v4719 = vld [vmem:[%s4536 + $0x5b0] sm:$0xff]
    %v4720 = vld [vmem:[%s4536 + $0x5b8] sm:$0xff]
    %v4721 = vld [vmem:[%s4536 + $0x5c0] sm:$0xff]
    %v4722 = vld [vmem:[%s4536 + $0x5c8] sm:$0xff]
    %v4723 = vld [vmem:[%s4536 + $0x5d0] sm:$0xff]
    %v4724 = vld [vmem:[%s4536 + $0x5d8] sm:$0xff]
    %v4725 = vld [vmem:[%s4536 + $0x5e0] sm:$0xff]
    %v4726 = vld [vmem:[%s4536 + $0x5e8] sm:$0xff]
    %v4727 = vld [vmem:[%s4536 + $0x5f0] sm:$0xff]
    %v4728 = vld [vmem:[%s4536 + $0x5f8] sm:$0xff]
    %v4921 = vunpack.c.l.b16 %v4537
    %v4922 = vunpack.c.h.b16 %v4537
    %v4923 = vunpack.c.l.b16 %v4538
    %v4924 = vunpack.c.h.b16 %v4538
    %v4925 = vunpack.c.l.b16 %v4539
    %v4926 = vunpack.c.h.b16 %v4539
    %v4927 = vunpack.c.l.b16 %v4540
    %v4928 = vunpack.c.h.b16 %v4540
    %v4929 = vunpack.c.l.b16 %v4541
    %v4930 = vunpack.c.h.b16 %v4541
    %v4931 = vunpack.c.l.b16 %v4542
    %v4932 = vunpack.c.h.b16 %v4542
    %v4933 = vunpack.c.l.b16 %v4543
    %v4934 = vunpack.c.h.b16 %v4543
    %v4935 = vunpack.c.l.b16 %v4544
    %v4936 = vunpack.c.h.b16 %v4544
    %v4937 = vunpack.c.l.b16 %v4545
    %v4938 = vunpack.c.h.b16 %v4545
    %v4939 = vunpack.c.l.b16 %v4546
    %v4940 = vunpack.c.h.b16 %v4546
    %v4941 = vunpack.c.l.b16 %v4547
    %v4942 = vunpack.c.h.b16 %v4547
    %v4943 = vunpack.c.l.b16 %v4548
    %v4944 = vunpack.c.h.b16 %v4548
    %v4945 = vunpack.c.l.b16 %v4549
    %v4946 = vunpack.c.h.b16 %v4549
    %v4947 = vunpack.c.l.b16 %v4550
    %v4948 = vunpack.c.h.b16 %v4550
    %v4949 = vunpack.c.l.b16 %v4551
    %v4950 = vunpack.c.h.b16 %v4551
    %v4951 = vunpack.c.l.b16 %v4552
    %v4952 = vunpack.c.h.b16 %v4552
    %v4953 = vunpack.c.l.b16 %v4553
    %v4954 = vunpack.c.h.b16 %v4553
    %v4955 = vunpack.c.l.b16 %v4554
    %v4956 = vunpack.c.h.b16 %v4554
    %v4957 = vunpack.c.l.b16 %v4555
    %v4958 = vunpack.c.h.b16 %v4555
    %v4959 = vunpack.c.l.b16 %v4556
    %v4960 = vunpack.c.h.b16 %v4556
    %v4961 = vunpack.c.l.b16 %v4557
    %v4962 = vunpack.c.h.b16 %v4557
    %v4963 = vunpack.c.l.b16 %v4558
    %v4964 = vunpack.c.h.b16 %v4558
    %v4965 = vunpack.c.l.b16 %v4559
    %v4966 = vunpack.c.h.b16 %v4559
    %v4967 = vunpack.c.l.b16 %v4560
    %v4968 = vunpack.c.h.b16 %v4560
    %v4969 = vunpack.c.l.b16 %v4561
    %v4970 = vunpack.c.h.b16 %v4561
    %v4971 = vunpack.c.l.b16 %v4562
    %v4972 = vunpack.c.h.b16 %v4562
    %v4973 = vunpack.c.l.b16 %v4563
    %v4974 = vunpack.c.h.b16 %v4563
    %v4975 = vunpack.c.l.b16 %v4564
    %v4976 = vunpack.c.h.b16 %v4564
    %v4977 = vunpack.c.l.b16 %v4565
    %v4978 = vunpack.c.h.b16 %v4565
    %v4979 = vunpack.c.l.b16 %v4566
    %v4980 = vunpack.c.h.b16 %v4566
    %v4981 = vunpack.c.l.b16 %v4567
    %v4982 = vunpack.c.h.b16 %v4567
    %v4983 = vunpack.c.l.b16 %v4568
    %v4984 = vunpack.c.h.b16 %v4568
    %v4985 = vunpack.c.l.b16 %v4569
    %v4986 = vunpack.c.h.b16 %v4569
    %v4987 = vunpack.c.l.b16 %v4570
    %v4988 = vunpack.c.h.b16 %v4570
    %v4989 = vunpack.c.l.b16 %v4571
    %v4990 = vunpack.c.h.b16 %v4571
    %v4991 = vunpack.c.l.b16 %v4572
    %v4992 = vunpack.c.h.b16 %v4572
    %v4993 = vunpack.c.l.b16 %v4573
    %v4994 = vunpack.c.h.b16 %v4573
    %v4995 = vunpack.c.l.b16 %v4574
    %v4996 = vunpack.c.h.b16 %v4574
    %v4997 = vunpack.c.l.b16 %v4575
    %v4998 = vunpack.c.h.b16 %v4575
    %v4999 = vunpack.c.l.b16 %v4576
    %v5000 = vunpack.c.h.b16 %v4576
    %v5001 = vunpack.c.l.b16 %v4577
    %v5002 = vunpack.c.h.b16 %v4577
    %v5003 = vunpack.c.l.b16 %v4578
    %v5004 = vunpack.c.h.b16 %v4578
    %v5005 = vunpack.c.l.b16 %v4579
    %v5006 = vunpack.c.h.b16 %v4579
    %v5007 = vunpack.c.l.b16 %v4580
    %v5008 = vunpack.c.h.b16 %v4580
    %v5009 = vunpack.c.l.b16 %v4581
    %v5010 = vunpack.c.h.b16 %v4581
    %v5011 = vunpack.c.l.b16 %v4582
    %v5012 = vunpack.c.h.b16 %v4582
    %v5013 = vunpack.c.l.b16 %v4583
    %v5014 = vunpack.c.h.b16 %v4583
    %v5015 = vunpack.c.l.b16 %v4584
    %v5016 = vunpack.c.h.b16 %v4584
    %v5017 = vunpack.c.l.b16 %v4585
    %v5018 = vunpack.c.h.b16 %v4585
    %v5019 = vunpack.c.l.b16 %v4586
    %v5020 = vunpack.c.h.b16 %v4586
    %v5021 = vunpack.c.l.b16 %v4587
    %v5022 = vunpack.c.h.b16 %v4587
    %v5023 = vunpack.c.l.b16 %v4588
    %v5024 = vunpack.c.h.b16 %v4588
    %v5025 = vunpack.c.l.b16 %v4589
    %v5026 = vunpack.c.h.b16 %v4589
    %v5027 = vunpack.c.l.b16 %v4590
    %v5028 = vunpack.c.h.b16 %v4590
    %v5029 = vunpack.c.l.b16 %v4591
    %v5030 = vunpack.c.h.b16 %v4591
    %v5031 = vunpack.c.l.b16 %v4592
    %v5032 = vunpack.c.h.b16 %v4592
    %v5033 = vunpack.c.l.b16 %v4593
    %v5034 = vunpack.c.h.b16 %v4593
    %v5035 = vunpack.c.l.b16 %v4594
    %v5036 = vunpack.c.h.b16 %v4594
    %v5037 = vunpack.c.l.b16 %v4595
    %v5038 = vunpack.c.h.b16 %v4595
    %v5039 = vunpack.c.l.b16 %v4596
    %v5040 = vunpack.c.h.b16 %v4596
    %v5041 = vunpack.c.l.b16 %v4597
    %v5042 = vunpack.c.h.b16 %v4597
    %v5043 = vunpack.c.l.b16 %v4598
    %v5044 = vunpack.c.h.b16 %v4598
    %v5045 = vunpack.c.l.b16 %v4599
    %v5046 = vunpack.c.h.b16 %v4599
    %v5047 = vunpack.c.l.b16 %v4600
    %v5048 = vunpack.c.h.b16 %v4600
    %v5049 = vunpack.c.l.b16 %v4601
    %v5050 = vunpack.c.h.b16 %v4601
    %v5051 = vunpack.c.l.b16 %v4602
    %v5052 = vunpack.c.h.b16 %v4602
    %v5053 = vunpack.c.l.b16 %v4603
    %v5054 = vunpack.c.h.b16 %v4603
    %v5055 = vunpack.c.l.b16 %v4604
    %v5056 = vunpack.c.h.b16 %v4604
    %v5057 = vunpack.c.l.b16 %v4605
    %v5058 = vunpack.c.h.b16 %v4605
    %v5059 = vunpack.c.l.b16 %v4606
    %v5060 = vunpack.c.h.b16 %v4606
    %v5061 = vunpack.c.l.b16 %v4607
    %v5062 = vunpack.c.h.b16 %v4607
    %v5063 = vunpack.c.l.b16 %v4608
    %v5064 = vunpack.c.h.b16 %v4608
    %v5065 = vunpack.c.l.b16 %v4609
    %v5066 = vunpack.c.h.b16 %v4609
    %v5067 = vunpack.c.l.b16 %v4610
    %v5068 = vunpack.c.h.b16 %v4610
    %v5069 = vunpack.c.l.b16 %v4611
    %v5070 = vunpack.c.h.b16 %v4611
    %v5071 = vunpack.c.l.b16 %v4612
    %v5072 = vunpack.c.h.b16 %v4612
    %v5073 = vunpack.c.l.b16 %v4613
    %v5074 = vunpack.c.h.b16 %v4613
    %v5075 = vunpack.c.l.b16 %v4614
    %v5076 = vunpack.c.h.b16 %v4614
    %v5077 = vunpack.c.l.b16 %v4615
    %v5078 = vunpack.c.h.b16 %v4615
    %v5079 = vunpack.c.l.b16 %v4616
    %v5080 = vunpack.c.h.b16 %v4616
    %v5081 = vunpack.c.l.b16 %v4617
    %v5082 = vunpack.c.h.b16 %v4617
    %v5083 = vunpack.c.l.b16 %v4618
    %v5084 = vunpack.c.h.b16 %v4618
    %v5085 = vunpack.c.l.b16 %v4619
    %v5086 = vunpack.c.h.b16 %v4619
    %v5087 = vunpack.c.l.b16 %v4620
    %v5088 = vunpack.c.h.b16 %v4620
    %v5089 = vunpack.c.l.b16 %v4621
    %v5090 = vunpack.c.h.b16 %v4621
    %v5091 = vunpack.c.l.b16 %v4622
    %v5092 = vunpack.c.h.b16 %v4622
    %v5093 = vunpack.c.l.b16 %v4623
    %v5094 = vunpack.c.h.b16 %v4623
    %v5095 = vunpack.c.l.b16 %v4624
    %v5096 = vunpack.c.h.b16 %v4624
    %v5097 = vunpack.c.l.b16 %v4625
    %v5098 = vunpack.c.h.b16 %v4625
    %v5099 = vunpack.c.l.b16 %v4626
    %v5100 = vunpack.c.h.b16 %v4626
    %v5101 = vunpack.c.l.b16 %v4627
    %v5102 = vunpack.c.h.b16 %v4627
    %v5103 = vunpack.c.l.b16 %v4628
    %v5104 = vunpack.c.h.b16 %v4628
    %v5105 = vunpack.c.l.b16 %v4629
    %v5106 = vunpack.c.h.b16 %v4629
    %v5107 = vunpack.c.l.b16 %v4630
    %v5108 = vunpack.c.h.b16 %v4630
    %v5109 = vunpack.c.l.b16 %v4631
    %v5110 = vunpack.c.h.b16 %v4631
    %v5111 = vunpack.c.l.b16 %v4632
    %v5112 = vunpack.c.h.b16 %v4632
    %v5113 = vunpack.c.l.b16 %v4633
    %v5114 = vunpack.c.h.b16 %v4633
    %v5115 = vunpack.c.l.b16 %v4634
    %v5116 = vunpack.c.h.b16 %v4634
    %v5117 = vunpack.c.l.b16 %v4635
    %v5118 = vunpack.c.h.b16 %v4635
    %v5119 = vunpack.c.l.b16 %v4636
    %v5120 = vunpack.c.h.b16 %v4636
    %v5121 = vunpack.c.l.b16 %v4637
    %v5122 = vunpack.c.h.b16 %v4637
    %v5123 = vunpack.c.l.b16 %v4638
    %v5124 = vunpack.c.h.b16 %v4638
    %v5125 = vunpack.c.l.b16 %v4639
    %v5126 = vunpack.c.h.b16 %v4639
    %v5127 = vunpack.c.l.b16 %v4640
    %v5128 = vunpack.c.h.b16 %v4640
    %v5129 = vunpack.c.l.b16 %v4641
    %v5130 = vunpack.c.h.b16 %v4641
    %v5131 = vunpack.c.l.b16 %v4642
    %v5132 = vunpack.c.h.b16 %v4642
    %v5133 = vunpack.c.l.b16 %v4643
    %v5134 = vunpack.c.h.b16 %v4643
    %v5135 = vunpack.c.l.b16 %v4644
    %v5136 = vunpack.c.h.b16 %v4644
    %v5137 = vunpack.c.l.b16 %v4645
    %v5138 = vunpack.c.h.b16 %v4645
    %v5139 = vunpack.c.l.b16 %v4646
    %v5140 = vunpack.c.h.b16 %v4646
    %v5141 = vunpack.c.l.b16 %v4647
    %v5142 = vunpack.c.h.b16 %v4647
    %v5143 = vunpack.c.l.b16 %v4648
    %v5144 = vunpack.c.h.b16 %v4648
    %v5145 = vunpack.c.l.b16 %v4649
    %v5146 = vunpack.c.h.b16 %v4649
    %v5147 = vunpack.c.l.b16 %v4650
    %v5148 = vunpack.c.h.b16 %v4650
    %v5149 = vunpack.c.l.b16 %v4651
    %v5150 = vunpack.c.h.b16 %v4651
    %v5151 = vunpack.c.l.b16 %v4652
    %v5152 = vunpack.c.h.b16 %v4652
    %v5153 = vunpack.c.l.b16 %v4653
    %v5154 = vunpack.c.h.b16 %v4653
    %v5155 = vunpack.c.l.b16 %v4654
    %v5156 = vunpack.c.h.b16 %v4654
    %v5157 = vunpack.c.l.b16 %v4655
    %v5158 = vunpack.c.h.b16 %v4655
    %v5159 = vunpack.c.l.b16 %v4656
    %v5160 = vunpack.c.h.b16 %v4656
    %v5161 = vunpack.c.l.b16 %v4657
    %v5162 = vunpack.c.h.b16 %v4657
    %v5163 = vunpack.c.l.b16 %v4658
    %v5164 = vunpack.c.h.b16 %v4658
    %v5165 = vunpack.c.l.b16 %v4659
    %v5166 = vunpack.c.h.b16 %v4659
    %v5167 = vunpack.c.l.b16 %v4660
    %v5168 = vunpack.c.h.b16 %v4660
    %v5169 = vunpack.c.l.b16 %v4661
    %v5170 = vunpack.c.h.b16 %v4661
    %v5171 = vunpack.c.l.b16 %v4662
    %v5172 = vunpack.c.h.b16 %v4662
    %v5173 = vunpack.c.l.b16 %v4663
    %v5174 = vunpack.c.h.b16 %v4663
    %v5175 = vunpack.c.l.b16 %v4664
    %v5176 = vunpack.c.h.b16 %v4664
    %v5177 = vunpack.c.l.b16 %v4665
    %v5178 = vunpack.c.h.b16 %v4665
    %v5179 = vunpack.c.l.b16 %v4666
    %v5180 = vunpack.c.h.b16 %v4666
    %v5181 = vunpack.c.l.b16 %v4667
    %v5182 = vunpack.c.h.b16 %v4667
    %v5183 = vunpack.c.l.b16 %v4668
    %v5184 = vunpack.c.h.b16 %v4668
    %v5185 = vunpack.c.l.b16 %v4669
    %v5186 = vunpack.c.h.b16 %v4669
    %v5187 = vunpack.c.l.b16 %v4670
    %v5188 = vunpack.c.h.b16 %v4670
    %v5189 = vunpack.c.l.b16 %v4671
    %v5190 = vunpack.c.h.b16 %v4671
    %v5191 = vunpack.c.l.b16 %v4672
    %v5192 = vunpack.c.h.b16 %v4672
    %v5193 = vunpack.c.l.b16 %v4673
    %v5194 = vunpack.c.h.b16 %v4673
    %v5195 = vunpack.c.l.b16 %v4674
    %v5196 = vunpack.c.h.b16 %v4674
    %v5197 = vunpack.c.l.b16 %v4675
    %v5198 = vunpack.c.h.b16 %v4675
    %v5199 = vunpack.c.l.b16 %v4676
    %v5200 = vunpack.c.h.b16 %v4676
    %v5201 = vunpack.c.l.b16 %v4677
    %v5202 = vunpack.c.h.b16 %v4677
    %v5203 = vunpack.c.l.b16 %v4678
    %v5204 = vunpack.c.h.b16 %v4678
    %v5205 = vunpack.c.l.b16 %v4679
    %v5206 = vunpack.c.h.b16 %v4679
    %v5207 = vunpack.c.l.b16 %v4680
    %v5208 = vunpack.c.h.b16 %v4680
    %v5209 = vunpack.c.l.b16 %v4681
    %v5210 = vunpack.c.h.b16 %v4681
    %v5211 = vunpack.c.l.b16 %v4682
    %v5212 = vunpack.c.h.b16 %v4682
    %v5213 = vunpack.c.l.b16 %v4683
    %v5214 = vunpack.c.h.b16 %v4683
    %v5215 = vunpack.c.l.b16 %v4684
    %v5216 = vunpack.c.h.b16 %v4684
    %v5217 = vunpack.c.l.b16 %v4685
    %v5218 = vunpack.c.h.b16 %v4685
    %v5219 = vunpack.c.l.b16 %v4686
    %v5220 = vunpack.c.h.b16 %v4686
    %v5221 = vunpack.c.l.b16 %v4687
    %v5222 = vunpack.c.h.b16 %v4687
    %v5223 = vunpack.c.l.b16 %v4688
    %v5224 = vunpack.c.h.b16 %v4688
    %v5225 = vunpack.c.l.b16 %v4689
    %v5226 = vunpack.c.h.b16 %v4689
    %v5227 = vunpack.c.l.b16 %v4690
    %v5228 = vunpack.c.h.b16 %v4690
    %v5229 = vunpack.c.l.b16 %v4691
    %v5230 = vunpack.c.h.b16 %v4691
    %v5231 = vunpack.c.l.b16 %v4692
    %v5232 = vunpack.c.h.b16 %v4692
    %v5233 = vunpack.c.l.b16 %v4693
    %v5234 = vunpack.c.h.b16 %v4693
    %v5235 = vunpack.c.l.b16 %v4694
    %v5236 = vunpack.c.h.b16 %v4694
    %v5237 = vunpack.c.l.b16 %v4695
    %v5238 = vunpack.c.h.b16 %v4695
    %v5239 = vunpack.c.l.b16 %v4696
    %v5240 = vunpack.c.h.b16 %v4696
    %v5241 = vunpack.c.l.b16 %v4697
    %v5242 = vunpack.c.h.b16 %v4697
    %v5243 = vunpack.c.l.b16 %v4698
    %v5244 = vunpack.c.h.b16 %v4698
    %v5245 = vunpack.c.l.b16 %v4699
    %v5246 = vunpack.c.h.b16 %v4699
    %v5247 = vunpack.c.l.b16 %v4700
    %v5248 = vunpack.c.h.b16 %v4700
    %v5249 = vunpack.c.l.b16 %v4701
    %v5250 = vunpack.c.h.b16 %v4701
    %v5251 = vunpack.c.l.b16 %v4702
    %v5252 = vunpack.c.h.b16 %v4702
    %v5253 = vunpack.c.l.b16 %v4703
    %v5254 = vunpack.c.h.b16 %v4703
    %v5255 = vunpack.c.l.b16 %v4704
    %v5256 = vunpack.c.h.b16 %v4704
    %v5257 = vunpack.c.l.b16 %v4705
    %v5258 = vunpack.c.h.b16 %v4705
    %v5259 = vunpack.c.l.b16 %v4706
    %v5260 = vunpack.c.h.b16 %v4706
    %v5261 = vunpack.c.l.b16 %v4707
    %v5262 = vunpack.c.h.b16 %v4707
    %v5263 = vunpack.c.l.b16 %v4708
    %v5264 = vunpack.c.h.b16 %v4708
    %v5265 = vunpack.c.l.b16 %v4709
    %v5266 = vunpack.c.h.b16 %v4709
    %v5267 = vunpack.c.l.b16 %v4710
    %v5268 = vunpack.c.h.b16 %v4710
    %v5269 = vunpack.c.l.b16 %v4711
    %v5270 = vunpack.c.h.b16 %v4711
    %v5271 = vunpack.c.l.b16 %v4712
    %v5272 = vunpack.c.h.b16 %v4712
    %v5273 = vunpack.c.l.b16 %v4713
    %v5274 = vunpack.c.h.b16 %v4713
    %v5275 = vunpack.c.l.b16 %v4714
    %v5276 = vunpack.c.h.b16 %v4714
    %v5277 = vunpack.c.l.b16 %v4715
    %v5278 = vunpack.c.h.b16 %v4715
    %v5279 = vunpack.c.l.b16 %v4716
    %v5280 = vunpack.c.h.b16 %v4716
    %v5281 = vunpack.c.l.b16 %v4717
    %v5282 = vunpack.c.h.b16 %v4717
    %v5283 = vunpack.c.l.b16 %v4718
    %v5284 = vunpack.c.h.b16 %v4718
    %v5285 = vunpack.c.l.b16 %v4719
    %v5286 = vunpack.c.h.b16 %v4719
    %v5287 = vunpack.c.l.b16 %v4720
    %v5288 = vunpack.c.h.b16 %v4720
    %v5289 = vunpack.c.l.b16 %v4721
    %v5290 = vunpack.c.h.b16 %v4721
    %v5291 = vunpack.c.l.b16 %v4722
    %v5292 = vunpack.c.h.b16 %v4722
    %v5293 = vunpack.c.l.b16 %v4723
    %v5294 = vunpack.c.h.b16 %v4723
    %v5295 = vunpack.c.l.b16 %v4724
    %v5296 = vunpack.c.h.b16 %v4724
    %v5297 = vunpack.c.l.b16 %v4725
    %v5298 = vunpack.c.h.b16 %v4725
    %v5299 = vunpack.c.l.b16 %v4726
    %v5300 = vunpack.c.h.b16 %v4726
    %v5301 = vunpack.c.l.b16 %v4727
    %v5302 = vunpack.c.h.b16 %v4727
    %v5303 = vunpack.c.l.b16 %v4728
    %v5304 = vunpack.c.h.b16 %v4728
    %v5305 = vpack.c.b16 %v4927, %v4921
    %v5306 = vpack.c.b16 %v4928, %v4922
    %v5307 = vpack.c.b16 %v4929, %v4923
    %v5308 = vpack.c.b16 %v4930, %v4924
    %v5309 = vpack.c.b16 %v4931, %v4925
    %v5310 = vpack.c.b16 %v4932, %v4926
    %v5311 = vpack.c.b16 %v4939, %v4933
    %v5312 = vpack.c.b16 %v4940, %v4934
    %v5313 = vpack.c.b16 %v4941, %v4935
    %v5314 = vpack.c.b16 %v4942, %v4936
    %v5315 = vpack.c.b16 %v4943, %v4937
    %v5316 = vpack.c.b16 %v4944, %v4938
    %v5317 = vpack.c.b16 %v4951, %v4945
    %v5318 = vpack.c.b16 %v4952, %v4946
    %v5319 = vpack.c.b16 %v4953, %v4947
    %v5320 = vpack.c.b16 %v4954, %v4948
    %v5321 = vpack.c.b16 %v4955, %v4949
    %v5322 = vpack.c.b16 %v4956, %v4950
    %v5323 = vpack.c.b16 %v4963, %v4957
    %v5324 = vpack.c.b16 %v4964, %v4958
    %v5325 = vpack.c.b16 %v4965, %v4959
    %v5326 = vpack.c.b16 %v4966, %v4960
    %v5327 = vpack.c.b16 %v4967, %v4961
    %v5328 = vpack.c.b16 %v4968, %v4962
    %v5329 = vpack.c.b16 %v4975, %v4969
    %v5330 = vpack.c.b16 %v4976, %v4970
    %v5331 = vpack.c.b16 %v4977, %v4971
    %v5332 = vpack.c.b16 %v4978, %v4972
    %v5333 = vpack.c.b16 %v4979, %v4973
    %v5334 = vpack.c.b16 %v4980, %v4974
    %v5335 = vpack.c.b16 %v4987, %v4981
    %v5336 = vpack.c.b16 %v4988, %v4982
    %v5337 = vpack.c.b16 %v4989, %v4983
    %v5338 = vpack.c.b16 %v4990, %v4984
    %v5339 = vpack.c.b16 %v4991, %v4985
    %v5340 = vpack.c.b16 %v4992, %v4986
    %v5341 = vpack.c.b16 %v4999, %v4993
    %v5342 = vpack.c.b16 %v5000, %v4994
    %v5343 = vpack.c.b16 %v5001, %v4995
    %v5344 = vpack.c.b16 %v5002, %v4996
    %v5345 = vpack.c.b16 %v5003, %v4997
    %v5346 = vpack.c.b16 %v5004, %v4998
    %v5347 = vpack.c.b16 %v5011, %v5005
    %v5348 = vpack.c.b16 %v5012, %v5006
    %v5349 = vpack.c.b16 %v5013, %v5007
    %v5350 = vpack.c.b16 %v5014, %v5008
    %v5351 = vpack.c.b16 %v5015, %v5009
    %v5352 = vpack.c.b16 %v5016, %v5010
    %v5353 = vpack.c.b16 %v5023, %v5017
    %v5354 = vpack.c.b16 %v5024, %v5018
    %v5355 = vpack.c.b16 %v5025, %v5019
    %v5356 = vpack.c.b16 %v5026, %v5020
    %v5357 = vpack.c.b16 %v5027, %v5021
    %v5358 = vpack.c.b16 %v5028, %v5022
    %v5359 = vpack.c.b16 %v5035, %v5029
    %v5360 = vpack.c.b16 %v5036, %v5030
    %v5361 = vpack.c.b16 %v5037, %v5031
    %v5362 = vpack.c.b16 %v5038, %v5032
    %v5363 = vpack.c.b16 %v5039, %v5033
    %v5364 = vpack.c.b16 %v5040, %v5034
    %v5365 = vpack.c.b16 %v5047, %v5041
    %v5366 = vpack.c.b16 %v5048, %v5042
    %v5367 = vpack.c.b16 %v5049, %v5043
    %v5368 = vpack.c.b16 %v5050, %v5044
    %v5369 = vpack.c.b16 %v5051, %v5045
    %v5370 = vpack.c.b16 %v5052, %v5046
    %v5371 = vpack.c.b16 %v5059, %v5053
    %v5372 = vpack.c.b16 %v5060, %v5054
    %v5373 = vpack.c.b16 %v5061, %v5055
    %v5374 = vpack.c.b16 %v5062, %v5056
    %v5375 = vpack.c.b16 %v5063, %v5057
    %v5376 = vpack.c.b16 %v5064, %v5058
    %v5377 = vpack.c.b16 %v5071, %v5065
    %v5378 = vpack.c.b16 %v5072, %v5066
    %v5379 = vpack.c.b16 %v5073, %v5067
    %v5380 = vpack.c.b16 %v5074, %v5068
    %v5381 = vpack.c.b16 %v5075, %v5069
    %v5382 = vpack.c.b16 %v5076, %v5070
    %v5383 = vpack.c.b16 %v5083, %v5077
    %v5384 = vpack.c.b16 %v5084, %v5078
    %v5385 = vpack.c.b16 %v5085, %v5079
    %v5386 = vpack.c.b16 %v5086, %v5080
    %v5387 = vpack.c.b16 %v5087, %v5081
    %v5388 = vpack.c.b16 %v5088, %v5082
    %v5389 = vpack.c.b16 %v5095, %v5089
    %v5390 = vpack.c.b16 %v5096, %v5090
    %v5391 = vpack.c.b16 %v5097, %v5091
    %v5392 = vpack.c.b16 %v5098, %v5092
    %v5393 = vpack.c.b16 %v5099, %v5093
    %v5394 = vpack.c.b16 %v5100, %v5094
    %v5395 = vpack.c.b16 %v5107, %v5101
    %v5396 = vpack.c.b16 %v5108, %v5102
    %v5397 = vpack.c.b16 %v5109, %v5103
    %v5398 = vpack.c.b16 %v5110, %v5104
    %v5399 = vpack.c.b16 %v5111, %v5105
    %v5400 = vpack.c.b16 %v5112, %v5106
    %v5401 = vpack.c.b16 %v5119, %v5113
    %v5402 = vpack.c.b16 %v5120, %v5114
    %v5403 = vpack.c.b16 %v5121, %v5115
    %v5404 = vpack.c.b16 %v5122, %v5116
    %v5405 = vpack.c.b16 %v5123, %v5117
    %v5406 = vpack.c.b16 %v5124, %v5118
    %v5407 = vpack.c.b16 %v5131, %v5125
    %v5408 = vpack.c.b16 %v5132, %v5126
    %v5409 = vpack.c.b16 %v5133, %v5127
    %v5410 = vpack.c.b16 %v5134, %v5128
    %v5411 = vpack.c.b16 %v5135, %v5129
    %v5412 = vpack.c.b16 %v5136, %v5130
    %v5413 = vpack.c.b16 %v5143, %v5137
    %v5414 = vpack.c.b16 %v5144, %v5138
    %v5415 = vpack.c.b16 %v5145, %v5139
    %v5416 = vpack.c.b16 %v5146, %v5140
    %v5417 = vpack.c.b16 %v5147, %v5141
    %v5418 = vpack.c.b16 %v5148, %v5142
    %v5419 = vpack.c.b16 %v5155, %v5149
    %v5420 = vpack.c.b16 %v5156, %v5150
    %v5421 = vpack.c.b16 %v5157, %v5151
    %v5422 = vpack.c.b16 %v5158, %v5152
    %v5423 = vpack.c.b16 %v5159, %v5153
    %v5424 = vpack.c.b16 %v5160, %v5154
    %v5425 = vpack.c.b16 %v5167, %v5161
    %v5426 = vpack.c.b16 %v5168, %v5162
    %v5427 = vpack.c.b16 %v5169, %v5163
    %v5428 = vpack.c.b16 %v5170, %v5164
    %v5429 = vpack.c.b16 %v5171, %v5165
    %v5430 = vpack.c.b16 %v5172, %v5166
    %v5431 = vpack.c.b16 %v5179, %v5173
    %v5432 = vpack.c.b16 %v5180, %v5174
    %v5433 = vpack.c.b16 %v5181, %v5175
    %v5434 = vpack.c.b16 %v5182, %v5176
    %v5435 = vpack.c.b16 %v5183, %v5177
    %v5436 = vpack.c.b16 %v5184, %v5178
    %v5437 = vpack.c.b16 %v5191, %v5185
    %v5438 = vpack.c.b16 %v5192, %v5186
    %v5439 = vpack.c.b16 %v5193, %v5187
    %v5440 = vpack.c.b16 %v5194, %v5188
    %v5441 = vpack.c.b16 %v5195, %v5189
    %v5442 = vpack.c.b16 %v5196, %v5190
    %v5443 = vpack.c.b16 %v5203, %v5197
    %v5444 = vpack.c.b16 %v5204, %v5198
    %v5445 = vpack.c.b16 %v5205, %v5199
    %v5446 = vpack.c.b16 %v5206, %v5200
    %v5447 = vpack.c.b16 %v5207, %v5201
    %v5448 = vpack.c.b16 %v5208, %v5202
    %v5449 = vpack.c.b16 %v5215, %v5209
    %v5450 = vpack.c.b16 %v5216, %v5210
    %v5451 = vpack.c.b16 %v5217, %v5211
    %v5452 = vpack.c.b16 %v5218, %v5212
    %v5453 = vpack.c.b16 %v5219, %v5213
    %v5454 = vpack.c.b16 %v5220, %v5214
    %v5455 = vpack.c.b16 %v5227, %v5221
    %v5456 = vpack.c.b16 %v5228, %v5222
    %v5457 = vpack.c.b16 %v5229, %v5223
    %v5458 = vpack.c.b16 %v5230, %v5224
    %v5459 = vpack.c.b16 %v5231, %v5225
    %v5460 = vpack.c.b16 %v5232, %v5226
    %v5461 = vpack.c.b16 %v5239, %v5233
    %v5462 = vpack.c.b16 %v5240, %v5234
    %v5463 = vpack.c.b16 %v5241, %v5235
    %v5464 = vpack.c.b16 %v5242, %v5236
    %v5465 = vpack.c.b16 %v5243, %v5237
    %v5466 = vpack.c.b16 %v5244, %v5238
    %v5467 = vpack.c.b16 %v5251, %v5245
    %v5468 = vpack.c.b16 %v5252, %v5246
    %v5469 = vpack.c.b16 %v5253, %v5247
    %v5470 = vpack.c.b16 %v5254, %v5248
    %v5471 = vpack.c.b16 %v5255, %v5249
    %v5472 = vpack.c.b16 %v5256, %v5250
    %v5473 = vpack.c.b16 %v5263, %v5257
    %v5474 = vpack.c.b16 %v5264, %v5258
    %v5475 = vpack.c.b16 %v5265, %v5259
    %v5476 = vpack.c.b16 %v5266, %v5260
    %v5477 = vpack.c.b16 %v5267, %v5261
    %v5478 = vpack.c.b16 %v5268, %v5262
    %v5479 = vpack.c.b16 %v5275, %v5269
    %v5480 = vpack.c.b16 %v5276, %v5270
    %v5481 = vpack.c.b16 %v5277, %v5271
    %v5482 = vpack.c.b16 %v5278, %v5272
    %v5483 = vpack.c.b16 %v5279, %v5273
    %v5484 = vpack.c.b16 %v5280, %v5274
    %v5485 = vpack.c.b16 %v5287, %v5281
    %v5486 = vpack.c.b16 %v5288, %v5282
    %v5487 = vpack.c.b16 %v5289, %v5283
    %v5488 = vpack.c.b16 %v5290, %v5284
    %v5489 = vpack.c.b16 %v5291, %v5285
    %v5490 = vpack.c.b16 %v5292, %v5286
    %v5491 = vpack.c.b16 %v5299, %v5293
    %v5492 = vpack.c.b16 %v5300, %v5294
    %v5493 = vpack.c.b16 %v5301, %v5295
    %v5494 = vpack.c.b16 %v5302, %v5296
    %v5495 = vpack.c.b16 %v5303, %v5297
    %v5496 = vpack.c.b16 %v5304, %v5298
    %5689 = vmatprep.subr.bf16.mxu0 %v5348
    %5690 = vmatpush1.bf16.msra.mxu0 %v5347
    %5691 = vmatprep.subr.bf16.mxu0 %v5342
    %5692 = vmatpush1.bf16.msra.mxu0 %v5341
    %5693 = vmatprep.subr.bf16.mxu0 %v5336
    %5694 = vmatpush1.bf16.msra.mxu0 %v5335
    %5695 = vmatprep.subr.bf16.mxu0 %v5330
    %5696 = vmatpush1.bf16.msra.mxu0 %v5329
    %5697 = vmatprep.subr.bf16.mxu0 %v5324
    %5698 = vmatpush1.bf16.msra.mxu0 %v5323
    %5699 = vmatprep.subr.bf16.mxu0 %v5318
    %5700 = vmatpush1.bf16.msra.mxu0 %v5317
    %5701 = vmatprep.subr.bf16.mxu0 %v5312
    %5702 = vmatpush1.bf16.msra.mxu0 %v5311
    %5703 = vmatprep.subr.bf16.mxu0 %v5306
    %5704 = vmatpush1.bf16.msra.mxu0 %v5305
    %5705 = vmatprep.subr.bf16.mxu0 %v5396
    %5706 = vmatpush2.bf16.msra.mxu0 %v5395
    %5707 = vmatprep.subr.bf16.mxu0 %v5390
    %5708 = vmatpush2.bf16.msra.mxu0 %v5389
    %5709 = vmatprep.subr.bf16.mxu0 %v5384
    %5710 = vmatpush2.bf16.msra.mxu0 %v5383
    %5711 = vmatprep.subr.bf16.mxu0 %v5378
    %5712 = vmatpush2.bf16.msra.mxu0 %v5377
    %5713 = vmatprep.subr.bf16.mxu0 %v5372
    %5714 = vmatpush2.bf16.msra.mxu0 %v5371
    %5715 = vmatprep.subr.bf16.mxu0 %v5366
    %5716 = vmatpush2.bf16.msra.mxu0 %v5365
    %5717 = vmatprep.subr.bf16.mxu0 %v5360
    %5718 = vmatpush2.bf16.msra.mxu0 %v5359
    %5719 = vmatprep.subr.bf16.mxu0 %v5354
    %5720 = vmatpush2.bf16.msra.mxu0 %v5353
    %5721 = vmatprep.mubr.bf16.mxu0 %v4529
    %5722 = vmatmul.mubr.bf16.gmra.mxu0 %v4528
    %v5723 = vpop.f32.mrf.mxu0
    %v5724 = vadd.f32 0.0, %v5723
    %v5725 = vpop.f32.mrf.mxu0
    %v5726 = vadd.f32 0.0, %v5725
    %v5727 = vpop.f32.mrf.mxu0
    %v5728 = vadd.f32 0.0, %v5727
    %v5729 = vpop.f32.mrf.mxu0
    %v5730 = vadd.f32 0.0, %v5729
    %5731 = vmatprep.mubr.bf16.mxu0 %v4533
    %5732 = vmatmul.mubr.bf16.gmra.mxu0 %v4532
    %v5733 = vpop.f32.mrf.mxu0
    %v5734 = vadd.f32 0.0, %v5733
    %v5735 = vpop.f32.mrf.mxu0
    %v5736 = vadd.f32 0.0, %v5735
    %v5737 = vpop.f32.mrf.mxu0
    %v5738 = vpop.f32.mrf.mxu0
    %5739 = vdwg.mxu0
    %5740 = vmatprep.subr.bf16.mxu0 %v5444
    %5741 = vmatpush1.bf16.msra.mxu0 %v5443
    %5742 = vmatprep.subr.bf16.mxu0 %v5438
    %5743 = vmatpush1.bf16.msra.mxu0 %v5437
    %5744 = vmatprep.subr.bf16.mxu0 %v5432
    %5745 = vmatpush1.bf16.msra.mxu0 %v5431
    %5746 = vmatprep.subr.bf16.mxu0 %v5426
    %5747 = vmatpush1.bf16.msra.mxu0 %v5425
    %5748 = vmatprep.subr.bf16.mxu0 %v5420
    %5749 = vmatpush1.bf16.msra.mxu0 %v5419
    %5750 = vmatprep.subr.bf16.mxu0 %v5414
    %5751 = vmatpush1.bf16.msra.mxu0 %v5413
    %5752 = vmatprep.subr.bf16.mxu0 %v5408
    %5753 = vmatpush1.bf16.msra.mxu0 %v5407
    %5754 = vmatprep.subr.bf16.mxu0 %v5402
    %5755 = vmatpush1.bf16.msra.mxu0 %v5401
    %5756 = vmatprep.subr.bf16.mxu0 %v5492
    %5757 = vmatpush2.bf16.msra.mxu0 %v5491
    %5758 = vmatprep.subr.bf16.mxu0 %v5486
    %5759 = vmatpush2.bf16.msra.mxu0 %v5485
    %5760 = vmatprep.subr.bf16.mxu0 %v5480
    %5761 = vmatpush2.bf16.msra.mxu0 %v5479
    %5762 = vmatprep.subr.bf16.mxu0 %v5474
    %5763 = vmatpush2.bf16.msra.mxu0 %v5473
    %5764 = vmatprep.subr.bf16.mxu0 %v5468
    %5765 = vmatpush2.bf16.msra.mxu0 %v5467
    %5766 = vmatprep.subr.bf16.mxu0 %v5462
    %5767 = vmatpush2.bf16.msra.mxu0 %v5461
    %5768 = vmatprep.subr.bf16.mxu0 %v5456
    %5769 = vmatpush2.bf16.msra.mxu0 %v5455
    %5770 = vmatprep.subr.bf16.mxu0 %v5450
    %5771 = vmatpush2.bf16.msra.mxu0 %v5449
    %5772 = vmatprep.mubr.bf16.mxu0 %v4531
    %5773 = vmatmul.mubr.bf16.gmra.mxu0 %v4530
    %v5774 = vpop.f32.mrf.mxu0
    %v5775 = vadd.f32 %v5724, %v5774
    %v5776 = vpop.f32.mrf.mxu0
    %v5777 = vadd.f32 %v5726, %v5776
    %v5778 = vpop.f32.mrf.mxu0
    %v5779 = vadd.f32 %v5728, %v5778
    %v5780 = vpop.f32.mrf.mxu0
    %v5781 = vadd.f32 %v5730, %v5780
    %5782 = vmatprep.mubr.bf16.mxu0 %v4535
    %5783 = vmatmul.mubr.bf16.gmra.mxu0 %v4534
    %v5784 = vpop.f32.mrf.mxu0
    %v5785 = vadd.f32 %v5734, %v5784
    %v5786 = vpop.f32.mrf.mxu0
    %v5787 = vadd.f32 %v5736, %v5786
    %v5788 = vpop.f32.mrf.mxu0
    %v5789 = vpop.f32.mrf.mxu0
    %5790 = vdwg.mxu0
    %5791 = vmatprep.subr.bf16.mxu0 %v5350
    %5792 = vmatpush1.bf16.msra.mxu0 %v5349
    %5793 = vmatprep.subr.bf16.mxu0 %v5344
    %5794 = vmatpush1.bf16.msra.mxu0 %v5343
    %5795 = vmatprep.subr.bf16.mxu0 %v5338
    %5796 = vmatpush1.bf16.msra.mxu0 %v5337
    %5797 = vmatprep.subr.bf16.mxu0 %v5332
    %5798 = vmatpush1.bf16.msra.mxu0 %v5331
    %5799 = vmatprep.subr.bf16.mxu0 %v5326
    %5800 = vmatpush1.bf16.msra.mxu0 %v5325
    %5801 = vmatprep.subr.bf16.mxu0 %v5320
    %5802 = vmatpush1.bf16.msra.mxu0 %v5319
    %5803 = vmatprep.subr.bf16.mxu0 %v5314
    %5804 = vmatpush1.bf16.msra.mxu0 %v5313
    %5805 = vmatprep.subr.bf16.mxu0 %v5308
    %5806 = vmatpush1.bf16.msra.mxu0 %v5307
    %5807 = vmatprep.subr.bf16.mxu0 %v5398
    %5808 = vmatpush2.bf16.msra.mxu0 %v5397
    %5809 = vmatprep.subr.bf16.mxu0 %v5392
    %5810 = vmatpush2.bf16.msra.mxu0 %v5391
    %5811 = vmatprep.subr.bf16.mxu0 %v5386
    %5812 = vmatpush2.bf16.msra.mxu0 %v5385
    %5813 = vmatprep.subr.bf16.mxu0 %v5380
    %5814 = vmatpush2.bf16.msra.mxu0 %v5379
    %5815 = vmatprep.subr.bf16.mxu0 %v5374
    %5816 = vmatpush2.bf16.msra.mxu0 %v5373
    %5817 = vmatprep.subr.bf16.mxu0 %v5368
    %5818 = vmatpush2.bf16.msra.mxu0 %v5367
    %5819 = vmatprep.subr.bf16.mxu0 %v5362
    %5820 = vmatpush2.bf16.msra.mxu0 %v5361
    %5821 = vmatprep.subr.bf16.mxu0 %v5356
    %5822 = vmatpush2.bf16.msra.mxu0 %v5355
    %5823 = vmatprep.mubr.bf16.mxu0 %v4529
    %5824 = vmatmul.mubr.bf16.gmra.mxu0 %v4528
    %v5825 = vpop.f32.mrf.mxu0
    %v5826 = vadd.f32 0.0, %v5825
    %v5827 = vpop.f32.mrf.mxu0
    %v5828 = vadd.f32 0.0, %v5827
    %v5829 = vpop.f32.mrf.mxu0
    %v5830 = vadd.f32 0.0, %v5829
    %v5831 = vpop.f32.mrf.mxu0
    %v5832 = vadd.f32 0.0, %v5831
    %5833 = vmatprep.mubr.bf16.mxu0 %v4533
    %5834 = vmatmul.mubr.bf16.gmra.mxu0 %v4532
    %v5835 = vpop.f32.mrf.mxu0
    %v5836 = vadd.f32 0.0, %v5835
    %v5837 = vpop.f32.mrf.mxu0
    %v5838 = vadd.f32 0.0, %v5837
    %v5839 = vpop.f32.mrf.mxu0
    %v5840 = vpop.f32.mrf.mxu0
    %5841 = vdwg.mxu0
    %5842 = vmatprep.subr.bf16.mxu0 %v5446
    %5843 = vmatpush1.bf16.msra.mxu0 %v5445
    %5844 = vmatprep.subr.bf16.mxu0 %v5440
    %5845 = vmatpush1.bf16.msra.mxu0 %v5439
    %5846 = vmatprep.subr.bf16.mxu0 %v5434
    %5847 = vmatpush1.bf16.msra.mxu0 %v5433
    %5848 = vmatprep.subr.bf16.mxu0 %v5428
    %5849 = vmatpush1.bf16.msra.mxu0 %v5427
    %5850 = vmatprep.subr.bf16.mxu0 %v5422
    %5851 = vmatpush1.bf16.msra.mxu0 %v5421
    %5852 = vmatprep.subr.bf16.mxu0 %v5416
    %5853 = vmatpush1.bf16.msra.mxu0 %v5415
    %5854 = vmatprep.subr.bf16.mxu0 %v5410
    %5855 = vmatpush1.bf16.msra.mxu0 %v5409
    %5856 = vmatprep.subr.bf16.mxu0 %v5404
    %5857 = vmatpush1.bf16.msra.mxu0 %v5403
    %5858 = vmatprep.subr.bf16.mxu0 %v5494
    %5859 = vmatpush2.bf16.msra.mxu0 %v5493
    %5860 = vmatprep.subr.bf16.mxu0 %v5488
    %5861 = vmatpush2.bf16.msra.mxu0 %v5487
    %5862 = vmatprep.subr.bf16.mxu0 %v5482
    %5863 = vmatpush2.bf16.msra.mxu0 %v5481
    %5864 = vmatprep.subr.bf16.mxu0 %v5476
    %5865 = vmatpush2.bf16.msra.mxu0 %v5475
    %5866 = vmatprep.subr.bf16.mxu0 %v5470
    %5867 = vmatpush2.bf16.msra.mxu0 %v5469
    %5868 = vmatprep.subr.bf16.mxu0 %v5464
    %5869 = vmatpush2.bf16.msra.mxu0 %v5463
    %5870 = vmatprep.subr.bf16.mxu0 %v5458
    %5871 = vmatpush2.bf16.msra.mxu0 %v5457
    %5872 = vmatprep.subr.bf16.mxu0 %v5452
    %5873 = vmatpush2.bf16.msra.mxu0 %v5451
    %5874 = vmatprep.mubr.bf16.mxu0 %v4531
    %5875 = vmatmul.mubr.bf16.gmra.mxu0 %v4530
    %v5876 = vpop.f32.mrf.mxu0
    %v5877 = vadd.f32 %v5826, %v5876
    %v5878 = vpop.f32.mrf.mxu0
    %v5879 = vadd.f32 %v5828, %v5878
    %v5880 = vpop.f32.mrf.mxu0
    %v5881 = vadd.f32 %v5830, %v5880
    %v5882 = vpop.f32.mrf.mxu0
    %v5883 = vadd.f32 %v5832, %v5882
    %5884 = vmatprep.mubr.bf16.mxu0 %v4535
    %5885 = vmatmul.mubr.bf16.gmra.mxu0 %v4534
    %v5886 = vpop.f32.mrf.mxu0
    %v5887 = vadd.f32 %v5836, %v5886
    %v5888 = vpop.f32.mrf.mxu0
    %v5889 = vadd.f32 %v5838, %v5888
    %v5890 = vpop.f32.mrf.mxu0
    %v5891 = vpop.f32.mrf.mxu0
    %5892 = vdwg.mxu0
    %5893 = vmatprep.subr.bf16.mxu0 %v5352
    %5894 = vmatpush1.bf16.msra.mxu0 %v5351
    %5895 = vmatprep.subr.bf16.mxu0 %v5346
    %5896 = vmatpush1.bf16.msra.mxu0 %v5345
    %5897 = vmatprep.subr.bf16.mxu0 %v5340
    %5898 = vmatpush1.bf16.msra.mxu0 %v5339
    %5899 = vmatprep.subr.bf16.mxu0 %v5334
    %5900 = vmatpush1.bf16.msra.mxu0 %v5333
    %5901 = vmatprep.subr.bf16.mxu0 %v5328
    %5902 = vmatpush1.bf16.msra.mxu0 %v5327
    %5903 = vmatprep.subr.bf16.mxu0 %v5322
    %5904 = vmatpush1.bf16.msra.mxu0 %v5321
    %5905 = vmatprep.subr.bf16.mxu0 %v5316
    %5906 = vmatpush1.bf16.msra.mxu0 %v5315
    %5907 = vmatprep.subr.bf16.mxu0 %v5310
    %5908 = vmatpush1.bf16.msra.mxu0 %v5309
    %5909 = vmatprep.subr.bf16.mxu0 %v5400
    %5910 = vmatpush2.bf16.msra.mxu0 %v5399
    %5911 = vmatprep.subr.bf16.mxu0 %v5394
    %5912 = vmatpush2.bf16.msra.mxu0 %v5393
    %5913 = vmatprep.subr.bf16.mxu0 %v5388
    %5914 = vmatpush2.bf16.msra.mxu0 %v5387
    %5915 = vmatprep.subr.bf16.mxu0 %v5382
    %5916 = vmatpush2.bf16.msra.mxu0 %v5381
    %5917 = vmatprep.subr.bf16.mxu0 %v5376
    %5918 = vmatpush2.bf16.msra.mxu0 %v5375
    %5919 = vmatprep.subr.bf16.mxu0 %v5370
    %5920 = vmatpush2.bf16.msra.mxu0 %v5369
    %5921 = vmatprep.subr.bf16.mxu0 %v5364
    %5922 = vmatpush2.bf16.msra.mxu0 %v5363
    %5923 = vmatprep.subr.bf16.mxu0 %v5358
    %5924 = vmatpush2.bf16.msra.mxu0 %v5357
    %5925 = vmatprep.mubr.bf16.mxu0 %v4529
    %5926 = vmatmul.mubr.bf16.gmra.mxu0 %v4528
    %v5927 = vpop.f32.mrf.mxu0
    %v5928 = vadd.f32 0.0, %v5927
    %v5929 = vpop.f32.mrf.mxu0
    %v5930 = vadd.f32 0.0, %v5929
    %v5931 = vpop.f32.mrf.mxu0
    %v5932 = vadd.f32 0.0, %v5931
    %v5933 = vpop.f32.mrf.mxu0
    %v5934 = vadd.f32 0.0, %v5933
    %5935 = vmatprep.mubr.bf16.mxu0 %v4533
    %5936 = vmatmul.mubr.bf16.gmra.mxu0 %v4532
    %v5937 = vpop.f32.mrf.mxu0
    %v5938 = vadd.f32 0.0, %v5937
    %v5939 = vpop.f32.mrf.mxu0
    %v5940 = vadd.f32 0.0, %v5939
    %v5941 = vpop.f32.mrf.mxu0
    %v5942 = vpop.f32.mrf.mxu0
    %5943 = vdwg.mxu0
    %5944 = vmatprep.subr.bf16.mxu0 %v5448
    %5945 = vmatpush1.bf16.msra.mxu0 %v5447
    %5946 = vmatprep.subr.bf16.mxu0 %v5442
    %5947 = vmatpush1.bf16.msra.mxu0 %v5441
    %5948 = vmatprep.subr.bf16.mxu0 %v5436
    %5949 = vmatpush1.bf16.msra.mxu0 %v5435
    %5950 = vmatprep.subr.bf16.mxu0 %v5430
    %5951 = vmatpush1.bf16.msra.mxu0 %v5429
    %5952 = vmatprep.subr.bf16.mxu0 %v5424
    %5953 = vmatpush1.bf16.msra.mxu0 %v5423
    %5954 = vmatprep.subr.bf16.mxu0 %v5418
    %5955 = vmatpush1.bf16.msra.mxu0 %v5417
    %5956 = vmatprep.subr.bf16.mxu0 %v5412
    %5957 = vmatpush1.bf16.msra.mxu0 %v5411
    %5958 = vmatprep.subr.bf16.mxu0 %v5406
    %5959 = vmatpush1.bf16.msra.mxu0 %v5405
    %5960 = vmatprep.subr.bf16.mxu0 %v5496
    %5961 = vmatpush2.bf16.msra.mxu0 %v5495
    %5962 = vmatprep.subr.bf16.mxu0 %v5490
    %5963 = vmatpush2.bf16.msra.mxu0 %v5489
    %5964 = vmatprep.subr.bf16.mxu0 %v5484
    %5965 = vmatpush2.bf16.msra.mxu0 %v5483
    %5966 = vmatprep.subr.bf16.mxu0 %v5478
    %5967 = vmatpush2.bf16.msra.mxu0 %v5477
    %5968 = vmatprep.subr.bf16.mxu0 %v5472
    %5969 = vmatpush2.bf16.msra.mxu0 %v5471
    %5970 = vmatprep.subr.bf16.mxu0 %v5466
    %5971 = vmatpush2.bf16.msra.mxu0 %v5465
    %5972 = vmatprep.subr.bf16.mxu0 %v5460
    %5973 = vmatpush2.bf16.msra.mxu0 %v5459
    %5974 = vmatprep.subr.bf16.mxu0 %v5454
    %5975 = vmatpush2.bf16.msra.mxu0 %v5453
    %5976 = vmatprep.mubr.bf16.mxu0 %v4531
    %5977 = vmatmul.mubr.bf16.gmra.mxu0 %v4530
    %v5978 = vpop.f32.mrf.mxu0
    %v5979 = vadd.f32 %v5928, %v5978
    %v5980 = vpop.f32.mrf.mxu0
    %v5981 = vadd.f32 %v5930, %v5980
    %v5982 = vpop.f32.mrf.mxu0
    %v5983 = vadd.f32 %v5932, %v5982
    %v5984 = vpop.f32.mrf.mxu0
    %v5985 = vadd.f32 %v5934, %v5984
    %5986 = vmatprep.mubr.bf16.mxu0 %v4535
    %5987 = vmatmul.mubr.bf16.gmra.mxu0 %v4534
    %v5988 = vpop.f32.mrf.mxu0
    %v5989 = vadd.f32 %v5938, %v5988
    %v5990 = vpop.f32.mrf.mxu0
    %v5991 = vadd.f32 %v5940, %v5990
    %v5992 = vpop.f32.mrf.mxu0
    %v5993 = vpop.f32.mrf.mxu0
    %5994 = vdwg.mxu0
    %v5995 = vadd.f32 %v4129, %v5775
    %v5996 = vadd.f32 %v4131, %v5777
    %v5997 = vadd.f32 %v4231, %v5877
    %v5998 = vadd.f32 %v4233, %v5879
    %v5999 = vadd.f32 %v4333, %v5979
    %v6000 = vadd.f32 %v4335, %v5981
    %v6001 = vadd.f32 %v4133, %v5779
    %v6002 = vadd.f32 %v4135, %v5781
    %v6003 = vadd.f32 %v4235, %v5881
    %v6004 = vadd.f32 %v4237, %v5883
    %v6005 = vadd.f32 %v4337, %v5983
    %v6006 = vadd.f32 %v4339, %v5985
    %v6007 = vadd.f32 %v4139, %v5785
    %v6008 = vadd.f32 %v4141, %v5787
    %v6009 = vadd.f32 %v4241, %v5887
    %v6010 = vadd.f32 %v4243, %v5889
    %v6011 = vadd.f32 %v4343, %v5989
    %v6012 = vadd.f32 %v4345, %v5991
    %v6013 = vld [vmem:[#allocation13] sm:$0x3f]
    %v6015 = vlaneseq
    %v6016 = vshrl.u32 %v6015, 7
    %v6017 = vsub.s32 0, %v6016
    %v6018 = vrot.slane %v6013, %v6017
    %v6019 = vlaneseq
    %v6020 = vshrl.u32 %v6019, 7
    %v6021 = vsub.s32 1, %v6020
    %v6022 = vrot.slane %v6013, %v6021
    %v6023 = vlaneseq
    %v6024 = vshrl.u32 %v6023, 7
    %v6025 = vsub.s32 2, %v6024
    %v6026 = vrot.slane %v6013, %v6025
    %v6027 = vlaneseq
    %v6028 = vshrl.u32 %v6027, 7
    %v6029 = vsub.s32 3, %v6028
    %v6030 = vrot.slane %v6013, %v6029
    %v6031 = vlaneseq
    %v6032 = vshrl.u32 %v6031, 7
    %v6033 = vsub.s32 4, %v6032
    %v6034 = vrot.slane %v6013, %v6033
    %v6035 = vlaneseq
    %v6036 = vshrl.u32 %v6035, 7
    %v6037 = vsub.s32 5, %v6036
    %v6038 = vrot.slane %v6013, %v6037
    %v6045 = vadd.f32 %v5995, %v6018
    %v6046 = vadd.f32 %v5996, %v6022
    %v6047 = vadd.f32 %v5997, %v6026
    %v6048 = vadd.f32 %v5998, %v6030
    %v6049 = vadd.f32 %v5999, %v6034
    %v6050 = vadd.f32 %v6000, %v6038
    %v6051 = vadd.f32 %v6001, %v6018
    %v6052 = vadd.f32 %v6002, %v6022
    %v6053 = vadd.f32 %v6003, %v6026
    %v6054 = vadd.f32 %v6004, %v6030
    %v6055 = vadd.f32 %v6005, %v6034
    %v6056 = vadd.f32 %v6006, %v6038
    %v6057 = vadd.f32 %v6007, %v6018
    %v6058 = vadd.f32 %v6008, %v6022
    %v6059 = vadd.f32 %v6009, %v6026
    %v6060 = vadd.f32 %v6010, %v6030
    %v6061 = vadd.f32 %v6011, %v6034
    %v6062 = vadd.f32 %v6012, %v6038
    %v6063 = vmax.f32 %v6045, 0.0
    %v6064 = vmax.f32 %v6046, 0.0
    %v6065 = vmax.f32 %v6047, 0.0
    %v6066 = vmax.f32 %v6048, 0.0
    %v6067 = vmax.f32 %v6049, 0.0
    %v6068 = vmax.f32 %v6050, 0.0
    %v6069 = vmax.f32 %v6051, 0.0
    %v6070 = vmax.f32 %v6052, 0.0
    %v6071 = vmax.f32 %v6053, 0.0
    %v6072 = vmax.f32 %v6054, 0.0
    %v6073 = vmax.f32 %v6055, 0.0
    %v6074 = vmax.f32 %v6056, 0.0
    %v6075 = vmax.f32 %v6057, 0.0
    %v6076 = vmax.f32 %v6058, 0.0
    %v6077 = vmax.f32 %v6059, 0.0
    %v6078 = vmax.f32 %v6060, 0.0
    %v6079 = vmax.f32 %v6061, 0.0
    %v6080 = vmax.f32 %v6062, 0.0
    %v6081 = vld [vmem:[%s7] sm:$0xff]
    %v6082 = vld [vmem:[%s7 + $0x8] sm:$0xf]
    %vm6083 = vcmask 195584
    %v6085 = vsel %vm6083, %v6081, 0
    %v6088 = vsel %vm6083, %v6082, 0
    %6090 = vmatprep.subr.mxu0 0.0
    %6091 = vmatpush1.msra.mxu0 0.0
    %6092 = vmatprep.subr.mxu0 0.0
    %6093 = vmatpush1.msra.mxu0 0.0
    %6094 = vmatprep.subr.mxu0 0.0
    %6095 = vmatpush1.msra.mxu0 0.0
    %6096 = vmatprep.subr.mxu0 0.0
    %6097 = vmatpush1.msra.mxu0 0.0
    %6098 = vmatprep.subr.mxu0 0.0
    %6099 = vmatpush1.msra.mxu0 0.0
    %6100 = vmatprep.subr.mxu0 0.0
    %6101 = vmatpush1.msra.mxu0 0.0
    %6102 = vmatprep.subr.mxu0 0.0
    %6103 = vmatpush1.msra.mxu0 0.0
    %6104 = vmatprep.subr.mxu0 0.0
    %6105 = vmatpush1.msra.mxu0 0.0
    %6106 = vmatprep.subr.mxu0 0.0
    %6107 = vmatpush1.msra.mxu0 0.0
    %6108 = vmatprep.subr.mxu0 0.0
    %6109 = vmatpush1.msra.mxu0 0.0
    %6110 = vmatprep.subr.mxu0 0.0
    %6111 = vmatpush1.msra.mxu0 0.0
    %6112 = vmatprep.subr.mxu0 0.0
    %6113 = vmatpush1.msra.mxu0 0.0
    %6114 = vmatprep.subr.mxu0 0.0
    %6115 = vmatpush1.msra.mxu0 0.0
    %6116 = vmatprep.subr.mxu0 %v6076
    %6117 = vmatpush1.msra.mxu0 %v6075
    %6118 = vmatprep.subr.mxu0 %v6070
    %6119 = vmatpush1.msra.mxu0 %v6069
    %6120 = vmatprep.subr.mxu0 %v6064
    %6121 = vmatpush1.msra.mxu0 %v6063
    %6122 = vmatprep.subr.mxu0 0.0
    %6123 = vmatpush2.msra.mxu0 0.0
    %6124 = vmatprep.subr.mxu0 0.0
    %6125 = vmatpush2.msra.mxu0 0.0
    %6126 = vmatprep.subr.mxu0 0.0
    %6127 = vmatpush2.msra.mxu0 0.0
    %6128 = vmatprep.subr.mxu0 0.0
    %6129 = vmatpush2.msra.mxu0 0.0
    %6130 = vmatprep.subr.mxu0 0.0
    %6131 = vmatpush2.msra.mxu0 0.0
    %6132 = vmatprep.subr.mxu0 0.0
    %6133 = vmatpush2.msra.mxu0 0.0
    %6134 = vmatprep.subr.mxu0 0.0
    %6135 = vmatpush2.msra.mxu0 0.0
    %6136 = vmatprep.subr.mxu0 0.0
    %6137 = vmatpush2.msra.mxu0 0.0
    %6138 = vmatprep.subr.mxu0 0.0
    %6139 = vmatpush2.msra.mxu0 0.0
    %6140 = vmatprep.subr.mxu0 0.0
    %6141 = vmatpush2.msra.mxu0 0.0
    %6142 = vmatprep.subr.mxu0 0.0
    %6143 = vmatpush2.msra.mxu0 0.0
    %6144 = vmatprep.subr.mxu0 0.0
    %6145 = vmatpush2.msra.mxu0 0.0
    %6146 = vmatprep.subr.mxu0 0.0
    %6147 = vmatpush2.msra.mxu0 0.0
    %6148 = vmatprep.subr.mxu0 0.0
    %6149 = vmatpush2.msra.mxu0 0.0
    %6150 = vmatprep.subr.mxu0 0.0
    %6151 = vmatpush2.msra.mxu0 0.0
    %6152 = vmatprep.subr.mxu0 0.0
    %6153 = vmatpush2.msra.mxu0 0.0
    %6154 = vmatprep.mubr.f32.mxu0 0.0
    %6155 = vmatmul.mubr.f32.gmra.mxu0 %v6085
    %v6156 = vpop.f32.mrf.mxu0
    %v6157 = vadd.f32 0.0, %v6156
    %v6158 = vpop.f32.mrf.mxu0
    %v6159 = vadd.f32 0.0, %v6158
    %6160 = vmatprep.mubr.f32.mxu0 0.0
    %6161 = vmatmul.mubr.f32.gmra.mxu0 %v6088
    %v6162 = vpop.f32.mrf.mxu0
    %v6163 = vadd.f32 0.0, %v6162
    %v6164 = vpop.f32.mrf.mxu0
    %v6165 = vadd.f32 0.0, %v6164
    %6166 = vdwg.mxu0
    %6167 = vmatprep.subr.mxu0 0.0
    %6168 = vmatpush1.msra.mxu0 0.0
    %6169 = vmatprep.subr.mxu0 0.0
    %6170 = vmatpush1.msra.mxu0 0.0
    %6171 = vmatprep.subr.mxu0 0.0
    %6172 = vmatpush1.msra.mxu0 0.0
    %6173 = vmatprep.subr.mxu0 0.0
    %6174 = vmatpush1.msra.mxu0 0.0
    %6175 = vmatprep.subr.mxu0 0.0
    %6176 = vmatpush1.msra.mxu0 0.0
    %6177 = vmatprep.subr.mxu0 0.0
    %6178 = vmatpush1.msra.mxu0 0.0
    %6179 = vmatprep.subr.mxu0 0.0
    %6180 = vmatpush1.msra.mxu0 0.0
    %6181 = vmatprep.subr.mxu0 0.0
    %6182 = vmatpush1.msra.mxu0 0.0
    %6183 = vmatprep.subr.mxu0 0.0
    %6184 = vmatpush1.msra.mxu0 0.0
    %6185 = vmatprep.subr.mxu0 0.0
    %6186 = vmatpush1.msra.mxu0 0.0
    %6187 = vmatprep.subr.mxu0 0.0
    %6188 = vmatpush1.msra.mxu0 0.0
    %6189 = vmatprep.subr.mxu0 0.0
    %6190 = vmatpush1.msra.mxu0 0.0
    %6191 = vmatprep.subr.mxu0 0.0
    %6192 = vmatpush1.msra.mxu0 0.0
    %6193 = vmatprep.subr.mxu0 %v6078
    %6194 = vmatpush1.msra.mxu0 %v6077
    %6195 = vmatprep.subr.mxu0 %v6072
    %6196 = vmatpush1.msra.mxu0 %v6071
    %6197 = vmatprep.subr.mxu0 %v6066
    %6198 = vmatpush1.msra.mxu0 %v6065
    %6199 = vmatprep.subr.mxu0 0.0
    %6200 = vmatpush2.msra.mxu0 0.0
    %6201 = vmatprep.subr.mxu0 0.0
    %6202 = vmatpush2.msra.mxu0 0.0
    %6203 = vmatprep.subr.mxu0 0.0
    %6204 = vmatpush2.msra.mxu0 0.0
    %6205 = vmatprep.subr.mxu0 0.0
    %6206 = vmatpush2.msra.mxu0 0.0
    %6207 = vmatprep.subr.mxu0 0.0
    %6208 = vmatpush2.msra.mxu0 0.0
    %6209 = vmatprep.subr.mxu0 0.0
    %6210 = vmatpush2.msra.mxu0 0.0
    %6211 = vmatprep.subr.mxu0 0.0
    %6212 = vmatpush2.msra.mxu0 0.0
    %6213 = vmatprep.subr.mxu0 0.0
    %6214 = vmatpush2.msra.mxu0 0.0
    %6215 = vmatprep.subr.mxu0 0.0
    %6216 = vmatpush2.msra.mxu0 0.0
    %6217 = vmatprep.subr.mxu0 0.0
    %6218 = vmatpush2.msra.mxu0 0.0
    %6219 = vmatprep.subr.mxu0 0.0
    %6220 = vmatpush2.msra.mxu0 0.0
    %6221 = vmatprep.subr.mxu0 0.0
    %6222 = vmatpush2.msra.mxu0 0.0
    %6223 = vmatprep.subr.mxu0 0.0
    %6224 = vmatpush2.msra.mxu0 0.0
    %6225 = vmatprep.subr.mxu0 0.0
    %6226 = vmatpush2.msra.mxu0 0.0
    %6227 = vmatprep.subr.mxu0 0.0
    %6228 = vmatpush2.msra.mxu0 0.0
    %6229 = vmatprep.subr.mxu0 0.0
    %6230 = vmatpush2.msra.mxu0 0.0
    %6231 = vmatprep.mubr.f32.mxu0 0.0
    %6232 = vmatmul.mubr.f32.gmra.mxu0 %v6085
    %v6233 = vpop.f32.mrf.mxu0
    %v6234 = vadd.f32 0.0, %v6233
    %v6235 = vpop.f32.mrf.mxu0
    %v6236 = vadd.f32 0.0, %v6235
    %6237 = vmatprep.mubr.f32.mxu0 0.0
    %6238 = vmatmul.mubr.f32.gmra.mxu0 %v6088
    %v6239 = vpop.f32.mrf.mxu0
    %v6240 = vadd.f32 0.0, %v6239
    %v6241 = vpop.f32.mrf.mxu0
    %v6242 = vadd.f32 0.0, %v6241
    %6243 = vdwg.mxu0
    %6244 = vmatprep.subr.mxu0 0.0
    %6245 = vmatpush1.msra.mxu0 0.0
    %6246 = vmatprep.subr.mxu0 0.0
    %6247 = vmatpush1.msra.mxu0 0.0
    %6248 = vmatprep.subr.mxu0 0.0
    %6249 = vmatpush1.msra.mxu0 0.0
    %6250 = vmatprep.subr.mxu0 0.0
    %6251 = vmatpush1.msra.mxu0 0.0
    %6252 = vmatprep.subr.mxu0 0.0
    %6253 = vmatpush1.msra.mxu0 0.0
    %6254 = vmatprep.subr.mxu0 0.0
    %6255 = vmatpush1.msra.mxu0 0.0
    %6256 = vmatprep.subr.mxu0 0.0
    %6257 = vmatpush1.msra.mxu0 0.0
    %6258 = vmatprep.subr.mxu0 0.0
    %6259 = vmatpush1.msra.mxu0 0.0
    %6260 = vmatprep.subr.mxu0 0.0
    %6261 = vmatpush1.msra.mxu0 0.0
    %6262 = vmatprep.subr.mxu0 0.0
    %6263 = vmatpush1.msra.mxu0 0.0
    %6264 = vmatprep.subr.mxu0 0.0
    %6265 = vmatpush1.msra.mxu0 0.0
    %6266 = vmatprep.subr.mxu0 0.0
    %6267 = vmatpush1.msra.mxu0 0.0
    %6268 = vmatprep.subr.mxu0 0.0
    %6269 = vmatpush1.msra.mxu0 0.0
    %6270 = vmatprep.subr.mxu0 %v6080
    %6271 = vmatpush1.msra.mxu0 %v6079
    %6272 = vmatprep.subr.mxu0 %v6074
    %6273 = vmatpush1.msra.mxu0 %v6073
    %6274 = vmatprep.subr.mxu0 %v6068
    %6275 = vmatpush1.msra.mxu0 %v6067
    %6276 = vmatprep.subr.mxu0 0.0
    %6277 = vmatpush2.msra.mxu0 0.0
    %6278 = vmatprep.subr.mxu0 0.0
    %6279 = vmatpush2.msra.mxu0 0.0
    %6280 = vmatprep.subr.mxu0 0.0
    %6281 = vmatpush2.msra.mxu0 0.0
    %6282 = vmatprep.subr.mxu0 0.0
    %6283 = vmatpush2.msra.mxu0 0.0
    %6284 = vmatprep.subr.mxu0 0.0
    %6285 = vmatpush2.msra.mxu0 0.0
    %6286 = vmatprep.subr.mxu0 0.0
    %6287 = vmatpush2.msra.mxu0 0.0
    %6288 = vmatprep.subr.mxu0 0.0
    %6289 = vmatpush2.msra.mxu0 0.0
    %6290 = vmatprep.subr.mxu0 0.0
    %6291 = vmatpush2.msra.mxu0 0.0
    %6292 = vmatprep.subr.mxu0 0.0
    %6293 = vmatpush2.msra.mxu0 0.0
    %6294 = vmatprep.subr.mxu0 0.0
    %6295 = vmatpush2.msra.mxu0 0.0
    %6296 = vmatprep.subr.mxu0 0.0
    %6297 = vmatpush2.msra.mxu0 0.0
    %6298 = vmatprep.subr.mxu0 0.0
    %6299 = vmatpush2.msra.mxu0 0.0
    %6300 = vmatprep.subr.mxu0 0.0
    %6301 = vmatpush2.msra.mxu0 0.0
    %6302 = vmatprep.subr.mxu0 0.0
    %6303 = vmatpush2.msra.mxu0 0.0
    %6304 = vmatprep.subr.mxu0 0.0
    %6305 = vmatpush2.msra.mxu0 0.0
    %6306 = vmatprep.subr.mxu0 0.0
    %6307 = vmatpush2.msra.mxu0 0.0
    %6308 = vmatprep.mubr.f32.mxu0 0.0
    %6309 = vmatmul.mubr.f32.gmra.mxu0 %v6085
    %v6310 = vpop.f32.mrf.mxu0
    %v6311 = vadd.f32 0.0, %v6310
    %v6312 = vpop.f32.mrf.mxu0
    %v6313 = vadd.f32 0.0, %v6312
    %6314 = vmatprep.mubr.f32.mxu0 0.0
    %6315 = vmatmul.mubr.f32.gmra.mxu0 %v6088
    %v6316 = vpop.f32.mrf.mxu0
    %v6317 = vadd.f32 0.0, %v6316
    %v6318 = vpop.f32.mrf.mxu0
    %v6319 = vadd.f32 0.0, %v6318
    %6320 = vdwg.mxu0
    %s6321 = scalar_lea.vmem %s7, 16
    %v6322 = vld [vmem:[%s6321] sm:$0xff]
    %v6323 = vld [vmem:[%s6321 + $0x8] sm:$0xf]
    %v6325 = vsel %vm6083, %v6322, 0
    %v6328 = vsel %vm6083, %v6323, 0
    %6330 = vmatprep.subr.mxu0 0.0
    %6331 = vmatpush1.msra.mxu0 0.0
    %6332 = vmatprep.subr.mxu0 0.0
    %6333 = vmatpush1.msra.mxu0 0.0
    %6334 = vmatprep.subr.mxu0 0.0
    %6335 = vmatpush1.msra.mxu0 0.0
    %6336 = vmatprep.subr.mxu0 0.0
    %6337 = vmatpush1.msra.mxu0 0.0
    %6338 = vmatprep.subr.mxu0 0.0
    %6339 = vmatpush1.msra.mxu0 0.0
    %6340 = vmatprep.subr.mxu0 0.0
    %6341 = vmatpush1.msra.mxu0 0.0
    %6342 = vmatprep.subr.mxu0 0.0
    %6343 = vmatpush1.msra.mxu0 0.0
    %6344 = vmatprep.subr.mxu0 0.0
    %6345 = vmatpush1.msra.mxu0 0.0
    %6346 = vmatprep.subr.mxu0 0.0
    %6347 = vmatpush1.msra.mxu0 0.0
    %6348 = vmatprep.subr.mxu0 0.0
    %6349 = vmatpush1.msra.mxu0 0.0
    %6350 = vmatprep.subr.mxu0 0.0
    %6351 = vmatpush1.msra.mxu0 0.0
    %6352 = vmatprep.subr.mxu0 0.0
    %6353 = vmatpush1.msra.mxu0 0.0
    %6354 = vmatprep.subr.mxu0 0.0
    %6355 = vmatpush1.msra.mxu0 0.0
    %6356 = vmatprep.subr.mxu0 %v6076
    %6357 = vmatpush1.msra.mxu0 %v6075
    %6358 = vmatprep.subr.mxu0 %v6070
    %6359 = vmatpush1.msra.mxu0 %v6069
    %6360 = vmatprep.subr.mxu0 %v6064
    %6361 = vmatpush1.msra.mxu0 %v6063
    %6362 = vmatprep.subr.mxu0 0.0
    %6363 = vmatpush2.msra.mxu0 0.0
    %6364 = vmatprep.subr.mxu0 0.0
    %6365 = vmatpush2.msra.mxu0 0.0
    %6366 = vmatprep.subr.mxu0 0.0
    %6367 = vmatpush2.msra.mxu0 0.0
    %6368 = vmatprep.subr.mxu0 0.0
    %6369 = vmatpush2.msra.mxu0 0.0
    %6370 = vmatprep.subr.mxu0 0.0
    %6371 = vmatpush2.msra.mxu0 0.0
    %6372 = vmatprep.subr.mxu0 0.0
    %6373 = vmatpush2.msra.mxu0 0.0
    %6374 = vmatprep.subr.mxu0 0.0
    %6375 = vmatpush2.msra.mxu0 0.0
    %6376 = vmatprep.subr.mxu0 0.0
    %6377 = vmatpush2.msra.mxu0 0.0
    %6378 = vmatprep.subr.mxu0 0.0
    %6379 = vmatpush2.msra.mxu0 0.0
    %6380 = vmatprep.subr.mxu0 0.0
    %6381 = vmatpush2.msra.mxu0 0.0
    %6382 = vmatprep.subr.mxu0 0.0
    %6383 = vmatpush2.msra.mxu0 0.0
    %6384 = vmatprep.subr.mxu0 0.0
    %6385 = vmatpush2.msra.mxu0 0.0
    %6386 = vmatprep.subr.mxu0 0.0
    %6387 = vmatpush2.msra.mxu0 0.0
    %6388 = vmatprep.subr.mxu0 0.0
    %6389 = vmatpush2.msra.mxu0 0.0
    %6390 = vmatprep.subr.mxu0 0.0
    %6391 = vmatpush2.msra.mxu0 0.0
    %6392 = vmatprep.subr.mxu0 0.0
    %6393 = vmatpush2.msra.mxu0 0.0
    %6394 = vmatprep.mubr.f32.mxu0 0.0
    %6395 = vmatmul.mubr.f32.gmra.mxu0 %v6325
    %v6396 = vpop.f32.mrf.mxu0
    %v6397 = vadd.f32 0.0, %v6396
    %v6398 = vpop.f32.mrf.mxu0
    %v6399 = vadd.f32 0.0, %v6398
    %6400 = vmatprep.mubr.f32.mxu0 0.0
    %6401 = vmatmul.mubr.f32.gmra.mxu0 %v6328
    %v6402 = vpop.f32.mrf.mxu0
    %v6403 = vadd.f32 0.0, %v6402
    %v6404 = vpop.f32.mrf.mxu0
    %v6405 = vadd.f32 0.0, %v6404
    %6406 = vdwg.mxu0
    %6407 = vmatprep.subr.mxu0 0.0
    %6408 = vmatpush1.msra.mxu0 0.0
    %6409 = vmatprep.subr.mxu0 0.0
    %6410 = vmatpush1.msra.mxu0 0.0
    %6411 = vmatprep.subr.mxu0 0.0
    %6412 = vmatpush1.msra.mxu0 0.0
    %6413 = vmatprep.subr.mxu0 0.0
    %6414 = vmatpush1.msra.mxu0 0.0
    %6415 = vmatprep.subr.mxu0 0.0
    %6416 = vmatpush1.msra.mxu0 0.0
    %6417 = vmatprep.subr.mxu0 0.0
    %6418 = vmatpush1.msra.mxu0 0.0
    %6419 = vmatprep.subr.mxu0 0.0
    %6420 = vmatpush1.msra.mxu0 0.0
    %6421 = vmatprep.subr.mxu0 0.0
    %6422 = vmatpush1.msra.mxu0 0.0
    %6423 = vmatprep.subr.mxu0 0.0
    %6424 = vmatpush1.msra.mxu0 0.0
    %6425 = vmatprep.subr.mxu0 0.0
    %6426 = vmatpush1.msra.mxu0 0.0
    %6427 = vmatprep.subr.mxu0 0.0
    %6428 = vmatpush1.msra.mxu0 0.0
    %6429 = vmatprep.subr.mxu0 0.0
    %6430 = vmatpush1.msra.mxu0 0.0
    %6431 = vmatprep.subr.mxu0 0.0
    %6432 = vmatpush1.msra.mxu0 0.0
    %6433 = vmatprep.subr.mxu0 %v6078
    %6434 = vmatpush1.msra.mxu0 %v6077
    %6435 = vmatprep.subr.mxu0 %v6072
    %6436 = vmatpush1.msra.mxu0 %v6071
    %6437 = vmatprep.subr.mxu0 %v6066
    %6438 = vmatpush1.msra.mxu0 %v6065
    %6439 = vmatprep.subr.mxu0 0.0
    %6440 = vmatpush2.msra.mxu0 0.0
    %6441 = vmatprep.subr.mxu0 0.0
    %6442 = vmatpush2.msra.mxu0 0.0
    %6443 = vmatprep.subr.mxu0 0.0
    %6444 = vmatpush2.msra.mxu0 0.0
    %6445 = vmatprep.subr.mxu0 0.0
    %6446 = vmatpush2.msra.mxu0 0.0
    %6447 = vmatprep.subr.mxu0 0.0
    %6448 = vmatpush2.msra.mxu0 0.0
    %6449 = vmatprep.subr.mxu0 0.0
    %6450 = vmatpush2.msra.mxu0 0.0
    %6451 = vmatprep.subr.mxu0 0.0
    %6452 = vmatpush2.msra.mxu0 0.0
    %6453 = vmatprep.subr.mxu0 0.0
    %6454 = vmatpush2.msra.mxu0 0.0
    %6455 = vmatprep.subr.mxu0 0.0
    %6456 = vmatpush2.msra.mxu0 0.0
    %6457 = vmatprep.subr.mxu0 0.0
    %6458 = vmatpush2.msra.mxu0 0.0
    %6459 = vmatprep.subr.mxu0 0.0
    %6460 = vmatpush2.msra.mxu0 0.0
    %6461 = vmatprep.subr.mxu0 0.0
    %6462 = vmatpush2.msra.mxu0 0.0
    %6463 = vmatprep.subr.mxu0 0.0
    %6464 = vmatpush2.msra.mxu0 0.0
    %6465 = vmatprep.subr.mxu0 0.0
    %6466 = vmatpush2.msra.mxu0 0.0
    %6467 = vmatprep.subr.mxu0 0.0
    %6468 = vmatpush2.msra.mxu0 0.0
    %6469 = vmatprep.subr.mxu0 0.0
    %6470 = vmatpush2.msra.mxu0 0.0
    %6471 = vmatprep.mubr.f32.mxu0 0.0
    %6472 = vmatmul.mubr.f32.gmra.mxu0 %v6325
    %v6473 = vpop.f32.mrf.mxu0
    %v6474 = vadd.f32 0.0, %v6473
    %v6475 = vpop.f32.mrf.mxu0
    %v6476 = vadd.f32 0.0, %v6475
    %6477 = vmatprep.mubr.f32.mxu0 0.0
    %6478 = vmatmul.mubr.f32.gmra.mxu0 %v6328
    %v6479 = vpop.f32.mrf.mxu0
    %v6480 = vadd.f32 0.0, %v6479
    %v6481 = vpop.f32.mrf.mxu0
    %v6482 = vadd.f32 0.0, %v6481
    %6483 = vdwg.mxu0
    %6484 = vmatprep.subr.mxu0 0.0
    %6485 = vmatpush1.msra.mxu0 0.0
    %6486 = vmatprep.subr.mxu0 0.0
    %6487 = vmatpush1.msra.mxu0 0.0
    %6488 = vmatprep.subr.mxu0 0.0
    %6489 = vmatpush1.msra.mxu0 0.0
    %6490 = vmatprep.subr.mxu0 0.0
    %6491 = vmatpush1.msra.mxu0 0.0
    %6492 = vmatprep.subr.mxu0 0.0
    %6493 = vmatpush1.msra.mxu0 0.0
    %6494 = vmatprep.subr.mxu0 0.0
    %6495 = vmatpush1.msra.mxu0 0.0
    %6496 = vmatprep.subr.mxu0 0.0
    %6497 = vmatpush1.msra.mxu0 0.0
    %6498 = vmatprep.subr.mxu0 0.0
    %6499 = vmatpush1.msra.mxu0 0.0
    %6500 = vmatprep.subr.mxu0 0.0
    %6501 = vmatpush1.msra.mxu0 0.0
    %6502 = vmatprep.subr.mxu0 0.0
    %6503 = vmatpush1.msra.mxu0 0.0
    %6504 = vmatprep.subr.mxu0 0.0
    %6505 = vmatpush1.msra.mxu0 0.0
    %6506 = vmatprep.subr.mxu0 0.0
    %6507 = vmatpush1.msra.mxu0 0.0
    %6508 = vmatprep.subr.mxu0 0.0
    %6509 = vmatpush1.msra.mxu0 0.0
    %6510 = vmatprep.subr.mxu0 %v6080
    %6511 = vmatpush1.msra.mxu0 %v6079
    %6512 = vmatprep.subr.mxu0 %v6074
    %6513 = vmatpush1.msra.mxu0 %v6073
    %6514 = vmatprep.subr.mxu0 %v6068
    %6515 = vmatpush1.msra.mxu0 %v6067
    %6516 = vmatprep.subr.mxu0 0.0
    %6517 = vmatpush2.msra.mxu0 0.0
    %6518 = vmatprep.subr.mxu0 0.0
    %6519 = vmatpush2.msra.mxu0 0.0
    %6520 = vmatprep.subr.mxu0 0.0
    %6521 = vmatpush2.msra.mxu0 0.0
    %6522 = vmatprep.subr.mxu0 0.0
    %6523 = vmatpush2.msra.mxu0 0.0
    %6524 = vmatprep.subr.mxu0 0.0
    %6525 = vmatpush2.msra.mxu0 0.0
    %6526 = vmatprep.subr.mxu0 0.0
    %6527 = vmatpush2.msra.mxu0 0.0
    %6528 = vmatprep.subr.mxu0 0.0
    %6529 = vmatpush2.msra.mxu0 0.0
    %6530 = vmatprep.subr.mxu0 0.0
    %6531 = vmatpush2.msra.mxu0 0.0
    %6532 = vmatprep.subr.mxu0 0.0
    %6533 = vmatpush2.msra.mxu0 0.0
    %6534 = vmatprep.subr.mxu0 0.0
    %6535 = vmatpush2.msra.mxu0 0.0
    %6536 = vmatprep.subr.mxu0 0.0
    %6537 = vmatpush2.msra.mxu0 0.0
    %6538 = vmatprep.subr.mxu0 0.0
    %6539 = vmatpush2.msra.mxu0 0.0
    %6540 = vmatprep.subr.mxu0 0.0
    %6541 = vmatpush2.msra.mxu0 0.0
    %6542 = vmatprep.subr.mxu0 0.0
    %6543 = vmatpush2.msra.mxu0 0.0
    %6544 = vmatprep.subr.mxu0 0.0
    %6545 = vmatpush2.msra.mxu0 0.0
    %6546 = vmatprep.subr.mxu0 0.0
    %6547 = vmatpush2.msra.mxu0 0.0
    %6548 = vmatprep.mubr.f32.mxu0 0.0
    %6549 = vmatmul.mubr.f32.gmra.mxu0 %v6325
    %v6550 = vpop.f32.mrf.mxu0
    %v6551 = vadd.f32 0.0, %v6550
    %v6552 = vpop.f32.mrf.mxu0
    %v6553 = vadd.f32 0.0, %v6552
    %6554 = vmatprep.mubr.f32.mxu0 0.0
    %6555 = vmatmul.mubr.f32.gmra.mxu0 %v6328
    %v6556 = vpop.f32.mrf.mxu0
    %v6557 = vadd.f32 0.0, %v6556
    %v6558 = vpop.f32.mrf.mxu0
    %v6559 = vadd.f32 0.0, %v6558
    %6560 = vdwg.mxu0
    %v6561 = vmax.f32 %v6157, %v6397
    %v6562 = vmax.f32 %v6159, %v6399
    %v6563 = vmax.f32 %v6234, %v6474
    %v6564 = vmax.f32 %v6236, %v6476
    %v6565 = vmax.f32 %v6311, %v6551
    %v6566 = vmax.f32 %v6313, %v6553
    %v6567 = vmax.f32 %v6163, %v6403
    %v6568 = vmax.f32 %v6165, %v6405
    %v6569 = vmax.f32 %v6240, %v6480
    %v6570 = vmax.f32 %v6242, %v6482
    %v6571 = vmax.f32 %v6317, %v6557
    %v6572 = vmax.f32 %v6319, %v6559
    %v6573 = vmax.f32 %v6561, %v6564
    %v6574 = vmax.f32 %v6562, %v6565
    %v6575 = vmax.f32 %v6563, %v6566
    %v6576 = vmax.f32 %v6567, %v6570
    %v6577 = vmax.f32 %v6568, %v6571
    %v6578 = vmax.f32 %v6569, %v6572
    %v6579 = vsel %vm1058, %v6576, 0.0
    %v6580 = vadd.f32 %v6573, %v6579
    %v6581 = vrot.slane %v6580, 4
    %v6582 = vadd.f32 %v6580, %v6581
    %v6583 = vrot.slane %v6582, 2
    %v6584 = vadd.f32 %v6582, %v6583
    %v6585 = vrot.slane %v6584, 1
    %v6586 = vadd.f32 %v6584, %v6585
    %v6587 = vsel %vm1058, %v6577, 0.0
    %v6588 = vadd.f32 %v6574, %v6587
    %v6589 = vrot.slane %v6588, 4
    %v6590 = vadd.f32 %v6588, %v6589
    %v6591 = vrot.slane %v6590, 2
    %v6592 = vadd.f32 %v6590, %v6591
    %v6593 = vrot.slane %v6592, 1
    %v6594 = vadd.f32 %v6592, %v6593
    %v6595 = vsel %vm1058, %v6578, 0.0
    %v6596 = vadd.f32 %v6575, %v6595
    %v6597 = vrot.slane %v6596, 4
    %v6598 = vadd.f32 %v6596, %v6597
    %v6599 = vrot.slane %v6598, 2
    %v6600 = vadd.f32 %v6598, %v6599
    %v6601 = vrot.slane %v6600, 1
    %v6602 = vadd.f32 %v6600, %v6601
    %v6603 = vmul.f32 %v6573, %v6573
    %v6604 = vmul.f32 %v6574, %v6574
    %v6605 = vmul.f32 %v6575, %v6575
    %v6606 = vmul.f32 %v6576, %v6576
    %v6607 = vmul.f32 %v6577, %v6577
    %v6608 = vmul.f32 %v6578, %v6578
    %v6609 = vsel %vm1058, %v6606, 0.0
    %v6610 = vadd.f32 %v6603, %v6609
    %v6611 = vrot.slane %v6610, 4
    %v6612 = vadd.f32 %v6610, %v6611
    %v6613 = vrot.slane %v6612, 2
    %v6614 = vadd.f32 %v6612, %v6613
    %v6615 = vrot.slane %v6614, 1
    %v6616 = vadd.f32 %v6614, %v6615
    %v6617 = vsel %vm1058, %v6607, 0.0
    %v6618 = vadd.f32 %v6604, %v6617
    %v6619 = vrot.slane %v6618, 4
    %v6620 = vadd.f32 %v6618, %v6619
    %v6621 = vrot.slane %v6620, 2
    %v6622 = vadd.f32 %v6620, %v6621
    %v6623 = vrot.slane %v6622, 1
    %v6624 = vadd.f32 %v6622, %v6623
    %v6625 = vsel %vm1058, %v6608, 0.0
    %v6626 = vadd.f32 %v6605, %v6625
    %v6627 = vrot.slane %v6626, 4
    %v6628 = vadd.f32 %v6626, %v6627
    %v6629 = vrot.slane %v6628, 2
    %v6630 = vadd.f32 %v6628, %v6629
    %v6631 = vrot.slane %v6630, 1
    %v6632 = vadd.f32 %v6630, %v6631
    %v6633 = vld [vmem:[%s9] sm:$0xff]
    %v6634 = vld [vmem:[%s9 + $0x8] sm:$0xff]
    %v6635 = vld [vmem:[%s9 + $0x10] sm:$0xff]
    %v6636 = vld [vmem:[%s9 + $0x18] sm:$0xff]
    %v6637 = vld [vmem:[%s9 + $0x20] sm:$0xff]
    %v6638 = vld [vmem:[%s9 + $0x28] sm:$0xff]
    %v6639 = vld [vmem:[%s9 + $0x30] sm:$0xff]
    %v6640 = vld [vmem:[%s9 + $0x38] sm:$0xff]
    %v6641 = vld [vmem:[%s9 + $0x40] sm:$0xff]
    %v6642 = vld [vmem:[%s9 + $0x48] sm:$0xff]
    %v6643 = vld [vmem:[%s9 + $0x50] sm:$0xff]
    %v6644 = vld [vmem:[%s9 + $0x58] sm:$0xff]
    %v6645 = vld [vmem:[%s9 + $0x60] sm:$0xff]
    %v6646 = vld [vmem:[%s9 + $0x68] sm:$0xff]
    %v6647 = vld [vmem:[%s9 + $0x70] sm:$0xff]
    %v6648 = vld [vmem:[%s9 + $0x78] sm:$0xff]
    %v6649 = vld [vmem:[%s9 + $0x80] sm:$0xff]
    %v6650 = vld [vmem:[%s9 + $0x88] sm:$0xff]
    %v6651 = vld [vmem:[%s9 + $0x90] sm:$0xff]
    %v6652 = vld [vmem:[%s9 + $0x98] sm:$0xff]
    %v6653 = vld [vmem:[%s9 + $0xa0] sm:$0xff]
    %v6654 = vld [vmem:[%s9 + $0xa8] sm:$0xff]
    %v6655 = vld [vmem:[%s9 + $0xb0] sm:$0xff]
    %v6656 = vld [vmem:[%s9 + $0xb8] sm:$0xff]
    %v6657 = vld [vmem:[%s9 + $0xc0] sm:$0xff]
    %v6658 = vld [vmem:[%s9 + $0xc8] sm:$0xff]
    %v6659 = vld [vmem:[%s9 + $0xd0] sm:$0xff]
    %v6660 = vld [vmem:[%s9 + $0xd8] sm:$0xff]
    %v6661 = vld [vmem:[%s9 + $0xe0] sm:$0xff]
    %v6662 = vld [vmem:[%s9 + $0xe8] sm:$0xff]
    %v6663 = vld [vmem:[%s9 + $0xf0] sm:$0xff]
    %v6664 = vld [vmem:[%s9 + $0xf8] sm:$0xff]
    %v6665 = vld [vmem:[%s9 + $0x100] sm:$0xff]
    %v6666 = vld [vmem:[%s9 + $0x108] sm:$0xff]
    %v6667 = vld [vmem:[%s9 + $0x110] sm:$0xff]
    %v6668 = vld [vmem:[%s9 + $0x118] sm:$0xff]
    %v6669 = vld [vmem:[%s9 + $0x120] sm:$0xff]
    %v6670 = vld [vmem:[%s9 + $0x128] sm:$0xff]
    %v6671 = vld [vmem:[%s9 + $0x130] sm:$0xff]
    %v6672 = vld [vmem:[%s9 + $0x138] sm:$0xff]
    %v6673 = vld [vmem:[%s9 + $0x140] sm:$0xff]
    %v6674 = vld [vmem:[%s9 + $0x148] sm:$0xff]
    %v6675 = vld [vmem:[%s9 + $0x150] sm:$0xff]
    %v6676 = vld [vmem:[%s9 + $0x158] sm:$0xff]
    %v6677 = vld [vmem:[%s9 + $0x160] sm:$0xff]
    %v6678 = vld [vmem:[%s9 + $0x168] sm:$0xff]
    %v6679 = vld [vmem:[%s9 + $0x170] sm:$0xff]
    %v6680 = vld [vmem:[%s9 + $0x178] sm:$0xff]
    %6681 = vmatprep.subr.mxu0 0.0
    %6682 = vmatpush1.msra.mxu0 %v6648
    %6683 = vmatprep.subr.mxu0 0.0
    %6684 = vmatpush1.msra.mxu0 %v6647
    %6685 = vmatprep.subr.mxu0 0.0
    %6686 = vmatpush1.msra.mxu0 %v6646
    %6687 = vmatprep.subr.mxu0 0.0
    %6688 = vmatpush1.msra.mxu0 %v6645
    %6689 = vmatprep.subr.mxu0 0.0
    %6690 = vmatpush1.msra.mxu0 %v6644
    %6691 = vmatprep.subr.mxu0 0.0
    %6692 = vmatpush1.msra.mxu0 %v6643
    %6693 = vmatprep.subr.mxu0 0.0
    %6694 = vmatpush1.msra.mxu0 %v6642
    %6695 = vmatprep.subr.mxu0 0.0
    %6696 = vmatpush1.msra.mxu0 %v6641
    %6697 = vmatprep.subr.mxu0 0.0
    %6698 = vmatpush1.msra.mxu0 %v6640
    %6699 = vmatprep.subr.mxu0 0.0
    %6700 = vmatpush1.msra.mxu0 %v6639
    %6701 = vmatprep.subr.mxu0 0.0
    %6702 = vmatpush1.msra.mxu0 %v6638
    %6703 = vmatprep.subr.mxu0 0.0
    %6704 = vmatpush1.msra.mxu0 %v6637
    %6705 = vmatprep.subr.mxu0 0.0
    %6706 = vmatpush1.msra.mxu0 %v6636
    %6707 = vmatprep.subr.mxu0 0.0
    %6708 = vmatpush1.msra.mxu0 %v6635
    %6709 = vmatprep.subr.mxu0 0.0
    %6710 = vmatpush1.msra.mxu0 %v6634
    %6711 = vmatprep.subr.mxu0 0.0
    %6712 = vmatpush1.msra.mxu0 %v6633
    %6713 = vmatprep.subr.mxu0 0.0
    %6714 = vmatpush2.msra.mxu0 %v6664
    %6715 = vmatprep.subr.mxu0 0.0
    %6716 = vmatpush2.msra.mxu0 %v6663
    %6717 = vmatprep.subr.mxu0 0.0
    %6718 = vmatpush2.msra.mxu0 %v6662
    %6719 = vmatprep.subr.mxu0 0.0
    %6720 = vmatpush2.msra.mxu0 %v6661
    %6721 = vmatprep.subr.mxu0 0.0
    %6722 = vmatpush2.msra.mxu0 %v6660
    %6723 = vmatprep.subr.mxu0 0.0
    %6724 = vmatpush2.msra.mxu0 %v6659
    %6725 = vmatprep.subr.mxu0 0.0
    %6726 = vmatpush2.msra.mxu0 %v6658
    %6727 = vmatprep.subr.mxu0 0.0
    %6728 = vmatpush2.msra.mxu0 %v6657
    %6729 = vmatprep.subr.mxu0 0.0
    %6730 = vmatpush2.msra.mxu0 %v6656
    %6731 = vmatprep.subr.mxu0 0.0
    %6732 = vmatpush2.msra.mxu0 %v6655
    %6733 = vmatprep.subr.mxu0 0.0
    %6734 = vmatpush2.msra.mxu0 %v6654
    %6735 = vmatprep.subr.mxu0 0.0
    %6736 = vmatpush2.msra.mxu0 %v6653
    %6737 = vmatprep.subr.mxu0 0.0
    %6738 = vmatpush2.msra.mxu0 %v6652
    %6739 = vmatprep.subr.mxu0 0.0
    %6740 = vmatpush2.msra.mxu0 %v6651
    %6741 = vmatprep.subr.mxu0 0.0
    %6742 = vmatpush2.msra.mxu0 %v6650
    %6743 = vmatprep.subr.mxu0 0.0
    %6744 = vmatpush2.msra.mxu0 %v6649
    %6745 = vmatprep.mubr.f32.mxu0 %v6594
    %6746 = vmatmul.mubr.f32.gmra.mxu0 %v6586
    %v6747 = vpop.f32.mrf.mxu0
    %v6748 = vadd.f32 0.0, %v6747
    %v6749 = vpop.f32.mrf.mxu0
    %6750 = vdwg.mxu0
    %6751 = vmatprep.subr.mxu0 0.0
    %6752 = vmatpush1.msra.mxu0 %v6680
    %6753 = vmatprep.subr.mxu0 0.0
    %6754 = vmatpush1.msra.mxu0 %v6679
    %6755 = vmatprep.subr.mxu0 0.0
    %6756 = vmatpush1.msra.mxu0 %v6678
    %6757 = vmatprep.subr.mxu0 0.0
    %6758 = vmatpush1.msra.mxu0 %v6677
    %6759 = vmatprep.subr.mxu0 0.0
    %6760 = vmatpush1.msra.mxu0 %v6676
    %6761 = vmatprep.subr.mxu0 0.0
    %6762 = vmatpush1.msra.mxu0 %v6675
    %6763 = vmatprep.subr.mxu0 0.0
    %6764 = vmatpush1.msra.mxu0 %v6674
    %6765 = vmatprep.subr.mxu0 0.0
    %6766 = vmatpush1.msra.mxu0 %v6673
    %6767 = vmatprep.subr.mxu0 0.0
    %6768 = vmatpush1.msra.mxu0 %v6672
    %6769 = vmatprep.subr.mxu0 0.0
    %6770 = vmatpush1.msra.mxu0 %v6671
    %6771 = vmatprep.subr.mxu0 0.0
    %6772 = vmatpush1.msra.mxu0 %v6670
    %6773 = vmatprep.subr.mxu0 0.0
    %6774 = vmatpush1.msra.mxu0 %v6669
    %6775 = vmatprep.subr.mxu0 0.0
    %6776 = vmatpush1.msra.mxu0 %v6668
    %6777 = vmatprep.subr.mxu0 0.0
    %6778 = vmatpush1.msra.mxu0 %v6667
    %6779 = vmatprep.subr.mxu0 0.0
    %6780 = vmatpush1.msra.mxu0 %v6666
    %6781 = vmatprep.subr.mxu0 0.0
    %6782 = vmatpush1.msra.mxu0 %v6665
    %6783 = vmatprep.subr.mxu0 0.0
    %6784 = vmatpush2.msra.mxu0 0.0
    %6785 = vmatprep.subr.mxu0 0.0
    %6786 = vmatpush2.msra.mxu0 0.0
    %6787 = vmatprep.subr.mxu0 0.0
    %6788 = vmatpush2.msra.mxu0 0.0
    %6789 = vmatprep.subr.mxu0 0.0
    %6790 = vmatpush2.msra.mxu0 0.0
    %6791 = vmatprep.subr.mxu0 0.0
    %6792 = vmatpush2.msra.mxu0 0.0
    %6793 = vmatprep.subr.mxu0 0.0
    %6794 = vmatpush2.msra.mxu0 0.0
    %6795 = vmatprep.subr.mxu0 0.0
    %6796 = vmatpush2.msra.mxu0 0.0
    %6797 = vmatprep.subr.mxu0 0.0
    %6798 = vmatpush2.msra.mxu0 0.0
    %6799 = vmatprep.subr.mxu0 0.0
    %6800 = vmatpush2.msra.mxu0 0.0
    %6801 = vmatprep.subr.mxu0 0.0
    %6802 = vmatpush2.msra.mxu0 0.0
    %6803 = vmatprep.subr.mxu0 0.0
    %6804 = vmatpush2.msra.mxu0 0.0
    %6805 = vmatprep.subr.mxu0 0.0
    %6806 = vmatpush2.msra.mxu0 0.0
    %6807 = vmatprep.subr.mxu0 0.0
    %6808 = vmatpush2.msra.mxu0 0.0
    %6809 = vmatprep.subr.mxu0 0.0
    %6810 = vmatpush2.msra.mxu0 0.0
    %6811 = vmatprep.subr.mxu0 0.0
    %6812 = vmatpush2.msra.mxu0 0.0
    %6813 = vmatprep.subr.mxu0 0.0
    %6814 = vmatpush2.msra.mxu0 0.0
    %6815 = vmatprep.mubr.f32.mxu0 0.0
    %6816 = vmatmul.mubr.f32.gmra.mxu0 %v6602
    %v6817 = vpop.f32.mrf.mxu0
    %v6818 = vadd.f32 %v6748, %v6817
    %v6819 = vpop.f32.mrf.mxu0
    %6820 = vdwg.mxu0
    %6821 = vmatprep.subr.mxu0 0.0
    %6822 = vmatpush1.msra.mxu0 %v6648
    %6823 = vmatprep.subr.mxu0 0.0
    %6824 = vmatpush1.msra.mxu0 %v6647
    %6825 = vmatprep.subr.mxu0 0.0
    %6826 = vmatpush1.msra.mxu0 %v6646
    %6827 = vmatprep.subr.mxu0 0.0
    %6828 = vmatpush1.msra.mxu0 %v6645
    %6829 = vmatprep.subr.mxu0 0.0
    %6830 = vmatpush1.msra.mxu0 %v6644
    %6831 = vmatprep.subr.mxu0 0.0
    %6832 = vmatpush1.msra.mxu0 %v6643
    %6833 = vmatprep.subr.mxu0 0.0
    %6834 = vmatpush1.msra.mxu0 %v6642
    %6835 = vmatprep.subr.mxu0 0.0
    %6836 = vmatpush1.msra.mxu0 %v6641
    %6837 = vmatprep.subr.mxu0 0.0
    %6838 = vmatpush1.msra.mxu0 %v6640
    %6839 = vmatprep.subr.mxu0 0.0
    %6840 = vmatpush1.msra.mxu0 %v6639
    %6841 = vmatprep.subr.mxu0 0.0
    %6842 = vmatpush1.msra.mxu0 %v6638
    %6843 = vmatprep.subr.mxu0 0.0
    %6844 = vmatpush1.msra.mxu0 %v6637
    %6845 = vmatprep.subr.mxu0 0.0
    %6846 = vmatpush1.msra.mxu0 %v6636
    %6847 = vmatprep.subr.mxu0 0.0
    %6848 = vmatpush1.msra.mxu0 %v6635
    %6849 = vmatprep.subr.mxu0 0.0
    %6850 = vmatpush1.msra.mxu0 %v6634
    %6851 = vmatprep.subr.mxu0 0.0
    %6852 = vmatpush1.msra.mxu0 %v6633
    %6853 = vmatprep.subr.mxu0 0.0
    %6854 = vmatpush2.msra.mxu0 %v6664
    %6855 = vmatprep.subr.mxu0 0.0
    %6856 = vmatpush2.msra.mxu0 %v6663
    %6857 = vmatprep.subr.mxu0 0.0
    %6858 = vmatpush2.msra.mxu0 %v6662
    %6859 = vmatprep.subr.mxu0 0.0
    %6860 = vmatpush2.msra.mxu0 %v6661
    %6861 = vmatprep.subr.mxu0 0.0
    %6862 = vmatpush2.msra.mxu0 %v6660
    %6863 = vmatprep.subr.mxu0 0.0
    %6864 = vmatpush2.msra.mxu0 %v6659
    %6865 = vmatprep.subr.mxu0 0.0
    %6866 = vmatpush2.msra.mxu0 %v6658
    %6867 = vmatprep.subr.mxu0 0.0
    %6868 = vmatpush2.msra.mxu0 %v6657
    %6869 = vmatprep.subr.mxu0 0.0
    %6870 = vmatpush2.msra.mxu0 %v6656
    %6871 = vmatprep.subr.mxu0 0.0
    %6872 = vmatpush2.msra.mxu0 %v6655
    %6873 = vmatprep.subr.mxu0 0.0
    %6874 = vmatpush2.msra.mxu0 %v6654
    %6875 = vmatprep.subr.mxu0 0.0
    %6876 = vmatpush2.msra.mxu0 %v6653
    %6877 = vmatprep.subr.mxu0 0.0
    %6878 = vmatpush2.msra.mxu0 %v6652
    %6879 = vmatprep.subr.mxu0 0.0
    %6880 = vmatpush2.msra.mxu0 %v6651
    %6881 = vmatprep.subr.mxu0 0.0
    %6882 = vmatpush2.msra.mxu0 %v6650
    %6883 = vmatprep.subr.mxu0 0.0
    %6884 = vmatpush2.msra.mxu0 %v6649
    %6885 = vmatprep.mubr.f32.mxu0 %v6624
    %6886 = vmatmul.mubr.f32.gmra.mxu0 %v6616
    %v6887 = vpop.f32.mrf.mxu0
    %v6888 = vadd.f32 0.0, %v6887
    %v6889 = vpop.f32.mrf.mxu0
    %6890 = vdwg.mxu0
    %6891 = vmatprep.subr.mxu0 0.0
    %6892 = vmatpush1.msra.mxu0 %v6680
    %6893 = vmatprep.subr.mxu0 0.0
    %6894 = vmatpush1.msra.mxu0 %v6679
    %6895 = vmatprep.subr.mxu0 0.0
    %6896 = vmatpush1.msra.mxu0 %v6678
    %6897 = vmatprep.subr.mxu0 0.0
    %6898 = vmatpush1.msra.mxu0 %v6677
    %6899 = vmatprep.subr.mxu0 0.0
    %6900 = vmatpush1.msra.mxu0 %v6676
    %6901 = vmatprep.subr.mxu0 0.0
    %6902 = vmatpush1.msra.mxu0 %v6675
    %6903 = vmatprep.subr.mxu0 0.0
    %6904 = vmatpush1.msra.mxu0 %v6674
    %6905 = vmatprep.subr.mxu0 0.0
    %6906 = vmatpush1.msra.mxu0 %v6673
    %6907 = vmatprep.subr.mxu0 0.0
    %6908 = vmatpush1.msra.mxu0 %v6672
    %6909 = vmatprep.subr.mxu0 0.0
    %6910 = vmatpush1.msra.mxu0 %v6671
    %6911 = vmatprep.subr.mxu0 0.0
    %6912 = vmatpush1.msra.mxu0 %v6670
    %6913 = vmatprep.subr.mxu0 0.0
    %6914 = vmatpush1.msra.mxu0 %v6669
    %6915 = vmatprep.subr.mxu0 0.0
    %6916 = vmatpush1.msra.mxu0 %v6668
    %6917 = vmatprep.subr.mxu0 0.0
    %6918 = vmatpush1.msra.mxu0 %v6667
    %6919 = vmatprep.subr.mxu0 0.0
    %6920 = vmatpush1.msra.mxu0 %v6666
    %6921 = vmatprep.subr.mxu0 0.0
    %6922 = vmatpush1.msra.mxu0 %v6665
    %6923 = vmatprep.subr.mxu0 0.0
    %6924 = vmatpush2.msra.mxu0 0.0
    %6925 = vmatprep.subr.mxu0 0.0
    %6926 = vmatpush2.msra.mxu0 0.0
    %6927 = vmatprep.subr.mxu0 0.0
    %6928 = vmatpush2.msra.mxu0 0.0
    %6929 = vmatprep.subr.mxu0 0.0
    %6930 = vmatpush2.msra.mxu0 0.0
    %6931 = vmatprep.subr.mxu0 0.0
    %6932 = vmatpush2.msra.mxu0 0.0
    %6933 = vmatprep.subr.mxu0 0.0
    %6934 = vmatpush2.msra.mxu0 0.0
    %6935 = vmatprep.subr.mxu0 0.0
    %6936 = vmatpush2.msra.mxu0 0.0
    %6937 = vmatprep.subr.mxu0 0.0
    %6938 = vmatpush2.msra.mxu0 0.0
    %6939 = vmatprep.subr.mxu0 0.0
    %6940 = vmatpush2.msra.mxu0 0.0
    %6941 = vmatprep.subr.mxu0 0.0
    %6942 = vmatpush2.msra.mxu0 0.0
    %6943 = vmatprep.subr.mxu0 0.0
    %6944 = vmatpush2.msra.mxu0 0.0
    %6945 = vmatprep.subr.mxu0 0.0
    %6946 = vmatpush2.msra.mxu0 0.0
    %6947 = vmatprep.subr.mxu0 0.0
    %6948 = vmatpush2.msra.mxu0 0.0
    %6949 = vmatprep.subr.mxu0 0.0
    %6950 = vmatpush2.msra.mxu0 0.0
    %6951 = vmatprep.subr.mxu0 0.0
    %6952 = vmatpush2.msra.mxu0 0.0
    %6953 = vmatprep.subr.mxu0 0.0
    %6954 = vmatpush2.msra.mxu0 0.0
    %6955 = vmatprep.mubr.f32.mxu0 0.0
    %6956 = vmatmul.mubr.f32.gmra.mxu0 %v6632
    %v6957 = vpop.f32.mrf.mxu0
    %v6958 = vadd.f32 %v6888, %v6957
    %v6959 = vpop.f32.mrf.mxu0
    %6960 = vdwg.mxu0
    %v6961 = vrcp.pop 72.0
    %v6962 = vmul.f32 %v6818, %v6961
    %v6963 = vmul.f32 %v6958, %v6961
    %v6964 = vmul.f32 %v6962, %v6962
    %v6965 = vsub.f32 %v6963, %v6964
    %v6966 = vld [vmem:[#allocation16] sm:$0x1]
    %v6967 = vadd.f32 %v6965, 1e-05
    %v6968 = vrsqrt.pop %v6967
    %v6969 = vmul.f32 %v6966, %v6968
    %v6970 = vld [vmem:[#allocation17] sm:$0x1]
    %v6971 = vmul.f32 %v6962, %v6969
    %v6972 = vsub.f32 %v6970, %v6971
    %v6973 = vld [vmem:[#allocation14] sm:$0xff]
    %v6974 = vld [vmem:[#allocation14 + $0x8] sm:$0xff]
    %v6975 = vld [vmem:[#allocation14 + $0x10] sm:$0xff]
    %v6976 = vld [vmem:[#allocation14 + $0x18] sm:$0xff]
    %v6977 = vld [vmem:[#allocation14 + $0x20] sm:$0xff]
    %v6978 = vld [vmem:[#allocation14 + $0x28] sm:$0xff]
    %v6979 = vld [vmem:[#allocation14 + $0x30] sm:$0xff]
    %v6980 = vld [vmem:[#allocation14 + $0x38] sm:$0xff]
    %v6981 = vld [vmem:[#allocation14 + $0x40] sm:$0xff]
    %v6982 = vld [vmem:[#allocation14 + $0x48] sm:$0xff]
    %v6983 = vld [vmem:[#allocation14 + $0x50] sm:$0xff]
    %v6984 = vld [vmem:[#allocation14 + $0x58] sm:$0xff]
    %v6985 = vld [vmem:[#allocation14 + $0x60] sm:$0xff]
    %v6986 = vld [vmem:[#allocation14 + $0x68] sm:$0xff]
    %v6987 = vld [vmem:[#allocation14 + $0x70] sm:$0xff]
    %v6988 = vld [vmem:[#allocation14 + $0x78] sm:$0xff]
    %v6989 = vld [vmem:[#allocation14 + $0x80] sm:$0xff]
    %v6990 = vld [vmem:[#allocation14 + $0x88] sm:$0xff]
    %v6991 = vld [vmem:[#allocation14 + $0x90] sm:$0xff]
    %v6992 = vld [vmem:[#allocation14 + $0x98] sm:$0xff]
    %v6993 = vld [vmem:[#allocation14 + $0xa0] sm:$0xff]
    %v6994 = vld [vmem:[#allocation14 + $0xa8] sm:$0xff]
    %v6995 = vld [vmem:[#allocation14 + $0xb0] sm:$0xff]
    %v6996 = vld [vmem:[#allocation14 + $0xb8] sm:$0xff]
    %vm6997 = vcmask 523264
    %v6999 = vsel %vm6997, %v6969, 0
    %7001 = vmatprep.subr.mxu0 0.0
    %7002 = vmatpush1.msra.mxu0 0.0
    %7003 = vmatprep.subr.mxu0 0.0
    %7004 = vmatpush1.msra.mxu0 0.0
    %7005 = vmatprep.subr.mxu0 0.0
    %7006 = vmatpush1.msra.mxu0 0.0
    %7007 = vmatprep.subr.mxu0 0.0
    %7008 = vmatpush1.msra.mxu0 0.0
    %7009 = vmatprep.subr.mxu0 0.0
    %7010 = vmatpush1.msra.mxu0 0.0
    %7011 = vmatprep.subr.mxu0 0.0
    %7012 = vmatpush1.msra.mxu0 0.0
    %7013 = vmatprep.subr.mxu0 0.0
    %7014 = vmatpush1.msra.mxu0 0.0
    %7015 = vmatprep.subr.mxu0 0.0
    %7016 = vmatpush1.msra.mxu0 0.0
    %7017 = vmatprep.subr.mxu0 %v6995
    %7018 = vmatpush1.msra.mxu0 %v6994
    %7019 = vmatprep.subr.mxu0 %v6992
    %7020 = vmatpush1.msra.mxu0 %v6991
    %7021 = vmatprep.subr.mxu0 %v6989
    %7022 = vmatpush1.msra.mxu0 %v6988
    %7023 = vmatprep.subr.mxu0 %v6986
    %7024 = vmatpush1.msra.mxu0 %v6985
    %7025 = vmatprep.subr.mxu0 %v6983
    %7026 = vmatpush1.msra.mxu0 %v6982
    %7027 = vmatprep.subr.mxu0 %v6980
    %7028 = vmatpush1.msra.mxu0 %v6979
    %7029 = vmatprep.subr.mxu0 %v6977
    %7030 = vmatpush1.msra.mxu0 %v6976
    %7031 = vmatprep.subr.mxu0 %v6974
    %7032 = vmatpush1.msra.mxu0 %v6973
    %7033 = vmatprep.subr.mxu0 0.0
    %7034 = vmatpush2.msra.mxu0 0.0
    %7035 = vmatprep.subr.mxu0 0.0
    %7036 = vmatpush2.msra.mxu0 0.0
    %7037 = vmatprep.subr.mxu0 0.0
    %7038 = vmatpush2.msra.mxu0 0.0
    %7039 = vmatprep.subr.mxu0 0.0
    %7040 = vmatpush2.msra.mxu0 0.0
    %7041 = vmatprep.subr.mxu0 0.0
    %7042 = vmatpush2.msra.mxu0 0.0
    %7043 = vmatprep.subr.mxu0 0.0
    %7044 = vmatpush2.msra.mxu0 0.0
    %7045 = vmatprep.subr.mxu0 0.0
    %7046 = vmatpush2.msra.mxu0 0.0
    %7047 = vmatprep.subr.mxu0 0.0
    %7048 = vmatpush2.msra.mxu0 0.0
    %7049 = vmatprep.subr.mxu0 0.0
    %7050 = vmatpush2.msra.mxu0 0.0
    %7051 = vmatprep.subr.mxu0 0.0
    %7052 = vmatpush2.msra.mxu0 0.0
    %7053 = vmatprep.subr.mxu0 0.0
    %7054 = vmatpush2.msra.mxu0 0.0
    %7055 = vmatprep.subr.mxu0 0.0
    %7056 = vmatpush2.msra.mxu0 0.0
    %7057 = vmatprep.subr.mxu0 0.0
    %7058 = vmatpush2.msra.mxu0 0.0
    %7059 = vmatprep.subr.mxu0 0.0
    %7060 = vmatpush2.msra.mxu0 0.0
    %7061 = vmatprep.subr.mxu0 0.0
    %7062 = vmatpush2.msra.mxu0 0.0
    %7063 = vmatprep.subr.mxu0 0.0
    %7064 = vmatpush2.msra.mxu0 0.0
    %7065 = vmatprep.mubr.f32.mxu0 0.0
    %7066 = vmatmul.mubr.f32.gmra.mxu0 %v6999
    %v7067 = vpop.f32.mrf.mxu0
    %v7068 = vadd.f32 0.0, %v7067
    %v7069 = vpop.f32.mrf.mxu0
    %v7070 = vadd.f32 0.0, %v7069
    %7071 = vdwg.mxu0
    %7072 = vmatprep.subr.mxu0 0.0
    %7073 = vmatpush1.msra.mxu0 0.0
    %7074 = vmatprep.subr.mxu0 0.0
    %7075 = vmatpush1.msra.mxu0 0.0
    %7076 = vmatprep.subr.mxu0 0.0
    %7077 = vmatpush1.msra.mxu0 0.0
    %7078 = vmatprep.subr.mxu0 0.0
    %7079 = vmatpush1.msra.mxu0 0.0
    %7080 = vmatprep.subr.mxu0 0.0
    %7081 = vmatpush1.msra.mxu0 0.0
    %7082 = vmatprep.subr.mxu0 0.0
    %7083 = vmatpush1.msra.mxu0 0.0
    %7084 = vmatprep.subr.mxu0 0.0
    %7085 = vmatpush1.msra.mxu0 0.0
    %7086 = vmatprep.subr.mxu0 0.0
    %7087 = vmatpush1.msra.mxu0 0.0
    %7088 = vmatprep.subr.mxu0 0.0
    %7089 = vmatpush1.msra.mxu0 %v6996
    %7090 = vmatprep.subr.mxu0 0.0
    %7091 = vmatpush1.msra.mxu0 %v6993
    %7092 = vmatprep.subr.mxu0 0.0
    %7093 = vmatpush1.msra.mxu0 %v6990
    %7094 = vmatprep.subr.mxu0 0.0
    %7095 = vmatpush1.msra.mxu0 %v6987
    %7096 = vmatprep.subr.mxu0 0.0
    %7097 = vmatpush1.msra.mxu0 %v6984
    %7098 = vmatprep.subr.mxu0 0.0
    %7099 = vmatpush1.msra.mxu0 %v6981
    %7100 = vmatprep.subr.mxu0 0.0
    %7101 = vmatpush1.msra.mxu0 %v6978
    %7102 = vmatprep.subr.mxu0 0.0
    %7103 = vmatpush1.msra.mxu0 %v6975
    %7104 = vmatprep.subr.mxu0 0.0
    %7105 = vmatpush2.msra.mxu0 0.0
    %7106 = vmatprep.subr.mxu0 0.0
    %7107 = vmatpush2.msra.mxu0 0.0
    %7108 = vmatprep.subr.mxu0 0.0
    %7109 = vmatpush2.msra.mxu0 0.0
    %7110 = vmatprep.subr.mxu0 0.0
    %7111 = vmatpush2.msra.mxu0 0.0
    %7112 = vmatprep.subr.mxu0 0.0
    %7113 = vmatpush2.msra.mxu0 0.0
    %7114 = vmatprep.subr.mxu0 0.0
    %7115 = vmatpush2.msra.mxu0 0.0
    %7116 = vmatprep.subr.mxu0 0.0
    %7117 = vmatpush2.msra.mxu0 0.0
    %7118 = vmatprep.subr.mxu0 0.0
    %7119 = vmatpush2.msra.mxu0 0.0
    %7120 = vmatprep.subr.mxu0 0.0
    %7121 = vmatpush2.msra.mxu0 0.0
    %7122 = vmatprep.subr.mxu0 0.0
    %7123 = vmatpush2.msra.mxu0 0.0
    %7124 = vmatprep.subr.mxu0 0.0
    %7125 = vmatpush2.msra.mxu0 0.0
    %7126 = vmatprep.subr.mxu0 0.0
    %7127 = vmatpush2.msra.mxu0 0.0
    %7128 = vmatprep.subr.mxu0 0.0
    %7129 = vmatpush2.msra.mxu0 0.0
    %7130 = vmatprep.subr.mxu0 0.0
    %7131 = vmatpush2.msra.mxu0 0.0
    %7132 = vmatprep.subr.mxu0 0.0
    %7133 = vmatpush2.msra.mxu0 0.0
    %7134 = vmatprep.subr.mxu0 0.0
    %7135 = vmatpush2.msra.mxu0 0.0
    %7136 = vmatprep.mubr.f32.mxu0 0.0
    %7137 = vmatmul.mubr.f32.gmra.mxu0 %v6999
    %v7138 = vpop.f32.mrf.mxu0
    %v7139 = vadd.f32 0.0, %v7138
    %v7140 = vpop.f32.mrf.mxu0
    %7141 = vdwg.mxu0
    %v7143 = vsel %vm6997, %v6972, 0
    %7145 = vmatprep.subr.mxu0 0.0
    %7146 = vmatpush1.msra.mxu0 0.0
    %7147 = vmatprep.subr.mxu0 0.0
    %7148 = vmatpush1.msra.mxu0 0.0
    %7149 = vmatprep.subr.mxu0 0.0
    %7150 = vmatpush1.msra.mxu0 0.0
    %7151 = vmatprep.subr.mxu0 0.0
    %7152 = vmatpush1.msra.mxu0 0.0
    %7153 = vmatprep.subr.mxu0 0.0
    %7154 = vmatpush1.msra.mxu0 0.0
    %7155 = vmatprep.subr.mxu0 0.0
    %7156 = vmatpush1.msra.mxu0 0.0
    %7157 = vmatprep.subr.mxu0 0.0
    %7158 = vmatpush1.msra.mxu0 0.0
    %7159 = vmatprep.subr.mxu0 0.0
    %7160 = vmatpush1.msra.mxu0 0.0
    %7161 = vmatprep.subr.mxu0 %v6995
    %7162 = vmatpush1.msra.mxu0 %v6994
    %7163 = vmatprep.subr.mxu0 %v6992
    %7164 = vmatpush1.msra.mxu0 %v6991
    %7165 = vmatprep.subr.mxu0 %v6989
    %7166 = vmatpush1.msra.mxu0 %v6988
    %7167 = vmatprep.subr.mxu0 %v6986
    %7168 = vmatpush1.msra.mxu0 %v6985
    %7169 = vmatprep.subr.mxu0 %v6983
    %7170 = vmatpush1.msra.mxu0 %v6982
    %7171 = vmatprep.subr.mxu0 %v6980
    %7172 = vmatpush1.msra.mxu0 %v6979
    %7173 = vmatprep.subr.mxu0 %v6977
    %7174 = vmatpush1.msra.mxu0 %v6976
    %7175 = vmatprep.subr.mxu0 %v6974
    %7176 = vmatpush1.msra.mxu0 %v6973
    %7177 = vmatprep.subr.mxu0 0.0
    %7178 = vmatpush2.msra.mxu0 0.0
    %7179 = vmatprep.subr.mxu0 0.0
    %7180 = vmatpush2.msra.mxu0 0.0
    %7181 = vmatprep.subr.mxu0 0.0
    %7182 = vmatpush2.msra.mxu0 0.0
    %7183 = vmatprep.subr.mxu0 0.0
    %7184 = vmatpush2.msra.mxu0 0.0
    %7185 = vmatprep.subr.mxu0 0.0
    %7186 = vmatpush2.msra.mxu0 0.0
    %7187 = vmatprep.subr.mxu0 0.0
    %7188 = vmatpush2.msra.mxu0 0.0
    %7189 = vmatprep.subr.mxu0 0.0
    %7190 = vmatpush2.msra.mxu0 0.0
    %7191 = vmatprep.subr.mxu0 0.0
    %7192 = vmatpush2.msra.mxu0 0.0
    %7193 = vmatprep.subr.mxu0 0.0
    %7194 = vmatpush2.msra.mxu0 0.0
    %7195 = vmatprep.subr.mxu0 0.0
    %7196 = vmatpush2.msra.mxu0 0.0
    %7197 = vmatprep.subr.mxu0 0.0
    %7198 = vmatpush2.msra.mxu0 0.0
    %7199 = vmatprep.subr.mxu0 0.0
    %7200 = vmatpush2.msra.mxu0 0.0
    %7201 = vmatprep.subr.mxu0 0.0
    %7202 = vmatpush2.msra.mxu0 0.0
    %7203 = vmatprep.subr.mxu0 0.0
    %7204 = vmatpush2.msra.mxu0 0.0
    %7205 = vmatprep.subr.mxu0 0.0
    %7206 = vmatpush2.msra.mxu0 0.0
    %7207 = vmatprep.subr.mxu0 0.0
    %7208 = vmatpush2.msra.mxu0 0.0
    %7209 = vmatprep.mubr.f32.mxu0 0.0
    %7210 = vmatmul.mubr.f32.gmra.mxu0 %v7143
    %v7211 = vpop.f32.mrf.mxu0
    %v7212 = vadd.f32 0.0, %v7211
    %v7213 = vpop.f32.mrf.mxu0
    %v7214 = vadd.f32 0.0, %v7213
    %7215 = vdwg.mxu0
    %7216 = vmatprep.subr.mxu0 0.0
    %7217 = vmatpush1.msra.mxu0 0.0
    %7218 = vmatprep.subr.mxu0 0.0
    %7219 = vmatpush1.msra.mxu0 0.0
    %7220 = vmatprep.subr.mxu0 0.0
    %7221 = vmatpush1.msra.mxu0 0.0
    %7222 = vmatprep.subr.mxu0 0.0
    %7223 = vmatpush1.msra.mxu0 0.0
    %7224 = vmatprep.subr.mxu0 0.0
    %7225 = vmatpush1.msra.mxu0 0.0
    %7226 = vmatprep.subr.mxu0 0.0
    %7227 = vmatpush1.msra.mxu0 0.0
    %7228 = vmatprep.subr.mxu0 0.0
    %7229 = vmatpush1.msra.mxu0 0.0
    %7230 = vmatprep.subr.mxu0 0.0
    %7231 = vmatpush1.msra.mxu0 0.0
    %7232 = vmatprep.subr.mxu0 0.0
    %7233 = vmatpush1.msra.mxu0 %v6996
    %7234 = vmatprep.subr.mxu0 0.0
    %7235 = vmatpush1.msra.mxu0 %v6993
    %7236 = vmatprep.subr.mxu0 0.0
    %7237 = vmatpush1.msra.mxu0 %v6990
    %7238 = vmatprep.subr.mxu0 0.0
    %7239 = vmatpush1.msra.mxu0 %v6987
    %7240 = vmatprep.subr.mxu0 0.0
    %7241 = vmatpush1.msra.mxu0 %v6984
    %7242 = vmatprep.subr.mxu0 0.0
    %7243 = vmatpush1.msra.mxu0 %v6981
    %7244 = vmatprep.subr.mxu0 0.0
    %7245 = vmatpush1.msra.mxu0 %v6978
    %7246 = vmatprep.subr.mxu0 0.0
    %7247 = vmatpush1.msra.mxu0 %v6975
    %7248 = vmatprep.subr.mxu0 0.0
    %7249 = vmatpush2.msra.mxu0 0.0
    %7250 = vmatprep.subr.mxu0 0.0
    %7251 = vmatpush2.msra.mxu0 0.0
    %7252 = vmatprep.subr.mxu0 0.0
    %7253 = vmatpush2.msra.mxu0 0.0
    %7254 = vmatprep.subr.mxu0 0.0
    %7255 = vmatpush2.msra.mxu0 0.0
    %7256 = vmatprep.subr.mxu0 0.0
    %7257 = vmatpush2.msra.mxu0 0.0
    %7258 = vmatprep.subr.mxu0 0.0
    %7259 = vmatpush2.msra.mxu0 0.0
    %7260 = vmatprep.subr.mxu0 0.0
    %7261 = vmatpush2.msra.mxu0 0.0
    %7262 = vmatprep.subr.mxu0 0.0
    %7263 = vmatpush2.msra.mxu0 0.0
    %7264 = vmatprep.subr.mxu0 0.0
    %7265 = vmatpush2.msra.mxu0 0.0
    %7266 = vmatprep.subr.mxu0 0.0
    %7267 = vmatpush2.msra.mxu0 0.0
    %7268 = vmatprep.subr.mxu0 0.0
    %7269 = vmatpush2.msra.mxu0 0.0
    %7270 = vmatprep.subr.mxu0 0.0
    %7271 = vmatpush2.msra.mxu0 0.0
    %7272 = vmatprep.subr.mxu0 0.0
    %7273 = vmatpush2.msra.mxu0 0.0
    %7274 = vmatprep.subr.mxu0 0.0
    %7275 = vmatpush2.msra.mxu0 0.0
    %7276 = vmatprep.subr.mxu0 0.0
    %7277 = vmatpush2.msra.mxu0 0.0
    %7278 = vmatprep.subr.mxu0 0.0
    %7279 = vmatpush2.msra.mxu0 0.0
    %7280 = vmatprep.mubr.f32.mxu0 0.0
    %7281 = vmatmul.mubr.f32.gmra.mxu0 %v7143
    %v7282 = vpop.f32.mrf.mxu0
    %v7283 = vadd.f32 0.0, %v7282
    %v7284 = vpop.f32.mrf.mxu0
    %7285 = vdwg.mxu0
    %v7286 = vlaneseq
    %v7287 = vshrl.u32 %v7286, 7
    %v7288 = vsub.s32 0, %v7287
    %v7289 = vrot.slane %v7068, %v7288
    %v7290 = vlaneseq
    %v7291 = vshrl.u32 %v7290, 7
    %v7292 = vsub.s32 0, %v7291
    %v7293 = vrot.slane %v7070, %v7292
    %v7294 = vlaneseq
    %v7295 = vshrl.u32 %v7294, 7
    %v7296 = vsub.s32 0, %v7295
    %v7297 = vrot.slane %v7139, %v7296
    %v7298 = vmul.f32 %v6573, %v7289
    %v7299 = vmul.f32 %v6574, %v7293
    %v7300 = vmul.f32 %v6575, %v7297
    %v7301 = vmul.f32 %v6576, %v7289
    %v7302 = vmul.f32 %v6577, %v7293
    %v7303 = vmul.f32 %v6578, %v7297
    %v7304 = vlaneseq
    %v7305 = vshrl.u32 %v7304, 7
    %v7306 = vsub.s32 0, %v7305
    %v7307 = vrot.slane %v7212, %v7306
    %v7308 = vlaneseq
    %v7309 = vshrl.u32 %v7308, 7
    %v7310 = vsub.s32 0, %v7309
    %v7311 = vrot.slane %v7214, %v7310
    %v7312 = vlaneseq
    %v7313 = vshrl.u32 %v7312, 7
    %v7314 = vsub.s32 0, %v7313
    %v7315 = vrot.slane %v7283, %v7314
    %v7316 = vadd.f32 %v7298, %v7307
    %v7317 = vadd.f32 %v7299, %v7311
    %v7318 = vadd.f32 %v7300, %v7315
    %v7319 = vadd.f32 %v7301, %v7307
    %v7320 = vadd.f32 %v7302, %v7311
    %v7321 = vadd.f32 %v7303, %v7315
    %v7322 = vpack.c.bf16 %v7319, %v7316
    %v7323 = vpack.c.bf16 %v7320, %v7317
    %v7324 = vpack.c.bf16 %v7321, %v7318
    %v7325 = vld [vmem:[#allocation19] sm:$0xf]
    %v7326 = vld [vmem:[#allocation19 + $0x4] sm:$0xf]
    %v7327 = vld [vmem:[#allocation19 + $0x8] sm:$0xf]
    %v7328 = vld [vmem:[#allocation19 + $0xc] sm:$0xf]
    %v7329 = vld [vmem:[#allocation19 + $0x10] sm:$0xf]
    %v7330 = vld [vmem:[#allocation19 + $0x14] sm:$0xf]
    %v7331 = vld [vmem:[#allocation19 + $0x18] sm:$0xf]
    %v7332 = vld [vmem:[#allocation19 + $0x1c] sm:$0xf]
    %v7333 = vld [vmem:[#allocation19 + $0x20] sm:$0xf]
    %v7334 = vld [vmem:[#allocation19 + $0x24] sm:$0xf]
    %v7335 = vld [vmem:[#allocation19 + $0x28] sm:$0xf]
    %v7336 = vld [vmem:[#allocation19 + $0x2c] sm:$0xf]
    %v7337 = vld [vmem:[#allocation19 + $0x30] sm:$0xf]
    %v7338 = vld [vmem:[#allocation19 + $0x34] sm:$0xf]
    %v7339 = vld [vmem:[#allocation19 + $0x38] sm:$0xf]
    %v7340 = vld [vmem:[#allocation19 + $0x3c] sm:$0xf]
    %v7341 = vld [vmem:[#allocation19 + $0x40] sm:$0xf]
    %v7342 = vld [vmem:[#allocation19 + $0x44] sm:$0xf]
    %v7343 = vld [vmem:[#allocation19 + $0x48] sm:$0xf]
    %v7344 = vld [vmem:[#allocation19 + $0x4c] sm:$0xf]
    %v7345 = vld [vmem:[#allocation19 + $0x50] sm:$0xf]
    %v7346 = vld [vmem:[#allocation19 + $0x54] sm:$0xf]
    %v7347 = vld [vmem:[#allocation19 + $0x58] sm:$0xf]
    %v7348 = vld [vmem:[#allocation19 + $0x5c] sm:$0xf]
    %v7349 = vld [vmem:[#allocation19 + $0x60] sm:$0xf]
    %v7350 = vld [vmem:[#allocation19 + $0x64] sm:$0xf]
    %v7351 = vld [vmem:[#allocation19 + $0x68] sm:$0xf]
    %v7352 = vld [vmem:[#allocation19 + $0x6c] sm:$0xf]
    %v7353 = vld [vmem:[#allocation19 + $0x70] sm:$0xf]
    %v7354 = vld [vmem:[#allocation19 + $0x74] sm:$0xf]
    %v7355 = vld [vmem:[#allocation19 + $0x78] sm:$0xf]
    %v7356 = vld [vmem:[#allocation19 + $0x7c] sm:$0xf]
    %v7357 = vld [vmem:[#allocation19 + $0x80] sm:$0xf]
    %v7358 = vld [vmem:[#allocation19 + $0x84] sm:$0xf]
    %v7359 = vld [vmem:[#allocation19 + $0x88] sm:$0xf]
    %v7360 = vld [vmem:[#allocation19 + $0x8c] sm:$0xf]
    %v7361 = vld [vmem:[#allocation19 + $0x90] sm:$0xf]
    %v7362 = vld [vmem:[#allocation19 + $0x94] sm:$0xf]
    %v7363 = vld [vmem:[#allocation19 + $0x98] sm:$0xf]
    %v7364 = vld [vmem:[#allocation19 + $0x9c] sm:$0xf]
    %v7365 = vld [vmem:[#allocation19 + $0xa0] sm:$0xf]
    %v7366 = vld [vmem:[#allocation19 + $0xa4] sm:$0xf]
    %v7367 = vld [vmem:[#allocation19 + $0xa8] sm:$0xf]
    %v7368 = vld [vmem:[#allocation19 + $0xac] sm:$0xf]
    %v7369 = vld [vmem:[#allocation19 + $0xb0] sm:$0xf]
    %v7370 = vld [vmem:[#allocation19 + $0xb4] sm:$0xf]
    %v7371 = vld [vmem:[#allocation19 + $0xb8] sm:$0xf]
    %v7372 = vld [vmem:[#allocation19 + $0xbc] sm:$0xf]
    %s7373 = scalar_lea.vmem [#allocation19], 192
    %v7374 = vld [vmem:[%s7373] sm:$0xf]
    %v7375 = vld [vmem:[%s7373 + $0x4] sm:$0xf]
    %v7376 = vld [vmem:[%s7373 + $0x8] sm:$0xf]
    %v7377 = vld [vmem:[%s7373 + $0xc] sm:$0xf]
    %v7378 = vld [vmem:[%s7373 + $0x10] sm:$0xf]
    %v7379 = vld [vmem:[%s7373 + $0x14] sm:$0xf]
    %v7380 = vld [vmem:[%s7373 + $0x18] sm:$0xf]
    %v7381 = vld [vmem:[%s7373 + $0x1c] sm:$0xf]
    %v7382 = vld [vmem:[%s7373 + $0x20] sm:$0xf]
    %v7383 = vld [vmem:[%s7373 + $0x24] sm:$0xf]
    %v7384 = vld [vmem:[%s7373 + $0x28] sm:$0xf]
    %v7385 = vld [vmem:[%s7373 + $0x2c] sm:$0xf]
    %v7386 = vld [vmem:[%s7373 + $0x30] sm:$0xf]
    %v7387 = vld [vmem:[%s7373 + $0x34] sm:$0xf]
    %v7388 = vld [vmem:[%s7373 + $0x38] sm:$0xf]
    %v7389 = vld [vmem:[%s7373 + $0x3c] sm:$0xf]
    %v7390 = vld [vmem:[%s7373 + $0x40] sm:$0xf]
    %v7391 = vld [vmem:[%s7373 + $0x44] sm:$0xf]
    %v7392 = vld [vmem:[%s7373 + $0x48] sm:$0xf]
    %v7393 = vld [vmem:[%s7373 + $0x4c] sm:$0xf]
    %v7394 = vld [vmem:[%s7373 + $0x50] sm:$0xf]
    %v7395 = vld [vmem:[%s7373 + $0x54] sm:$0xf]
    %v7396 = vld [vmem:[%s7373 + $0x58] sm:$0xf]
    %v7397 = vld [vmem:[%s7373 + $0x5c] sm:$0xf]
    %v7398 = vld [vmem:[%s7373 + $0x60] sm:$0xf]
    %v7399 = vld [vmem:[%s7373 + $0x64] sm:$0xf]
    %v7400 = vld [vmem:[%s7373 + $0x68] sm:$0xf]
    %v7401 = vld [vmem:[%s7373 + $0x6c] sm:$0xf]
    %v7402 = vld [vmem:[%s7373 + $0x70] sm:$0xf]
    %v7403 = vld [vmem:[%s7373 + $0x74] sm:$0xf]
    %v7404 = vld [vmem:[%s7373 + $0x78] sm:$0xf]
    %v7405 = vld [vmem:[%s7373 + $0x7c] sm:$0xf]
    %v7406 = vld [vmem:[%s7373 + $0x80] sm:$0xf]
    %v7407 = vld [vmem:[%s7373 + $0x84] sm:$0xf]
    %v7408 = vld [vmem:[%s7373 + $0x88] sm:$0xf]
    %v7409 = vld [vmem:[%s7373 + $0x8c] sm:$0xf]
    %v7410 = vld [vmem:[%s7373 + $0x90] sm:$0xf]
    %v7411 = vld [vmem:[%s7373 + $0x94] sm:$0xf]
    %v7412 = vld [vmem:[%s7373 + $0x98] sm:$0xf]
    %v7413 = vld [vmem:[%s7373 + $0x9c] sm:$0xf]
    %v7414 = vld [vmem:[%s7373 + $0xa0] sm:$0xf]
    %v7415 = vld [vmem:[%s7373 + $0xa4] sm:$0xf]
    %v7416 = vld [vmem:[%s7373 + $0xa8] sm:$0xf]
    %v7417 = vld [vmem:[%s7373 + $0xac] sm:$0xf]
    %v7418 = vld [vmem:[%s7373 + $0xb0] sm:$0xf]
    %v7419 = vld [vmem:[%s7373 + $0xb4] sm:$0xf]
    %v7420 = vld [vmem:[%s7373 + $0xb8] sm:$0xf]
    %v7421 = vld [vmem:[%s7373 + $0xbc] sm:$0xf]
    %v7425 = vrot.slane %v7322, 1
    %v7426 = vrot.slane %v7323, 1
    %v7427 = vrot.slane %v7324, 1
    %v7479 = vunpack.c.l.b16 %v7374
    %v7480 = vunpack.c.l.b16 %v7375
    %v7481 = vunpack.c.l.b16 %v7376
    %v7482 = vunpack.c.l.b16 %v7377
    %v7483 = vunpack.c.l.b16 %v7378
    %v7484 = vunpack.c.l.b16 %v7379
    %v7485 = vunpack.c.l.b16 %v7380
    %v7486 = vunpack.c.l.b16 %v7381
    %v7487 = vunpack.c.l.b16 %v7382
    %v7488 = vunpack.c.l.b16 %v7383
    %v7489 = vunpack.c.l.b16 %v7384
    %v7490 = vunpack.c.l.b16 %v7385
    %v7491 = vunpack.c.l.b16 %v7386
    %v7492 = vunpack.c.l.b16 %v7387
    %v7493 = vunpack.c.l.b16 %v7388
    %v7494 = vunpack.c.l.b16 %v7389
    %v7495 = vunpack.c.l.b16 %v7390
    %v7496 = vunpack.c.l.b16 %v7391
    %v7497 = vunpack.c.l.b16 %v7392
    %v7498 = vunpack.c.l.b16 %v7393
    %v7499 = vunpack.c.l.b16 %v7394
    %v7500 = vunpack.c.l.b16 %v7395
    %v7501 = vunpack.c.l.b16 %v7396
    %v7502 = vunpack.c.l.b16 %v7397
    %v7503 = vunpack.c.l.b16 %v7398
    %v7504 = vunpack.c.l.b16 %v7399
    %v7505 = vunpack.c.l.b16 %v7400
    %v7506 = vunpack.c.l.b16 %v7401
    %v7507 = vunpack.c.l.b16 %v7402
    %v7508 = vunpack.c.l.b16 %v7403
    %v7509 = vunpack.c.l.b16 %v7404
    %v7510 = vunpack.c.l.b16 %v7405
    %v7511 = vunpack.c.l.b16 %v7406
    %v7512 = vunpack.c.l.b16 %v7407
    %v7513 = vunpack.c.l.b16 %v7408
    %v7514 = vunpack.c.l.b16 %v7409
    %v7515 = vunpack.c.l.b16 %v7410
    %v7516 = vunpack.c.l.b16 %v7411
    %v7517 = vunpack.c.l.b16 %v7412
    %v7518 = vunpack.c.l.b16 %v7413
    %v7519 = vunpack.c.l.b16 %v7414
    %v7520 = vunpack.c.l.b16 %v7415
    %v7521 = vunpack.c.l.b16 %v7416
    %v7522 = vunpack.c.l.b16 %v7417
    %v7523 = vunpack.c.l.b16 %v7418
    %v7524 = vunpack.c.l.b16 %v7419
    %v7525 = vunpack.c.l.b16 %v7420
    %v7526 = vunpack.c.l.b16 %v7421
    %v7527 = vpack.c.b16 %v7480, %v7479
    %v7528 = vpack.c.b16 %v7482, %v7481
    %v7529 = vpack.c.b16 %v7484, %v7483
    %v7530 = vpack.c.b16 %v7486, %v7485
    %v7531 = vpack.c.b16 %v7488, %v7487
    %v7532 = vpack.c.b16 %v7490, %v7489
    %v7533 = vpack.c.b16 %v7492, %v7491
    %v7534 = vpack.c.b16 %v7494, %v7493
    %v7535 = vpack.c.b16 %v7496, %v7495
    %v7536 = vpack.c.b16 %v7498, %v7497
    %v7537 = vpack.c.b16 %v7500, %v7499
    %v7538 = vpack.c.b16 %v7502, %v7501
    %v7539 = vpack.c.b16 %v7504, %v7503
    %v7540 = vpack.c.b16 %v7506, %v7505
    %v7541 = vpack.c.b16 %v7508, %v7507
    %v7542 = vpack.c.b16 %v7510, %v7509
    %v7543 = vpack.c.b16 %v7512, %v7511
    %v7544 = vpack.c.b16 %v7514, %v7513
    %v7545 = vpack.c.b16 %v7516, %v7515
    %v7546 = vpack.c.b16 %v7518, %v7517
    %v7547 = vpack.c.b16 %v7520, %v7519
    %v7548 = vpack.c.b16 %v7522, %v7521
    %v7549 = vpack.c.b16 %v7524, %v7523
    %v7550 = vpack.c.b16 %v7526, %v7525
    %7575 = vmatprep.subr.bf16.mxu0 0
    %7576 = vmatpush1.bf16.msra.mxu0 %v7534
    %7577 = vmatprep.subr.bf16.mxu0 0
    %7578 = vmatpush1.bf16.msra.mxu0 %v7533
    %7579 = vmatprep.subr.bf16.mxu0 0
    %7580 = vmatpush1.bf16.msra.mxu0 %v7532
    %7581 = vmatprep.subr.bf16.mxu0 0
    %7582 = vmatpush1.bf16.msra.mxu0 %v7531
    %7583 = vmatprep.subr.bf16.mxu0 0
    %7584 = vmatpush1.bf16.msra.mxu0 %v7530
    %7585 = vmatprep.subr.bf16.mxu0 0
    %7586 = vmatpush1.bf16.msra.mxu0 %v7529
    %7587 = vmatprep.subr.bf16.mxu0 0
    %7588 = vmatpush1.bf16.msra.mxu0 %v7528
    %7589 = vmatprep.subr.bf16.mxu0 0
    %7590 = vmatpush1.bf16.msra.mxu0 %v7527
    %7591 = vmatprep.subr.bf16.mxu0 0
    %7592 = vmatpush2.bf16.msra.mxu0 %v7542
    %7593 = vmatprep.subr.bf16.mxu0 0
    %7594 = vmatpush2.bf16.msra.mxu0 %v7541
    %7595 = vmatprep.subr.bf16.mxu0 0
    %7596 = vmatpush2.bf16.msra.mxu0 %v7540
    %7597 = vmatprep.subr.bf16.mxu0 0
    %7598 = vmatpush2.bf16.msra.mxu0 %v7539
    %7599 = vmatprep.subr.bf16.mxu0 0
    %7600 = vmatpush2.bf16.msra.mxu0 %v7538
    %7601 = vmatprep.subr.bf16.mxu0 0
    %7602 = vmatpush2.bf16.msra.mxu0 %v7537
    %7603 = vmatprep.subr.bf16.mxu0 0
    %7604 = vmatpush2.bf16.msra.mxu0 %v7536
    %7605 = vmatprep.subr.bf16.mxu0 0
    %7606 = vmatpush2.bf16.msra.mxu0 %v7535
    %7607 = vmatprep.mubr.bf16.mxu0 %v7426
    %7608 = vmatmul.mubr.bf16.gmra.mxu0 %v7425
    %v7609 = vpop.f32.mrf.mxu0
    %v7610 = vadd.f32 0.0, %v7609
    %v7611 = vpop.f32.mrf.mxu0
    %v7612 = vpop.f32.mrf.mxu0
    %v7613 = vpop.f32.mrf.mxu0
    %7614 = vdwg.mxu0
    %7615 = vmatprep.subr.bf16.mxu0 0
    %7616 = vmatpush1.bf16.msra.mxu0 %v7550
    %7617 = vmatprep.subr.bf16.mxu0 0
    %7618 = vmatpush1.bf16.msra.mxu0 %v7549
    %7619 = vmatprep.subr.bf16.mxu0 0
    %7620 = vmatpush1.bf16.msra.mxu0 %v7548
    %7621 = vmatprep.subr.bf16.mxu0 0
    %7622 = vmatpush1.bf16.msra.mxu0 %v7547
    %7623 = vmatprep.subr.bf16.mxu0 0
    %7624 = vmatpush1.bf16.msra.mxu0 %v7546
    %7625 = vmatprep.subr.bf16.mxu0 0
    %7626 = vmatpush1.bf16.msra.mxu0 %v7545
    %7627 = vmatprep.subr.bf16.mxu0 0
    %7628 = vmatpush1.bf16.msra.mxu0 %v7544
    %7629 = vmatprep.subr.bf16.mxu0 0
    %7630 = vmatpush1.bf16.msra.mxu0 %v7543
    %7631 = vmatprep.subr.bf16.mxu0 0
    %7632 = vmatpush2.bf16.msra.mxu0 0
    %7633 = vmatprep.subr.bf16.mxu0 0
    %7634 = vmatpush2.bf16.msra.mxu0 0
    %7635 = vmatprep.subr.bf16.mxu0 0
    %7636 = vmatpush2.bf16.msra.mxu0 0
    %7637 = vmatprep.subr.bf16.mxu0 0
    %7638 = vmatpush2.bf16.msra.mxu0 0
    %7639 = vmatprep.subr.bf16.mxu0 0
    %7640 = vmatpush2.bf16.msra.mxu0 0
    %7641 = vmatprep.subr.bf16.mxu0 0
    %7642 = vmatpush2.bf16.msra.mxu0 0
    %7643 = vmatprep.subr.bf16.mxu0 0
    %7644 = vmatpush2.bf16.msra.mxu0 0
    %7645 = vmatprep.subr.bf16.mxu0 0
    %7646 = vmatpush2.bf16.msra.mxu0 0
    %7647 = vmatprep.mubr.bf16.mxu0 0
    %7648 = vmatmul.mubr.bf16.gmra.mxu0 %v7427
    %v7649 = vpop.f32.mrf.mxu0
    %v7650 = vadd.f32 %v7610, %v7649
    %v7651 = vpop.f32.mrf.mxu0
    %v7652 = vpop.f32.mrf.mxu0
    %v7653 = vpop.f32.mrf.mxu0
    %7654 = vdwg.mxu0
    %v7703 = vunpack.c.l.b16 %v7325
    %v7704 = vunpack.c.l.b16 %v7326
    %v7705 = vunpack.c.l.b16 %v7327
    %v7706 = vunpack.c.l.b16 %v7328
    %v7707 = vunpack.c.l.b16 %v7329
    %v7708 = vunpack.c.l.b16 %v7330
    %v7709 = vunpack.c.l.b16 %v7331
    %v7710 = vunpack.c.l.b16 %v7332
    %v7711 = vunpack.c.l.b16 %v7333
    %v7712 = vunpack.c.l.b16 %v7334
    %v7713 = vunpack.c.l.b16 %v7335
    %v7714 = vunpack.c.l.b16 %v7336
    %v7715 = vunpack.c.l.b16 %v7337
    %v7716 = vunpack.c.l.b16 %v7338
    %v7717 = vunpack.c.l.b16 %v7339
    %v7718 = vunpack.c.l.b16 %v7340
    %v7719 = vunpack.c.l.b16 %v7341
    %v7720 = vunpack.c.l.b16 %v7342
    %v7721 = vunpack.c.l.b16 %v7343
    %v7722 = vunpack.c.l.b16 %v7344
    %v7723 = vunpack.c.l.b16 %v7345
    %v7724 = vunpack.c.l.b16 %v7346
    %v7725 = vunpack.c.l.b16 %v7347
    %v7726 = vunpack.c.l.b16 %v7348
    %v7727 = vunpack.c.l.b16 %v7349
    %v7728 = vunpack.c.l.b16 %v7350
    %v7729 = vunpack.c.l.b16 %v7351
    %v7730 = vunpack.c.l.b16 %v7352
    %v7731 = vunpack.c.l.b16 %v7353
    %v7732 = vunpack.c.l.b16 %v7354
    %v7733 = vunpack.c.l.b16 %v7355
    %v7734 = vunpack.c.l.b16 %v7356
    %v7735 = vunpack.c.l.b16 %v7357
    %v7736 = vunpack.c.l.b16 %v7358
    %v7737 = vunpack.c.l.b16 %v7359
    %v7738 = vunpack.c.l.b16 %v7360
    %v7739 = vunpack.c.l.b16 %v7361
    %v7740 = vunpack.c.l.b16 %v7362
    %v7741 = vunpack.c.l.b16 %v7363
    %v7742 = vunpack.c.l.b16 %v7364
    %v7743 = vunpack.c.l.b16 %v7365
    %v7744 = vunpack.c.l.b16 %v7366
    %v7745 = vunpack.c.l.b16 %v7367
    %v7746 = vunpack.c.l.b16 %v7368
    %v7747 = vunpack.c.l.b16 %v7369
    %v7748 = vunpack.c.l.b16 %v7370
    %v7749 = vunpack.c.l.b16 %v7371
    %v7750 = vunpack.c.l.b16 %v7372
    %v7751 = vpack.c.b16 %v7704, %v7703
    %v7752 = vpack.c.b16 %v7706, %v7705
    %v7753 = vpack.c.b16 %v7708, %v7707
    %v7754 = vpack.c.b16 %v7710, %v7709
    %v7755 = vpack.c.b16 %v7712, %v7711
    %v7756 = vpack.c.b16 %v7714, %v7713
    %v7757 = vpack.c.b16 %v7716, %v7715
    %v7758 = vpack.c.b16 %v7718, %v7717
    %v7759 = vpack.c.b16 %v7720, %v7719
    %v7760 = vpack.c.b16 %v7722, %v7721
    %v7761 = vpack.c.b16 %v7724, %v7723
    %v7762 = vpack.c.b16 %v7726, %v7725
    %v7763 = vpack.c.b16 %v7728, %v7727
    %v7764 = vpack.c.b16 %v7730, %v7729
    %v7765 = vpack.c.b16 %v7732, %v7731
    %v7766 = vpack.c.b16 %v7734, %v7733
    %v7767 = vpack.c.b16 %v7736, %v7735
    %v7768 = vpack.c.b16 %v7738, %v7737
    %v7769 = vpack.c.b16 %v7740, %v7739
    %v7770 = vpack.c.b16 %v7742, %v7741
    %v7771 = vpack.c.b16 %v7744, %v7743
    %v7772 = vpack.c.b16 %v7746, %v7745
    %v7773 = vpack.c.b16 %v7748, %v7747
    %v7774 = vpack.c.b16 %v7750, %v7749
    %7799 = vmatprep.subr.bf16.mxu0 0
    %7800 = vmatpush1.bf16.msra.mxu0 %v7758
    %7801 = vmatprep.subr.bf16.mxu0 0
    %7802 = vmatpush1.bf16.msra.mxu0 %v7757
    %7803 = vmatprep.subr.bf16.mxu0 0
    %7804 = vmatpush1.bf16.msra.mxu0 %v7756
    %7805 = vmatprep.subr.bf16.mxu0 0
    %7806 = vmatpush1.bf16.msra.mxu0 %v7755
    %7807 = vmatprep.subr.bf16.mxu0 0
    %7808 = vmatpush1.bf16.msra.mxu0 %v7754
    %7809 = vmatprep.subr.bf16.mxu0 0
    %7810 = vmatpush1.bf16.msra.mxu0 %v7753
    %7811 = vmatprep.subr.bf16.mxu0 0
    %7812 = vmatpush1.bf16.msra.mxu0 %v7752
    %7813 = vmatprep.subr.bf16.mxu0 0
    %7814 = vmatpush1.bf16.msra.mxu0 %v7751
    %7815 = vmatprep.subr.bf16.mxu0 0
    %7816 = vmatpush2.bf16.msra.mxu0 %v7766
    %7817 = vmatprep.subr.bf16.mxu0 0
    %7818 = vmatpush2.bf16.msra.mxu0 %v7765
    %7819 = vmatprep.subr.bf16.mxu0 0
    %7820 = vmatpush2.bf16.msra.mxu0 %v7764
    %7821 = vmatprep.subr.bf16.mxu0 0
    %7822 = vmatpush2.bf16.msra.mxu0 %v7763
    %7823 = vmatprep.subr.bf16.mxu0 0
    %7824 = vmatpush2.bf16.msra.mxu0 %v7762
    %7825 = vmatprep.subr.bf16.mxu0 0
    %7826 = vmatpush2.bf16.msra.mxu0 %v7761
    %7827 = vmatprep.subr.bf16.mxu0 0
    %7828 = vmatpush2.bf16.msra.mxu0 %v7760
    %7829 = vmatprep.subr.bf16.mxu0 0
    %7830 = vmatpush2.bf16.msra.mxu0 %v7759
    %7831 = vmatprep.mubr.bf16.mxu0 %v7323
    %7832 = vmatmul.mubr.bf16.gmra.mxu0 %v7322
    %v7833 = vpop.f32.mrf.mxu0
    %v7834 = vadd.f32 %v7650, %v7833
    %v7835 = vpop.f32.mrf.mxu0
    %v7836 = vpop.f32.mrf.mxu0
    %v7837 = vpop.f32.mrf.mxu0
    %7838 = vdwg.mxu0
    %7839 = vmatprep.subr.bf16.mxu0 0
    %7840 = vmatpush1.bf16.msra.mxu0 %v7774
    %7841 = vmatprep.subr.bf16.mxu0 0
    %7842 = vmatpush1.bf16.msra.mxu0 %v7773
    %7843 = vmatprep.subr.bf16.mxu0 0
    %7844 = vmatpush1.bf16.msra.mxu0 %v7772
    %7845 = vmatprep.subr.bf16.mxu0 0
    %7846 = vmatpush1.bf16.msra.mxu0 %v7771
    %7847 = vmatprep.subr.bf16.mxu0 0
    %7848 = vmatpush1.bf16.msra.mxu0 %v7770
    %7849 = vmatprep.subr.bf16.mxu0 0
    %7850 = vmatpush1.bf16.msra.mxu0 %v7769
    %7851 = vmatprep.subr.bf16.mxu0 0
    %7852 = vmatpush1.bf16.msra.mxu0 %v7768
    %7853 = vmatprep.subr.bf16.mxu0 0
    %7854 = vmatpush1.bf16.msra.mxu0 %v7767
    %7855 = vmatprep.subr.bf16.mxu0 0
    %7856 = vmatpush2.bf16.msra.mxu0 0
    %7857 = vmatprep.subr.bf16.mxu0 0
    %7858 = vmatpush2.bf16.msra.mxu0 0
    %7859 = vmatprep.subr.bf16.mxu0 0
    %7860 = vmatpush2.bf16.msra.mxu0 0
    %7861 = vmatprep.subr.bf16.mxu0 0
    %7862 = vmatpush2.bf16.msra.mxu0 0
    %7863 = vmatprep.subr.bf16.mxu0 0
    %7864 = vmatpush2.bf16.msra.mxu0 0
    %7865 = vmatprep.subr.bf16.mxu0 0
    %7866 = vmatpush2.bf16.msra.mxu0 0
    %7867 = vmatprep.subr.bf16.mxu0 0
    %7868 = vmatpush2.bf16.msra.mxu0 0
    %7869 = vmatprep.subr.bf16.mxu0 0
    %7870 = vmatpush2.bf16.msra.mxu0 0
    %7871 = vmatprep.mubr.bf16.mxu0 0
    %7872 = vmatmul.mubr.bf16.gmra.mxu0 %v7324
    %v7873 = vpop.f32.mrf.mxu0
    %v7874 = vadd.f32 %v7834, %v7873
    %v7875 = vpop.f32.mrf.mxu0
    %v7876 = vpop.f32.mrf.mxu0
    %v7877 = vpop.f32.mrf.mxu0
    %7878 = vdwg.mxu0
    %s7879 = scalar_lea.vmem [#allocation19], 384
    %v7880 = vld [vmem:[%s7879] sm:$0xf]
    %v7881 = vld [vmem:[%s7879 + $0x4] sm:$0xf]
    %v7882 = vld [vmem:[%s7879 + $0x8] sm:$0xf]
    %v7883 = vld [vmem:[%s7879 + $0xc] sm:$0xf]
    %v7884 = vld [vmem:[%s7879 + $0x10] sm:$0xf]
    %v7885 = vld [vmem:[%s7879 + $0x14] sm:$0xf]
    %v7886 = vld [vmem:[%s7879 + $0x18] sm:$0xf]
    %v7887 = vld [vmem:[%s7879 + $0x1c] sm:$0xf]
    %v7888 = vld [vmem:[%s7879 + $0x20] sm:$0xf]
    %v7889 = vld [vmem:[%s7879 + $0x24] sm:$0xf]
    %v7890 = vld [vmem:[%s7879 + $0x28] sm:$0xf]
    %v7891 = vld [vmem:[%s7879 + $0x2c] sm:$0xf]
    %v7892 = vld [vmem:[%s7879 + $0x30] sm:$0xf]
    %v7893 = vld [vmem:[%s7879 + $0x34] sm:$0xf]
    %v7894 = vld [vmem:[%s7879 + $0x38] sm:$0xf]
    %v7895 = vld [vmem:[%s7879 + $0x3c] sm:$0xf]
    %v7896 = vld [vmem:[%s7879 + $0x40] sm:$0xf]
    %v7897 = vld [vmem:[%s7879 + $0x44] sm:$0xf]
    %v7898 = vld [vmem:[%s7879 + $0x48] sm:$0xf]
    %v7899 = vld [vmem:[%s7879 + $0x4c] sm:$0xf]
    %v7900 = vld [vmem:[%s7879 + $0x50] sm:$0xf]
    %v7901 = vld [vmem:[%s7879 + $0x54] sm:$0xf]
    %v7902 = vld [vmem:[%s7879 + $0x58] sm:$0xf]
    %v7903 = vld [vmem:[%s7879 + $0x5c] sm:$0xf]
    %v7904 = vld [vmem:[%s7879 + $0x60] sm:$0xf]
    %v7905 = vld [vmem:[%s7879 + $0x64] sm:$0xf]
    %v7906 = vld [vmem:[%s7879 + $0x68] sm:$0xf]
    %v7907 = vld [vmem:[%s7879 + $0x6c] sm:$0xf]
    %v7908 = vld [vmem:[%s7879 + $0x70] sm:$0xf]
    %v7909 = vld [vmem:[%s7879 + $0x74] sm:$0xf]
    %v7910 = vld [vmem:[%s7879 + $0x78] sm:$0xf]
    %v7911 = vld [vmem:[%s7879 + $0x7c] sm:$0xf]
    %v7912 = vld [vmem:[%s7879 + $0x80] sm:$0xf]
    %v7913 = vld [vmem:[%s7879 + $0x84] sm:$0xf]
    %v7914 = vld [vmem:[%s7879 + $0x88] sm:$0xf]
    %v7915 = vld [vmem:[%s7879 + $0x8c] sm:$0xf]
    %v7916 = vld [vmem:[%s7879 + $0x90] sm:$0xf]
    %v7917 = vld [vmem:[%s7879 + $0x94] sm:$0xf]
    %v7918 = vld [vmem:[%s7879 + $0x98] sm:$0xf]
    %v7919 = vld [vmem:[%s7879 + $0x9c] sm:$0xf]
    %v7920 = vld [vmem:[%s7879 + $0xa0] sm:$0xf]
    %v7921 = vld [vmem:[%s7879 + $0xa4] sm:$0xf]
    %v7922 = vld [vmem:[%s7879 + $0xa8] sm:$0xf]
    %v7923 = vld [vmem:[%s7879 + $0xac] sm:$0xf]
    %v7924 = vld [vmem:[%s7879 + $0xb0] sm:$0xf]
    %v7925 = vld [vmem:[%s7879 + $0xb4] sm:$0xf]
    %v7926 = vld [vmem:[%s7879 + $0xb8] sm:$0xf]
    %v7927 = vld [vmem:[%s7879 + $0xbc] sm:$0xf]
    %v7928 = vrot.slane %v7322, 2
    %v7929 = vrot.slane %v7323, 2
    %v7930 = vrot.slane %v7324, 2
    %v7982 = vunpack.c.l.b16 %v7880
    %v7983 = vunpack.c.l.b16 %v7881
    %v7984 = vunpack.c.l.b16 %v7882
    %v7985 = vunpack.c.l.b16 %v7883
    %v7986 = vunpack.c.l.b16 %v7884
    %v7987 = vunpack.c.l.b16 %v7885
    %v7988 = vunpack.c.l.b16 %v7886
    %v7989 = vunpack.c.l.b16 %v7887
    %v7990 = vunpack.c.l.b16 %v7888
    %v7991 = vunpack.c.l.b16 %v7889
    %v7992 = vunpack.c.l.b16 %v7890
    %v7993 = vunpack.c.l.b16 %v7891
    %v7994 = vunpack.c.l.b16 %v7892
    %v7995 = vunpack.c.l.b16 %v7893
    %v7996 = vunpack.c.l.b16 %v7894
    %v7997 = vunpack.c.l.b16 %v7895
    %v7998 = vunpack.c.l.b16 %v7896
    %v7999 = vunpack.c.l.b16 %v7897
    %v8000 = vunpack.c.l.b16 %v7898
    %v8001 = vunpack.c.l.b16 %v7899
    %v8002 = vunpack.c.l.b16 %v7900
    %v8003 = vunpack.c.l.b16 %v7901
    %v8004 = vunpack.c.l.b16 %v7902
    %v8005 = vunpack.c.l.b16 %v7903
    %v8006 = vunpack.c.l.b16 %v7904
    %v8007 = vunpack.c.l.b16 %v7905
    %v8008 = vunpack.c.l.b16 %v7906
    %v8009 = vunpack.c.l.b16 %v7907
    %v8010 = vunpack.c.l.b16 %v7908
    %v8011 = vunpack.c.l.b16 %v7909
    %v8012 = vunpack.c.l.b16 %v7910
    %v8013 = vunpack.c.l.b16 %v7911
    %v8014 = vunpack.c.l.b16 %v7912
    %v8015 = vunpack.c.l.b16 %v7913
    %v8016 = vunpack.c.l.b16 %v7914
    %v8017 = vunpack.c.l.b16 %v7915
    %v8018 = vunpack.c.l.b16 %v7916
    %v8019 = vunpack.c.l.b16 %v7917
    %v8020 = vunpack.c.l.b16 %v7918
    %v8021 = vunpack.c.l.b16 %v7919
    %v8022 = vunpack.c.l.b16 %v7920
    %v8023 = vunpack.c.l.b16 %v7921
    %v8024 = vunpack.c.l.b16 %v7922
    %v8025 = vunpack.c.l.b16 %v7923
    %v8026 = vunpack.c.l.b16 %v7924
    %v8027 = vunpack.c.l.b16 %v7925
    %v8028 = vunpack.c.l.b16 %v7926
    %v8029 = vunpack.c.l.b16 %v7927
    %v8030 = vpack.c.b16 %v7983, %v7982
    %v8031 = vpack.c.b16 %v7985, %v7984
    %v8032 = vpack.c.b16 %v7987, %v7986
    %v8033 = vpack.c.b16 %v7989, %v7988
    %v8034 = vpack.c.b16 %v7991, %v7990
    %v8035 = vpack.c.b16 %v7993, %v7992
    %v8036 = vpack.c.b16 %v7995, %v7994
    %v8037 = vpack.c.b16 %v7997, %v7996
    %v8038 = vpack.c.b16 %v7999, %v7998
    %v8039 = vpack.c.b16 %v8001, %v8000
    %v8040 = vpack.c.b16 %v8003, %v8002
    %v8041 = vpack.c.b16 %v8005, %v8004
    %v8042 = vpack.c.b16 %v8007, %v8006
    %v8043 = vpack.c.b16 %v8009, %v8008
    %v8044 = vpack.c.b16 %v8011, %v8010
    %v8045 = vpack.c.b16 %v8013, %v8012
    %v8046 = vpack.c.b16 %v8015, %v8014
    %v8047 = vpack.c.b16 %v8017, %v8016
    %v8048 = vpack.c.b16 %v8019, %v8018
    %v8049 = vpack.c.b16 %v8021, %v8020
    %v8050 = vpack.c.b16 %v8023, %v8022
    %v8051 = vpack.c.b16 %v8025, %v8024
    %v8052 = vpack.c.b16 %v8027, %v8026
    %v8053 = vpack.c.b16 %v8029, %v8028
    %8078 = vmatprep.subr.bf16.mxu0 0
    %8079 = vmatpush1.bf16.msra.mxu0 %v8037
    %8080 = vmatprep.subr.bf16.mxu0 0
    %8081 = vmatpush1.bf16.msra.mxu0 %v8036
    %8082 = vmatprep.subr.bf16.mxu0 0
    %8083 = vmatpush1.bf16.msra.mxu0 %v8035
    %8084 = vmatprep.subr.bf16.mxu0 0
    %8085 = vmatpush1.bf16.msra.mxu0 %v8034
    %8086 = vmatprep.subr.bf16.mxu0 0
    %8087 = vmatpush1.bf16.msra.mxu0 %v8033
    %8088 = vmatprep.subr.bf16.mxu0 0
    %8089 = vmatpush1.bf16.msra.mxu0 %v8032
    %8090 = vmatprep.subr.bf16.mxu0 0
    %8091 = vmatpush1.bf16.msra.mxu0 %v8031
    %8092 = vmatprep.subr.bf16.mxu0 0
    %8093 = vmatpush1.bf16.msra.mxu0 %v8030
    %8094 = vmatprep.subr.bf16.mxu0 0
    %8095 = vmatpush2.bf16.msra.mxu0 %v8045
    %8096 = vmatprep.subr.bf16.mxu0 0
    %8097 = vmatpush2.bf16.msra.mxu0 %v8044
    %8098 = vmatprep.subr.bf16.mxu0 0
    %8099 = vmatpush2.bf16.msra.mxu0 %v8043
    %8100 = vmatprep.subr.bf16.mxu0 0
    %8101 = vmatpush2.bf16.msra.mxu0 %v8042
    %8102 = vmatprep.subr.bf16.mxu0 0
    %8103 = vmatpush2.bf16.msra.mxu0 %v8041
    %8104 = vmatprep.subr.bf16.mxu0 0
    %8105 = vmatpush2.bf16.msra.mxu0 %v8040
    %8106 = vmatprep.subr.bf16.mxu0 0
    %8107 = vmatpush2.bf16.msra.mxu0 %v8039
    %8108 = vmatprep.subr.bf16.mxu0 0
    %8109 = vmatpush2.bf16.msra.mxu0 %v8038
    %8110 = vmatprep.mubr.bf16.mxu0 %v7929
    %8111 = vmatmul.mubr.bf16.gmra.mxu0 %v7928
    %v8112 = vpop.f32.mrf.mxu0
    %v8113 = vadd.f32 0.0, %v8112
    %v8114 = vpop.f32.mrf.mxu0
    %v8115 = vpop.f32.mrf.mxu0
    %v8116 = vpop.f32.mrf.mxu0
    %8117 = vdwg.mxu0
    %8118 = vmatprep.subr.bf16.mxu0 0
    %8119 = vmatpush1.bf16.msra.mxu0 %v8053
    %8120 = vmatprep.subr.bf16.mxu0 0
    %8121 = vmatpush1.bf16.msra.mxu0 %v8052
    %8122 = vmatprep.subr.bf16.mxu0 0
    %8123 = vmatpush1.bf16.msra.mxu0 %v8051
    %8124 = vmatprep.subr.bf16.mxu0 0
    %8125 = vmatpush1.bf16.msra.mxu0 %v8050
    %8126 = vmatprep.subr.bf16.mxu0 0
    %8127 = vmatpush1.bf16.msra.mxu0 %v8049
    %8128 = vmatprep.subr.bf16.mxu0 0
    %8129 = vmatpush1.bf16.msra.mxu0 %v8048
    %8130 = vmatprep.subr.bf16.mxu0 0
    %8131 = vmatpush1.bf16.msra.mxu0 %v8047
    %8132 = vmatprep.subr.bf16.mxu0 0
    %8133 = vmatpush1.bf16.msra.mxu0 %v8046
    %8134 = vmatprep.subr.bf16.mxu0 0
    %8135 = vmatpush2.bf16.msra.mxu0 0
    %8136 = vmatprep.subr.bf16.mxu0 0
    %8137 = vmatpush2.bf16.msra.mxu0 0
    %8138 = vmatprep.subr.bf16.mxu0 0
    %8139 = vmatpush2.bf16.msra.mxu0 0
    %8140 = vmatprep.subr.bf16.mxu0 0
    %8141 = vmatpush2.bf16.msra.mxu0 0
    %8142 = vmatprep.subr.bf16.mxu0 0
    %8143 = vmatpush2.bf16.msra.mxu0 0
    %8144 = vmatprep.subr.bf16.mxu0 0
    %8145 = vmatpush2.bf16.msra.mxu0 0
    %8146 = vmatprep.subr.bf16.mxu0 0
    %8147 = vmatpush2.bf16.msra.mxu0 0
    %8148 = vmatprep.subr.bf16.mxu0 0
    %8149 = vmatpush2.bf16.msra.mxu0 0
    %8150 = vmatprep.mubr.bf16.mxu0 0
    %8151 = vmatmul.mubr.bf16.gmra.mxu0 %v7930
    %v8152 = vpop.f32.mrf.mxu0
    %v8153 = vadd.f32 %v8113, %v8152
    %v8154 = vpop.f32.mrf.mxu0
    %v8155 = vpop.f32.mrf.mxu0
    %v8156 = vpop.f32.mrf.mxu0
    %8157 = vdwg.mxu0
    %v8158 = vadd.f32 %v7874, %v8153
    %s8159 = scalar_lea.vmem [#allocation19], 576
    %v8160 = vld [vmem:[%s8159] sm:$0xf]
    %v8161 = vld [vmem:[%s8159 + $0x4] sm:$0xf]
    %v8162 = vld [vmem:[%s8159 + $0x8] sm:$0xf]
    %v8163 = vld [vmem:[%s8159 + $0xc] sm:$0xf]
    %v8164 = vld [vmem:[%s8159 + $0x10] sm:$0xf]
    %v8165 = vld [vmem:[%s8159 + $0x14] sm:$0xf]
    %v8166 = vld [vmem:[%s8159 + $0x18] sm:$0xf]
    %v8167 = vld [vmem:[%s8159 + $0x1c] sm:$0xf]
    %v8168 = vld [vmem:[%s8159 + $0x20] sm:$0xf]
    %v8169 = vld [vmem:[%s8159 + $0x24] sm:$0xf]
    %v8170 = vld [vmem:[%s8159 + $0x28] sm:$0xf]
    %v8171 = vld [vmem:[%s8159 + $0x2c] sm:$0xf]
    %v8172 = vld [vmem:[%s8159 + $0x30] sm:$0xf]
    %v8173 = vld [vmem:[%s8159 + $0x34] sm:$0xf]
    %v8174 = vld [vmem:[%s8159 + $0x38] sm:$0xf]
    %v8175 = vld [vmem:[%s8159 + $0x3c] sm:$0xf]
    %v8176 = vld [vmem:[%s8159 + $0x40] sm:$0xf]
    %v8177 = vld [vmem:[%s8159 + $0x44] sm:$0xf]
    %v8178 = vld [vmem:[%s8159 + $0x48] sm:$0xf]
    %v8179 = vld [vmem:[%s8159 + $0x4c] sm:$0xf]
    %v8180 = vld [vmem:[%s8159 + $0x50] sm:$0xf]
    %v8181 = vld [vmem:[%s8159 + $0x54] sm:$0xf]
    %v8182 = vld [vmem:[%s8159 + $0x58] sm:$0xf]
    %v8183 = vld [vmem:[%s8159 + $0x5c] sm:$0xf]
    %v8184 = vld [vmem:[%s8159 + $0x60] sm:$0xf]
    %v8185 = vld [vmem:[%s8159 + $0x64] sm:$0xf]
    %v8186 = vld [vmem:[%s8159 + $0x68] sm:$0xf]
    %v8187 = vld [vmem:[%s8159 + $0x6c] sm:$0xf]
    %v8188 = vld [vmem:[%s8159 + $0x70] sm:$0xf]
    %v8189 = vld [vmem:[%s8159 + $0x74] sm:$0xf]
    %v8190 = vld [vmem:[%s8159 + $0x78] sm:$0xf]
    %v8191 = vld [vmem:[%s8159 + $0x7c] sm:$0xf]
    %v8192 = vld [vmem:[%s8159 + $0x80] sm:$0xf]
    %v8193 = vld [vmem:[%s8159 + $0x84] sm:$0xf]
    %v8194 = vld [vmem:[%s8159 + $0x88] sm:$0xf]
    %v8195 = vld [vmem:[%s8159 + $0x8c] sm:$0xf]
    %v8196 = vld [vmem:[%s8159 + $0x90] sm:$0xf]
    %v8197 = vld [vmem:[%s8159 + $0x94] sm:$0xf]
    %v8198 = vld [vmem:[%s8159 + $0x98] sm:$0xf]
    %v8199 = vld [vmem:[%s8159 + $0x9c] sm:$0xf]
    %v8200 = vld [vmem:[%s8159 + $0xa0] sm:$0xf]
    %v8201 = vld [vmem:[%s8159 + $0xa4] sm:$0xf]
    %v8202 = vld [vmem:[%s8159 + $0xa8] sm:$0xf]
    %v8203 = vld [vmem:[%s8159 + $0xac] sm:$0xf]
    %v8204 = vld [vmem:[%s8159 + $0xb0] sm:$0xf]
    %v8205 = vld [vmem:[%s8159 + $0xb4] sm:$0xf]
    %v8206 = vld [vmem:[%s8159 + $0xb8] sm:$0xf]
    %v8207 = vld [vmem:[%s8159 + $0xbc] sm:$0xf]
    %v8208 = vrot.slane %v7322, 3
    %v8209 = vrot.slane %v7323, 3
    %v8210 = vrot.slane %v7324, 3
    %v8262 = vunpack.c.l.b16 %v8160
    %v8263 = vunpack.c.l.b16 %v8161
    %v8264 = vunpack.c.l.b16 %v8162
    %v8265 = vunpack.c.l.b16 %v8163
    %v8266 = vunpack.c.l.b16 %v8164
    %v8267 = vunpack.c.l.b16 %v8165
    %v8268 = vunpack.c.l.b16 %v8166
    %v8269 = vunpack.c.l.b16 %v8167
    %v8270 = vunpack.c.l.b16 %v8168
    %v8271 = vunpack.c.l.b16 %v8169
    %v8272 = vunpack.c.l.b16 %v8170
    %v8273 = vunpack.c.l.b16 %v8171
    %v8274 = vunpack.c.l.b16 %v8172
    %v8275 = vunpack.c.l.b16 %v8173
    %v8276 = vunpack.c.l.b16 %v8174
    %v8277 = vunpack.c.l.b16 %v8175
    %v8278 = vunpack.c.l.b16 %v8176
    %v8279 = vunpack.c.l.b16 %v8177
    %v8280 = vunpack.c.l.b16 %v8178
    %v8281 = vunpack.c.l.b16 %v8179
    %v8282 = vunpack.c.l.b16 %v8180
    %v8283 = vunpack.c.l.b16 %v8181
    %v8284 = vunpack.c.l.b16 %v8182
    %v8285 = vunpack.c.l.b16 %v8183
    %v8286 = vunpack.c.l.b16 %v8184
    %v8287 = vunpack.c.l.b16 %v8185
    %v8288 = vunpack.c.l.b16 %v8186
    %v8289 = vunpack.c.l.b16 %v8187
    %v8290 = vunpack.c.l.b16 %v8188
    %v8291 = vunpack.c.l.b16 %v8189
    %v8292 = vunpack.c.l.b16 %v8190
    %v8293 = vunpack.c.l.b16 %v8191
    %v8294 = vunpack.c.l.b16 %v8192
    %v8295 = vunpack.c.l.b16 %v8193
    %v8296 = vunpack.c.l.b16 %v8194
    %v8297 = vunpack.c.l.b16 %v8195
    %v8298 = vunpack.c.l.b16 %v8196
    %v8299 = vunpack.c.l.b16 %v8197
    %v8300 = vunpack.c.l.b16 %v8198
    %v8301 = vunpack.c.l.b16 %v8199
    %v8302 = vunpack.c.l.b16 %v8200
    %v8303 = vunpack.c.l.b16 %v8201
    %v8304 = vunpack.c.l.b16 %v8202
    %v8305 = vunpack.c.l.b16 %v8203
    %v8306 = vunpack.c.l.b16 %v8204
    %v8307 = vunpack.c.l.b16 %v8205
    %v8308 = vunpack.c.l.b16 %v8206
    %v8309 = vunpack.c.l.b16 %v8207
    %v8310 = vpack.c.b16 %v8263, %v8262
    %v8311 = vpack.c.b16 %v8265, %v8264
    %v8312 = vpack.c.b16 %v8267, %v8266
    %v8313 = vpack.c.b16 %v8269, %v8268
    %v8314 = vpack.c.b16 %v8271, %v8270
    %v8315 = vpack.c.b16 %v8273, %v8272
    %v8316 = vpack.c.b16 %v8275, %v8274
    %v8317 = vpack.c.b16 %v8277, %v8276
    %v8318 = vpack.c.b16 %v8279, %v8278
    %v8319 = vpack.c.b16 %v8281, %v8280
    %v8320 = vpack.c.b16 %v8283, %v8282
    %v8321 = vpack.c.b16 %v8285, %v8284
    %v8322 = vpack.c.b16 %v8287, %v8286
    %v8323 = vpack.c.b16 %v8289, %v8288
    %v8324 = vpack.c.b16 %v8291, %v8290
    %v8325 = vpack.c.b16 %v8293, %v8292
    %v8326 = vpack.c.b16 %v8295, %v8294
    %v8327 = vpack.c.b16 %v8297, %v8296
    %v8328 = vpack.c.b16 %v8299, %v8298
    %v8329 = vpack.c.b16 %v8301, %v8300
    %v8330 = vpack.c.b16 %v8303, %v8302
    %v8331 = vpack.c.b16 %v8305, %v8304
    %v8332 = vpack.c.b16 %v8307, %v8306
    %v8333 = vpack.c.b16 %v8309, %v8308
    %8358 = vmatprep.subr.bf16.mxu0 0
    %8359 = vmatpush1.bf16.msra.mxu0 %v8317
    %8360 = vmatprep.subr.bf16.mxu0 0
    %8361 = vmatpush1.bf16.msra.mxu0 %v8316
    %8362 = vmatprep.subr.bf16.mxu0 0
    %8363 = vmatpush1.bf16.msra.mxu0 %v8315
    %8364 = vmatprep.subr.bf16.mxu0 0
    %8365 = vmatpush1.bf16.msra.mxu0 %v8314
    %8366 = vmatprep.subr.bf16.mxu0 0
    %8367 = vmatpush1.bf16.msra.mxu0 %v8313
    %8368 = vmatprep.subr.bf16.mxu0 0
    %8369 = vmatpush1.bf16.msra.mxu0 %v8312
    %8370 = vmatprep.subr.bf16.mxu0 0
    %8371 = vmatpush1.bf16.msra.mxu0 %v8311
    %8372 = vmatprep.subr.bf16.mxu0 0
    %8373 = vmatpush1.bf16.msra.mxu0 %v8310
    %8374 = vmatprep.subr.bf16.mxu0 0
    %8375 = vmatpush2.bf16.msra.mxu0 %v8325
    %8376 = vmatprep.subr.bf16.mxu0 0
    %8377 = vmatpush2.bf16.msra.mxu0 %v8324
    %8378 = vmatprep.subr.bf16.mxu0 0
    %8379 = vmatpush2.bf16.msra.mxu0 %v8323
    %8380 = vmatprep.subr.bf16.mxu0 0
    %8381 = vmatpush2.bf16.msra.mxu0 %v8322
    %8382 = vmatprep.subr.bf16.mxu0 0
    %8383 = vmatpush2.bf16.msra.mxu0 %v8321
    %8384 = vmatprep.subr.bf16.mxu0 0
    %8385 = vmatpush2.bf16.msra.mxu0 %v8320
    %8386 = vmatprep.subr.bf16.mxu0 0
    %8387 = vmatpush2.bf16.msra.mxu0 %v8319
    %8388 = vmatprep.subr.bf16.mxu0 0
    %8389 = vmatpush2.bf16.msra.mxu0 %v8318
    %8390 = vmatprep.mubr.bf16.mxu0 %v8209
    %8391 = vmatmul.mubr.bf16.gmra.mxu0 %v8208
    %v8392 = vpop.f32.mrf.mxu0
    %v8393 = vadd.f32 0.0, %v8392
    %v8394 = vpop.f32.mrf.mxu0
    %v8395 = vpop.f32.mrf.mxu0
    %v8396 = vpop.f32.mrf.mxu0
    %8397 = vdwg.mxu0
    %8398 = vmatprep.subr.bf16.mxu0 0
    %8399 = vmatpush1.bf16.msra.mxu0 %v8333
    %8400 = vmatprep.subr.bf16.mxu0 0
    %8401 = vmatpush1.bf16.msra.mxu0 %v8332
    %8402 = vmatprep.subr.bf16.mxu0 0
    %8403 = vmatpush1.bf16.msra.mxu0 %v8331
    %8404 = vmatprep.subr.bf16.mxu0 0
    %8405 = vmatpush1.bf16.msra.mxu0 %v8330
    %8406 = vmatprep.subr.bf16.mxu0 0
    %8407 = vmatpush1.bf16.msra.mxu0 %v8329
    %8408 = vmatprep.subr.bf16.mxu0 0
    %8409 = vmatpush1.bf16.msra.mxu0 %v8328
    %8410 = vmatprep.subr.bf16.mxu0 0
    %8411 = vmatpush1.bf16.msra.mxu0 %v8327
    %8412 = vmatprep.subr.bf16.mxu0 0
    %8413 = vmatpush1.bf16.msra.mxu0 %v8326
    %8414 = vmatprep.subr.bf16.mxu0 0
    %8415 = vmatpush2.bf16.msra.mxu0 0
    %8416 = vmatprep.subr.bf16.mxu0 0
    %8417 = vmatpush2.bf16.msra.mxu0 0
    %8418 = vmatprep.subr.bf16.mxu0 0
    %8419 = vmatpush2.bf16.msra.mxu0 0
    %8420 = vmatprep.subr.bf16.mxu0 0
    %8421 = vmatpush2.bf16.msra.mxu0 0
    %8422 = vmatprep.subr.bf16.mxu0 0
    %8423 = vmatpush2.bf16.msra.mxu0 0
    %8424 = vmatprep.subr.bf16.mxu0 0
    %8425 = vmatpush2.bf16.msra.mxu0 0
    %8426 = vmatprep.subr.bf16.mxu0 0
    %8427 = vmatpush2.bf16.msra.mxu0 0
    %8428 = vmatprep.subr.bf16.mxu0 0
    %8429 = vmatpush2.bf16.msra.mxu0 0
    %8430 = vmatprep.mubr.bf16.mxu0 0
    %8431 = vmatmul.mubr.bf16.gmra.mxu0 %v8210
    %v8432 = vpop.f32.mrf.mxu0
    %v8433 = vadd.f32 %v8393, %v8432
    %v8434 = vpop.f32.mrf.mxu0
    %v8435 = vpop.f32.mrf.mxu0
    %v8436 = vpop.f32.mrf.mxu0
    %8437 = vdwg.mxu0
    %v8438 = vadd.f32 %v8158, %v8433
    %s8439 = scalar_lea.vmem [#allocation19], 768
    %v8440 = vld [vmem:[%s8439] sm:$0xf]
    %v8441 = vld [vmem:[%s8439 + $0x4] sm:$0xf]
    %v8442 = vld [vmem:[%s8439 + $0x8] sm:$0xf]
    %v8443 = vld [vmem:[%s8439 + $0xc] sm:$0xf]
    %v8444 = vld [vmem:[%s8439 + $0x10] sm:$0xf]
    %v8445 = vld [vmem:[%s8439 + $0x14] sm:$0xf]
    %v8446 = vld [vmem:[%s8439 + $0x18] sm:$0xf]
    %v8447 = vld [vmem:[%s8439 + $0x1c] sm:$0xf]
    %v8448 = vld [vmem:[%s8439 + $0x20] sm:$0xf]
    %v8449 = vld [vmem:[%s8439 + $0x24] sm:$0xf]
    %v8450 = vld [vmem:[%s8439 + $0x28] sm:$0xf]
    %v8451 = vld [vmem:[%s8439 + $0x2c] sm:$0xf]
    %v8452 = vld [vmem:[%s8439 + $0x30] sm:$0xf]
    %v8453 = vld [vmem:[%s8439 + $0x34] sm:$0xf]
    %v8454 = vld [vmem:[%s8439 + $0x38] sm:$0xf]
    %v8455 = vld [vmem:[%s8439 + $0x3c] sm:$0xf]
    %v8456 = vld [vmem:[%s8439 + $0x40] sm:$0xf]
    %v8457 = vld [vmem:[%s8439 + $0x44] sm:$0xf]
    %v8458 = vld [vmem:[%s8439 + $0x48] sm:$0xf]
    %v8459 = vld [vmem:[%s8439 + $0x4c] sm:$0xf]
    %v8460 = vld [vmem:[%s8439 + $0x50] sm:$0xf]
    %v8461 = vld [vmem:[%s8439 + $0x54] sm:$0xf]
    %v8462 = vld [vmem:[%s8439 + $0x58] sm:$0xf]
    %v8463 = vld [vmem:[%s8439 + $0x5c] sm:$0xf]
    %v8464 = vld [vmem:[%s8439 + $0x60] sm:$0xf]
    %v8465 = vld [vmem:[%s8439 + $0x64] sm:$0xf]
    %v8466 = vld [vmem:[%s8439 + $0x68] sm:$0xf]
    %v8467 = vld [vmem:[%s8439 + $0x6c] sm:$0xf]
    %v8468 = vld [vmem:[%s8439 + $0x70] sm:$0xf]
    %v8469 = vld [vmem:[%s8439 + $0x74] sm:$0xf]
    %v8470 = vld [vmem:[%s8439 + $0x78] sm:$0xf]
    %v8471 = vld [vmem:[%s8439 + $0x7c] sm:$0xf]
    %v8472 = vld [vmem:[%s8439 + $0x80] sm:$0xf]
    %v8473 = vld [vmem:[%s8439 + $0x84] sm:$0xf]
    %v8474 = vld [vmem:[%s8439 + $0x88] sm:$0xf]
    %v8475 = vld [vmem:[%s8439 + $0x8c] sm:$0xf]
    %v8476 = vld [vmem:[%s8439 + $0x90] sm:$0xf]
    %v8477 = vld [vmem:[%s8439 + $0x94] sm:$0xf]
    %v8478 = vld [vmem:[%s8439 + $0x98] sm:$0xf]
    %v8479 = vld [vmem:[%s8439 + $0x9c] sm:$0xf]
    %v8480 = vld [vmem:[%s8439 + $0xa0] sm:$0xf]
    %v8481 = vld [vmem:[%s8439 + $0xa4] sm:$0xf]
    %v8482 = vld [vmem:[%s8439 + $0xa8] sm:$0xf]
    %v8483 = vld [vmem:[%s8439 + $0xac] sm:$0xf]
    %v8484 = vld [vmem:[%s8439 + $0xb0] sm:$0xf]
    %v8485 = vld [vmem:[%s8439 + $0xb4] sm:$0xf]
    %v8486 = vld [vmem:[%s8439 + $0xb8] sm:$0xf]
    %v8487 = vld [vmem:[%s8439 + $0xbc] sm:$0xf]
    %v8488 = vrot.slane %v7322, 4
    %v8489 = vrot.slane %v7323, 4
    %v8490 = vrot.slane %v7324, 4
    %v8542 = vunpack.c.l.b16 %v8440
    %v8543 = vunpack.c.l.b16 %v8441
    %v8544 = vunpack.c.l.b16 %v8442
    %v8545 = vunpack.c.l.b16 %v8443
    %v8546 = vunpack.c.l.b16 %v8444
    %v8547 = vunpack.c.l.b16 %v8445
    %v8548 = vunpack.c.l.b16 %v8446
    %v8549 = vunpack.c.l.b16 %v8447
    %v8550 = vunpack.c.l.b16 %v8448
    %v8551 = vunpack.c.l.b16 %v8449
    %v8552 = vunpack.c.l.b16 %v8450
    %v8553 = vunpack.c.l.b16 %v8451
    %v8554 = vunpack.c.l.b16 %v8452
    %v8555 = vunpack.c.l.b16 %v8453
    %v8556 = vunpack.c.l.b16 %v8454
    %v8557 = vunpack.c.l.b16 %v8455
    %v8558 = vunpack.c.l.b16 %v8456
    %v8559 = vunpack.c.l.b16 %v8457
    %v8560 = vunpack.c.l.b16 %v8458
    %v8561 = vunpack.c.l.b16 %v8459
    %v8562 = vunpack.c.l.b16 %v8460
    %v8563 = vunpack.c.l.b16 %v8461
    %v8564 = vunpack.c.l.b16 %v8462
    %v8565 = vunpack.c.l.b16 %v8463
    %v8566 = vunpack.c.l.b16 %v8464
    %v8567 = vunpack.c.l.b16 %v8465
    %v8568 = vunpack.c.l.b16 %v8466
    %v8569 = vunpack.c.l.b16 %v8467
    %v8570 = vunpack.c.l.b16 %v8468
    %v8571 = vunpack.c.l.b16 %v8469
    %v8572 = vunpack.c.l.b16 %v8470
    %v8573 = vunpack.c.l.b16 %v8471
    %v8574 = vunpack.c.l.b16 %v8472
    %v8575 = vunpack.c.l.b16 %v8473
    %v8576 = vunpack.c.l.b16 %v8474
    %v8577 = vunpack.c.l.b16 %v8475
    %v8578 = vunpack.c.l.b16 %v8476
    %v8579 = vunpack.c.l.b16 %v8477
    %v8580 = vunpack.c.l.b16 %v8478
    %v8581 = vunpack.c.l.b16 %v8479
    %v8582 = vunpack.c.l.b16 %v8480
    %v8583 = vunpack.c.l.b16 %v8481
    %v8584 = vunpack.c.l.b16 %v8482
    %v8585 = vunpack.c.l.b16 %v8483
    %v8586 = vunpack.c.l.b16 %v8484
    %v8587 = vunpack.c.l.b16 %v8485
    %v8588 = vunpack.c.l.b16 %v8486
    %v8589 = vunpack.c.l.b16 %v8487
    %v8590 = vpack.c.b16 %v8543, %v8542
    %v8591 = vpack.c.b16 %v8545, %v8544
    %v8592 = vpack.c.b16 %v8547, %v8546
    %v8593 = vpack.c.b16 %v8549, %v8548
    %v8594 = vpack.c.b16 %v8551, %v8550
    %v8595 = vpack.c.b16 %v8553, %v8552
    %v8596 = vpack.c.b16 %v8555, %v8554
    %v8597 = vpack.c.b16 %v8557, %v8556
    %v8598 = vpack.c.b16 %v8559, %v8558
    %v8599 = vpack.c.b16 %v8561, %v8560
    %v8600 = vpack.c.b16 %v8563, %v8562
    %v8601 = vpack.c.b16 %v8565, %v8564
    %v8602 = vpack.c.b16 %v8567, %v8566
    %v8603 = vpack.c.b16 %v8569, %v8568
    %v8604 = vpack.c.b16 %v8571, %v8570
    %v8605 = vpack.c.b16 %v8573, %v8572
    %v8606 = vpack.c.b16 %v8575, %v8574
    %v8607 = vpack.c.b16 %v8577, %v8576
    %v8608 = vpack.c.b16 %v8579, %v8578
    %v8609 = vpack.c.b16 %v8581, %v8580
    %v8610 = vpack.c.b16 %v8583, %v8582
    %v8611 = vpack.c.b16 %v8585, %v8584
    %v8612 = vpack.c.b16 %v8587, %v8586
    %v8613 = vpack.c.b16 %v8589, %v8588
    %8638 = vmatprep.subr.bf16.mxu0 0
    %8639 = vmatpush1.bf16.msra.mxu0 %v8597
    %8640 = vmatprep.subr.bf16.mxu0 0
    %8641 = vmatpush1.bf16.msra.mxu0 %v8596
    %8642 = vmatprep.subr.bf16.mxu0 0
    %8643 = vmatpush1.bf16.msra.mxu0 %v8595
    %8644 = vmatprep.subr.bf16.mxu0 0
    %8645 = vmatpush1.bf16.msra.mxu0 %v8594
    %8646 = vmatprep.subr.bf16.mxu0 0
    %8647 = vmatpush1.bf16.msra.mxu0 %v8593
    %8648 = vmatprep.subr.bf16.mxu0 0
    %8649 = vmatpush1.bf16.msra.mxu0 %v8592
    %8650 = vmatprep.subr.bf16.mxu0 0
    %8651 = vmatpush1.bf16.msra.mxu0 %v8591
    %8652 = vmatprep.subr.bf16.mxu0 0
    %8653 = vmatpush1.bf16.msra.mxu0 %v8590
    %8654 = vmatprep.subr.bf16.mxu0 0
    %8655 = vmatpush2.bf16.msra.mxu0 %v8605
    %8656 = vmatprep.subr.bf16.mxu0 0
    %8657 = vmatpush2.bf16.msra.mxu0 %v8604
    %8658 = vmatprep.subr.bf16.mxu0 0
    %8659 = vmatpush2.bf16.msra.mxu0 %v8603
    %8660 = vmatprep.subr.bf16.mxu0 0
    %8661 = vmatpush2.bf16.msra.mxu0 %v8602
    %8662 = vmatprep.subr.bf16.mxu0 0
    %8663 = vmatpush2.bf16.msra.mxu0 %v8601
    %8664 = vmatprep.subr.bf16.mxu0 0
    %8665 = vmatpush2.bf16.msra.mxu0 %v8600
    %8666 = vmatprep.subr.bf16.mxu0 0
    %8667 = vmatpush2.bf16.msra.mxu0 %v8599
    %8668 = vmatprep.subr.bf16.mxu0 0
    %8669 = vmatpush2.bf16.msra.mxu0 %v8598
    %8670 = vmatprep.mubr.bf16.mxu0 %v8489
    %8671 = vmatmul.mubr.bf16.gmra.mxu0 %v8488
    %v8672 = vpop.f32.mrf.mxu0
    %v8673 = vadd.f32 0.0, %v8672
    %v8674 = vpop.f32.mrf.mxu0
    %v8675 = vpop.f32.mrf.mxu0
    %v8676 = vpop.f32.mrf.mxu0
    %8677 = vdwg.mxu0
    %8678 = vmatprep.subr.bf16.mxu0 0
    %8679 = vmatpush1.bf16.msra.mxu0 %v8613
    %8680 = vmatprep.subr.bf16.mxu0 0
    %8681 = vmatpush1.bf16.msra.mxu0 %v8612
    %8682 = vmatprep.subr.bf16.mxu0 0
    %8683 = vmatpush1.bf16.msra.mxu0 %v8611
    %8684 = vmatprep.subr.bf16.mxu0 0
    %8685 = vmatpush1.bf16.msra.mxu0 %v8610
    %8686 = vmatprep.subr.bf16.mxu0 0
    %8687 = vmatpush1.bf16.msra.mxu0 %v8609
    %8688 = vmatprep.subr.bf16.mxu0 0
    %8689 = vmatpush1.bf16.msra.mxu0 %v8608
    %8690 = vmatprep.subr.bf16.mxu0 0
    %8691 = vmatpush1.bf16.msra.mxu0 %v8607
    %8692 = vmatprep.subr.bf16.mxu0 0
    %8693 = vmatpush1.bf16.msra.mxu0 %v8606
    %8694 = vmatprep.subr.bf16.mxu0 0
    %8695 = vmatpush2.bf16.msra.mxu0 0
    %8696 = vmatprep.subr.bf16.mxu0 0
    %8697 = vmatpush2.bf16.msra.mxu0 0
    %8698 = vmatprep.subr.bf16.mxu0 0
    %8699 = vmatpush2.bf16.msra.mxu0 0
    %8700 = vmatprep.subr.bf16.mxu0 0
    %8701 = vmatpush2.bf16.msra.mxu0 0
    %8702 = vmatprep.subr.bf16.mxu0 0
    %8703 = vmatpush2.bf16.msra.mxu0 0
    %8704 = vmatprep.subr.bf16.mxu0 0
    %8705 = vmatpush2.bf16.msra.mxu0 0
    %8706 = vmatprep.subr.bf16.mxu0 0
    %8707 = vmatpush2.bf16.msra.mxu0 0
    %8708 = vmatprep.subr.bf16.mxu0 0
    %8709 = vmatpush2.bf16.msra.mxu0 0
    %8710 = vmatprep.mubr.bf16.mxu0 0
    %8711 = vmatmul.mubr.bf16.gmra.mxu0 %v8490
    %v8712 = vpop.f32.mrf.mxu0
    %v8713 = vadd.f32 %v8673, %v8712
    %v8714 = vpop.f32.mrf.mxu0
    %v8715 = vpop.f32.mrf.mxu0
    %v8716 = vpop.f32.mrf.mxu0
    %8717 = vdwg.mxu0
    %v8718 = vadd.f32 %v8438, %v8713
    %s8719 = scalar_lea.vmem [#allocation19], 960
    %v8720 = vld [vmem:[%s8719] sm:$0xf]
    %v8721 = vld [vmem:[%s8719 + $0x4] sm:$0xf]
    %v8722 = vld [vmem:[%s8719 + $0x8] sm:$0xf]
    %v8723 = vld [vmem:[%s8719 + $0xc] sm:$0xf]
    %v8724 = vld [vmem:[%s8719 + $0x10] sm:$0xf]
    %v8725 = vld [vmem:[%s8719 + $0x14] sm:$0xf]
    %v8726 = vld [vmem:[%s8719 + $0x18] sm:$0xf]
    %v8727 = vld [vmem:[%s8719 + $0x1c] sm:$0xf]
    %v8728 = vld [vmem:[%s8719 + $0x20] sm:$0xf]
    %v8729 = vld [vmem:[%s8719 + $0x24] sm:$0xf]
    %v8730 = vld [vmem:[%s8719 + $0x28] sm:$0xf]
    %v8731 = vld [vmem:[%s8719 + $0x2c] sm:$0xf]
    %v8732 = vld [vmem:[%s8719 + $0x30] sm:$0xf]
    %v8733 = vld [vmem:[%s8719 + $0x34] sm:$0xf]
    %v8734 = vld [vmem:[%s8719 + $0x38] sm:$0xf]
    %v8735 = vld [vmem:[%s8719 + $0x3c] sm:$0xf]
    %v8736 = vld [vmem:[%s8719 + $0x40] sm:$0xf]
    %v8737 = vld [vmem:[%s8719 + $0x44] sm:$0xf]
    %v8738 = vld [vmem:[%s8719 + $0x48] sm:$0xf]
    %v8739 = vld [vmem:[%s8719 + $0x4c] sm:$0xf]
    %v8740 = vld [vmem:[%s8719 + $0x50] sm:$0xf]
    %v8741 = vld [vmem:[%s8719 + $0x54] sm:$0xf]
    %v8742 = vld [vmem:[%s8719 + $0x58] sm:$0xf]
    %v8743 = vld [vmem:[%s8719 + $0x5c] sm:$0xf]
    %v8744 = vld [vmem:[%s8719 + $0x60] sm:$0xf]
    %v8745 = vld [vmem:[%s8719 + $0x64] sm:$0xf]
    %v8746 = vld [vmem:[%s8719 + $0x68] sm:$0xf]
    %v8747 = vld [vmem:[%s8719 + $0x6c] sm:$0xf]
    %v8748 = vld [vmem:[%s8719 + $0x70] sm:$0xf]
    %v8749 = vld [vmem:[%s8719 + $0x74] sm:$0xf]
    %v8750 = vld [vmem:[%s8719 + $0x78] sm:$0xf]
    %v8751 = vld [vmem:[%s8719 + $0x7c] sm:$0xf]
    %v8752 = vld [vmem:[%s8719 + $0x80] sm:$0xf]
    %v8753 = vld [vmem:[%s8719 + $0x84] sm:$0xf]
    %v8754 = vld [vmem:[%s8719 + $0x88] sm:$0xf]
    %v8755 = vld [vmem:[%s8719 + $0x8c] sm:$0xf]
    %v8756 = vld [vmem:[%s8719 + $0x90] sm:$0xf]
    %v8757 = vld [vmem:[%s8719 + $0x94] sm:$0xf]
    %v8758 = vld [vmem:[%s8719 + $0x98] sm:$0xf]
    %v8759 = vld [vmem:[%s8719 + $0x9c] sm:$0xf]
    %v8760 = vld [vmem:[%s8719 + $0xa0] sm:$0xf]
    %v8761 = vld [vmem:[%s8719 + $0xa4] sm:$0xf]
    %v8762 = vld [vmem:[%s8719 + $0xa8] sm:$0xf]
    %v8763 = vld [vmem:[%s8719 + $0xac] sm:$0xf]
    %v8764 = vld [vmem:[%s8719 + $0xb0] sm:$0xf]
    %v8765 = vld [vmem:[%s8719 + $0xb4] sm:$0xf]
    %v8766 = vld [vmem:[%s8719 + $0xb8] sm:$0xf]
    %v8767 = vld [vmem:[%s8719 + $0xbc] sm:$0xf]
    %v8768 = vrot.slane %v7322, 5
    %v8769 = vrot.slane %v7323, 5
    %v8770 = vrot.slane %v7324, 5
    %v8822 = vunpack.c.l.b16 %v8720
    %v8823 = vunpack.c.l.b16 %v8721
    %v8824 = vunpack.c.l.b16 %v8722
    %v8825 = vunpack.c.l.b16 %v8723
    %v8826 = vunpack.c.l.b16 %v8724
    %v8827 = vunpack.c.l.b16 %v8725
    %v8828 = vunpack.c.l.b16 %v8726
    %v8829 = vunpack.c.l.b16 %v8727
    %v8830 = vunpack.c.l.b16 %v8728
    %v8831 = vunpack.c.l.b16 %v8729
    %v8832 = vunpack.c.l.b16 %v8730
    %v8833 = vunpack.c.l.b16 %v8731
    %v8834 = vunpack.c.l.b16 %v8732
    %v8835 = vunpack.c.l.b16 %v8733
    %v8836 = vunpack.c.l.b16 %v8734
    %v8837 = vunpack.c.l.b16 %v8735
    %v8838 = vunpack.c.l.b16 %v8736
    %v8839 = vunpack.c.l.b16 %v8737
    %v8840 = vunpack.c.l.b16 %v8738
    %v8841 = vunpack.c.l.b16 %v8739
    %v8842 = vunpack.c.l.b16 %v8740
    %v8843 = vunpack.c.l.b16 %v8741
    %v8844 = vunpack.c.l.b16 %v8742
    %v8845 = vunpack.c.l.b16 %v8743
    %v8846 = vunpack.c.l.b16 %v8744
    %v8847 = vunpack.c.l.b16 %v8745
    %v8848 = vunpack.c.l.b16 %v8746
    %v8849 = vunpack.c.l.b16 %v8747
    %v8850 = vunpack.c.l.b16 %v8748
    %v8851 = vunpack.c.l.b16 %v8749
    %v8852 = vunpack.c.l.b16 %v8750
    %v8853 = vunpack.c.l.b16 %v8751
    %v8854 = vunpack.c.l.b16 %v8752
    %v8855 = vunpack.c.l.b16 %v8753
    %v8856 = vunpack.c.l.b16 %v8754
    %v8857 = vunpack.c.l.b16 %v8755
    %v8858 = vunpack.c.l.b16 %v8756
    %v8859 = vunpack.c.l.b16 %v8757
    %v8860 = vunpack.c.l.b16 %v8758
    %v8861 = vunpack.c.l.b16 %v8759
    %v8862 = vunpack.c.l.b16 %v8760
    %v8863 = vunpack.c.l.b16 %v8761
    %v8864 = vunpack.c.l.b16 %v8762
    %v8865 = vunpack.c.l.b16 %v8763
    %v8866 = vunpack.c.l.b16 %v8764
    %v8867 = vunpack.c.l.b16 %v8765
    %v8868 = vunpack.c.l.b16 %v8766
    %v8869 = vunpack.c.l.b16 %v8767
    %v8870 = vpack.c.b16 %v8823, %v8822
    %v8871 = vpack.c.b16 %v8825, %v8824
    %v8872 = vpack.c.b16 %v8827, %v8826
    %v8873 = vpack.c.b16 %v8829, %v8828
    %v8874 = vpack.c.b16 %v8831, %v8830
    %v8875 = vpack.c.b16 %v8833, %v8832
    %v8876 = vpack.c.b16 %v8835, %v8834
    %v8877 = vpack.c.b16 %v8837, %v8836
    %v8878 = vpack.c.b16 %v8839, %v8838
    %v8879 = vpack.c.b16 %v8841, %v8840
    %v8880 = vpack.c.b16 %v8843, %v8842
    %v8881 = vpack.c.b16 %v8845, %v8844
    %v8882 = vpack.c.b16 %v8847, %v8846
    %v8883 = vpack.c.b16 %v8849, %v8848
    %v8884 = vpack.c.b16 %v8851, %v8850
    %v8885 = vpack.c.b16 %v8853, %v8852
    %v8886 = vpack.c.b16 %v8855, %v8854
    %v8887 = vpack.c.b16 %v8857, %v8856
    %v8888 = vpack.c.b16 %v8859, %v8858
    %v8889 = vpack.c.b16 %v8861, %v8860
    %v8890 = vpack.c.b16 %v8863, %v8862
    %v8891 = vpack.c.b16 %v8865, %v8864
    %v8892 = vpack.c.b16 %v8867, %v8866
    %v8893 = vpack.c.b16 %v8869, %v8868
    %8918 = vmatprep.subr.bf16.mxu0 0
    %8919 = vmatpush1.bf16.msra.mxu0 %v8877
    %8920 = vmatprep.subr.bf16.mxu0 0
    %8921 = vmatpush1.bf16.msra.mxu0 %v8876
    %8922 = vmatprep.subr.bf16.mxu0 0
    %8923 = vmatpush1.bf16.msra.mxu0 %v8875
    %8924 = vmatprep.subr.bf16.mxu0 0
    %8925 = vmatpush1.bf16.msra.mxu0 %v8874
    %8926 = vmatprep.subr.bf16.mxu0 0
    %8927 = vmatpush1.bf16.msra.mxu0 %v8873
    %8928 = vmatprep.subr.bf16.mxu0 0
    %8929 = vmatpush1.bf16.msra.mxu0 %v8872
    %8930 = vmatprep.subr.bf16.mxu0 0
    %8931 = vmatpush1.bf16.msra.mxu0 %v8871
    %8932 = vmatprep.subr.bf16.mxu0 0
    %8933 = vmatpush1.bf16.msra.mxu0 %v8870
    %8934 = vmatprep.subr.bf16.mxu0 0
    %8935 = vmatpush2.bf16.msra.mxu0 %v8885
    %8936 = vmatprep.subr.bf16.mxu0 0
    %8937 = vmatpush2.bf16.msra.mxu0 %v8884
    %8938 = vmatprep.subr.bf16.mxu0 0
    %8939 = vmatpush2.bf16.msra.mxu0 %v8883
    %8940 = vmatprep.subr.bf16.mxu0 0
    %8941 = vmatpush2.bf16.msra.mxu0 %v8882
    %8942 = vmatprep.subr.bf16.mxu0 0
    %8943 = vmatpush2.bf16.msra.mxu0 %v8881
    %8944 = vmatprep.subr.bf16.mxu0 0
    %8945 = vmatpush2.bf16.msra.mxu0 %v8880
    %8946 = vmatprep.subr.bf16.mxu0 0
    %8947 = vmatpush2.bf16.msra.mxu0 %v8879
    %8948 = vmatprep.subr.bf16.mxu0 0
    %8949 = vmatpush2.bf16.msra.mxu0 %v8878
    %8950 = vmatprep.mubr.bf16.mxu0 %v8769
    %8951 = vmatmul.mubr.bf16.gmra.mxu0 %v8768
    %v8952 = vpop.f32.mrf.mxu0
    %v8953 = vadd.f32 0.0, %v8952
    %v8954 = vpop.f32.mrf.mxu0
    %v8955 = vpop.f32.mrf.mxu0
    %v8956 = vpop.f32.mrf.mxu0
    %8957 = vdwg.mxu0
    %8958 = vmatprep.subr.bf16.mxu0 0
    %8959 = vmatpush1.bf16.msra.mxu0 %v8893
    %8960 = vmatprep.subr.bf16.mxu0 0
    %8961 = vmatpush1.bf16.msra.mxu0 %v8892
    %8962 = vmatprep.subr.bf16.mxu0 0
    %8963 = vmatpush1.bf16.msra.mxu0 %v8891
    %8964 = vmatprep.subr.bf16.mxu0 0
    %8965 = vmatpush1.bf16.msra.mxu0 %v8890
    %8966 = vmatprep.subr.bf16.mxu0 0
    %8967 = vmatpush1.bf16.msra.mxu0 %v8889
    %8968 = vmatprep.subr.bf16.mxu0 0
    %8969 = vmatpush1.bf16.msra.mxu0 %v8888
    %8970 = vmatprep.subr.bf16.mxu0 0
    %8971 = vmatpush1.bf16.msra.mxu0 %v8887
    %8972 = vmatprep.subr.bf16.mxu0 0
    %8973 = vmatpush1.bf16.msra.mxu0 %v8886
    %8974 = vmatprep.subr.bf16.mxu0 0
    %8975 = vmatpush2.bf16.msra.mxu0 0
    %8976 = vmatprep.subr.bf16.mxu0 0
    %8977 = vmatpush2.bf16.msra.mxu0 0
    %8978 = vmatprep.subr.bf16.mxu0 0
    %8979 = vmatpush2.bf16.msra.mxu0 0
    %8980 = vmatprep.subr.bf16.mxu0 0
    %8981 = vmatpush2.bf16.msra.mxu0 0
    %8982 = vmatprep.subr.bf16.mxu0 0
    %8983 = vmatpush2.bf16.msra.mxu0 0
    %8984 = vmatprep.subr.bf16.mxu0 0
    %8985 = vmatpush2.bf16.msra.mxu0 0
    %8986 = vmatprep.subr.bf16.mxu0 0
    %8987 = vmatpush2.bf16.msra.mxu0 0
    %8988 = vmatprep.subr.bf16.mxu0 0
    %8989 = vmatpush2.bf16.msra.mxu0 0
    %8990 = vmatprep.mubr.bf16.mxu0 0
    %8991 = vmatmul.mubr.bf16.gmra.mxu0 %v8770
    %v8992 = vpop.f32.mrf.mxu0
    %v8993 = vadd.f32 %v8953, %v8992
    %v8994 = vpop.f32.mrf.mxu0
    %v8995 = vpop.f32.mrf.mxu0
    %v8996 = vpop.f32.mrf.mxu0
    %8997 = vdwg.mxu0
    %v8998 = vadd.f32 %v8718, %v8993
    %v8999 = vld [vmem:[#allocation20] sm:$0x1]
    %v9001 = vlaneseq
    %v9002 = vshrl.u32 %v9001, 7
    %v9003 = vsub.s32 0, %v9002
    %v9004 = vrot.slane %v8999, %v9003
    %v9006 = vadd.f32 %v8998, %v9004
    %v9007 = vmax.f32 %v9006, 0.0
    %vm9008 = vcmask 1041408
    %v9009 = vsel %vm9008, %v9007, 0.0
    %v9010 = vrot.slane %v9009, 4
    %v9011 = vadd.f32 %v9009, %v9010
    %v9012 = vrot.slane %v9011, 2
    %v9013 = vadd.f32 %v9011, %v9012
    %v9014 = vrot.slane %v9013, 1
    %v9015 = vadd.f32 %v9013, %v9014
    %v9016 = vrcp.pop 2.0
    %v9017 = vmul.f32 %v9015, %v9016
    %v9018 = vmul.f32 %v9007, %v9007
    %v9019 = vsel %vm9008, %v9018, 0.0
    %v9020 = vrot.slane %v9019, 4
    %v9021 = vadd.f32 %v9019, %v9020
    %v9022 = vrot.slane %v9021, 2
    %v9023 = vadd.f32 %v9021, %v9022
    %v9024 = vrot.slane %v9023, 1
    %v9025 = vadd.f32 %v9023, %v9024
    %v9026 = vmul.f32 %v9025, %v9016
    %v9027 = vmul.f32 %v9017, %v9017
    %v9028 = vsub.f32 %v9026, %v9027
    %v9029 = vadd.f32 %v9028, 1e-05
    %v9030 = vrsqrt.pop %v9029
    %v9031 = vld [vmem:[#allocation22] sm:$0x1]
    %v9032 = vmul.f32 %v9030, %v9031
    %v9033 = vsub.f32 %v9007, %v9017
    %v9034 = vlaneseq
    %v9035 = vshrl.u32 %v9034, 7
    %v9036 = vsub.s32 0, %v9035
    %v9037 = vrot.slane %v9032, %v9036
    %v9038 = vmul.f32 %v9033, %v9037
    %v9039 = vld [vmem:[#allocation23] sm:$0x1]
    %v9041 = vlaneseq
    %v9042 = vshrl.u32 %v9041, 7
    %v9043 = vsub.s32 0, %v9042
    %v9044 = vrot.slane %v9039, %v9043
    %v9046 = vadd.f32 %v9038, %v9044
    %v9047 = vld [vmem:[%s16] sm:$0xff]
    %v9048 = vld [vmem:[%s16 + $0x8] sm:$0xff]
    %v9049 = vld [vmem:[%s16 + $0x10] sm:$0xff]
    %v9050 = vld [vmem:[%s16 + $0x18] sm:$0xff]
    %v9051 = vld [vmem:[%s16 + $0x20] sm:$0xff]
    %v9052 = vld [vmem:[%s16 + $0x28] sm:$0xff]
    %v9053 = vld [vmem:[%s16 + $0x30] sm:$0xff]
    %v9054 = vld [vmem:[%s16 + $0x38] sm:$0xff]
    %v9055 = vld [vmem:[%s16 + $0x40] sm:$0xff]
    %v9056 = vld [vmem:[%s16 + $0x48] sm:$0xff]
    %v9057 = vld [vmem:[%s16 + $0x50] sm:$0xff]
    %v9058 = vld [vmem:[%s16 + $0x58] sm:$0xff]
    %v9059 = vld [vmem:[%s16 + $0x60] sm:$0xff]
    %v9060 = vld [vmem:[%s16 + $0x68] sm:$0xff]
    %v9061 = vld [vmem:[%s16 + $0x70] sm:$0xff]
    %v9062 = vld [vmem:[%s16 + $0x78] sm:$0xff]
    %v9063 = vld [vmem:[#allocation25] sm:$0x1]
    %v9065 = vlaneseq
    %v9066 = vshrl.u32 %v9065, 7
    %v9067 = vsub.s32 0, %v9066
    %v9068 = vrot.slane %v9063, %v9067
    %9070 = vmatprep.subr.mxu0 0.0
    %9071 = vmatpush1.msra.mxu0 %v9062
    %9072 = vmatprep.subr.mxu0 0.0
    %9073 = vmatpush1.msra.mxu0 %v9061
    %9074 = vmatprep.subr.mxu0 0.0
    %9075 = vmatpush1.msra.mxu0 %v9060
    %9076 = vmatprep.subr.mxu0 0.0
    %9077 = vmatpush1.msra.mxu0 %v9059
    %9078 = vmatprep.subr.mxu0 0.0
    %9079 = vmatpush1.msra.mxu0 %v9058
    %9080 = vmatprep.subr.mxu0 0.0
    %9081 = vmatpush1.msra.mxu0 %v9057
    %9082 = vmatprep.subr.mxu0 0.0
    %9083 = vmatpush1.msra.mxu0 %v9056
    %9084 = vmatprep.subr.mxu0 0.0
    %9085 = vmatpush1.msra.mxu0 %v9055
    %9086 = vmatprep.subr.mxu0 0.0
    %9087 = vmatpush1.msra.mxu0 %v9054
    %9088 = vmatprep.subr.mxu0 0.0
    %9089 = vmatpush1.msra.mxu0 %v9053
    %9090 = vmatprep.subr.mxu0 0.0
    %9091 = vmatpush1.msra.mxu0 %v9052
    %9092 = vmatprep.subr.mxu0 0.0
    %9093 = vmatpush1.msra.mxu0 %v9051
    %9094 = vmatprep.subr.mxu0 0.0
    %9095 = vmatpush1.msra.mxu0 %v9050
    %9096 = vmatprep.subr.mxu0 0.0
    %9097 = vmatpush1.msra.mxu0 %v9049
    %9098 = vmatprep.subr.mxu0 0.0
    %9099 = vmatpush1.msra.mxu0 %v9048
    %9100 = vmatprep.subr.mxu0 0.0
    %9101 = vmatpush1.msra.mxu0 %v9047
    %9102 = vmatprep.subr.mxu0 0.0
    %9103 = vmatpush2.msra.mxu0 0.0
    %9104 = vmatprep.subr.mxu0 0.0
    %9105 = vmatpush2.msra.mxu0 0.0
    %9106 = vmatprep.subr.mxu0 0.0
    %9107 = vmatpush2.msra.mxu0 0.0
    %9108 = vmatprep.subr.mxu0 0.0
    %9109 = vmatpush2.msra.mxu0 0.0
    %9110 = vmatprep.subr.mxu0 0.0
    %9111 = vmatpush2.msra.mxu0 0.0
    %9112 = vmatprep.subr.mxu0 0.0
    %9113 = vmatpush2.msra.mxu0 0.0
    %9114 = vmatprep.subr.mxu0 0.0
    %9115 = vmatpush2.msra.mxu0 0.0
    %9116 = vmatprep.subr.mxu0 0.0
    %9117 = vmatpush2.msra.mxu0 0.0
    %9118 = vmatprep.subr.mxu0 0.0
    %9119 = vmatpush2.msra.mxu0 0.0
    %9120 = vmatprep.subr.mxu0 0.0
    %9121 = vmatpush2.msra.mxu0 0.0
    %9122 = vmatprep.subr.mxu0 0.0
    %9123 = vmatpush2.msra.mxu0 0.0
    %9124 = vmatprep.subr.mxu0 0.0
    %9125 = vmatpush2.msra.mxu0 0.0
    %9126 = vmatprep.subr.mxu0 0.0
    %9127 = vmatpush2.msra.mxu0 0.0
    %9128 = vmatprep.subr.mxu0 0.0
    %9129 = vmatpush2.msra.mxu0 0.0
    %9130 = vmatprep.subr.mxu0 0.0
    %9131 = vmatpush2.msra.mxu0 0.0
    %9132 = vmatprep.subr.mxu0 0.0
    %9133 = vmatpush2.msra.mxu0 0.0
    %9134 = vmatprep.mubr.f32.mxu0 0.0
    %9135 = vmatmul.mubr.f32.gmra.mxu0 %v9046
    %v9136 = vpop.f32.mrf.mxu0
    %v9137 = vadd.f32 %v9068, %v9136
    %v9138 = vpop.f32.mrf.mxu0
    %9139 = vdwg.mxu0
    %vm9140 = vcmask 74752
    %9141 = vst.msk [vmem:[#allocation26] sm:$0x3] %vm9140, %v9137
    // Predicated region
    $region134: #{mnist_classifier_forward.1} parent=1 // pred_check
      _
    $region135: #{mnist_classifier_forward.1} parent=1 // pred_check_branch
      %9143 = sbr.rel (0) target = $region137
    $region136: #{mnist_classifier_forward.1} parent=1 // pred_region
      %s9145 = ssub.s32 32, 32
      %9146 = vsyncadd [#allocation4], %s9145
      %s9148 = sshll.u32 [#allocation26], 4
      %s9149 = int_to_ptr.vmem [resolvable:$true] %s9148
      %9151 = dma.vmem_to_hbm [thread:$0]  %s9149, 32, %s18, [#allocation4]
    $region137: #{mnist_classifier_forward.1} parent=1 // pred_fallthru
      _
    // Predicated region
    $region138: #{mnist_classifier_forward.1} parent=1 // pred_check
      _
    $region139: #{mnist_classifier_forward.1} parent=1 // pred_check_branch
      %9153 = sbr.rel (0) target = $region141
    $region140: #{mnist_classifier_forward.1} parent=1 // pred_region
      %9154 = dma.done [#allocation4], 32
    $region141: #{mnist_classifier_forward.1} parent=1 // pred_fallthru
      _
    %9155 = vsyncpa [#allocation3], 1
    %9156 = vsyncpa [#allocation6], 1
    %9157 = vsyncpa [#allocation9], 1
    %9158 = vsyncpa [#allocation12], 1
    %9159 = vsyncpa [#allocation15], 1
    %9160 = vsyncpa [#allocation18], 1
    %9161 = vsyncpa [#allocation21], 1
    %9162 = vsyncpa [#allocation24], 1
    %9163 = vsyncpa [#allocation4], 1

</llo_original>
